<compile_context>
chip_gen: v5e
topology: v5e:2x2
jax: 0.10.0
libtpu: 0.0.40
codegen_flags: <defaults>
</compile_context>

<pallas_src>
import math
from functools import partial

import jax
import jax.numpy as jnp
from jax.experimental import pallas as pl
from jax.experimental.pallas import tpu as pltpu

MASK_VALUE = -1e30
VMEM_LIMIT = 32 * 1024 * 1024
LN_EPS = 1e-5


# ----------------------------- tiling helpers -----------------------------

def _pick_tile(dim, target, align):
    """Largest tile <= target, multiple of `align`, dividing `dim`; else the full dim."""
    if dim <= target:
        return dim
    t = (target // align) * align
    while t >= align:
        if dim % t == 0:
            return t
        t -= align
    return dim


def _pick_seq_tile(length):
    if length <= 256:
        return length
    for t in (512, 384, 256, 128):
        if length % t == 0:
            return t
    return length


def _pad_axis(a, axis, mult):
    rem = (-a.shape[axis]) % mult
    if rem == 0:
        return a
    widths = [(0, 0)] * a.ndim
    widths[axis] = (0, rem)
    return jnp.pad(a, widths)


# ----------------------------- plain tiled linear (bias in epilogue) -----------------------------

def _linear_kernel(x_ref, w_ref, b_ref, o_ref, acc_ref):
    @pl.when(pl.program_id(2) == 0)
    def _():
        acc_ref[...] = jnp.zeros_like(acc_ref)

    acc_ref[...] += jnp.dot(x_ref[...], w_ref[...], preferred_element_type=jnp.float32)

    @pl.when(pl.program_id(2) == pl.num_programs(2) - 1)
    def _():
        o_ref[...] = (acc_ref[...] + b_ref[...]).astype(o_ref.dtype)


def linear(x, w, b, out_dtype=jnp.bfloat16):
    """x: (M, K) bf16, w: (K, N) bf16 (pre-transposed), b: (N,) f32 -> (M, N) out_dtype."""
    M0, _ = x.shape
    N0 = w.shape[1]
    x = _pad_axis(_pad_axis(x, 0, 8), 1, 128)
    w = _pad_axis(_pad_axis(w, 0, 128), 1, 128)
    b2 = _pad_axis(b.reshape(1, -1).astype(jnp.float32), 1, 128)
    M, K = x.shape
    N = w.shape[1]
    tm = _pick_tile(M, 256, 8)
    tn = _pick_tile(N, 512, 128)
    tk = _pick_tile(K, 512, 128)
    out = pl.pallas_call(
        _linear_kernel,
        out_shape=jax.ShapeDtypeStruct((M, N), out_dtype),
        grid=(M // tm, N // tn, K // tk),
        in_specs=[pl.BlockSpec((tm, tk), lambda i, j, k: (i, k)),
                  pl.BlockSpec((tk, tn), lambda i, j, k: (k, j)),
                  pl.BlockSpec((1, tn), lambda i, j, k: (0, j))],
        out_specs=pl.BlockSpec((tm, tn), lambda i, j, k: (i, j)),
        scratch_shapes=[pltpu.VMEM((tm, tn), jnp.float32)],
        compiler_params=pltpu.CompilerParams(
            dimension_semantics=("parallel", "parallel", "arbitrary"),
            vmem_limit_bytes=VMEM_LIMIT),
    )(x, w, b2)
    if (M, N) != (M0, N0):
        out = out[:M0, :N0]
    return out


# ----------------------------- linear + residual + LayerNorm (fused epilogue) -----------------------------

def _linear_res_ln_kernel(x_ref, w_ref, b_ref, r_ref, g_ref, be_ref, o_ref, acc_ref, *, eps):
    @pl.when(pl.program_id(1) == 0)
    def _():
        acc_ref[...] = jnp.zeros_like(acc_ref)

    acc_ref[...] += jnp.dot(x_ref[...], w_ref[...], preferred_element_type=jnp.float32)

    @pl.when(pl.program_id(1) == pl.num_programs(1) - 1)
    def _():
        y = acc_ref[...] + b_ref[...] + r_ref[...].astype(jnp.float32)
        mean = jnp.mean(y, axis=-1, keepdims=True)
        cen = y - mean
        var = jnp.mean(cen * cen, axis=-1, keepdims=True)
        o_ref[...] = (cen * jax.lax.rsqrt(var + eps) * g_ref[...] + be_ref[...]).astype(o_ref.dtype)


def linear_res_ln(x, w, b, res, gamma, beta):
    """LayerNorm(res + (x @ w + b)) over the last axis; x:(M,K) bf16, w:(K,D) bf16."""
    M, K = x.shape
    D = w.shape[1]
    tm = _pick_tile(M, 256, 8)
    tk = _pick_tile(K, 512, 128)
    return pl.pallas_call(
        partial(_linear_res_ln_kernel, eps=LN_EPS),
        out_shape=jax.ShapeDtypeStruct((M, D), jnp.bfloat16),
        grid=(M // tm, K // tk),
        in_specs=[pl.BlockSpec((tm, tk), lambda i, k: (i, k)),
                  pl.BlockSpec((tk, D), lambda i, k: (k, 0)),
                  pl.BlockSpec((1, D), lambda i, k: (0, 0)),
                  pl.BlockSpec((tm, D), lambda i, k: (i, 0)),
                  pl.BlockSpec((1, D), lambda i, k: (0, 0)),
                  pl.BlockSpec((1, D), lambda i, k: (0, 0))],
        out_specs=pl.BlockSpec((tm, D), lambda i, k: (i, 0)),
        scratch_shapes=[pltpu.VMEM((tm, D), jnp.float32)],
        compiler_params=pltpu.CompilerParams(
            dimension_semantics=("parallel", "arbitrary"),
            vmem_limit_bytes=VMEM_LIMIT),
    )(x, w, b.reshape(1, D).astype(jnp.float32), res,
      gamma.reshape(1, D).astype(jnp.float32), beta.reshape(1, D).astype(jnp.float32))


# ----------------------------- F-tiled FFN + residual + LayerNorm (one kernel) -----------------------------

def _ffn_res_ln_kernel(x_ref, w1_ref, b1_ref, w2_ref, b2_ref, r_ref, g_ref, be_ref,
                       o_ref, acc_ref, *, eps):
    @pl.when(pl.program_id(1) == 0)
    def _():
        acc_ref[...] = jnp.zeros_like(acc_ref)

    h = jnp.dot(x_ref[...], w1_ref[...], preferred_element_type=jnp.float32) + b1_ref[...]
    h = jnp.maximum(h, 0.0).astype(jnp.bfloat16)
    acc_ref[...] += jnp.dot(h, w2_ref[...], preferred_element_type=jnp.float32)

    @pl.when(pl.program_id(1) == pl.num_programs(1) - 1)
    def _():
        y = acc_ref[...] + b2_ref[...] + r_ref[...].astype(jnp.float32)
        mean = jnp.mean(y, axis=-1, keepdims=True)
        cen = y - mean
        var = jnp.mean(cen * cen, axis=-1, keepdims=True)
        o_ref[...] = (cen * jax.lax.rsqrt(var + eps) * g_ref[...] + be_ref[...]).astype(o_ref.dtype)


def ffn_res_ln(x, w1, b1, w2, b2, res, gamma, beta):
    """LayerNorm(res + relu(x@w1+b1)@w2+b2); F streamed in tiles, (tm,F) never hits HBM."""
    M, D = x.shape
    F = w1.shape[1]
    tm = _pick_tile(M, 256, 8)
    tf = _pick_tile(F, 512, 128)
    return pl.pallas_call(
        partial(_ffn_res_ln_kernel, eps=LN_EPS),
        out_shape=jax.ShapeDtypeStruct((M, D), jnp.bfloat16),
        grid=(M // tm, F // tf),
        in_specs=[pl.BlockSpec((tm, D), lambda i, f: (i, 0)),
                  pl.BlockSpec((D, tf), lambda i, f: (0, f)),
                  pl.BlockSpec((1, tf), lambda i, f: (0, f)),
                  pl.BlockSpec((tf, D), lambda i, f: (f, 0)),
                  pl.BlockSpec((1, D), lambda i, f: (0, 0)),
                  pl.BlockSpec((tm, D), lambda i, f: (i, 0)),
                  pl.BlockSpec((1, D), lambda i, f: (0, 0)),
                  pl.BlockSpec((1, D), lambda i, f: (0, 0))],
        out_specs=pl.BlockSpec((tm, D), lambda i, f: (i, 0)),
        scratch_shapes=[pltpu.VMEM((tm, D), jnp.float32)],
        compiler_params=pltpu.CompilerParams(
            dimension_semantics=("parallel", "arbitrary"),
            vmem_limit_bytes=VMEM_LIMIT),
    )(x, w1, b1.reshape(1, F).astype(jnp.float32), w2,
      b2.reshape(1, D).astype(jnp.float32), res,
      gamma.reshape(1, D).astype(jnp.float32), beta.reshape(1, D).astype(jnp.float32))


# ----------------------------- flash-style multi-head attention -----------------------------

def _flash_attn_kernel(q_ref, k_ref, v_ref, bias_ref, o_ref, m_ref, l_ref, acc_ref,
                       *, scale, causal, num_heads, head_dim, tq, tk):
    qi = pl.program_id(1)
    ki = pl.program_id(2)

    @pl.when(ki == 0)
    def _():
        m_ref[...] = jnp.full_like(m_ref, MASK_VALUE)
        l_ref[...] = jnp.zeros_like(l_ref)
        acc_ref[...] = jnp.zeros_like(acc_ref)

    q = q_ref[0]                                       # (tq, D) bf16
    k = k_ref[0]                                       # (tk, D) bf16
    v = v_ref[0]                                       # (tk, D) bf16
    bias = bias_ref[0].astype(jnp.float32)             # (1, tk) additive key-padding bias
    if causal:
        row = qi * tq + jax.lax.broadcasted_iota(jnp.int32, (tq, tk), 0)
        col = ki * tk + jax.lax.broadcasted_iota(jnp.int32, (tq, tk), 1)
        bias = bias + jnp.where(col > row, MASK_VALUE, 0.0)

    # TODO(synk): stack heads along the matmul M dim for higher MXU occupancy at tiny tq.
    for h in range(num_heads):
        hs = slice(h * head_dim, (h + 1) * head_dim)
        s = jax.lax.dot_general(q[:, hs], k[:, hs],
                                (((1,), (1,)), ((), ())),
                                preferred_element_type=jnp.float32) * scale   # (tq, tk)
        s = s + bias
        m_prev = m_ref[:, h:h + 1]
        m_cur = jnp.maximum(m_prev, jnp.max(s, axis=-1, keepdims=True))
        alpha = jnp.exp(m_prev - m_cur)
        p = jnp.exp(s - m_cur)
        l_ref[:, h:h + 1] = alpha * l_ref[:, h:h + 1] + jnp.sum(p, axis=-1, keepdims=True)
        acc_ref[:, hs] = alpha * acc_ref[:, hs] + jnp.dot(
            p.astype(jnp.bfloat16), v[:, hs], preferred_element_type=jnp.float32)
        m_ref[:, h:h + 1] = m_cur

    @pl.when(ki == pl.num_programs(2) - 1)
    def _():
        for h in range(num_heads):
            hs = slice(h * head_dim, (h + 1) * head_dim)
            inv = pl.reciprocal(l_ref[:, h:h + 1], approx=True)
            o_ref[0, :, hs] = (acc_ref[:, hs] * inv).astype(o_ref.dtype)


def attention(q_src, q_col, k_src, k_col, v_src, v_col, bias_b1k, *, d_model, num_heads, causal):
    """q_src: (B,Lq,nq*D), k_src/v_src: (B,Lk,nkv*D); *_col = column-block index of the slice.
    bias_b1k: (B,1,Lk) additive f32 bias (0 or MASK_VALUE). Output: (B, Lq, D) bf16, lane-dense."""
    B, Lq, _ = q_src.shape
    Lk = k_src.shape[1]
    head_dim = d_model // num_heads
    tq = _pick_seq_tile(Lq)
    tk = _pick_seq_tile(Lk)
    kernel = partial(_flash_attn_kernel, scale=1.0 / math.sqrt(head_dim), causal=causal,
                     num_heads=num_heads, head_dim=head_dim, tq=tq, tk=tk)
    return pl.pallas_call(
        kernel,
        out_shape=jax.ShapeDtypeStruct((B, Lq, d_model), jnp.bfloat16),
        grid=(B, Lq // tq, Lk // tk),
        in_specs=[pl.BlockSpec((1, tq, d_model), lambda b, qi, ki: (b, qi, q_col)),
                  pl.BlockSpec((1, tk, d_model), lambda b, qi, ki: (b, ki, k_col)),
                  pl.BlockSpec((1, tk, d_model), lambda b, qi, ki: (b, ki, v_col)),
                  pl.BlockSpec((1, 1, tk), lambda b, qi, ki: (b, 0, ki))],
        out_specs=pl.BlockSpec((1, tq, d_model), lambda b, qi, ki: (b, qi, 0)),
        scratch_shapes=[pltpu.VMEM((tq, num_heads), jnp.float32),
                        pltpu.VMEM((tq, num_heads), jnp.float32),
                        pltpu.VMEM((tq, d_model), jnp.float32)],
        compiler_params=pltpu.CompilerParams(
            dimension_semantics=("parallel", "parallel", "arbitrary"),
            vmem_limit_bytes=VMEM_LIMIT),
    )(q_src, k_src, v_src, bias_b1k)


# ----------------------------- Transformer glue (all activations batch-major, bf16) -----------------------------

def mha_self(x2d, pa, bias, B, L, D, H, causal):
    qkv = linear(x2d, pa["w_qkv"], pa["b_qkv"])                       # (B*L, 3D) bf16
    if D % 128 == 0:
        q3 = qkv.reshape(B, L, 3 * D)                                 # free reshape
        attn = attention(q3, 0, q3, 1, q3, 2, bias, d_model=D, num_heads=H, causal=causal)
    else:  # fall back to explicit q/k/v slices when D isn't lane-aligned
        q = qkv[:, :D].reshape(B, L, D)
        k = qkv[:, D:2 * D].reshape(B, L, D)
        v = qkv[:, 2 * D:].reshape(B, L, D)
        attn = attention(q, 0, k, 0, v, 0, bias, d_model=D, num_heads=H, causal=causal)
    return attn.reshape(B * L, D)


def mha_cross(y2d, mem2d, pa, bias, B, Lt, Ls, D, H):
    qp = linear(y2d, pa["w_q"], pa["b_q"])                            # (B*Lt, D)
    kv = linear(mem2d, pa["w_kv"], pa["b_kv"])                        # (B*Ls, 2D)
    q3 = qp.reshape(B, Lt, D)
    if D % 128 == 0:
        kv3 = kv.reshape(B, Ls, 2 * D)
        attn = attention(q3, 0, kv3, 0, kv3, 1, bias, d_model=D, num_heads=H, causal=False)
    else:
        k3 = kv[:, :D].reshape(B, Ls, D)
        v3 = kv[:, D:].reshape(B, Ls, D)
        attn = attention(q3, 0, k3, 0, v3, 0, bias, d_model=D, num_heads=H, causal=False)
    return attn.reshape(B * Lt, D)


def encoder_layer(x2d, p, src_bias, B, L, D, H):
    a = mha_self(x2d, p["self_attn"], src_bias, B, L, D, H, causal=False)
    x1 = linear_res_ln(a, p["self_attn"]["w_out"], p["self_attn"]["b_out"],
                       x2d, p["norm1_g"], p["norm1_b"])
    x2 = ffn_res_ln(x1, p["linear1_w"], p["linear1_b"], p["linear2_w"], p["linear2_b"],
                    x1, p["norm2_g"], p["norm2_b"])
    return x2


def decoder_layer(y2d, mem2d, p, tgt_bias, src_bias, B, Lt, Ls, D, H):
    a = mha_self(y2d, p["self_attn"], tgt_bias, B, Lt, D, H, causal=True)
    y1 = linear_res_ln(a, p["self_attn"]["w_out"], p["self_attn"]["b_out"],
                       y2d, p["norm1_g"], p["norm1_b"])
    c = mha_cross(y1, mem2d, p["cross_attn"], src_bias, B, Lt, Ls, D, H)
    y2 = linear_res_ln(c, p["cross_attn"]["w_out"], p["cross_attn"]["b_out"],
                       y1, p["norm2_g"], p["norm2_b"])
    y3 = ffn_res_ln(y2, p["linear1_w"], p["linear1_b"], p["linear2_w"], p["linear2_b"],
                    y2, p["norm3_g"], p["norm3_b"])
    return y3


def get_positional_encoding(d_model, max_len=1000):
    # Mirrors the module's __init__ (the reference forward never adds this).
    position = jnp.arange(max_len, dtype=jnp.float32)[:, None]
    div_term = jnp.exp(jnp.arange(0, d_model, 2, dtype=jnp.float32) *
                       (-math.log(10000.0) / d_model))
    pe = jnp.zeros((max_len, d_model), jnp.float32)
    pe = pe.at[:, 0::2].set(jnp.sin(position * div_term))
    pe = pe.at[:, 1::2].set(jnp.cos(position * div_term))
    return pe[None]


def transformer_translator_forward(params, src, tgt, num_heads):
    """src: (B, Ls) int32, tgt: (B, Lt) int32 -> (B, Lt, vocab) f32."""
    B, Ls = src.shape
    Lt = tgt.shape[1]
    D = params["embedding"].shape[1]

    # Embedding lookup left to XLA (gather).  # TODO(synk): no clean Pallas gather equivalent here.
    src_emb = params["embedding"][src].astype(jnp.bfloat16)              # (B, Ls, D)
    src_bias = jnp.where(src == 0, MASK_VALUE, 0.0).astype(jnp.float32)[:, None, :]  # (B,1,Ls)

    x2d = src_emb.reshape(B * Ls, D)
    for lp in params["encoder_layers"]:
        x2d = encoder_layer(x2d, lp, src_bias, B, Ls, D, num_heads)
    mem2d = x2d                                                           # (B*Ls, D)

    # reference: generate_square_subsequent_mask(tgt.size(0)) -> only valid when batch == tgt_len
    assert tgt.shape[0] == Lt, "reference code only type-checks when batch == tgt_len"

    tgt_emb = params["embedding"][tgt].astype(jnp.bfloat16)               # (B, Lt, D)
    zero_bias = jnp.zeros((B, 1, Lt), jnp.float32)                        # no tgt key padding
    y2d = tgt_emb.reshape(B * Lt, D)
    for lp in params["decoder_layers"]:
        y2d = decoder_layer(y2d, mem2d, lp, zero_bias, src_bias, B, Lt, Ls, D, num_heads)

    out = linear(y2d, params["fc_w"], params["fc_b"], out_dtype=jnp.float32)   # (B*Lt, vocab)
    return out.reshape(B, Lt, -1)


# ----------------------------- deterministic init (weights bf16, pre-transposed (K, N)) -----------------------------

def init_params(key, vocab_size, d_model, num_heads, num_layers, dim_feedforward=2048):
    keys = iter(jax.random.split(key, 1024))

    def nrm(shape, scale=0.05, dtype=jnp.bfloat16):
        return (jax.random.normal(next(keys), shape, jnp.float32) * scale).astype(dtype)

    def self_attn_params():
        return dict(w_qkv=nrm((d_model, 3 * d_model)),
                    b_qkv=nrm((3 * d_model,), dtype=jnp.float32),
                    w_out=nrm((d_model, d_model)),
                    b_out=nrm((d_model,), dtype=jnp.float32))

    def cross_attn_params():
        return dict(w_q=nrm((d_model, d_model)),
                    b_q=nrm((d_model,), dtype=jnp.float32),
                    w_kv=nrm((d_model, 2 * d_model)),
                    b_kv=nrm((2 * d_model,), dtype=jnp.float32),
                    w_out=nrm((d_model, d_model)),
                    b_out=nrm((d_model,), dtype=jnp.float32))

    def ff_norm_params(n_norms):
        p = dict(linear1_w=nrm((d_model, dim_feedforward)),
                 linear1_b=nrm((dim_feedforward,), dtype=jnp.float32),
                 linear2_w=nrm((dim_feedforward, d_model)),
                 linear2_b=nrm((d_model,), dtype=jnp.float32))
        for i in range(1, n_norms + 1):
            p[f"norm{i}_g"] = jnp.ones((d_model,), jnp.float32)
            p[f"norm{i}_b"] = jnp.zeros((d_model,), jnp.float32)
        return p

    enc_layers, dec_layers = [], []
    for _ in range(num_layers):
        p = dict(self_attn=self_attn_params()); p.update(ff_norm_params(2)); enc_layers.append(p)
    for _ in range(num_layers):
        p = dict(self_attn=self_attn_params(), cross_attn=cross_attn_params())
        p.update(ff_norm_params(3)); dec_layers.append(p)

    return dict(
        embedding=jax.random.normal(next(keys), (vocab_size, d_model), jnp.float32),
        positional_encoding=get_positional_encoding(d_model),  # unused by forward (matches ref)
        encoder_layers=enc_layers,
        decoder_layers=dec_layers,
        fc_w=nrm((d_model, vocab_size)),
        fc_b=nrm((vocab_size,), dtype=jnp.float32),
    )


# ----------------------------- example run -----------------------------

if __name__ == "__main__":
    vocab_size, d_model, num_heads, num_layers = 128, 128, 4, 2
    B, Ls, Lt = 8, 8, 8   # batch == tgt_len (see mask-size quirk in the reference)

    key = jax.random.PRNGKey(0)
    pkey, skey, tkey = jax.random.split(key, 3)
    params = init_params(pkey, vocab_size, d_model, num_heads, num_layers)

    src = jax.random.randint(skey, (B, Ls), 0, vocab_size, dtype=jnp.int32)
    src = src.at[:, 0].set(1)   # ensure at least one non-pad key per sequence
    tgt = jax.random.randint(tkey, (B, Lt), 1, vocab_size, dtype=jnp.int32)

    fwd = jax.jit(transformer_translator_forward, static_argnums=(3,))
    out = fwd(params, src, tgt, num_heads)
    out = jax.block_until_ready(out)
    assert out.shape == (B, Lt, vocab_size)
    assert bool(jnp.all(jnp.isfinite(out)))
    print("KERNEL_OK")
</pallas_src>

<mosaic_0001>
module attributes {stable_mosaic.version = 11 : i64} {
  func.func @_flash_attn_kernel(%arg0: i32, %arg1: i32, %arg2: i32, %arg3: memref<1x8x128xbf16, #tpu.memory_space<vmem>>, %arg4: memref<1x8x128xbf16, #tpu.memory_space<vmem>>, %arg5: memref<1x8x128xbf16, #tpu.memory_space<vmem>>, %arg6: memref<1x1x8xf32, #tpu.memory_space<vmem>>, %arg7: memref<1x8x128xbf16, #tpu.memory_space<vmem>>, %arg8: memref<8x4xf32, #tpu.memory_space<vmem>>, %arg9: memref<8x4xf32, #tpu.memory_space<vmem>>, %arg10: memref<8x128xf32, #tpu.memory_space<vmem>>) attributes {dimension_semantics = [#tpu.dimension_semantics<parallel>, #tpu.dimension_semantics<parallel>, #tpu.dimension_semantics<arbitrary>], iteration_bounds = array<i64: 8, 1, 1>, scalar_prefetch = 0 : i64, scratch_operands = 3 : i64, tpu.core_type = #tpu.core_type<tc>, window_params = [{transform_indices = @transform_0, window_bounds = array<i64: 1, 8, 128>}, {transform_indices = @transform_1, window_bounds = array<i64: 1, 8, 128>}, {transform_indices = @transform_2, window_bounds = array<i64: 1, 8, 128>}, {transform_indices = @transform_3, window_bounds = array<i64: 1, 1, 8>}, {transform_indices = @transform_4, window_bounds = array<i64: 1, 8, 128>}]} {
    %c0_i32 = arith.constant 0 : i32
    %0 = arith.cmpi eq, %arg2, %c0_i32 : i32
    %1 = arith.extui %0 : i1 to i32
    %c0_i32_0 = arith.constant 0 : i32
    %2 = arith.cmpi ne, %1, %c0_i32_0 : i32
    scf.if %2 {
      %cst_78 = arith.constant -1.000000e+30 : f32
      %148 = vector.broadcast %cst_78 : f32 to vector<8x4xf32>
      %c0_79 = arith.constant 0 : index
      %c0_80 = arith.constant 0 : index
      %149 = vector.load %arg8[%c0_79, %c0_80] : memref<8x4xf32, #tpu.memory_space<vmem>>, vector<8x4xf32>
      tpu.vector_store %arg8[%c0_79, %c0_80], %148 {strides = array<i32>} : memref<8x4xf32, #tpu.memory_space<vmem>>, vector<8x4xf32>,
      %cst_81 = arith.constant 0.000000e+00 : f32
      %150 = vector.broadcast %cst_81 : f32 to vector<8x4xf32>
      %c0_82 = arith.constant 0 : index
      %c0_83 = arith.constant 0 : index
      %151 = vector.load %arg9[%c0_82, %c0_83] : memref<8x4xf32, #tpu.memory_space<vmem>>, vector<8x4xf32>
      tpu.vector_store %arg9[%c0_82, %c0_83], %150 {strides = array<i32>} : memref<8x4xf32, #tpu.memory_space<vmem>>, vector<8x4xf32>,
      %cst_84 = arith.constant 0.000000e+00 : f32
      %152 = vector.broadcast %cst_84 : f32 to vector<8x128xf32>
      %c0_85 = arith.constant 0 : index
      %c0_86 = arith.constant 0 : index
      %153 = vector.load %arg10[%c0_85, %c0_86] : memref<8x128xf32, #tpu.memory_space<vmem>>, vector<8x128xf32>
      tpu.vector_store %arg10[%c0_85, %c0_86], %152 {strides = array<i32>} : memref<8x128xf32, #tpu.memory_space<vmem>>, vector<8x128xf32>,
    } else {
    }
    %c0 = arith.constant 0 : index
    %c0_1 = arith.constant 0 : index
    %c0_2 = arith.constant 0 : index
    %3 = vector.load %arg3[%c0, %c0_1, %c0_2] : memref<1x8x128xbf16, #tpu.memory_space<vmem>>, vector<1x8x128xbf16>
    %4 = vector.shape_cast %3 : vector<1x8x128xbf16> to vector<8x128xbf16>
    %c0_3 = arith.constant 0 : index
    %c0_4 = arith.constant 0 : index
    %c0_5 = arith.constant 0 : index
    %5 = vector.load %arg4[%c0_3, %c0_4, %c0_5] : memref<1x8x128xbf16, #tpu.memory_space<vmem>>, vector<1x8x128xbf16>
    %6 = vector.shape_cast %5 : vector<1x8x128xbf16> to vector<8x128xbf16>
    %c0_6 = arith.constant 0 : index
    %c0_7 = arith.constant 0 : index
    %c0_8 = arith.constant 0 : index
    %7 = vector.load %arg5[%c0_6, %c0_7, %c0_8] : memref<1x8x128xbf16, #tpu.memory_space<vmem>>, vector<1x8x128xbf16>
    %8 = vector.shape_cast %7 : vector<1x8x128xbf16> to vector<8x128xbf16>
    %c0_9 = arith.constant 0 : index
    %c0_10 = arith.constant 0 : index
    %c0_11 = arith.constant 0 : index
    %9 = vector.load %arg6[%c0_9, %c0_10, %c0_11] : memref<1x1x8xf32, #tpu.memory_space<vmem>>, vector<1x1x8xf32>
    %10 = vector.shape_cast %9 : vector<1x1x8xf32> to vector<1x8xf32>
    %c8_i32 = arith.constant 8 : i32
    %11 = arith.muli %arg1, %c8_i32 : i32
    %12 = tpu.iota {dimensions = array<i32: 0>} : vector<8x8xi32>
    %13 = vector.broadcast %11 : i32 to vector<8x8xi32>
    %14 = arith.addi %13, %12 : vector<8x8xi32>
    %c8_i32_12 = arith.constant 8 : i32
    %15 = arith.muli %arg2, %c8_i32_12 : i32
    %16 = tpu.iota {dimensions = array<i32: 1>} : vector<8x8xi32>
    %17 = vector.broadcast %15 : i32 to vector<8x8xi32>
    %18 = arith.addi %17, %16 : vector<8x8xi32>
    %19 = arith.cmpi sgt, %18, %14 : vector<8x8xi32>
    %cst = arith.constant -1.000000e+30 : f32
    %cst_13 = arith.constant 0.000000e+00 : f32
    %20 = vector.broadcast %cst : f32 to vector<8x8xf32>
    %21 = vector.broadcast %cst_13 : f32 to vector<8x8xf32>
    %22 = arith.select %19, %20, %21 : vector<8x8xi1>, vector<8x8xf32>
    %23 = vector.broadcast %10 : vector<1x8xf32> to vector<8x8xf32>
    %24 = arith.addf %23, %22 : vector<8x8xf32>
    %25 = vector.extract_strided_slice %4 {offsets = [0, 0], sizes = [8, 32], strides = [1, 1]} : vector<8x128xbf16> to vector<8x32xbf16>
    %26 = vector.extract_strided_slice %6 {offsets = [0, 0], sizes = [8, 32], strides = [1, 1]} : vector<8x128xbf16> to vector<8x32xbf16>
    %cst_14 = arith.constant dense<0.000000e+00> : vector<8x8xf32>
    %27 = tpu.matmul %25, %26, %cst_14 {dimension_numbers = #tpu.dot_dimension_numbers<[1], [1], [0], [0], [0, 0, 1, 0], [], []>} : vector<8x32xbf16>, vector<8x32xbf16>, vector<8x8xf32> -> vector<8x8xf32>
    %cst_15 = arith.constant 0.176776692 : f32
    %28 = vector.broadcast %cst_15 : f32 to vector<8x8xf32>
    %29 = arith.mulf %27, %28 : vector<8x8xf32>
    %30 = arith.addf %29, %24 : vector<8x8xf32>
    %c0_16 = arith.constant 0 : index
    %c0_17 = arith.constant 0 : index
    %31 = vector.load %arg8[%c0_16, %c0_17] : memref<8x4xf32, #tpu.memory_space<vmem>>, vector<8x1xf32>
    %cst_18 = arith.constant dense<0xFF800000> : vector<8xf32>
    %32 = vector.multi_reduction <maximumf>, %30, %cst_18 [1] : vector<8x8xf32> to vector<8xf32>
    %33 = vector.shape_cast %32 : vector<8xf32> to vector<8x1xf32>
    %34 = arith.maximumf %31, %33 : vector<8x1xf32>
    %35 = arith.subf %31, %34 : vector<8x1xf32>
    %36 = math.exp %35 : vector<8x1xf32>
    %37 = vector.broadcast %34 : vector<8x1xf32> to vector<8x8xf32>
    %38 = arith.subf %30, %37 : vector<8x8xf32>
    %39 = math.exp %38 : vector<8x8xf32>
    %c0_19 = arith.constant 0 : index
    %c0_20 = arith.constant 0 : index
    %40 = vector.load %arg9[%c0_19, %c0_20] : memref<8x4xf32, #tpu.memory_space<vmem>>, vector<8x1xf32>
    %41 = arith.mulf %36, %40 : vector<8x1xf32>
    %cst_21 = arith.constant dense<0.000000e+00> : vector<8xf32>
    %42 = vector.multi_reduction <add>, %39, %cst_21 [1] : vector<8x8xf32> to vector<8xf32>
    %43 = vector.shape_cast %42 : vector<8xf32> to vector<8x1xf32>
    %44 = arith.addf %41, %43 : vector<8x1xf32>
    %c0_22 = arith.constant 0 : index
    %c0_23 = arith.constant 0 : index
    %45 = vector.load %arg9[%c0_22, %c0_23] : memref<8x4xf32, #tpu.memory_space<vmem>>, vector<8x1xf32>
    tpu.vector_store %arg9[%c0_22, %c0_23], %44 {strides = array<i32>} : memref<8x4xf32, #tpu.memory_space<vmem>>, vector<8x1xf32>,
    %c0_24 = arith.constant 0 : index
    %c0_25 = arith.constant 0 : index
    %46 = vector.load %arg10[%c0_24, %c0_25] : memref<8x128xf32, #tpu.memory_space<vmem>>, vector<8x32xf32>
    %47 = vector.broadcast %36 : vector<8x1xf32> to vector<8x32xf32>
    %48 = arith.mulf %47, %46 : vector<8x32xf32>
    %49 = arith.truncf %39 : vector<8x8xf32> to vector<8x8xbf16>
    %50 = vector.extract_strided_slice %8 {offsets = [0, 0], sizes = [8, 32], strides = [1, 1]} : vector<8x128xbf16> to vector<8x32xbf16>
    %cst_26 = arith.constant dense<0.000000e+00> : vector<8x32xf32>
    %51 = tpu.matmul %49, %50, %cst_26 {dimension_numbers = #tpu.dot_dimension_numbers<[1], [0], [0], [1], [0, 0, 1, 1], [], []>} : vector<8x8xbf16>, vector<8x32xbf16>, vector<8x32xf32> -> vector<8x32xf32>
    %52 = arith.addf %48, %51 : vector<8x32xf32>
    %c0_27 = arith.constant 0 : index
    %c0_28 = arith.constant 0 : index
    %53 = vector.load %arg10[%c0_27, %c0_28] : memref<8x128xf32, #tpu.memory_space<vmem>>, vector<8x32xf32>
    tpu.vector_store %arg10[%c0_27, %c0_28], %52 {strides = array<i32>} : memref<8x128xf32, #tpu.memory_space<vmem>>, vector<8x32xf32>,
    %c0_29 = arith.constant 0 : index
    %c0_30 = arith.constant 0 : index
    %54 = vector.load %arg8[%c0_29, %c0_30] : memref<8x4xf32, #tpu.memory_space<vmem>>, vector<8x1xf32>
    tpu.vector_store %arg8[%c0_29, %c0_30], %34 {strides = array<i32>} : memref<8x4xf32, #tpu.memory_space<vmem>>, vector<8x1xf32>,
    %55 = vector.extract_strided_slice %4 {offsets = [0, 32], sizes = [8, 32], strides = [1, 1]} : vector<8x128xbf16> to vector<8x32xbf16>
    %56 = vector.extract_strided_slice %6 {offsets = [0, 32], sizes = [8, 32], strides = [1, 1]} : vector<8x128xbf16> to vector<8x32xbf16>
    %cst_31 = arith.constant dense<0.000000e+00> : vector<8x8xf32>
    %57 = tpu.matmul %55, %56, %cst_31 {dimension_numbers = #tpu.dot_dimension_numbers<[1], [1], [0], [0], [0, 0, 1, 0], [], []>} : vector<8x32xbf16>, vector<8x32xbf16>, vector<8x8xf32> -> vector<8x8xf32>
    %cst_32 = arith.constant 0.176776692 : f32
    %58 = vector.broadcast %cst_32 : f32 to vector<8x8xf32>
    %59 = arith.mulf %57, %58 : vector<8x8xf32>
    %60 = arith.addf %59, %24 : vector<8x8xf32>
    %c0_33 = arith.constant 0 : index
    %c1 = arith.constant 1 : index
    %61 = vector.load %arg8[%c0_33, %c1] : memref<8x4xf32, #tpu.memory_space<vmem>>, vector<8x1xf32>
    %cst_34 = arith.constant dense<0xFF800000> : vector<8xf32>
    %62 = vector.multi_reduction <maximumf>, %60, %cst_34 [1] : vector<8x8xf32> to vector<8xf32>
    %63 = vector.shape_cast %62 : vector<8xf32> to vector<8x1xf32>
    %64 = arith.maximumf %61, %63 : vector<8x1xf32>
    %65 = arith.subf %61, %64 : vector<8x1xf32>
    %66 = math.exp %65 : vector<8x1xf32>
    %67 = vector.broadcast %64 : vector<8x1xf32> to vector<8x8xf32>
    %68 = arith.subf %60, %67 : vector<8x8xf32>
    %69 = math.exp %68 : vector<8x8xf32>
    %c0_35 = arith.constant 0 : index
    %c1_36 = arith.constant 1 : index
    %70 = vector.load %arg9[%c0_35, %c1_36] : memref<8x4xf32, #tpu.memory_space<vmem>>, vector<8x1xf32>
    %71 = arith.mulf %66, %70 : vector<8x1xf32>
    %cst_37 = arith.constant dense<0.000000e+00> : vector<8xf32>
    %72 = vector.multi_reduction <add>, %69, %cst_37 [1] : vector<8x8xf32> to vector<8xf32>
    %73 = vector.shape_cast %72 : vector<8xf32> to vector<8x1xf32>
    %74 = arith.addf %71, %73 : vector<8x1xf32>
    %c0_38 = arith.constant 0 : index
    %c1_39 = arith.constant 1 : index
    %75 = vector.load %arg9[%c0_38, %c1_39] : memref<8x4xf32, #tpu.memory_space<vmem>>, vector<8x1xf32>
    tpu.vector_store %arg9[%c0_38, %c1_39], %74 {strides = array<i32>} : memref<8x4xf32, #tpu.memory_space<vmem>>, vector<8x1xf32>,
    %c0_40 = arith.constant 0 : index
    %c32 = arith.constant 32 : index
    %76 = vector.load %arg10[%c0_40, %c32] : memref<8x128xf32, #tpu.memory_space<vmem>>, vector<8x32xf32>
    %77 = vector.broadcast %66 : vector<8x1xf32> to vector<8x32xf32>
    %78 = arith.mulf %77, %76 : vector<8x32xf32>
    %79 = arith.truncf %69 : vector<8x8xf32> to vector<8x8xbf16>
    %80 = vector.extract_strided_slice %8 {offsets = [0, 32], sizes = [8, 32], strides = [1, 1]} : vector<8x128xbf16> to vector<8x32xbf16>
    %cst_41 = arith.constant dense<0.000000e+00> : vector<8x32xf32>
    %81 = tpu.matmul %79, %80, %cst_41 {dimension_numbers = #tpu.dot_dimension_numbers<[1], [0], [0], [1], [0, 0, 1, 1], [], []>} : vector<8x8xbf16>, vector<8x32xbf16>, vector<8x32xf32> -> vector<8x32xf32>
    %82 = arith.addf %78, %81 : vector<8x32xf32>
    %c0_42 = arith.constant 0 : index
    %c32_43 = arith.constant 32 : index
    %83 = vector.load %arg10[%c0_42, %c32_43] : memref<8x128xf32, #tpu.memory_space<vmem>>, vector<8x32xf32>
    tpu.vector_store %arg10[%c0_42, %c32_43], %82 {strides = array<i32>} : memref<8x128xf32, #tpu.memory_space<vmem>>, vector<8x32xf32>,
    %c0_44 = arith.constant 0 : index
    %c1_45 = arith.constant 1 : index
    %84 = vector.load %arg8[%c0_44, %c1_45] : memref<8x4xf32, #tpu.memory_space<vmem>>, vector<8x1xf32>
    tpu.vector_store %arg8[%c0_44, %c1_45], %64 {strides = array<i32>} : memref<8x4xf32, #tpu.memory_space<vmem>>, vector<8x1xf32>,
    %85 = vector.extract_strided_slice %4 {offsets = [0, 64], sizes = [8, 32], strides = [1, 1]} : vector<8x128xbf16> to vector<8x32xbf16>
    %86 = vector.extract_strided_slice %6 {offsets = [0, 64], sizes = [8, 32], strides = [1, 1]} : vector<8x128xbf16> to vector<8x32xbf16>
    %cst_46 = arith.constant dense<0.000000e+00> : vector<8x8xf32>
    %87 = tpu.matmul %85, %86, %cst_46 {dimension_numbers = #tpu.dot_dimension_numbers<[1], [1], [0], [0], [0, 0, 1, 0], [], []>} : vector<8x32xbf16>, vector<8x32xbf16>, vector<8x8xf32> -> vector<8x8xf32>
    %cst_47 = arith.constant 0.176776692 : f32
    %88 = vector.broadcast %cst_47 : f32 to vector<8x8xf32>
    %89 = arith.mulf %87, %88 : vector<8x8xf32>
    %90 = arith.addf %89, %24 : vector<8x8xf32>
    %c0_48 = arith.constant 0 : index
    %c2 = arith.constant 2 : index
    %91 = vector.load %arg8[%c0_48, %c2] : memref<8x4xf32, #tpu.memory_space<vmem>>, vector<8x1xf32>
    %cst_49 = arith.constant dense<0xFF800000> : vector<8xf32>
    %92 = vector.multi_reduction <maximumf>, %90, %cst_49 [1] : vector<8x8xf32> to vector<8xf32>
    %93 = vector.shape_cast %92 : vector<8xf32> to vector<8x1xf32>
    %94 = arith.maximumf %91, %93 : vector<8x1xf32>
    %95 = arith.subf %91, %94 : vector<8x1xf32>
    %96 = math.exp %95 : vector<8x1xf32>
    %97 = vector.broadcast %94 : vector<8x1xf32> to vector<8x8xf32>
    %98 = arith.subf %90, %97 : vector<8x8xf32>
    %99 = math.exp %98 : vector<8x8xf32>
    %c0_50 = arith.constant 0 : index
    %c2_51 = arith.constant 2 : index
    %100 = vector.load %arg9[%c0_50, %c2_51] : memref<8x4xf32, #tpu.memory_space<vmem>>, vector<8x1xf32>
    %101 = arith.mulf %96, %100 : vector<8x1xf32>
    %cst_52 = arith.constant dense<0.000000e+00> : vector<8xf32>
    %102 = vector.multi_reduction <add>, %99, %cst_52 [1] : vector<8x8xf32> to vector<8xf32>
    %103 = vector.shape_cast %102 : vector<8xf32> to vector<8x1xf32>
    %104 = arith.addf %101, %103 : vector<8x1xf32>
    %c0_53 = arith.constant 0 : index
    %c2_54 = arith.constant 2 : index
    %105 = vector.load %arg9[%c0_53, %c2_54] : memref<8x4xf32, #tpu.memory_space<vmem>>, vector<8x1xf32>
    tpu.vector_store %arg9[%c0_53, %c2_54], %104 {strides = array<i32>} : memref<8x4xf32, #tpu.memory_space<vmem>>, vector<8x1xf32>,
    %c0_55 = arith.constant 0 : index
    %c64 = arith.constant 64 : index
    %106 = vector.load %arg10[%c0_55, %c64] : memref<8x128xf32, #tpu.memory_space<vmem>>, vector<8x32xf32>
    %107 = vector.broadcast %96 : vector<8x1xf32> to vector<8x32xf32>
    %108 = arith.mulf %107, %106 : vector<8x32xf32>
    %109 = arith.truncf %99 : vector<8x8xf32> to vector<8x8xbf16>
    %110 = vector.extract_strided_slice %8 {offsets = [0, 64], sizes = [8, 32], strides = [1, 1]} : vector<8x128xbf16> to vector<8x32xbf16>
    %cst_56 = arith.constant dense<0.000000e+00> : vector<8x32xf32>
    %111 = tpu.matmul %109, %110, %cst_56 {dimension_numbers = #tpu.dot_dimension_numbers<[1], [0], [0], [1], [0, 0, 1, 1], [], []>} : vector<8x8xbf16>, vector<8x32xbf16>, vector<8x32xf32> -> vector<8x32xf32>
    %112 = arith.addf %108, %111 : vector<8x32xf32>
    %c0_57 = arith.constant 0 : index
    %c64_58 = arith.constant 64 : index
    %113 = vector.load %arg10[%c0_57, %c64_58] : memref<8x128xf32, #tpu.memory_space<vmem>>, vector<8x32xf32>
    tpu.vector_store %arg10[%c0_57, %c64_58], %112 {strides = array<i32>} : memref<8x128xf32, #tpu.memory_space<vmem>>, vector<8x32xf32>,
    %c0_59 = arith.constant 0 : index
    %c2_60 = arith.constant 2 : index
    %114 = vector.load %arg8[%c0_59, %c2_60] : memref<8x4xf32, #tpu.memory_space<vmem>>, vector<8x1xf32>
    tpu.vector_store %arg8[%c0_59, %c2_60], %94 {strides = array<i32>} : memref<8x4xf32, #tpu.memory_space<vmem>>, vector<8x1xf32>,
    %115 = vector.extract_strided_slice %4 {offsets = [0, 96], sizes = [8, 32], strides = [1, 1]} : vector<8x128xbf16> to vector<8x32xbf16>
    %116 = vector.extract_strided_slice %6 {offsets = [0, 96], sizes = [8, 32], strides = [1, 1]} : vector<8x128xbf16> to vector<8x32xbf16>
    %cst_61 = arith.constant dense<0.000000e+00> : vector<8x8xf32>
    %117 = tpu.matmul %115, %116, %cst_61 {dimension_numbers = #tpu.dot_dimension_numbers<[1], [1], [0], [0], [0, 0, 1, 0], [], []>} : vector<8x32xbf16>, vector<8x32xbf16>, vector<8x8xf32> -> vector<8x8xf32>
    %cst_62 = arith.constant 0.176776692 : f32
    %118 = vector.broadcast %cst_62 : f32 to vector<8x8xf32>
    %119 = arith.mulf %117, %118 : vector<8x8xf32>
    %120 = arith.addf %119, %24 : vector<8x8xf32>
    %c0_63 = arith.constant 0 : index
    %c3 = arith.constant 3 : index
    %121 = vector.load %arg8[%c0_63, %c3] : memref<8x4xf32, #tpu.memory_space<vmem>>, vector<8x1xf32>
    %cst_64 = arith.constant dense<0xFF800000> : vector<8xf32>
    %122 = vector.multi_reduction <maximumf>, %120, %cst_64 [1] : vector<8x8xf32> to vector<8xf32>
    %123 = vector.shape_cast %122 : vector<8xf32> to vector<8x1xf32>
    %124 = arith.maximumf %121, %123 : vector<8x1xf32>
    %125 = arith.subf %121, %124 : vector<8x1xf32>
    %126 = math.exp %125 : vector<8x1xf32>
    %127 = vector.broadcast %124 : vector<8x1xf32> to vector<8x8xf32>
    %128 = arith.subf %120, %127 : vector<8x8xf32>
    %129 = math.exp %128 : vector<8x8xf32>
    %c0_65 = arith.constant 0 : index
    %c3_66 = arith.constant 3 : index
    %130 = vector.load %arg9[%c0_65, %c3_66] : memref<8x4xf32, #tpu.memory_space<vmem>>, vector<8x1xf32>
    %131 = arith.mulf %126, %130 : vector<8x1xf32>
    %cst_67 = arith.constant dense<0.000000e+00> : vector<8xf32>
    %132 = vector.multi_reduction <add>, %129, %cst_67 [1] : vector<8x8xf32> to vector<8xf32>
    %133 = vector.shape_cast %132 : vector<8xf32> to vector<8x1xf32>
    %134 = arith.addf %131, %133 : vector<8x1xf32>
    %c0_68 = arith.constant 0 : index
    %c3_69 = arith.constant 3 : index
    %135 = vector.load %arg9[%c0_68, %c3_69] : memref<8x4xf32, #tpu.memory_space<vmem>>, vector<8x1xf32>
    tpu.vector_store %arg9[%c0_68, %c3_69], %134 {strides = array<i32>} : memref<8x4xf32, #tpu.memory_space<vmem>>, vector<8x1xf32>,
    %c0_70 = arith.constant 0 : index
    %c96 = arith.constant 96 : index
    %136 = vector.load %arg10[%c0_70, %c96] : memref<8x128xf32, #tpu.memory_space<vmem>>, vector<8x32xf32>
    %137 = vector.broadcast %126 : vector<8x1xf32> to vector<8x32xf32>
    %138 = arith.mulf %137, %136 : vector<8x32xf32>
    %139 = arith.truncf %129 : vector<8x8xf32> to vector<8x8xbf16>
    %140 = vector.extract_strided_slice %8 {offsets = [0, 96], sizes = [8, 32], strides = [1, 1]} : vector<8x128xbf16> to vector<8x32xbf16>
    %cst_71 = arith.constant dense<0.000000e+00> : vector<8x32xf32>
    %141 = tpu.matmul %139, %140, %cst_71 {dimension_numbers = #tpu.dot_dimension_numbers<[1], [0], [0], [1], [0, 0, 1, 1], [], []>} : vector<8x8xbf16>, vector<8x32xbf16>, vector<8x32xf32> -> vector<8x32xf32>
    %142 = arith.addf %138, %141 : vector<8x32xf32>
    %c0_72 = arith.constant 0 : index
    %c96_73 = arith.constant 96 : index
    %143 = vector.load %arg10[%c0_72, %c96_73] : memref<8x128xf32, #tpu.memory_space<vmem>>, vector<8x32xf32>
    tpu.vector_store %arg10[%c0_72, %c96_73], %142 {strides = array<i32>} : memref<8x128xf32, #tpu.memory_space<vmem>>, vector<8x32xf32>,
    %c0_74 = arith.constant 0 : index
    %c3_75 = arith.constant 3 : index
    %144 = vector.load %arg8[%c0_74, %c3_75] : memref<8x4xf32, #tpu.memory_space<vmem>>, vector<8x1xf32>
    tpu.vector_store %arg8[%c0_74, %c3_75], %124 {strides = array<i32>} : memref<8x4xf32, #tpu.memory_space<vmem>>, vector<8x1xf32>,
    %c0_i32_76 = arith.constant 0 : i32
    %145 = arith.cmpi eq, %arg2, %c0_i32_76 : i32
    %146 = arith.extui %145 : i1 to i32
    %c0_i32_77 = arith.constant 0 : i32
    %147 = arith.cmpi ne, %146, %c0_i32_77 : i32
    scf.if %147 {
      %c0_78 = arith.constant 0 : index
      %c0_79 = arith.constant 0 : index
      %148 = vector.load %arg9[%c0_78, %c0_79] : memref<8x4xf32, #tpu.memory_space<vmem>>, vector<8x1xf32>
      %149 = tpu.reciprocal %148 {approx = true} : vector<8x1xf32> -> vector<8x1xf32>
      %c0_80 = arith.constant 0 : index
      %c0_81 = arith.constant 0 : index
      %150 = vector.load %arg10[%c0_80, %c0_81] : memref<8x128xf32, #tpu.memory_space<vmem>>, vector<8x32xf32>
      %151 = vector.broadcast %149 : vector<8x1xf32> to vector<8x32xf32>
      %152 = arith.mulf %150, %151 : vector<8x32xf32>
      %153 = arith.truncf %152 : vector<8x32xf32> to vector<8x32xbf16>
      %c0_82 = arith.constant 0 : index
      %c0_83 = arith.constant 0 : index
      %c0_84 = arith.constant 0 : index
      %154 = vector.load %arg7[%c0_82, %c0_83, %c0_84] : memref<1x8x128xbf16, #tpu.memory_space<vmem>>, vector<1x8x32xbf16>
      %155 = vector.shape_cast %154 : vector<1x8x32xbf16> to vector<8x32xbf16>
      %156 = vector.shape_cast %153 : vector<8x32xbf16> to vector<1x8x32xbf16>
      tpu.vector_store %arg7[%c0_82, %c0_83, %c0_84], %156 {strides = array<i32>} : memref<1x8x128xbf16, #tpu.memory_space<vmem>>, vector<1x8x32xbf16>,
      %c0_85 = arith.constant 0 : index
      %c1_86 = arith.constant 1 : index
      %157 = vector.load %arg9[%c0_85, %c1_86] : memref<8x4xf32, #tpu.memory_space<vmem>>, vector<8x1xf32>
      %158 = tpu.reciprocal %157 {approx = true} : vector<8x1xf32> -> vector<8x1xf32>
      %c0_87 = arith.constant 0 : index
      %c32_88 = arith.constant 32 : index
      %159 = vector.load %arg10[%c0_87, %c32_88] : memref<8x128xf32, #tpu.memory_space<vmem>>, vector<8x32xf32>
      %160 = vector.broadcast %158 : vector<8x1xf32> to vector<8x32xf32>
      %161 = arith.mulf %159, %160 : vector<8x32xf32>
      %162 = arith.truncf %161 : vector<8x32xf32> to vector<8x32xbf16>
      %c0_89 = arith.constant 0 : index
      %c0_90 = arith.constant 0 : index
      %c32_91 = arith.constant 32 : index
      %163 = vector.load %arg7[%c0_89, %c0_90, %c32_91] : memref<1x8x128xbf16, #tpu.memory_space<vmem>>, vector<1x8x32xbf16>
      %164 = vector.shape_cast %163 : vector<1x8x32xbf16> to vector<8x32xbf16>
      %165 = vector.shape_cast %162 : vector<8x32xbf16> to vector<1x8x32xbf16>
      tpu.vector_store %arg7[%c0_89, %c0_90, %c32_91], %165 {strides = array<i32>} : memref<1x8x128xbf16, #tpu.memory_space<vmem>>, vector<1x8x32xbf16>,
      %c0_92 = arith.constant 0 : index
      %c2_93 = arith.constant 2 : index
      %166 = vector.load %arg9[%c0_92, %c2_93] : memref<8x4xf32, #tpu.memory_space<vmem>>, vector<8x1xf32>
      %167 = tpu.reciprocal %166 {approx = true} : vector<8x1xf32> -> vector<8x1xf32>
      %c0_94 = arith.constant 0 : index
      %c64_95 = arith.constant 64 : index
      %168 = vector.load %arg10[%c0_94, %c64_95] : memref<8x128xf32, #tpu.memory_space<vmem>>, vector<8x32xf32>
      %169 = vector.broadcast %167 : vector<8x1xf32> to vector<8x32xf32>
      %170 = arith.mulf %168, %169 : vector<8x32xf32>
      %171 = arith.truncf %170 : vector<8x32xf32> to vector<8x32xbf16>
      %c0_96 = arith.constant 0 : index
      %c0_97 = arith.constant 0 : index
      %c64_98 = arith.constant 64 : index
      %172 = vector.load %arg7[%c0_96, %c0_97, %c64_98] : memref<1x8x128xbf16, #tpu.memory_space<vmem>>, vector<1x8x32xbf16>
      %173 = vector.shape_cast %172 : vector<1x8x32xbf16> to vector<8x32xbf16>
      %174 = vector.shape_cast %171 : vector<8x32xbf16> to vector<1x8x32xbf16>
      tpu.vector_store %arg7[%c0_96, %c0_97, %c64_98], %174 {strides = array<i32>} : memref<1x8x128xbf16, #tpu.memory_space<vmem>>, vector<1x8x32xbf16>,
      %c0_99 = arith.constant 0 : index
      %c3_100 = arith.constant 3 : index
      %175 = vector.load %arg9[%c0_99, %c3_100] : memref<8x4xf32, #tpu.memory_space<vmem>>, vector<8x1xf32>
      %176 = tpu.reciprocal %175 {approx = true} : vector<8x1xf32> -> vector<8x1xf32>
      %c0_101 = arith.constant 0 : index
      %c96_102 = arith.constant 96 : index
      %177 = vector.load %arg10[%c0_101, %c96_102] : memref<8x128xf32, #tpu.memory_space<vmem>>, vector<8x32xf32>
      %178 = vector.broadcast %176 : vector<8x1xf32> to vector<8x32xf32>
      %179 = arith.mulf %177, %178 : vector<8x32xf32>
      %180 = arith.truncf %179 : vector<8x32xf32> to vector<8x32xbf16>
      %c0_103 = arith.constant 0 : index
      %c0_104 = arith.constant 0 : index
      %c96_105 = arith.constant 96 : index
      %181 = vector.load %arg7[%c0_103, %c0_104, %c96_105] : memref<1x8x128xbf16, #tpu.memory_space<vmem>>, vector<1x8x32xbf16>
      %182 = vector.shape_cast %181 : vector<1x8x32xbf16> to vector<8x32xbf16>
      %183 = vector.shape_cast %180 : vector<8x32xbf16> to vector<1x8x32xbf16>
      tpu.vector_store %arg7[%c0_103, %c0_104, %c96_105], %183 {strides = array<i32>} : memref<1x8x128xbf16, #tpu.memory_space<vmem>>, vector<1x8x32xbf16>,
    } else {
    }
    return
  }
  func.func @transform_0(%arg0: i32, %arg1: i32, %arg2: i32) -> (i32, i32, i32) {
    %c0_i32 = arith.constant 0 : i32
    %c0_i32_0 = arith.constant 0 : i32
    return %arg0, %arg1, %c0_i32 : i32, i32, i32
  }
  func.func @transform_1(%arg0: i32, %arg1: i32, %arg2: i32) -> (i32, i32, i32) {
    %c1_i32 = arith.constant 1 : i32
    %c0_i32 = arith.constant 0 : i32
    return %arg0, %arg2, %c1_i32 : i32, i32, i32
  }
  func.func @transform_2(%arg0: i32, %arg1: i32, %arg2: i32) -> (i32, i32, i32) {
    %c2_i32 = arith.constant 2 : i32
    %c0_i32 = arith.constant 0 : i32
    return %arg0, %arg2, %c2_i32 : i32, i32, i32
  }
  func.func @transform_3(%arg0: i32, %arg1: i32, %arg2: i32) -> (i32, i32, i32) {
    %c0_i32 = arith.constant 0 : i32
    %c0_i32_0 = arith.constant 0 : i32
    return %arg0, %c0_i32, %arg2 : i32, i32, i32
  }
  func.func @transform_4(%arg0: i32, %arg1: i32, %arg2: i32) -> (i32, i32, i32) {
    %c0_i32 = arith.constant 0 : i32
    %c0_i32_0 = arith.constant 0 : i32
    return %arg0, %arg1, %c0_i32 : i32, i32, i32
  }
}

module attributes {stable_mosaic.version = 11 : i64} {
  func.func @_linear_kernel(%arg0: i32, %arg1: i32, %arg2: i32, %arg3: memref<64x128xbf16, #tpu.memory_space<vmem>>, %arg4: memref<128x128xbf16, #tpu.memory_space<vmem>>, %arg5: memref<1x128xf32, #tpu.memory_space<vmem>>, %arg6: memref<64x128xbf16, #tpu.memory_space<vmem>>, %arg7: memref<64x128xf32, #tpu.memory_space<vmem>>) attributes {dimension_semantics = [#tpu.dimension_semantics<parallel>, #tpu.dimension_semantics<parallel>, #tpu.dimension_semantics<arbitrary>], iteration_bounds = array<i64: 1, 1, 1>, scalar_prefetch = 0 : i64, scratch_operands = 1 : i64, tpu.core_type = #tpu.core_type<tc>, window_params = [{transform_indices = @transform_0, window_bounds = array<i64: 64, 128>}, {transform_indices = @transform_1, window_bounds = array<i64: 128, 128>}, {transform_indices = @transform_2, window_bounds = array<i64: 1, 128>}, {transform_indices = @transform_3, window_bounds = array<i64: 64, 128>}]} {
    %c0_i32 = arith.constant 0 : i32
    %0 = arith.cmpi eq, %arg2, %c0_i32 : i32
    %1 = arith.extui %0 : i1 to i32
    %c0_i32_0 = arith.constant 0 : i32
    %2 = arith.cmpi ne, %1, %c0_i32_0 : i32
    scf.if %2 {
      %cst_10 = arith.constant 0.000000e+00 : f32
      %12 = vector.broadcast %cst_10 : f32 to vector<64x128xf32>
      %c0_11 = arith.constant 0 : index
      %c0_12 = arith.constant 0 : index
      %13 = vector.load %arg7[%c0_11, %c0_12] : memref<64x128xf32, #tpu.memory_space<vmem>>, vector<64x128xf32>
      tpu.vector_store %arg7[%c0_11, %c0_12], %12 {strides = array<i32>} : memref<64x128xf32, #tpu.memory_space<vmem>>, vector<64x128xf32>,
    } else {
    }
    %c0 = arith.constant 0 : index
    %c0_1 = arith.constant 0 : index
    %3 = vector.load %arg7[%c0, %c0_1] : memref<64x128xf32, #tpu.memory_space<vmem>>, vector<64x128xf32>
    %c0_2 = arith.constant 0 : index
    %c0_3 = arith.constant 0 : index
    %4 = vector.load %arg3[%c0_2, %c0_3] : memref<64x128xbf16, #tpu.memory_space<vmem>>, vector<64x128xbf16>
    %c0_4 = arith.constant 0 : index
    %c0_5 = arith.constant 0 : index
    %5 = vector.load %arg4[%c0_4, %c0_5] : memref<128x128xbf16, #tpu.memory_space<vmem>>, vector<128x128xbf16>
    %cst = arith.constant dense<0.000000e+00> : vector<64x128xf32>
    %6 = tpu.matmul %4, %5, %cst {dimension_numbers = #tpu.dot_dimension_numbers<[1], [0], [0], [1], [0, 0, 1, 1], [], []>} : vector<64x128xbf16>, vector<128x128xbf16>, vector<64x128xf32> -> vector<64x128xf32>
    %7 = arith.addf %3, %6 : vector<64x128xf32>
    %c0_6 = arith.constant 0 : index
    %c0_7 = arith.constant 0 : index
    %8 = vector.load %arg7[%c0_6, %c0_7] : memref<64x128xf32, #tpu.memory_space<vmem>>, vector<64x128xf32>
    tpu.vector_store %arg7[%c0_6, %c0_7], %7 {strides = array<i32>} : memref<64x128xf32, #tpu.memory_space<vmem>>, vector<64x128xf32>,
    %c0_i32_8 = arith.constant 0 : i32
    %9 = arith.cmpi eq, %arg2, %c0_i32_8 : i32
    %10 = arith.extui %9 : i1 to i32
    %c0_i32_9 = arith.constant 0 : i32
    %11 = arith.cmpi ne, %10, %c0_i32_9 : i32
    scf.if %11 {
      %c0_10 = arith.constant 0 : index
      %c0_11 = arith.constant 0 : index
      %12 = vector.load %arg7[%c0_10, %c0_11] : memref<64x128xf32, #tpu.memory_space<vmem>>, vector<64x128xf32>
      %c0_12 = arith.constant 0 : index
      %c0_13 = arith.constant 0 : index
      %13 = vector.load %arg5[%c0_12, %c0_13] : memref<1x128xf32, #tpu.memory_space<vmem>>, vector<1x128xf32>
      %14 = vector.broadcast %13 : vector<1x128xf32> to vector<64x128xf32>
      %15 = arith.addf %12, %14 : vector<64x128xf32>
      %16 = arith.truncf %15 : vector<64x128xf32> to vector<64x128xbf16>
      %c0_14 = arith.constant 0 : index
      %c0_15 = arith.constant 0 : index
      %17 = vector.load %arg6[%c0_14, %c0_15] : memref<64x128xbf16, #tpu.memory_space<vmem>>, vector<64x128xbf16>
      tpu.vector_store %arg6[%c0_14, %c0_15], %16 {strides = array<i32>} : memref<64x128xbf16, #tpu.memory_space<vmem>>, vector<64x128xbf16>,
    } else {
    }
    return
  }
  func.func @transform_0(%arg0: i32, %arg1: i32, %arg2: i32) -> (i32, i32) {
    %c0_i32 = arith.constant 0 : i32
    return %arg0, %arg2 : i32, i32
  }
  func.func @transform_1(%arg0: i32, %arg1: i32, %arg2: i32) -> (i32, i32) {
    %c0_i32 = arith.constant 0 : i32
    return %arg2, %arg1 : i32, i32
  }
  func.func @transform_2(%arg0: i32, %arg1: i32, %arg2: i32) -> (i32, i32) {
    %c0_i32 = arith.constant 0 : i32
    %c0_i32_0 = arith.constant 0 : i32
    return %c0_i32, %arg1 : i32, i32
  }
  func.func @transform_3(%arg0: i32, %arg1: i32, %arg2: i32) -> (i32, i32) {
    %c0_i32 = arith.constant 0 : i32
    return %arg0, %arg1 : i32, i32
  }
}

module attributes {stable_mosaic.version = 11 : i64} {
  func.func @_linear_res_ln_kernel(%arg0: i32, %arg1: i32, %arg2: memref<64x128xbf16, #tpu.memory_space<vmem>>, %arg3: memref<128x128xbf16, #tpu.memory_space<vmem>>, %arg4: memref<1x128xf32, #tpu.memory_space<vmem>>, %arg5: memref<64x128xbf16, #tpu.memory_space<vmem>>, %arg6: memref<1x128xf32, #tpu.memory_space<vmem>>, %arg7: memref<1x128xf32, #tpu.memory_space<vmem>>, %arg8: memref<64x128xbf16, #tpu.memory_space<vmem>>, %arg9: memref<64x128xf32, #tpu.memory_space<vmem>>) attributes {dimension_semantics = [#tpu.dimension_semantics<parallel>, #tpu.dimension_semantics<arbitrary>], iteration_bounds = array<i64: 1, 1>, scalar_prefetch = 0 : i64, scratch_operands = 1 : i64, tpu.core_type = #tpu.core_type<tc>, window_params = [{transform_indices = @transform_0, window_bounds = array<i64: 64, 128>}, {transform_indices = @transform_1, window_bounds = array<i64: 128, 128>}, {pipeline_mode = #tpu.pipeline_mode<synchronous>, transform_indices = @transform_2, window_bounds = array<i64: 1, 128>}, {transform_indices = @transform_3, window_bounds = array<i64: 64, 128>}, {pipeline_mode = #tpu.pipeline_mode<synchronous>, transform_indices = @transform_4, window_bounds = array<i64: 1, 128>}, {pipeline_mode = #tpu.pipeline_mode<synchronous>, transform_indices = @transform_5, window_bounds = array<i64: 1, 128>}, {transform_indices = @transform_6, window_bounds = array<i64: 64, 128>}]} {
    %c0_i32 = arith.constant 0 : i32
    %0 = arith.cmpi eq, %arg1, %c0_i32 : i32
    %1 = arith.extui %0 : i1 to i32
    %c0_i32_0 = arith.constant 0 : i32
    %2 = arith.cmpi ne, %1, %c0_i32_0 : i32
    scf.if %2 {
      %cst_10 = arith.constant 0.000000e+00 : f32
      %12 = vector.broadcast %cst_10 : f32 to vector<64x128xf32>
      %c0_11 = arith.constant 0 : index
      %c0_12 = arith.constant 0 : index
      %13 = vector.load %arg9[%c0_11, %c0_12] : memref<64x128xf32, #tpu.memory_space<vmem>>, vector<64x128xf32>
      tpu.vector_store %arg9[%c0_11, %c0_12], %12 {strides = array<i32>} : memref<64x128xf32, #tpu.memory_space<vmem>>, vector<64x128xf32>,
    } else {
    }
    %c0 = arith.constant 0 : index
    %c0_1 = arith.constant 0 : index
    %3 = vector.load %arg9[%c0, %c0_1] : memref<64x128xf32, #tpu.memory_space<vmem>>, vector<64x128xf32>
    %c0_2 = arith.constant 0 : index
    %c0_3 = arith.constant 0 : index
    %4 = vector.load %arg2[%c0_2, %c0_3] : memref<64x128xbf16, #tpu.memory_space<vmem>>, vector<64x128xbf16>
    %c0_4 = arith.constant 0 : index
    %c0_5 = arith.constant 0 : index
    %5 = vector.load %arg3[%c0_4, %c0_5] : memref<128x128xbf16, #tpu.memory_space<vmem>>, vector<128x128xbf16>
    %cst = arith.constant dense<0.000000e+00> : vector<64x128xf32>
    %6 = tpu.matmul %4, %5, %cst {dimension_numbers = #tpu.dot_dimension_numbers<[1], [0], [0], [1], [0, 0, 1, 1], [], []>} : vector<64x128xbf16>, vector<128x128xbf16>, vector<64x128xf32> -> vector<64x128xf32>
    %7 = arith.addf %3, %6 : vector<64x128xf32>
    %c0_6 = arith.constant 0 : index
    %c0_7 = arith.constant 0 : index
    %8 = vector.load %arg9[%c0_6, %c0_7] : memref<64x128xf32, #tpu.memory_space<vmem>>, vector<64x128xf32>
    tpu.vector_store %arg9[%c0_6, %c0_7], %7 {strides = array<i32>} : memref<64x128xf32, #tpu.memory_space<vmem>>, vector<64x128xf32>,
    %c0_i32_8 = arith.constant 0 : i32
    %9 = arith.cmpi eq, %arg1, %c0_i32_8 : i32
    %10 = arith.extui %9 : i1 to i32
    %c0_i32_9 = arith.constant 0 : i32
    %11 = arith.cmpi ne, %10, %c0_i32_9 : i32
    scf.if %11 {
      %c0_10 = arith.constant 0 : index
      %c0_11 = arith.constant 0 : index
      %12 = vector.load %arg9[%c0_10, %c0_11] : memref<64x128xf32, #tpu.memory_space<vmem>>, vector<64x128xf32>
      %c0_12 = arith.constant 0 : index
      %c0_13 = arith.constant 0 : index
      %13 = vector.load %arg4[%c0_12, %c0_13] : memref<1x128xf32, #tpu.memory_space<vmem>>, vector<1x128xf32>
      %14 = vector.broadcast %13 : vector<1x128xf32> to vector<64x128xf32>
      %15 = arith.addf %12, %14 : vector<64x128xf32>
      %c0_14 = arith.constant 0 : index
      %c0_15 = arith.constant 0 : index
      %16 = vector.load %arg5[%c0_14, %c0_15] : memref<64x128xbf16, #tpu.memory_space<vmem>>, vector<64x128xbf16>
      %17 = arith.extf %16 : vector<64x128xbf16> to vector<64x128xf32>
      %18 = arith.addf %15, %17 : vector<64x128xf32>
      %cst_16 = arith.constant dense<0.000000e+00> : vector<64xf32>
      %19 = vector.multi_reduction <add>, %18, %cst_16 [1] : vector<64x128xf32> to vector<64xf32>
      %20 = vector.shape_cast %19 : vector<64xf32> to vector<64x1xf32>
      %cst_17 = arith.constant 1.280000e+02 : f32
      %21 = vector.broadcast %cst_17 : f32 to vector<64x1xf32>
      %22 = arith.divf %20, %21 : vector<64x1xf32>
      %23 = vector.broadcast %22 : vector<64x1xf32> to vector<64x128xf32>
      %24 = arith.subf %18, %23 : vector<64x128xf32>
      %25 = arith.mulf %24, %24 : vector<64x128xf32>
      %cst_18 = arith.constant dense<0.000000e+00> : vector<64xf32>
      %26 = vector.multi_reduction <add>, %25, %cst_18 [1] : vector<64x128xf32> to vector<64xf32>
      %27 = vector.shape_cast %26 : vector<64xf32> to vector<64x1xf32>
      %cst_19 = arith.constant 1.280000e+02 : f32
      %28 = vector.broadcast %cst_19 : f32 to vector<64x1xf32>
      %29 = arith.divf %27, %28 : vector<64x1xf32>
      %cst_20 = arith.constant 9.99999974E-6 : f32
      %30 = vector.broadcast %cst_20 : f32 to vector<64x1xf32>
      %31 = arith.addf %29, %30 : vector<64x1xf32>
      %32 = math.rsqrt %31 : vector<64x1xf32>
      %33 = vector.broadcast %32 : vector<64x1xf32> to vector<64x128xf32>
      %34 = arith.mulf %24, %33 : vector<64x128xf32>
      %c0_21 = arith.constant 0 : index
      %c0_22 = arith.constant 0 : index
      %35 = vector.load %arg6[%c0_21, %c0_22] : memref<1x128xf32, #tpu.memory_space<vmem>>, vector<1x128xf32>
      %36 = vector.broadcast %35 : vector<1x128xf32> to vector<64x128xf32>
      %37 = arith.mulf %34, %36 : vector<64x128xf32>
      %c0_23 = arith.constant 0 : index
      %c0_24 = arith.constant 0 : index
      %38 = vector.load %arg7[%c0_23, %c0_24] : memref<1x128xf32, #tpu.memory_space<vmem>>, vector<1x128xf32>
      %39 = vector.broadcast %38 : vector<1x128xf32> to vector<64x128xf32>
      %40 = arith.addf %37, %39 : vector<64x128xf32>
      %41 = arith.truncf %40 : vector<64x128xf32> to vector<64x128xbf16>
      %c0_25 = arith.constant 0 : index
      %c0_26 = arith.constant 0 : index
      %42 = vector.load %arg8[%c0_25, %c0_26] : memref<64x128xbf16, #tpu.memory_space<vmem>>, vector<64x128xbf16>
      tpu.vector_store %arg8[%c0_25, %c0_26], %41 {strides = array<i32>} : memref<64x128xbf16, #tpu.memory_space<vmem>>, vector<64x128xbf16>,
    } else {
    }
    return
  }
  func.func @transform_0(%arg0: i32, %arg1: i32) -> (i32, i32) {
    %c0_i32 = arith.constant 0 : i32
    return %arg0, %arg1 : i32, i32
  }
  func.func @transform_1(%arg0: i32, %arg1: i32) -> (i32, i32) {
    %c0_i32 = arith.constant 0 : i32
    %c0_i32_0 = arith.constant 0 : i32
    return %arg1, %c0_i32 : i32, i32
  }
  func.func @transform_2(%arg0: i32, %arg1: i32) -> (i32, i32) {
    %c0_i32 = arith.constant 0 : i32
    %c0_i32_0 = arith.constant 0 : i32
    %c0_i32_1 = arith.constant 0 : i32
    return %c0_i32, %c0_i32_0 : i32, i32
  }
  func.func @transform_3(%arg0: i32, %arg1: i32) -> (i32, i32) {
    %c0_i32 = arith.constant 0 : i32
    %c0_i32_0 = arith.constant 0 : i32
    return %arg0, %c0_i32 : i32, i32
  }
  func.func @transform_4(%arg0: i32, %arg1: i32) -> (i32, i32) {
    %c0_i32 = arith.constant 0 : i32
    %c0_i32_0 = arith.constant 0 : i32
    %c0_i32_1 = arith.constant 0 : i32
    return %c0_i32, %c0_i32_0 : i32, i32
  }
  func.func @transform_5(%arg0: i32, %arg1: i32) -> (i32, i32) {
    %c0_i32 = arith.constant 0 : i32
    %c0_i32_0 = arith.constant 0 : i32
    %c0_i32_1 = arith.constant 0 : i32
    return %c0_i32, %c0_i32_0 : i32, i32
  }
  func.func @transform_6(%arg0: i32, %arg1: i32) -> (i32, i32) {
    %c0_i32 = arith.constant 0 : i32
    %c0_i32_0 = arith.constant 0 : i32
    return %arg0, %c0_i32 : i32, i32
  }
}

module attributes {stable_mosaic.version = 11 : i64} {
  func.func @_linear_kernel(%arg0: i32, %arg1: i32, %arg2: i32, %arg3: memref<64x128xbf16, #tpu.memory_space<vmem>>, %arg4: memref<128x384xbf16, #tpu.memory_space<vmem>>, %arg5: memref<1x384xf32, #tpu.memory_space<vmem>>, %arg6: memref<64x384xbf16, #tpu.memory_space<vmem>>, %arg7: memref<64x384xf32, #tpu.memory_space<vmem>>) attributes {dimension_semantics = [#tpu.dimension_semantics<parallel>, #tpu.dimension_semantics<parallel>, #tpu.dimension_semantics<arbitrary>], iteration_bounds = array<i64: 1, 1, 1>, scalar_prefetch = 0 : i64, scratch_operands = 1 : i64, tpu.core_type = #tpu.core_type<tc>, window_params = [{transform_indices = @transform_0, window_bounds = array<i64: 64, 128>}, {transform_indices = @transform_1, window_bounds = array<i64: 128, 384>}, {transform_indices = @transform_2, window_bounds = array<i64: 1, 384>}, {transform_indices = @transform_3, window_bounds = array<i64: 64, 384>}]} {
    %c0_i32 = arith.constant 0 : i32
    %0 = arith.cmpi eq, %arg2, %c0_i32 : i32
    %1 = arith.extui %0 : i1 to i32
    %c0_i32_0 = arith.constant 0 : i32
    %2 = arith.cmpi ne, %1, %c0_i32_0 : i32
    scf.if %2 {
      %cst_10 = arith.constant 0.000000e+00 : f32
      %12 = vector.broadcast %cst_10 : f32 to vector<64x384xf32>
      %c0_11 = arith.constant 0 : index
      %c0_12 = arith.constant 0 : index
      %13 = vector.load %arg7[%c0_11, %c0_12] : memref<64x384xf32, #tpu.memory_space<vmem>>, vector<64x384xf32>
      tpu.vector_store %arg7[%c0_11, %c0_12], %12 {strides = array<i32>} : memref<64x384xf32, #tpu.memory_space<vmem>>, vector<64x384xf32>,
    } else {
    }
    %c0 = arith.constant 0 : index
    %c0_1 = arith.constant 0 : index
    %3 = vector.load %arg7[%c0, %c0_1] : memref<64x384xf32, #tpu.memory_space<vmem>>, vector<64x384xf32>
    %c0_2 = arith.constant 0 : index
    %c0_3 = arith.constant 0 : index
    %4 = vector.load %arg3[%c0_2, %c0_3] : memref<64x128xbf16, #tpu.memory_space<vmem>>, vector<64x128xbf16>
    %c0_4 = arith.constant 0 : index
    %c0_5 = arith.constant 0 : index
    %5 = vector.load %arg4[%c0_4, %c0_5] : memref<128x384xbf16, #tpu.memory_space<vmem>>, vector<128x384xbf16>
    %cst = arith.constant dense<0.000000e+00> : vector<64x384xf32>
    %6 = tpu.matmul %4, %5, %cst {dimension_numbers = #tpu.dot_dimension_numbers<[1], [0], [0], [1], [0, 0, 1, 1], [], []>} : vector<64x128xbf16>, vector<128x384xbf16>, vector<64x384xf32> -> vector<64x384xf32>
    %7 = arith.addf %3, %6 : vector<64x384xf32>
    %c0_6 = arith.constant 0 : index
    %c0_7 = arith.constant 0 : index
    %8 = vector.load %arg7[%c0_6, %c0_7] : memref<64x384xf32, #tpu.memory_space<vmem>>, vector<64x384xf32>
    tpu.vector_store %arg7[%c0_6, %c0_7], %7 {strides = array<i32>} : memref<64x384xf32, #tpu.memory_space<vmem>>, vector<64x384xf32>,
    %c0_i32_8 = arith.constant 0 : i32
    %9 = arith.cmpi eq, %arg2, %c0_i32_8 : i32
    %10 = arith.extui %9 : i1 to i32
    %c0_i32_9 = arith.constant 0 : i32
    %11 = arith.cmpi ne, %10, %c0_i32_9 : i32
    scf.if %11 {
      %c0_10 = arith.constant 0 : index
      %c0_11 = arith.constant 0 : index
      %12 = vector.load %arg7[%c0_10, %c0_11] : memref<64x384xf32, #tpu.memory_space<vmem>>, vector<64x384xf32>
      %c0_12 = arith.constant 0 : index
      %c0_13 = arith.constant 0 : index
      %13 = vector.load %arg5[%c0_12, %c0_13] : memref<1x384xf32, #tpu.memory_space<vmem>>, vector<1x384xf32>
      %14 = vector.broadcast %13 : vector<1x384xf32> to vector<64x384xf32>
      %15 = arith.addf %12, %14 : vector<64x384xf32>
      %16 = arith.truncf %15 : vector<64x384xf32> to vector<64x384xbf16>
      %c0_14 = arith.constant 0 : index
      %c0_15 = arith.constant 0 : index
      %17 = vector.load %arg6[%c0_14, %c0_15] : memref<64x384xbf16, #tpu.memory_space<vmem>>, vector<64x384xbf16>
      tpu.vector_store %arg6[%c0_14, %c0_15], %16 {strides = array<i32>} : memref<64x384xbf16, #tpu.memory_space<vmem>>, vector<64x384xbf16>,
    } else {
    }
    return
  }
  func.func @transform_0(%arg0: i32, %arg1: i32, %arg2: i32) -> (i32, i32) {
    %c0_i32 = arith.constant 0 : i32
    return %arg0, %arg2 : i32, i32
  }
  func.func @transform_1(%arg0: i32, %arg1: i32, %arg2: i32) -> (i32, i32) {
    %c0_i32 = arith.constant 0 : i32
    return %arg2, %arg1 : i32, i32
  }
  func.func @transform_2(%arg0: i32, %arg1: i32, %arg2: i32) -> (i32, i32) {
    %c0_i32 = arith.constant 0 : i32
    %c0_i32_0 = arith.constant 0 : i32
    return %c0_i32, %arg1 : i32, i32
  }
  func.func @transform_3(%arg0: i32, %arg1: i32, %arg2: i32) -> (i32, i32) {
    %c0_i32 = arith.constant 0 : i32
    return %arg0, %arg1 : i32, i32
  }
}

module attributes {stable_mosaic.version = 11 : i64} {
  func.func @_ffn_res_ln_kernel(%arg0: i32, %arg1: i32, %arg2: memref<64x128xbf16, #tpu.memory_space<vmem>>, %arg3: memref<128x512xbf16, #tpu.memory_space<vmem>>, %arg4: memref<1x512xf32, #tpu.memory_space<vmem>>, %arg5: memref<512x128xbf16, #tpu.memory_space<vmem>>, %arg6: memref<1x128xf32, #tpu.memory_space<vmem>>, %arg7: memref<64x128xbf16, #tpu.memory_space<vmem>>, %arg8: memref<1x128xf32, #tpu.memory_space<vmem>>, %arg9: memref<1x128xf32, #tpu.memory_space<vmem>>, %arg10: memref<64x128xbf16, #tpu.memory_space<vmem>>, %arg11: memref<64x128xf32, #tpu.memory_space<vmem>>) attributes {dimension_semantics = [#tpu.dimension_semantics<parallel>, #tpu.dimension_semantics<arbitrary>], iteration_bounds = array<i64: 1, 4>, scalar_prefetch = 0 : i64, scratch_operands = 1 : i64, tpu.core_type = #tpu.core_type<tc>, window_params = [{transform_indices = @transform_0, window_bounds = array<i64: 64, 128>}, {transform_indices = @transform_1, window_bounds = array<i64: 128, 512>}, {transform_indices = @transform_2, window_bounds = array<i64: 1, 512>}, {transform_indices = @transform_3, window_bounds = array<i64: 512, 128>}, {pipeline_mode = #tpu.pipeline_mode<synchronous>, transform_indices = @transform_4, window_bounds = array<i64: 1, 128>}, {transform_indices = @transform_5, window_bounds = array<i64: 64, 128>}, {pipeline_mode = #tpu.pipeline_mode<synchronous>, transform_indices = @transform_6, window_bounds = array<i64: 1, 128>}, {pipeline_mode = #tpu.pipeline_mode<synchronous>, transform_indices = @transform_7, window_bounds = array<i64: 1, 128>}, {transform_indices = @transform_8, window_bounds = array<i64: 64, 128>}]} {
    %c0_i32 = arith.constant 0 : i32
    %0 = arith.cmpi eq, %arg1, %c0_i32 : i32
    %1 = arith.extui %0 : i1 to i32
    %c0_i32_0 = arith.constant 0 : i32
    %2 = arith.cmpi ne, %1, %c0_i32_0 : i32
    scf.if %2 {
      %cst_15 = arith.constant 0.000000e+00 : f32
      %20 = vector.broadcast %cst_15 : f32 to vector<64x128xf32>
      %c0_16 = arith.constant 0 : index
      %c0_17 = arith.constant 0 : index
      %21 = vector.load %arg11[%c0_16, %c0_17] : memref<64x128xf32, #tpu.memory_space<vmem>>, vector<64x128xf32>
      tpu.vector_store %arg11[%c0_16, %c0_17], %20 {strides = array<i32>} : memref<64x128xf32, #tpu.memory_space<vmem>>, vector<64x128xf32>,
    } else {
    }
    %c0 = arith.constant 0 : index
    %c0_1 = arith.constant 0 : index
    %3 = vector.load %arg2[%c0, %c0_1] : memref<64x128xbf16, #tpu.memory_space<vmem>>, vector<64x128xbf16>
    %c0_2 = arith.constant 0 : index
    %c0_3 = arith.constant 0 : index
    %4 = vector.load %arg3[%c0_2, %c0_3] : memref<128x512xbf16, #tpu.memory_space<vmem>>, vector<128x512xbf16>
    %cst = arith.constant dense<0.000000e+00> : vector<64x512xf32>
    %5 = tpu.matmul %3, %4, %cst {dimension_numbers = #tpu.dot_dimension_numbers<[1], [0], [0], [1], [0, 0, 1, 1], [], []>} : vector<64x128xbf16>, vector<128x512xbf16>, vector<64x512xf32> -> vector<64x512xf32>
    %c0_4 = arith.constant 0 : index
    %c0_5 = arith.constant 0 : index
    %6 = vector.load %arg4[%c0_4, %c0_5] : memref<1x512xf32, #tpu.memory_space<vmem>>, vector<1x512xf32>
    %7 = vector.broadcast %6 : vector<1x512xf32> to vector<64x512xf32>
    %8 = arith.addf %5, %7 : vector<64x512xf32>
    %cst_6 = arith.constant 0.000000e+00 : f32
    %9 = vector.broadcast %cst_6 : f32 to vector<64x512xf32>
    %10 = arith.maximumf %8, %9 : vector<64x512xf32>
    %11 = arith.truncf %10 : vector<64x512xf32> to vector<64x512xbf16>
    %c0_7 = arith.constant 0 : index
    %c0_8 = arith.constant 0 : index
    %12 = vector.load %arg11[%c0_7, %c0_8] : memref<64x128xf32, #tpu.memory_space<vmem>>, vector<64x128xf32>
    %c0_9 = arith.constant 0 : index
    %c0_10 = arith.constant 0 : index
    %13 = vector.load %arg5[%c0_9, %c0_10] : memref<512x128xbf16, #tpu.memory_space<vmem>>, vector<512x128xbf16>
    %cst_11 = arith.constant dense<0.000000e+00> : vector<64x128xf32>
    %14 = tpu.matmul %11, %13, %cst_11 {dimension_numbers = #tpu.dot_dimension_numbers<[1], [0], [0], [1], [0, 0, 1, 1], [], []>} : vector<64x512xbf16>, vector<512x128xbf16>, vector<64x128xf32> -> vector<64x128xf32>
    %15 = arith.addf %12, %14 : vector<64x128xf32>
    %c0_12 = arith.constant 0 : index
    %c0_13 = arith.constant 0 : index
    %16 = vector.load %arg11[%c0_12, %c0_13] : memref<64x128xf32, #tpu.memory_space<vmem>>, vector<64x128xf32>
    tpu.vector_store %arg11[%c0_12, %c0_13], %15 {strides = array<i32>} : memref<64x128xf32, #tpu.memory_space<vmem>>, vector<64x128xf32>,
    %c3_i32 = arith.constant 3 : i32
    %17 = arith.cmpi eq, %arg1, %c3_i32 : i32
    %18 = arith.extui %17 : i1 to i32
    %c0_i32_14 = arith.constant 0 : i32
    %19 = arith.cmpi ne, %18, %c0_i32_14 : i32
    scf.if %19 {
      %c0_15 = arith.constant 0 : index
      %c0_16 = arith.constant 0 : index
      %20 = vector.load %arg11[%c0_15, %c0_16] : memref<64x128xf32, #tpu.memory_space<vmem>>, vector<64x128xf32>
      %c0_17 = arith.constant 0 : index
      %c0_18 = arith.constant 0 : index
      %21 = vector.load %arg6[%c0_17, %c0_18] : memref<1x128xf32, #tpu.memory_space<vmem>>, vector<1x128xf32>
      %22 = vector.broadcast %21 : vector<1x128xf32> to vector<64x128xf32>
      %23 = arith.addf %20, %22 : vector<64x128xf32>
      %c0_19 = arith.constant 0 : index
      %c0_20 = arith.constant 0 : index
      %24 = vector.load %arg7[%c0_19, %c0_20] : memref<64x128xbf16, #tpu.memory_space<vmem>>, vector<64x128xbf16>
      %25 = arith.extf %24 : vector<64x128xbf16> to vector<64x128xf32>
      %26 = arith.addf %23, %25 : vector<64x128xf32>
      %cst_21 = arith.constant dense<0.000000e+00> : vector<64xf32>
      %27 = vector.multi_reduction <add>, %26, %cst_21 [1] : vector<64x128xf32> to vector<64xf32>
      %28 = vector.shape_cast %27 : vector<64xf32> to vector<64x1xf32>
      %cst_22 = arith.constant 1.280000e+02 : f32
      %29 = vector.broadcast %cst_22 : f32 to vector<64x1xf32>
      %30 = arith.divf %28, %29 : vector<64x1xf32>
      %31 = vector.broadcast %30 : vector<64x1xf32> to vector<64x128xf32>
      %32 = arith.subf %26, %31 : vector<64x128xf32>
      %33 = arith.mulf %32, %32 : vector<64x128xf32>
      %cst_23 = arith.constant dense<0.000000e+00> : vector<64xf32>
      %34 = vector.multi_reduction <add>, %33, %cst_23 [1] : vector<64x128xf32> to vector<64xf32>
      %35 = vector.shape_cast %34 : vector<64xf32> to vector<64x1xf32>
      %cst_24 = arith.constant 1.280000e+02 : f32
      %36 = vector.broadcast %cst_24 : f32 to vector<64x1xf32>
      %37 = arith.divf %35, %36 : vector<64x1xf32>
      %cst_25 = arith.constant 9.99999974E-6 : f32
      %38 = vector.broadcast %cst_25 : f32 to vector<64x1xf32>
      %39 = arith.addf %37, %38 : vector<64x1xf32>
      %40 = math.rsqrt %39 : vector<64x1xf32>
      %41 = vector.broadcast %40 : vector<64x1xf32> to vector<64x128xf32>
      %42 = arith.mulf %32, %41 : vector<64x128xf32>
      %c0_26 = arith.constant 0 : index
      %c0_27 = arith.constant 0 : index
      %43 = vector.load %arg8[%c0_26, %c0_27] : memref<1x128xf32, #tpu.memory_space<vmem>>, vector<1x128xf32>
      %44 = vector.broadcast %43 : vector<1x128xf32> to vector<64x128xf32>
      %45 = arith.mulf %42, %44 : vector<64x128xf32>
      %c0_28 = arith.constant 0 : index
      %c0_29 = arith.constant 0 : index
      %46 = vector.load %arg9[%c0_28, %c0_29] : memref<1x128xf32, #tpu.memory_space<vmem>>, vector<1x128xf32>
      %47 = vector.broadcast %46 : vector<1x128xf32> to vector<64x128xf32>
      %48 = arith.addf %45, %47 : vector<64x128xf32>
      %49 = arith.truncf %48 : vector<64x128xf32> to vector<64x128xbf16>
      %c0_30 = arith.constant 0 : index
      %c0_31 = arith.constant 0 : index
      %50 = vector.load %arg10[%c0_30, %c0_31] : memref<64x128xbf16, #tpu.memory_space<vmem>>, vector<64x128xbf16>
      tpu.vector_store %arg10[%c0_30, %c0_31], %49 {strides = array<i32>} : memref<64x128xbf16, #tpu.memory_space<vmem>>, vector<64x128xbf16>,
    } else {
    }
    return
  }
  func.func @transform_0(%arg0: i32, %arg1: i32) -> (i32, i32) {
    %c0_i32 = arith.constant 0 : i32
    %c0_i32_0 = arith.constant 0 : i32
    return %arg0, %c0_i32 : i32, i32
  }
  func.func @transform_1(%arg0: i32, %arg1: i32) -> (i32, i32) {
    %c0_i32 = arith.constant 0 : i32
    %c0_i32_0 = arith.constant 0 : i32
    return %c0_i32, %arg1 : i32, i32
  }
  func.func @transform_2(%arg0: i32, %arg1: i32) -> (i32, i32) {
    %c0_i32 = arith.constant 0 : i32
    %c0_i32_0 = arith.constant 0 : i32
    return %c0_i32, %arg1 : i32, i32
  }
  func.func @transform_3(%arg0: i32, %arg1: i32) -> (i32, i32) {
    %c0_i32 = arith.constant 0 : i32
    %c0_i32_0 = arith.constant 0 : i32
    return %arg1, %c0_i32 : i32, i32
  }
  func.func @transform_4(%arg0: i32, %arg1: i32) -> (i32, i32) {
    %c0_i32 = arith.constant 0 : i32
    %c0_i32_0 = arith.constant 0 : i32
    %c0_i32_1 = arith.constant 0 : i32
    return %c0_i32, %c0_i32_0 : i32, i32
  }
  func.func @transform_5(%arg0: i32, %arg1: i32) -> (i32, i32) {
    %c0_i32 = arith.constant 0 : i32
    %c0_i32_0 = arith.constant 0 : i32
    return %arg0, %c0_i32 : i32, i32
  }
  func.func @transform_6(%arg0: i32, %arg1: i32) -> (i32, i32) {
    %c0_i32 = arith.constant 0 : i32
    %c0_i32_0 = arith.constant 0 : i32
    %c0_i32_1 = arith.constant 0 : i32
    return %c0_i32, %c0_i32_0 : i32, i32
  }
  func.func @transform_7(%arg0: i32, %arg1: i32) -> (i32, i32) {
    %c0_i32 = arith.constant 0 : i32
    %c0_i32_0 = arith.constant 0 : i32
    %c0_i32_1 = arith.constant 0 : i32
    return %c0_i32, %c0_i32_0 : i32, i32
  }
  func.func @transform_8(%arg0: i32, %arg1: i32) -> (i32, i32) {
    %c0_i32 = arith.constant 0 : i32
    %c0_i32_0 = arith.constant 0 : i32
    return %arg0, %c0_i32 : i32, i32
  }
}

module attributes {stable_mosaic.version = 11 : i64} {
  func.func @_flash_attn_kernel(%arg0: i32, %arg1: i32, %arg2: i32, %arg3: memref<1x8x128xbf16, #tpu.memory_space<vmem>>, %arg4: memref<1x8x128xbf16, #tpu.memory_space<vmem>>, %arg5: memref<1x8x128xbf16, #tpu.memory_space<vmem>>, %arg6: memref<1x1x8xf32, #tpu.memory_space<vmem>>, %arg7: memref<1x8x128xbf16, #tpu.memory_space<vmem>>, %arg8: memref<8x4xf32, #tpu.memory_space<vmem>>, %arg9: memref<8x4xf32, #tpu.memory_space<vmem>>, %arg10: memref<8x128xf32, #tpu.memory_space<vmem>>) attributes {dimension_semantics = [#tpu.dimension_semantics<parallel>, #tpu.dimension_semantics<parallel>, #tpu.dimension_semantics<arbitrary>], iteration_bounds = array<i64: 8, 1, 1>, scalar_prefetch = 0 : i64, scratch_operands = 3 : i64, tpu.core_type = #tpu.core_type<tc>, window_params = [{transform_indices = @transform_0, window_bounds = array<i64: 1, 8, 128>}, {transform_indices = @transform_1, window_bounds = array<i64: 1, 8, 128>}, {transform_indices = @transform_2, window_bounds = array<i64: 1, 8, 128>}, {transform_indices = @transform_3, window_bounds = array<i64: 1, 1, 8>}, {transform_indices = @transform_4, window_bounds = array<i64: 1, 8, 128>}]} {
    %c0_i32 = arith.constant 0 : i32
    %0 = arith.cmpi eq, %arg2, %c0_i32 : i32
    %1 = arith.extui %0 : i1 to i32
    %c0_i32_0 = arith.constant 0 : i32
    %2 = arith.cmpi ne, %1, %c0_i32_0 : i32
    scf.if %2 {
      %cst_75 = arith.constant -1.000000e+30 : f32
      %138 = vector.broadcast %cst_75 : f32 to vector<8x4xf32>
      %c0_76 = arith.constant 0 : index
      %c0_77 = arith.constant 0 : index
      %139 = vector.load %arg8[%c0_76, %c0_77] : memref<8x4xf32, #tpu.memory_space<vmem>>, vector<8x4xf32>
      tpu.vector_store %arg8[%c0_76, %c0_77], %138 {strides = array<i32>} : memref<8x4xf32, #tpu.memory_space<vmem>>, vector<8x4xf32>,
      %cst_78 = arith.constant 0.000000e+00 : f32
      %140 = vector.broadcast %cst_78 : f32 to vector<8x4xf32>
      %c0_79 = arith.constant 0 : index
      %c0_80 = arith.constant 0 : index
      %141 = vector.load %arg9[%c0_79, %c0_80] : memref<8x4xf32, #tpu.memory_space<vmem>>, vector<8x4xf32>
      tpu.vector_store %arg9[%c0_79, %c0_80], %140 {strides = array<i32>} : memref<8x4xf32, #tpu.memory_space<vmem>>, vector<8x4xf32>,
      %cst_81 = arith.constant 0.000000e+00 : f32
      %142 = vector.broadcast %cst_81 : f32 to vector<8x128xf32>
      %c0_82 = arith.constant 0 : index
      %c0_83 = arith.constant 0 : index
      %143 = vector.load %arg10[%c0_82, %c0_83] : memref<8x128xf32, #tpu.memory_space<vmem>>, vector<8x128xf32>
      tpu.vector_store %arg10[%c0_82, %c0_83], %142 {strides = array<i32>} : memref<8x128xf32, #tpu.memory_space<vmem>>, vector<8x128xf32>,
    } else {
    }
    %c0 = arith.constant 0 : index
    %c0_1 = arith.constant 0 : index
    %c0_2 = arith.constant 0 : index
    %3 = vector.load %arg3[%c0, %c0_1, %c0_2] : memref<1x8x128xbf16, #tpu.memory_space<vmem>>, vector<1x8x128xbf16>
    %4 = vector.shape_cast %3 : vector<1x8x128xbf16> to vector<8x128xbf16>
    %c0_3 = arith.constant 0 : index
    %c0_4 = arith.constant 0 : index
    %c0_5 = arith.constant 0 : index
    %5 = vector.load %arg4[%c0_3, %c0_4, %c0_5] : memref<1x8x128xbf16, #tpu.memory_space<vmem>>, vector<1x8x128xbf16>
    %6 = vector.shape_cast %5 : vector<1x8x128xbf16> to vector<8x128xbf16>
    %c0_6 = arith.constant 0 : index
    %c0_7 = arith.constant 0 : index
    %c0_8 = arith.constant 0 : index
    %7 = vector.load %arg5[%c0_6, %c0_7, %c0_8] : memref<1x8x128xbf16, #tpu.memory_space<vmem>>, vector<1x8x128xbf16>
    %8 = vector.shape_cast %7 : vector<1x8x128xbf16> to vector<8x128xbf16>
    %c0_9 = arith.constant 0 : index
    %c0_10 = arith.constant 0 : index
    %c0_11 = arith.constant 0 : index
    %9 = vector.load %arg6[%c0_9, %c0_10, %c0_11] : memref<1x1x8xf32, #tpu.memory_space<vmem>>, vector<1x1x8xf32>
    %10 = vector.shape_cast %9 : vector<1x1x8xf32> to vector<1x8xf32>
    %11 = vector.extract_strided_slice %4 {offsets = [0, 0], sizes = [8, 32], strides = [1, 1]} : vector<8x128xbf16> to vector<8x32xbf16>
    %12 = vector.extract_strided_slice %6 {offsets = [0, 0], sizes = [8, 32], strides = [1, 1]} : vector<8x128xbf16> to vector<8x32xbf16>
    %cst = arith.constant dense<0.000000e+00> : vector<8x8xf32>
    %13 = tpu.matmul %11, %12, %cst {dimension_numbers = #tpu.dot_dimension_numbers<[1], [1], [0], [0], [0, 0, 1, 0], [], []>} : vector<8x32xbf16>, vector<8x32xbf16>, vector<8x8xf32> -> vector<8x8xf32>
    %cst_12 = arith.constant 0.176776692 : f32
    %14 = vector.broadcast %cst_12 : f32 to vector<8x8xf32>
    %15 = arith.mulf %13, %14 : vector<8x8xf32>
    %16 = vector.broadcast %10 : vector<1x8xf32> to vector<8x8xf32>
    %17 = arith.addf %15, %16 : vector<8x8xf32>
    %c0_13 = arith.constant 0 : index
    %c0_14 = arith.constant 0 : index
    %18 = vector.load %arg8[%c0_13, %c0_14] : memref<8x4xf32, #tpu.memory_space<vmem>>, vector<8x1xf32>
    %cst_15 = arith.constant dense<0xFF800000> : vector<8xf32>
    %19 = vector.multi_reduction <maximumf>, %17, %cst_15 [1] : vector<8x8xf32> to vector<8xf32>
    %20 = vector.shape_cast %19 : vector<8xf32> to vector<8x1xf32>
    %21 = arith.maximumf %18, %20 : vector<8x1xf32>
    %22 = arith.subf %18, %21 : vector<8x1xf32>
    %23 = math.exp %22 : vector<8x1xf32>
    %24 = vector.broadcast %21 : vector<8x1xf32> to vector<8x8xf32>
    %25 = arith.subf %17, %24 : vector<8x8xf32>
    %26 = math.exp %25 : vector<8x8xf32>
    %c0_16 = arith.constant 0 : index
    %c0_17 = arith.constant 0 : index
    %27 = vector.load %arg9[%c0_16, %c0_17] : memref<8x4xf32, #tpu.memory_space<vmem>>, vector<8x1xf32>
    %28 = arith.mulf %23, %27 : vector<8x1xf32>
    %cst_18 = arith.constant dense<0.000000e+00> : vector<8xf32>
    %29 = vector.multi_reduction <add>, %26, %cst_18 [1] : vector<8x8xf32> to vector<8xf32>
    %30 = vector.shape_cast %29 : vector<8xf32> to vector<8x1xf32>
    %31 = arith.addf %28, %30 : vector<8x1xf32>
    %c0_19 = arith.constant 0 : index
    %c0_20 = arith.constant 0 : index
    %32 = vector.load %arg9[%c0_19, %c0_20] : memref<8x4xf32, #tpu.memory_space<vmem>>, vector<8x1xf32>
    tpu.vector_store %arg9[%c0_19, %c0_20], %31 {strides = array<i32>} : memref<8x4xf32, #tpu.memory_space<vmem>>, vector<8x1xf32>,
    %c0_21 = arith.constant 0 : index
    %c0_22 = arith.constant 0 : index
    %33 = vector.load %arg10[%c0_21, %c0_22] : memref<8x128xf32, #tpu.memory_space<vmem>>, vector<8x32xf32>
    %34 = vector.broadcast %23 : vector<8x1xf32> to vector<8x32xf32>
    %35 = arith.mulf %34, %33 : vector<8x32xf32>
    %36 = arith.truncf %26 : vector<8x8xf32> to vector<8x8xbf16>
    %37 = vector.extract_strided_slice %8 {offsets = [0, 0], sizes = [8, 32], strides = [1, 1]} : vector<8x128xbf16> to vector<8x32xbf16>
    %cst_23 = arith.constant dense<0.000000e+00> : vector<8x32xf32>
    %38 = tpu.matmul %36, %37, %cst_23 {dimension_numbers = #tpu.dot_dimension_numbers<[1], [0], [0], [1], [0, 0, 1, 1], [], []>} : vector<8x8xbf16>, vector<8x32xbf16>, vector<8x32xf32> -> vector<8x32xf32>
    %39 = arith.addf %35, %38 : vector<8x32xf32>
    %c0_24 = arith.constant 0 : index
    %c0_25 = arith.constant 0 : index
    %40 = vector.load %arg10[%c0_24, %c0_25] : memref<8x128xf32, #tpu.memory_space<vmem>>, vector<8x32xf32>
    tpu.vector_store %arg10[%c0_24, %c0_25], %39 {strides = array<i32>} : memref<8x128xf32, #tpu.memory_space<vmem>>, vector<8x32xf32>,
    %c0_26 = arith.constant 0 : index
    %c0_27 = arith.constant 0 : index
    %41 = vector.load %arg8[%c0_26, %c0_27] : memref<8x4xf32, #tpu.memory_space<vmem>>, vector<8x1xf32>
    tpu.vector_store %arg8[%c0_26, %c0_27], %21 {strides = array<i32>} : memref<8x4xf32, #tpu.memory_space<vmem>>, vector<8x1xf32>,
    %42 = vector.extract_strided_slice %4 {offsets = [0, 32], sizes = [8, 32], strides = [1, 1]} : vector<8x128xbf16> to vector<8x32xbf16>
    %43 = vector.extract_strided_slice %6 {offsets = [0, 32], sizes = [8, 32], strides = [1, 1]} : vector<8x128xbf16> to vector<8x32xbf16>
    %cst_28 = arith.constant dense<0.000000e+00> : vector<8x8xf32>
    %44 = tpu.matmul %42, %43, %cst_28 {dimension_numbers = #tpu.dot_dimension_numbers<[1], [1], [0], [0], [0, 0, 1, 0], [], []>} : vector<8x32xbf16>, vector<8x32xbf16>, vector<8x8xf32> -> vector<8x8xf32>
    %cst_29 = arith.constant 0.176776692 : f32
    %45 = vector.broadcast %cst_29 : f32 to vector<8x8xf32>
    %46 = arith.mulf %44, %45 : vector<8x8xf32>
    %47 = vector.broadcast %10 : vector<1x8xf32> to vector<8x8xf32>
    %48 = arith.addf %46, %47 : vector<8x8xf32>
    %c0_30 = arith.constant 0 : index
    %c1 = arith.constant 1 : index
    %49 = vector.load %arg8[%c0_30, %c1] : memref<8x4xf32, #tpu.memory_space<vmem>>, vector<8x1xf32>
    %cst_31 = arith.constant dense<0xFF800000> : vector<8xf32>
    %50 = vector.multi_reduction <maximumf>, %48, %cst_31 [1] : vector<8x8xf32> to vector<8xf32>
    %51 = vector.shape_cast %50 : vector<8xf32> to vector<8x1xf32>
    %52 = arith.maximumf %49, %51 : vector<8x1xf32>
    %53 = arith.subf %49, %52 : vector<8x1xf32>
    %54 = math.exp %53 : vector<8x1xf32>
    %55 = vector.broadcast %52 : vector<8x1xf32> to vector<8x8xf32>
    %56 = arith.subf %48, %55 : vector<8x8xf32>
    %57 = math.exp %56 : vector<8x8xf32>
    %c0_32 = arith.constant 0 : index
    %c1_33 = arith.constant 1 : index
    %58 = vector.load %arg9[%c0_32, %c1_33] : memref<8x4xf32, #tpu.memory_space<vmem>>, vector<8x1xf32>
    %59 = arith.mulf %54, %58 : vector<8x1xf32>
    %cst_34 = arith.constant dense<0.000000e+00> : vector<8xf32>
    %60 = vector.multi_reduction <add>, %57, %cst_34 [1] : vector<8x8xf32> to vector<8xf32>
    %61 = vector.shape_cast %60 : vector<8xf32> to vector<8x1xf32>
    %62 = arith.addf %59, %61 : vector<8x1xf32>
    %c0_35 = arith.constant 0 : index
    %c1_36 = arith.constant 1 : index
    %63 = vector.load %arg9[%c0_35, %c1_36] : memref<8x4xf32, #tpu.memory_space<vmem>>, vector<8x1xf32>
    tpu.vector_store %arg9[%c0_35, %c1_36], %62 {strides = array<i32>} : memref<8x4xf32, #tpu.memory_space<vmem>>, vector<8x1xf32>,
    %c0_37 = arith.constant 0 : index
    %c32 = arith.constant 32 : index
    %64 = vector.load %arg10[%c0_37, %c32] : memref<8x128xf32, #tpu.memory_space<vmem>>, vector<8x32xf32>
    %65 = vector.broadcast %54 : vector<8x1xf32> to vector<8x32xf32>
    %66 = arith.mulf %65, %64 : vector<8x32xf32>
    %67 = arith.truncf %57 : vector<8x8xf32> to vector<8x8xbf16>
    %68 = vector.extract_strided_slice %8 {offsets = [0, 32], sizes = [8, 32], strides = [1, 1]} : vector<8x128xbf16> to vector<8x32xbf16>
    %cst_38 = arith.constant dense<0.000000e+00> : vector<8x32xf32>
    %69 = tpu.matmul %67, %68, %cst_38 {dimension_numbers = #tpu.dot_dimension_numbers<[1], [0], [0], [1], [0, 0, 1, 1], [], []>} : vector<8x8xbf16>, vector<8x32xbf16>, vector<8x32xf32> -> vector<8x32xf32>
    %70 = arith.addf %66, %69 : vector<8x32xf32>
    %c0_39 = arith.constant 0 : index
    %c32_40 = arith.constant 32 : index
    %71 = vector.load %arg10[%c0_39, %c32_40] : memref<8x128xf32, #tpu.memory_space<vmem>>, vector<8x32xf32>
    tpu.vector_store %arg10[%c0_39, %c32_40], %70 {strides = array<i32>} : memref<8x128xf32, #tpu.memory_space<vmem>>, vector<8x32xf32>,
    %c0_41 = arith.constant 0 : index
    %c1_42 = arith.constant 1 : index
    %72 = vector.load %arg8[%c0_41, %c1_42] : memref<8x4xf32, #tpu.memory_space<vmem>>, vector<8x1xf32>
    tpu.vector_store %arg8[%c0_41, %c1_42], %52 {strides = array<i32>} : memref<8x4xf32, #tpu.memory_space<vmem>>, vector<8x1xf32>,
    %73 = vector.extract_strided_slice %4 {offsets = [0, 64], sizes = [8, 32], strides = [1, 1]} : vector<8x128xbf16> to vector<8x32xbf16>
    %74 = vector.extract_strided_slice %6 {offsets = [0, 64], sizes = [8, 32], strides = [1, 1]} : vector<8x128xbf16> to vector<8x32xbf16>
    %cst_43 = arith.constant dense<0.000000e+00> : vector<8x8xf32>
    %75 = tpu.matmul %73, %74, %cst_43 {dimension_numbers = #tpu.dot_dimension_numbers<[1], [1], [0], [0], [0, 0, 1, 0], [], []>} : vector<8x32xbf16>, vector<8x32xbf16>, vector<8x8xf32> -> vector<8x8xf32>
    %cst_44 = arith.constant 0.176776692 : f32
    %76 = vector.broadcast %cst_44 : f32 to vector<8x8xf32>
    %77 = arith.mulf %75, %76 : vector<8x8xf32>
    %78 = vector.broadcast %10 : vector<1x8xf32> to vector<8x8xf32>
    %79 = arith.addf %77, %78 : vector<8x8xf32>
    %c0_45 = arith.constant 0 : index
    %c2 = arith.constant 2 : index
    %80 = vector.load %arg8[%c0_45, %c2] : memref<8x4xf32, #tpu.memory_space<vmem>>, vector<8x1xf32>
    %cst_46 = arith.constant dense<0xFF800000> : vector<8xf32>
    %81 = vector.multi_reduction <maximumf>, %79, %cst_46 [1] : vector<8x8xf32> to vector<8xf32>
    %82 = vector.shape_cast %81 : vector<8xf32> to vector<8x1xf32>
    %83 = arith.maximumf %80, %82 : vector<8x1xf32>
    %84 = arith.subf %80, %83 : vector<8x1xf32>
    %85 = math.exp %84 : vector<8x1xf32>
    %86 = vector.broadcast %83 : vector<8x1xf32> to vector<8x8xf32>
    %87 = arith.subf %79, %86 : vector<8x8xf32>
    %88 = math.exp %87 : vector<8x8xf32>
    %c0_47 = arith.constant 0 : index
    %c2_48 = arith.constant 2 : index
    %89 = vector.load %arg9[%c0_47, %c2_48] : memref<8x4xf32, #tpu.memory_space<vmem>>, vector<8x1xf32>
    %90 = arith.mulf %85, %89 : vector<8x1xf32>
    %cst_49 = arith.constant dense<0.000000e+00> : vector<8xf32>
    %91 = vector.multi_reduction <add>, %88, %cst_49 [1] : vector<8x8xf32> to vector<8xf32>
    %92 = vector.shape_cast %91 : vector<8xf32> to vector<8x1xf32>
    %93 = arith.addf %90, %92 : vector<8x1xf32>
    %c0_50 = arith.constant 0 : index
    %c2_51 = arith.constant 2 : index
    %94 = vector.load %arg9[%c0_50, %c2_51] : memref<8x4xf32, #tpu.memory_space<vmem>>, vector<8x1xf32>
    tpu.vector_store %arg9[%c0_50, %c2_51], %93 {strides = array<i32>} : memref<8x4xf32, #tpu.memory_space<vmem>>, vector<8x1xf32>,
    %c0_52 = arith.constant 0 : index
    %c64 = arith.constant 64 : index
    %95 = vector.load %arg10[%c0_52, %c64] : memref<8x128xf32, #tpu.memory_space<vmem>>, vector<8x32xf32>
    %96 = vector.broadcast %85 : vector<8x1xf32> to vector<8x32xf32>
    %97 = arith.mulf %96, %95 : vector<8x32xf32>
    %98 = arith.truncf %88 : vector<8x8xf32> to vector<8x8xbf16>
    %99 = vector.extract_strided_slice %8 {offsets = [0, 64], sizes = [8, 32], strides = [1, 1]} : vector<8x128xbf16> to vector<8x32xbf16>
    %cst_53 = arith.constant dense<0.000000e+00> : vector<8x32xf32>
    %100 = tpu.matmul %98, %99, %cst_53 {dimension_numbers = #tpu.dot_dimension_numbers<[1], [0], [0], [1], [0, 0, 1, 1], [], []>} : vector<8x8xbf16>, vector<8x32xbf16>, vector<8x32xf32> -> vector<8x32xf32>
    %101 = arith.addf %97, %100 : vector<8x32xf32>
    %c0_54 = arith.constant 0 : index
    %c64_55 = arith.constant 64 : index
    %102 = vector.load %arg10[%c0_54, %c64_55] : memref<8x128xf32, #tpu.memory_space<vmem>>, vector<8x32xf32>
    tpu.vector_store %arg10[%c0_54, %c64_55], %101 {strides = array<i32>} : memref<8x128xf32, #tpu.memory_space<vmem>>, vector<8x32xf32>,
    %c0_56 = arith.constant 0 : index
    %c2_57 = arith.constant 2 : index
    %103 = vector.load %arg8[%c0_56, %c2_57] : memref<8x4xf32, #tpu.memory_space<vmem>>, vector<8x1xf32>
    tpu.vector_store %arg8[%c0_56, %c2_57], %83 {strides = array<i32>} : memref<8x4xf32, #tpu.memory_space<vmem>>, vector<8x1xf32>,
    %104 = vector.extract_strided_slice %4 {offsets = [0, 96], sizes = [8, 32], strides = [1, 1]} : vector<8x128xbf16> to vector<8x32xbf16>
    %105 = vector.extract_strided_slice %6 {offsets = [0, 96], sizes = [8, 32], strides = [1, 1]} : vector<8x128xbf16> to vector<8x32xbf16>
    %cst_58 = arith.constant dense<0.000000e+00> : vector<8x8xf32>
    %106 = tpu.matmul %104, %105, %cst_58 {dimension_numbers = #tpu.dot_dimension_numbers<[1], [1], [0], [0], [0, 0, 1, 0], [], []>} : vector<8x32xbf16>, vector<8x32xbf16>, vector<8x8xf32> -> vector<8x8xf32>
    %cst_59 = arith.constant 0.176776692 : f32
    %107 = vector.broadcast %cst_59 : f32 to vector<8x8xf32>
    %108 = arith.mulf %106, %107 : vector<8x8xf32>
    %109 = vector.broadcast %10 : vector<1x8xf32> to vector<8x8xf32>
    %110 = arith.addf %108, %109 : vector<8x8xf32>
    %c0_60 = arith.constant 0 : index
    %c3 = arith.constant 3 : index
    %111 = vector.load %arg8[%c0_60, %c3] : memref<8x4xf32, #tpu.memory_space<vmem>>, vector<8x1xf32>
    %cst_61 = arith.constant dense<0xFF800000> : vector<8xf32>
    %112 = vector.multi_reduction <maximumf>, %110, %cst_61 [1] : vector<8x8xf32> to vector<8xf32>
    %113 = vector.shape_cast %112 : vector<8xf32> to vector<8x1xf32>
    %114 = arith.maximumf %111, %113 : vector<8x1xf32>
    %115 = arith.subf %111, %114 : vector<8x1xf32>
    %116 = math.exp %115 : vector<8x1xf32>
    %117 = vector.broadcast %114 : vector<8x1xf32> to vector<8x8xf32>
    %118 = arith.subf %110, %117 : vector<8x8xf32>
    %119 = math.exp %118 : vector<8x8xf32>
    %c0_62 = arith.constant 0 : index
    %c3_63 = arith.constant 3 : index
    %120 = vector.load %arg9[%c0_62, %c3_63] : memref<8x4xf32, #tpu.memory_space<vmem>>, vector<8x1xf32>
    %121 = arith.mulf %116, %120 : vector<8x1xf32>
    %cst_64 = arith.constant dense<0.000000e+00> : vector<8xf32>
    %122 = vector.multi_reduction <add>, %119, %cst_64 [1] : vector<8x8xf32> to vector<8xf32>
    %123 = vector.shape_cast %122 : vector<8xf32> to vector<8x1xf32>
    %124 = arith.addf %121, %123 : vector<8x1xf32>
    %c0_65 = arith.constant 0 : index
    %c3_66 = arith.constant 3 : index
    %125 = vector.load %arg9[%c0_65, %c3_66] : memref<8x4xf32, #tpu.memory_space<vmem>>, vector<8x1xf32>
    tpu.vector_store %arg9[%c0_65, %c3_66], %124 {strides = array<i32>} : memref<8x4xf32, #tpu.memory_space<vmem>>, vector<8x1xf32>,
    %c0_67 = arith.constant 0 : index
    %c96 = arith.constant 96 : index
    %126 = vector.load %arg10[%c0_67, %c96] : memref<8x128xf32, #tpu.memory_space<vmem>>, vector<8x32xf32>
    %127 = vector.broadcast %116 : vector<8x1xf32> to vector<8x32xf32>
    %128 = arith.mulf %127, %126 : vector<8x32xf32>
    %129 = arith.truncf %119 : vector<8x8xf32> to vector<8x8xbf16>
    %130 = vector.extract_strided_slice %8 {offsets = [0, 96], sizes = [8, 32], strides = [1, 1]} : vector<8x128xbf16> to vector<8x32xbf16>
    %cst_68 = arith.constant dense<0.000000e+00> : vector<8x32xf32>
    %131 = tpu.matmul %129, %130, %cst_68 {dimension_numbers = #tpu.dot_dimension_numbers<[1], [0], [0], [1], [0, 0, 1, 1], [], []>} : vector<8x8xbf16>, vector<8x32xbf16>, vector<8x32xf32> -> vector<8x32xf32>
    %132 = arith.addf %128, %131 : vector<8x32xf32>
    %c0_69 = arith.constant 0 : index
    %c96_70 = arith.constant 96 : index
    %133 = vector.load %arg10[%c0_69, %c96_70] : memref<8x128xf32, #tpu.memory_space<vmem>>, vector<8x32xf32>
    tpu.vector_store %arg10[%c0_69, %c96_70], %132 {strides = array<i32>} : memref<8x128xf32, #tpu.memory_space<vmem>>, vector<8x32xf32>,
    %c0_71 = arith.constant 0 : index
    %c3_72 = arith.constant 3 : index
    %134 = vector.load %arg8[%c0_71, %c3_72] : memref<8x4xf32, #tpu.memory_space<vmem>>, vector<8x1xf32>
    tpu.vector_store %arg8[%c0_71, %c3_72], %114 {strides = array<i32>} : memref<8x4xf32, #tpu.memory_space<vmem>>, vector<8x1xf32>,
    %c0_i32_73 = arith.constant 0 : i32
    %135 = arith.cmpi eq, %arg2, %c0_i32_73 : i32
    %136 = arith.extui %135 : i1 to i32
    %c0_i32_74 = arith.constant 0 : i32
    %137 = arith.cmpi ne, %136, %c0_i32_74 : i32
    scf.if %137 {
      %c0_75 = arith.constant 0 : index
      %c0_76 = arith.constant 0 : index
      %138 = vector.load %arg9[%c0_75, %c0_76] : memref<8x4xf32, #tpu.memory_space<vmem>>, vector<8x1xf32>
      %139 = tpu.reciprocal %138 {approx = true} : vector<8x1xf32> -> vector<8x1xf32>
      %c0_77 = arith.constant 0 : index
      %c0_78 = arith.constant 0 : index
      %140 = vector.load %arg10[%c0_77, %c0_78] : memref<8x128xf32, #tpu.memory_space<vmem>>, vector<8x32xf32>
      %141 = vector.broadcast %139 : vector<8x1xf32> to vector<8x32xf32>
      %142 = arith.mulf %140, %141 : vector<8x32xf32>
      %143 = arith.truncf %142 : vector<8x32xf32> to vector<8x32xbf16>
      %c0_79 = arith.constant 0 : index
      %c0_80 = arith.constant 0 : index
      %c0_81 = arith.constant 0 : index
      %144 = vector.load %arg7[%c0_79, %c0_80, %c0_81] : memref<1x8x128xbf16, #tpu.memory_space<vmem>>, vector<1x8x32xbf16>
      %145 = vector.shape_cast %144 : vector<1x8x32xbf16> to vector<8x32xbf16>
      %146 = vector.shape_cast %143 : vector<8x32xbf16> to vector<1x8x32xbf16>
      tpu.vector_store %arg7[%c0_79, %c0_80, %c0_81], %146 {strides = array<i32>} : memref<1x8x128xbf16, #tpu.memory_space<vmem>>, vector<1x8x32xbf16>,
      %c0_82 = arith.constant 0 : index
      %c1_83 = arith.constant 1 : index
      %147 = vector.load %arg9[%c0_82, %c1_83] : memref<8x4xf32, #tpu.memory_space<vmem>>, vector<8x1xf32>
      %148 = tpu.reciprocal %147 {approx = true} : vector<8x1xf32> -> vector<8x1xf32>
      %c0_84 = arith.constant 0 : index
      %c32_85 = arith.constant 32 : index
      %149 = vector.load %arg10[%c0_84, %c32_85] : memref<8x128xf32, #tpu.memory_space<vmem>>, vector<8x32xf32>
      %150 = vector.broadcast %148 : vector<8x1xf32> to vector<8x32xf32>
      %151 = arith.mulf %149, %150 : vector<8x32xf32>
      %152 = arith.truncf %151 : vector<8x32xf32> to vector<8x32xbf16>
      %c0_86 = arith.constant 0 : index
      %c0_87 = arith.constant 0 : index
      %c32_88 = arith.constant 32 : index
      %153 = vector.load %arg7[%c0_86, %c0_87, %c32_88] : memref<1x8x128xbf16, #tpu.memory_space<vmem>>, vector<1x8x32xbf16>
      %154 = vector.shape_cast %153 : vector<1x8x32xbf16> to vector<8x32xbf16>
      %155 = vector.shape_cast %152 : vector<8x32xbf16> to vector<1x8x32xbf16>
      tpu.vector_store %arg7[%c0_86, %c0_87, %c32_88], %155 {strides = array<i32>} : memref<1x8x128xbf16, #tpu.memory_space<vmem>>, vector<1x8x32xbf16>,
      %c0_89 = arith.constant 0 : index
      %c2_90 = arith.constant 2 : index
      %156 = vector.load %arg9[%c0_89, %c2_90] : memref<8x4xf32, #tpu.memory_space<vmem>>, vector<8x1xf32>
      %157 = tpu.reciprocal %156 {approx = true} : vector<8x1xf32> -> vector<8x1xf32>
      %c0_91 = arith.constant 0 : index
      %c64_92 = arith.constant 64 : index
      %158 = vector.load %arg10[%c0_91, %c64_92] : memref<8x128xf32, #tpu.memory_space<vmem>>, vector<8x32xf32>
      %159 = vector.broadcast %157 : vector<8x1xf32> to vector<8x32xf32>
      %160 = arith.mulf %158, %159 : vector<8x32xf32>
      %161 = arith.truncf %160 : vector<8x32xf32> to vector<8x32xbf16>
      %c0_93 = arith.constant 0 : index
      %c0_94 = arith.constant 0 : index
      %c64_95 = arith.constant 64 : index
      %162 = vector.load %arg7[%c0_93, %c0_94, %c64_95] : memref<1x8x128xbf16, #tpu.memory_space<vmem>>, vector<1x8x32xbf16>
      %163 = vector.shape_cast %162 : vector<1x8x32xbf16> to vector<8x32xbf16>
      %164 = vector.shape_cast %161 : vector<8x32xbf16> to vector<1x8x32xbf16>
      tpu.vector_store %arg7[%c0_93, %c0_94, %c64_95], %164 {strides = array<i32>} : memref<1x8x128xbf16, #tpu.memory_space<vmem>>, vector<1x8x32xbf16>,
      %c0_96 = arith.constant 0 : index
      %c3_97 = arith.constant 3 : index
      %165 = vector.load %arg9[%c0_96, %c3_97] : memref<8x4xf32, #tpu.memory_space<vmem>>, vector<8x1xf32>
      %166 = tpu.reciprocal %165 {approx = true} : vector<8x1xf32> -> vector<8x1xf32>
      %c0_98 = arith.constant 0 : index
      %c96_99 = arith.constant 96 : index
      %167 = vector.load %arg10[%c0_98, %c96_99] : memref<8x128xf32, #tpu.memory_space<vmem>>, vector<8x32xf32>
      %168 = vector.broadcast %166 : vector<8x1xf32> to vector<8x32xf32>
      %169 = arith.mulf %167, %168 : vector<8x32xf32>
      %170 = arith.truncf %169 : vector<8x32xf32> to vector<8x32xbf16>
      %c0_100 = arith.constant 0 : index
      %c0_101 = arith.constant 0 : index
      %c96_102 = arith.constant 96 : index
      %171 = vector.load %arg7[%c0_100, %c0_101, %c96_102] : memref<1x8x128xbf16, #tpu.memory_space<vmem>>, vector<1x8x32xbf16>
      %172 = vector.shape_cast %171 : vector<1x8x32xbf16> to vector<8x32xbf16>
      %173 = vector.shape_cast %170 : vector<8x32xbf16> to vector<1x8x32xbf16>
      tpu.vector_store %arg7[%c0_100, %c0_101, %c96_102], %173 {strides = array<i32>} : memref<1x8x128xbf16, #tpu.memory_space<vmem>>, vector<1x8x32xbf16>,
    } else {
    }
    return
  }
  func.func @transform_0(%arg0: i32, %arg1: i32, %arg2: i32) -> (i32, i32, i32) {
    %c0_i32 = arith.constant 0 : i32
    %c0_i32_0 = arith.constant 0 : i32
    return %arg0, %arg1, %c0_i32 : i32, i32, i32
  }
  func.func @transform_1(%arg0: i32, %arg1: i32, %arg2: i32) -> (i32, i32, i32) {
    %c1_i32 = arith.constant 1 : i32
    %c0_i32 = arith.constant 0 : i32
    return %arg0, %arg2, %c1_i32 : i32, i32, i32
  }
  func.func @transform_2(%arg0: i32, %arg1: i32, %arg2: i32) -> (i32, i32, i32) {
    %c2_i32 = arith.constant 2 : i32
    %c0_i32 = arith.constant 0 : i32
    return %arg0, %arg2, %c2_i32 : i32, i32, i32
  }
  func.func @transform_3(%arg0: i32, %arg1: i32, %arg2: i32) -> (i32, i32, i32) {
    %c0_i32 = arith.constant 0 : i32
    %c0_i32_0 = arith.constant 0 : i32
    return %arg0, %c0_i32, %arg2 : i32, i32, i32
  }
  func.func @transform_4(%arg0: i32, %arg1: i32, %arg2: i32) -> (i32, i32, i32) {
    %c0_i32 = arith.constant 0 : i32
    %c0_i32_0 = arith.constant 0 : i32
    return %arg0, %arg1, %c0_i32 : i32, i32, i32
  }
}

module attributes {stable_mosaic.version = 11 : i64} {
  func.func @_linear_kernel(%arg0: i32, %arg1: i32, %arg2: i32, %arg3: memref<64x128xbf16, #tpu.memory_space<vmem>>, %arg4: memref<128x384xbf16, #tpu.memory_space<vmem>>, %arg5: memref<1x384xf32, #tpu.memory_space<vmem>>, %arg6: memref<64x384xbf16, #tpu.memory_space<vmem>>, %arg7: memref<64x384xf32, #tpu.memory_space<vmem>>) attributes {dimension_semantics = [#tpu.dimension_semantics<parallel>, #tpu.dimension_semantics<parallel>, #tpu.dimension_semantics<arbitrary>], iteration_bounds = array<i64: 1, 1, 1>, scalar_prefetch = 0 : i64, scratch_operands = 1 : i64, tpu.core_type = #tpu.core_type<tc>, window_params = [{transform_indices = @transform_0, window_bounds = array<i64: 64, 128>}, {transform_indices = @transform_1, window_bounds = array<i64: 128, 384>}, {transform_indices = @transform_2, window_bounds = array<i64: 1, 384>}, {transform_indices = @transform_3, window_bounds = array<i64: 64, 384>}]} {
    %c0_i32 = arith.constant 0 : i32
    %0 = arith.cmpi eq, %arg2, %c0_i32 : i32
    %1 = arith.extui %0 : i1 to i32
    %c0_i32_0 = arith.constant 0 : i32
    %2 = arith.cmpi ne, %1, %c0_i32_0 : i32
    scf.if %2 {
      %cst_10 = arith.constant 0.000000e+00 : f32
      %12 = vector.broadcast %cst_10 : f32 to vector<64x384xf32>
      %c0_11 = arith.constant 0 : index
      %c0_12 = arith.constant 0 : index
      %13 = vector.load %arg7[%c0_11, %c0_12] : memref<64x384xf32, #tpu.memory_space<vmem>>, vector<64x384xf32>
      tpu.vector_store %arg7[%c0_11, %c0_12], %12 {strides = array<i32>} : memref<64x384xf32, #tpu.memory_space<vmem>>, vector<64x384xf32>,
    } else {
    }
    %c0 = arith.constant 0 : index
    %c0_1 = arith.constant 0 : index
    %3 = vector.load %arg7[%c0, %c0_1] : memref<64x384xf32, #tpu.memory_space<vmem>>, vector<64x384xf32>
    %c0_2 = arith.constant 0 : index
    %c0_3 = arith.constant 0 : index
    %4 = vector.load %arg3[%c0_2, %c0_3] : memref<64x128xbf16, #tpu.memory_space<vmem>>, vector<64x128xbf16>
    %c0_4 = arith.constant 0 : index
    %c0_5 = arith.constant 0 : index
    %5 = vector.load %arg4[%c0_4, %c0_5] : memref<128x384xbf16, #tpu.memory_space<vmem>>, vector<128x384xbf16>
    %cst = arith.constant dense<0.000000e+00> : vector<64x384xf32>
    %6 = tpu.matmul %4, %5, %cst {dimension_numbers = #tpu.dot_dimension_numbers<[1], [0], [0], [1], [0, 0, 1, 1], [], []>} : vector<64x128xbf16>, vector<128x384xbf16>, vector<64x384xf32> -> vector<64x384xf32>
    %7 = arith.addf %3, %6 : vector<64x384xf32>
    %c0_6 = arith.constant 0 : index
    %c0_7 = arith.constant 0 : index
    %8 = vector.load %arg7[%c0_6, %c0_7] : memref<64x384xf32, #tpu.memory_space<vmem>>, vector<64x384xf32>
    tpu.vector_store %arg7[%c0_6, %c0_7], %7 {strides = array<i32>} : memref<64x384xf32, #tpu.memory_space<vmem>>, vector<64x384xf32>,
    %c0_i32_8 = arith.constant 0 : i32
    %9 = arith.cmpi eq, %arg2, %c0_i32_8 : i32
    %10 = arith.extui %9 : i1 to i32
    %c0_i32_9 = arith.constant 0 : i32
    %11 = arith.cmpi ne, %10, %c0_i32_9 : i32
    scf.if %11 {
      %c0_10 = arith.constant 0 : index
      %c0_11 = arith.constant 0 : index
      %12 = vector.load %arg7[%c0_10, %c0_11] : memref<64x384xf32, #tpu.memory_space<vmem>>, vector<64x384xf32>
      %c0_12 = arith.constant 0 : index
      %c0_13 = arith.constant 0 : index
      %13 = vector.load %arg5[%c0_12, %c0_13] : memref<1x384xf32, #tpu.memory_space<vmem>>, vector<1x384xf32>
      %14 = vector.broadcast %13 : vector<1x384xf32> to vector<64x384xf32>
      %15 = arith.addf %12, %14 : vector<64x384xf32>
      %16 = arith.truncf %15 : vector<64x384xf32> to vector<64x384xbf16>
      %c0_14 = arith.constant 0 : index
      %c0_15 = arith.constant 0 : index
      %17 = vector.load %arg6[%c0_14, %c0_15] : memref<64x384xbf16, #tpu.memory_space<vmem>>, vector<64x384xbf16>
      tpu.vector_store %arg6[%c0_14, %c0_15], %16 {strides = array<i32>} : memref<64x384xbf16, #tpu.memory_space<vmem>>, vector<64x384xbf16>,
    } else {
    }
    return
  }
  func.func @transform_0(%arg0: i32, %arg1: i32, %arg2: i32) -> (i32, i32) {
    %c0_i32 = arith.constant 0 : i32
    return %arg0, %arg2 : i32, i32
  }
  func.func @transform_1(%arg0: i32, %arg1: i32, %arg2: i32) -> (i32, i32) {
    %c0_i32 = arith.constant 0 : i32
    return %arg2, %arg1 : i32, i32
  }
  func.func @transform_2(%arg0: i32, %arg1: i32, %arg2: i32) -> (i32, i32) {
    %c0_i32 = arith.constant 0 : i32
    %c0_i32_0 = arith.constant 0 : i32
    return %c0_i32, %arg1 : i32, i32
  }
  func.func @transform_3(%arg0: i32, %arg1: i32, %arg2: i32) -> (i32, i32) {
    %c0_i32 = arith.constant 0 : i32
    return %arg0, %arg1 : i32, i32
  }
}

module attributes {stable_mosaic.version = 11 : i64} {
  func.func @_linear_kernel(%arg0: i32, %arg1: i32, %arg2: i32, %arg3: memref<64x128xbf16, #tpu.memory_space<vmem>>, %arg4: memref<128x256xbf16, #tpu.memory_space<vmem>>, %arg5: memref<1x256xf32, #tpu.memory_space<vmem>>, %arg6: memref<64x256xbf16, #tpu.memory_space<vmem>>, %arg7: memref<64x256xf32, #tpu.memory_space<vmem>>) attributes {dimension_semantics = [#tpu.dimension_semantics<parallel>, #tpu.dimension_semantics<parallel>, #tpu.dimension_semantics<arbitrary>], iteration_bounds = array<i64: 1, 1, 1>, scalar_prefetch = 0 : i64, scratch_operands = 1 : i64, tpu.core_type = #tpu.core_type<tc>, window_params = [{transform_indices = @transform_0, window_bounds = array<i64: 64, 128>}, {transform_indices = @transform_1, window_bounds = array<i64: 128, 256>}, {transform_indices = @transform_2, window_bounds = array<i64: 1, 256>}, {transform_indices = @transform_3, window_bounds = array<i64: 64, 256>}]} {
    %c0_i32 = arith.constant 0 : i32
    %0 = arith.cmpi eq, %arg2, %c0_i32 : i32
    %1 = arith.extui %0 : i1 to i32
    %c0_i32_0 = arith.constant 0 : i32
    %2 = arith.cmpi ne, %1, %c0_i32_0 : i32
    scf.if %2 {
      %cst_10 = arith.constant 0.000000e+00 : f32
      %12 = vector.broadcast %cst_10 : f32 to vector<64x256xf32>
      %c0_11 = arith.constant 0 : index
      %c0_12 = arith.constant 0 : index
      %13 = vector.load %arg7[%c0_11, %c0_12] : memref<64x256xf32, #tpu.memory_space<vmem>>, vector<64x256xf32>
      tpu.vector_store %arg7[%c0_11, %c0_12], %12 {strides = array<i32>} : memref<64x256xf32, #tpu.memory_space<vmem>>, vector<64x256xf32>,
    } else {
    }
    %c0 = arith.constant 0 : index
    %c0_1 = arith.constant 0 : index
    %3 = vector.load %arg7[%c0, %c0_1] : memref<64x256xf32, #tpu.memory_space<vmem>>, vector<64x256xf32>
    %c0_2 = arith.constant 0 : index
    %c0_3 = arith.constant 0 : index
    %4 = vector.load %arg3[%c0_2, %c0_3] : memref<64x128xbf16, #tpu.memory_space<vmem>>, vector<64x128xbf16>
    %c0_4 = arith.constant 0 : index
    %c0_5 = arith.constant 0 : index
    %5 = vector.load %arg4[%c0_4, %c0_5] : memref<128x256xbf16, #tpu.memory_space<vmem>>, vector<128x256xbf16>
    %cst = arith.constant dense<0.000000e+00> : vector<64x256xf32>
    %6 = tpu.matmul %4, %5, %cst {dimension_numbers = #tpu.dot_dimension_numbers<[1], [0], [0], [1], [0, 0, 1, 1], [], []>} : vector<64x128xbf16>, vector<128x256xbf16>, vector<64x256xf32> -> vector<64x256xf32>
    %7 = arith.addf %3, %6 : vector<64x256xf32>
    %c0_6 = arith.constant 0 : index
    %c0_7 = arith.constant 0 : index
    %8 = vector.load %arg7[%c0_6, %c0_7] : memref<64x256xf32, #tpu.memory_space<vmem>>, vector<64x256xf32>
    tpu.vector_store %arg7[%c0_6, %c0_7], %7 {strides = array<i32>} : memref<64x256xf32, #tpu.memory_space<vmem>>, vector<64x256xf32>,
    %c0_i32_8 = arith.constant 0 : i32
    %9 = arith.cmpi eq, %arg2, %c0_i32_8 : i32
    %10 = arith.extui %9 : i1 to i32
    %c0_i32_9 = arith.constant 0 : i32
    %11 = arith.cmpi ne, %10, %c0_i32_9 : i32
    scf.if %11 {
      %c0_10 = arith.constant 0 : index
      %c0_11 = arith.constant 0 : index
      %12 = vector.load %arg7[%c0_10, %c0_11] : memref<64x256xf32, #tpu.memory_space<vmem>>, vector<64x256xf32>
      %c0_12 = arith.constant 0 : index
      %c0_13 = arith.constant 0 : index
      %13 = vector.load %arg5[%c0_12, %c0_13] : memref<1x256xf32, #tpu.memory_space<vmem>>, vector<1x256xf32>
      %14 = vector.broadcast %13 : vector<1x256xf32> to vector<64x256xf32>
      %15 = arith.addf %12, %14 : vector<64x256xf32>
      %16 = arith.truncf %15 : vector<64x256xf32> to vector<64x256xbf16>
      %c0_14 = arith.constant 0 : index
      %c0_15 = arith.constant 0 : index
      %17 = vector.load %arg6[%c0_14, %c0_15] : memref<64x256xbf16, #tpu.memory_space<vmem>>, vector<64x256xbf16>
      tpu.vector_store %arg6[%c0_14, %c0_15], %16 {strides = array<i32>} : memref<64x256xbf16, #tpu.memory_space<vmem>>, vector<64x256xbf16>,
    } else {
    }
    return
  }
  func.func @transform_0(%arg0: i32, %arg1: i32, %arg2: i32) -> (i32, i32) {
    %c0_i32 = arith.constant 0 : i32
    return %arg0, %arg2 : i32, i32
  }
  func.func @transform_1(%arg0: i32, %arg1: i32, %arg2: i32) -> (i32, i32) {
    %c0_i32 = arith.constant 0 : i32
    return %arg2, %arg1 : i32, i32
  }
  func.func @transform_2(%arg0: i32, %arg1: i32, %arg2: i32) -> (i32, i32) {
    %c0_i32 = arith.constant 0 : i32
    %c0_i32_0 = arith.constant 0 : i32
    return %c0_i32, %arg1 : i32, i32
  }
  func.func @transform_3(%arg0: i32, %arg1: i32, %arg2: i32) -> (i32, i32) {
    %c0_i32 = arith.constant 0 : i32
    return %arg0, %arg1 : i32, i32
  }
}

module attributes {stable_mosaic.version = 11 : i64} {
  func.func @_linear_kernel(%arg0: i32, %arg1: i32, %arg2: i32, %arg3: memref<64x128xbf16, #tpu.memory_space<vmem>>, %arg4: memref<128x128xbf16, #tpu.memory_space<vmem>>, %arg5: memref<1x128xf32, #tpu.memory_space<vmem>>, %arg6: memref<64x128xf32, #tpu.memory_space<vmem>>, %arg7: memref<64x128xf32, #tpu.memory_space<vmem>>) attributes {dimension_semantics = [#tpu.dimension_semantics<parallel>, #tpu.dimension_semantics<parallel>, #tpu.dimension_semantics<arbitrary>], iteration_bounds = array<i64: 1, 1, 1>, scalar_prefetch = 0 : i64, scratch_operands = 1 : i64, tpu.core_type = #tpu.core_type<tc>, window_params = [{transform_indices = @transform_0, window_bounds = array<i64: 64, 128>}, {transform_indices = @transform_1, window_bounds = array<i64: 128, 128>}, {transform_indices = @transform_2, window_bounds = array<i64: 1, 128>}, {transform_indices = @transform_3, window_bounds = array<i64: 64, 128>}]} {
    %c0_i32 = arith.constant 0 : i32
    %0 = arith.cmpi eq, %arg2, %c0_i32 : i32
    %1 = arith.extui %0 : i1 to i32
    %c0_i32_0 = arith.constant 0 : i32
    %2 = arith.cmpi ne, %1, %c0_i32_0 : i32
    scf.if %2 {
      %cst_10 = arith.constant 0.000000e+00 : f32
      %12 = vector.broadcast %cst_10 : f32 to vector<64x128xf32>
      %c0_11 = arith.constant 0 : index
      %c0_12 = arith.constant 0 : index
      %13 = vector.load %arg7[%c0_11, %c0_12] : memref<64x128xf32, #tpu.memory_space<vmem>>, vector<64x128xf32>
      tpu.vector_store %arg7[%c0_11, %c0_12], %12 {strides = array<i32>} : memref<64x128xf32, #tpu.memory_space<vmem>>, vector<64x128xf32>,
    } else {
    }
    %c0 = arith.constant 0 : index
    %c0_1 = arith.constant 0 : index
    %3 = vector.load %arg7[%c0, %c0_1] : memref<64x128xf32, #tpu.memory_space<vmem>>, vector<64x128xf32>
    %c0_2 = arith.constant 0 : index
    %c0_3 = arith.constant 0 : index
    %4 = vector.load %arg3[%c0_2, %c0_3] : memref<64x128xbf16, #tpu.memory_space<vmem>>, vector<64x128xbf16>
    %c0_4 = arith.constant 0 : index
    %c0_5 = arith.constant 0 : index
    %5 = vector.load %arg4[%c0_4, %c0_5] : memref<128x128xbf16, #tpu.memory_space<vmem>>, vector<128x128xbf16>
    %cst = arith.constant dense<0.000000e+00> : vector<64x128xf32>
    %6 = tpu.matmul %4, %5, %cst {dimension_numbers = #tpu.dot_dimension_numbers<[1], [0], [0], [1], [0, 0, 1, 1], [], []>} : vector<64x128xbf16>, vector<128x128xbf16>, vector<64x128xf32> -> vector<64x128xf32>
    %7 = arith.addf %3, %6 : vector<64x128xf32>
    %c0_6 = arith.constant 0 : index
    %c0_7 = arith.constant 0 : index
    %8 = vector.load %arg7[%c0_6, %c0_7] : memref<64x128xf32, #tpu.memory_space<vmem>>, vector<64x128xf32>
    tpu.vector_store %arg7[%c0_6, %c0_7], %7 {strides = array<i32>} : memref<64x128xf32, #tpu.memory_space<vmem>>, vector<64x128xf32>,
    %c0_i32_8 = arith.constant 0 : i32
    %9 = arith.cmpi eq, %arg2, %c0_i32_8 : i32
    %10 = arith.extui %9 : i1 to i32
    %c0_i32_9 = arith.constant 0 : i32
    %11 = arith.cmpi ne, %10, %c0_i32_9 : i32
    scf.if %11 {
      %c0_10 = arith.constant 0 : index
      %c0_11 = arith.constant 0 : index
      %12 = vector.load %arg7[%c0_10, %c0_11] : memref<64x128xf32, #tpu.memory_space<vmem>>, vector<64x128xf32>
      %c0_12 = arith.constant 0 : index
      %c0_13 = arith.constant 0 : index
      %13 = vector.load %arg5[%c0_12, %c0_13] : memref<1x128xf32, #tpu.memory_space<vmem>>, vector<1x128xf32>
      %14 = vector.broadcast %13 : vector<1x128xf32> to vector<64x128xf32>
      %15 = arith.addf %12, %14 : vector<64x128xf32>
      %c0_14 = arith.constant 0 : index
      %c0_15 = arith.constant 0 : index
      %16 = vector.load %arg6[%c0_14, %c0_15] : memref<64x128xf32, #tpu.memory_space<vmem>>, vector<64x128xf32>
      tpu.vector_store %arg6[%c0_14, %c0_15], %15 {strides = array<i32>} : memref<64x128xf32, #tpu.memory_space<vmem>>, vector<64x128xf32>,
    } else {
    }
    return
  }
  func.func @transform_0(%arg0: i32, %arg1: i32, %arg2: i32) -> (i32, i32) {
    %c0_i32 = arith.constant 0 : i32
    return %arg0, %arg2 : i32, i32
  }
  func.func @transform_1(%arg0: i32, %arg1: i32, %arg2: i32) -> (i32, i32) {
    %c0_i32 = arith.constant 0 : i32
    return %arg2, %arg1 : i32, i32
  }
  func.func @transform_2(%arg0: i32, %arg1: i32, %arg2: i32) -> (i32, i32) {
    %c0_i32 = arith.constant 0 : i32
    %c0_i32_0 = arith.constant 0 : i32
    return %c0_i32, %arg1 : i32, i32
  }
  func.func @transform_3(%arg0: i32, %arg1: i32, %arg2: i32) -> (i32, i32) {
    %c0_i32 = arith.constant 0 : i32
    return %arg0, %arg1 : i32, i32
  }
}

module attributes {stable_mosaic.version = 11 : i64} {
  func.func @_flash_attn_kernel(%arg0: i32, %arg1: i32, %arg2: i32, %arg3: memref<1x8x128xbf16, #tpu.memory_space<vmem>>, %arg4: memref<1x8x128xbf16, #tpu.memory_space<vmem>>, %arg5: memref<1x8x128xbf16, #tpu.memory_space<vmem>>, %arg6: memref<1x1x8xf32, #tpu.memory_space<vmem>>, %arg7: memref<1x8x128xbf16, #tpu.memory_space<vmem>>, %arg8: memref<8x4xf32, #tpu.memory_space<vmem>>, %arg9: memref<8x4xf32, #tpu.memory_space<vmem>>, %arg10: memref<8x128xf32, #tpu.memory_space<vmem>>) attributes {dimension_semantics = [#tpu.dimension_semantics<parallel>, #tpu.dimension_semantics<parallel>, #tpu.dimension_semantics<arbitrary>], iteration_bounds = array<i64: 8, 1, 1>, scalar_prefetch = 0 : i64, scratch_operands = 3 : i64, tpu.core_type = #tpu.core_type<tc>, window_params = [{transform_indices = @transform_0, window_bounds = array<i64: 1, 8, 128>}, {transform_indices = @transform_1, window_bounds = array<i64: 1, 8, 128>}, {transform_indices = @transform_2, window_bounds = array<i64: 1, 8, 128>}, {transform_indices = @transform_3, window_bounds = array<i64: 1, 1, 8>}, {transform_indices = @transform_4, window_bounds = array<i64: 1, 8, 128>}]} {
    %c0_i32 = arith.constant 0 : i32
    %0 = arith.cmpi eq, %arg2, %c0_i32 : i32
    %1 = arith.extui %0 : i1 to i32
    %c0_i32_0 = arith.constant 0 : i32
    %2 = arith.cmpi ne, %1, %c0_i32_0 : i32
    scf.if %2 {
      %cst_75 = arith.constant -1.000000e+30 : f32
      %138 = vector.broadcast %cst_75 : f32 to vector<8x4xf32>
      %c0_76 = arith.constant 0 : index
      %c0_77 = arith.constant 0 : index
      %139 = vector.load %arg8[%c0_76, %c0_77] : memref<8x4xf32, #tpu.memory_space<vmem>>, vector<8x4xf32>
      tpu.vector_store %arg8[%c0_76, %c0_77], %138 {strides = array<i32>} : memref<8x4xf32, #tpu.memory_space<vmem>>, vector<8x4xf32>,
      %cst_78 = arith.constant 0.000000e+00 : f32
      %140 = vector.broadcast %cst_78 : f32 to vector<8x4xf32>
      %c0_79 = arith.constant 0 : index
      %c0_80 = arith.constant 0 : index
      %141 = vector.load %arg9[%c0_79, %c0_80] : memref<8x4xf32, #tpu.memory_space<vmem>>, vector<8x4xf32>
      tpu.vector_store %arg9[%c0_79, %c0_80], %140 {strides = array<i32>} : memref<8x4xf32, #tpu.memory_space<vmem>>, vector<8x4xf32>,
      %cst_81 = arith.constant 0.000000e+00 : f32
      %142 = vector.broadcast %cst_81 : f32 to vector<8x128xf32>
      %c0_82 = arith.constant 0 : index
      %c0_83 = arith.constant 0 : index
      %143 = vector.load %arg10[%c0_82, %c0_83] : memref<8x128xf32, #tpu.memory_space<vmem>>, vector<8x128xf32>
      tpu.vector_store %arg10[%c0_82, %c0_83], %142 {strides = array<i32>} : memref<8x128xf32, #tpu.memory_space<vmem>>, vector<8x128xf32>,
    } else {
    }
    %c0 = arith.constant 0 : index
    %c0_1 = arith.constant 0 : index
    %c0_2 = arith.constant 0 : index
    %3 = vector.load %arg3[%c0, %c0_1, %c0_2] : memref<1x8x128xbf16, #tpu.memory_space<vmem>>, vector<1x8x128xbf16>
    %4 = vector.shape_cast %3 : vector<1x8x128xbf16> to vector<8x128xbf16>
    %c0_3 = arith.constant 0 : index
    %c0_4 = arith.constant 0 : index
    %c0_5 = arith.constant 0 : index
    %5 = vector.load %arg4[%c0_3, %c0_4, %c0_5] : memref<1x8x128xbf16, #tpu.memory_space<vmem>>, vector<1x8x128xbf16>
    %6 = vector.shape_cast %5 : vector<1x8x128xbf16> to vector<8x128xbf16>
    %c0_6 = arith.constant 0 : index
    %c0_7 = arith.constant 0 : index
    %c0_8 = arith.constant 0 : index
    %7 = vector.load %arg5[%c0_6, %c0_7, %c0_8] : memref<1x8x128xbf16, #tpu.memory_space<vmem>>, vector<1x8x128xbf16>
    %8 = vector.shape_cast %7 : vector<1x8x128xbf16> to vector<8x128xbf16>
    %c0_9 = arith.constant 0 : index
    %c0_10 = arith.constant 0 : index
    %c0_11 = arith.constant 0 : index
    %9 = vector.load %arg6[%c0_9, %c0_10, %c0_11] : memref<1x1x8xf32, #tpu.memory_space<vmem>>, vector<1x1x8xf32>
    %10 = vector.shape_cast %9 : vector<1x1x8xf32> to vector<1x8xf32>
    %11 = vector.extract_strided_slice %4 {offsets = [0, 0], sizes = [8, 32], strides = [1, 1]} : vector<8x128xbf16> to vector<8x32xbf16>
    %12 = vector.extract_strided_slice %6 {offsets = [0, 0], sizes = [8, 32], strides = [1, 1]} : vector<8x128xbf16> to vector<8x32xbf16>
    %cst = arith.constant dense<0.000000e+00> : vector<8x8xf32>
    %13 = tpu.matmul %11, %12, %cst {dimension_numbers = #tpu.dot_dimension_numbers<[1], [1], [0], [0], [0, 0, 1, 0], [], []>} : vector<8x32xbf16>, vector<8x32xbf16>, vector<8x8xf32> -> vector<8x8xf32>
    %cst_12 = arith.constant 0.176776692 : f32
    %14 = vector.broadcast %cst_12 : f32 to vector<8x8xf32>
    %15 = arith.mulf %13, %14 : vector<8x8xf32>
    %16 = vector.broadcast %10 : vector<1x8xf32> to vector<8x8xf32>
    %17 = arith.addf %15, %16 : vector<8x8xf32>
    %c0_13 = arith.constant 0 : index
    %c0_14 = arith.constant 0 : index
    %18 = vector.load %arg8[%c0_13, %c0_14] : memref<8x4xf32, #tpu.memory_space<vmem>>, vector<8x1xf32>
    %cst_15 = arith.constant dense<0xFF800000> : vector<8xf32>
    %19 = vector.multi_reduction <maximumf>, %17, %cst_15 [1] : vector<8x8xf32> to vector<8xf32>
    %20 = vector.shape_cast %19 : vector<8xf32> to vector<8x1xf32>
    %21 = arith.maximumf %18, %20 : vector<8x1xf32>
    %22 = arith.subf %18, %21 : vector<8x1xf32>
    %23 = math.exp %22 : vector<8x1xf32>
    %24 = vector.broadcast %21 : vector<8x1xf32> to vector<8x8xf32>
    %25 = arith.subf %17, %24 : vector<8x8xf32>
    %26 = math.exp %25 : vector<8x8xf32>
    %c0_16 = arith.constant 0 : index
    %c0_17 = arith.constant 0 : index
    %27 = vector.load %arg9[%c0_16, %c0_17] : memref<8x4xf32, #tpu.memory_space<vmem>>, vector<8x1xf32>
    %28 = arith.mulf %23, %27 : vector<8x1xf32>
    %cst_18 = arith.constant dense<0.000000e+00> : vector<8xf32>
    %29 = vector.multi_reduction <add>, %26, %cst_18 [1] : vector<8x8xf32> to vector<8xf32>
    %30 = vector.shape_cast %29 : vector<8xf32> to vector<8x1xf32>
    %31 = arith.addf %28, %30 : vector<8x1xf32>
    %c0_19 = arith.constant 0 : index
    %c0_20 = arith.constant 0 : index
    %32 = vector.load %arg9[%c0_19, %c0_20] : memref<8x4xf32, #tpu.memory_space<vmem>>, vector<8x1xf32>
    tpu.vector_store %arg9[%c0_19, %c0_20], %31 {strides = array<i32>} : memref<8x4xf32, #tpu.memory_space<vmem>>, vector<8x1xf32>,
    %c0_21 = arith.constant 0 : index
    %c0_22 = arith.constant 0 : index
    %33 = vector.load %arg10[%c0_21, %c0_22] : memref<8x128xf32, #tpu.memory_space<vmem>>, vector<8x32xf32>
    %34 = vector.broadcast %23 : vector<8x1xf32> to vector<8x32xf32>
    %35 = arith.mulf %34, %33 : vector<8x32xf32>
    %36 = arith.truncf %26 : vector<8x8xf32> to vector<8x8xbf16>
    %37 = vector.extract_strided_slice %8 {offsets = [0, 0], sizes = [8, 32], strides = [1, 1]} : vector<8x128xbf16> to vector<8x32xbf16>
    %cst_23 = arith.constant dense<0.000000e+00> : vector<8x32xf32>
    %38 = tpu.matmul %36, %37, %cst_23 {dimension_numbers = #tpu.dot_dimension_numbers<[1], [0], [0], [1], [0, 0, 1, 1], [], []>} : vector<8x8xbf16>, vector<8x32xbf16>, vector<8x32xf32> -> vector<8x32xf32>
    %39 = arith.addf %35, %38 : vector<8x32xf32>
    %c0_24 = arith.constant 0 : index
    %c0_25 = arith.constant 0 : index
    %40 = vector.load %arg10[%c0_24, %c0_25] : memref<8x128xf32, #tpu.memory_space<vmem>>, vector<8x32xf32>
    tpu.vector_store %arg10[%c0_24, %c0_25], %39 {strides = array<i32>} : memref<8x128xf32, #tpu.memory_space<vmem>>, vector<8x32xf32>,
    %c0_26 = arith.constant 0 : index
    %c0_27 = arith.constant 0 : index
    %41 = vector.load %arg8[%c0_26, %c0_27] : memref<8x4xf32, #tpu.memory_space<vmem>>, vector<8x1xf32>
    tpu.vector_store %arg8[%c0_26, %c0_27], %21 {strides = array<i32>} : memref<8x4xf32, #tpu.memory_space<vmem>>, vector<8x1xf32>,
    %42 = vector.extract_strided_slice %4 {offsets = [0, 32], sizes = [8, 32], strides = [1, 1]} : vector<8x128xbf16> to vector<8x32xbf16>
    %43 = vector.extract_strided_slice %6 {offsets = [0, 32], sizes = [8, 32], strides = [1, 1]} : vector<8x128xbf16> to vector<8x32xbf16>
    %cst_28 = arith.constant dense<0.000000e+00> : vector<8x8xf32>
    %44 = tpu.matmul %42, %43, %cst_28 {dimension_numbers = #tpu.dot_dimension_numbers<[1], [1], [0], [0], [0, 0, 1, 0], [], []>} : vector<8x32xbf16>, vector<8x32xbf16>, vector<8x8xf32> -> vector<8x8xf32>
    %cst_29 = arith.constant 0.176776692 : f32
    %45 = vector.broadcast %cst_29 : f32 to vector<8x8xf32>
    %46 = arith.mulf %44, %45 : vector<8x8xf32>
    %47 = vector.broadcast %10 : vector<1x8xf32> to vector<8x8xf32>
    %48 = arith.addf %46, %47 : vector<8x8xf32>
    %c0_30 = arith.constant 0 : index
    %c1 = arith.constant 1 : index
    %49 = vector.load %arg8[%c0_30, %c1] : memref<8x4xf32, #tpu.memory_space<vmem>>, vector<8x1xf32>
    %cst_31 = arith.constant dense<0xFF800000> : vector<8xf32>
    %50 = vector.multi_reduction <maximumf>, %48, %cst_31 [1] : vector<8x8xf32> to vector<8xf32>
    %51 = vector.shape_cast %50 : vector<8xf32> to vector<8x1xf32>
    %52 = arith.maximumf %49, %51 : vector<8x1xf32>
    %53 = arith.subf %49, %52 : vector<8x1xf32>
    %54 = math.exp %53 : vector<8x1xf32>
    %55 = vector.broadcast %52 : vector<8x1xf32> to vector<8x8xf32>
    %56 = arith.subf %48, %55 : vector<8x8xf32>
    %57 = math.exp %56 : vector<8x8xf32>
    %c0_32 = arith.constant 0 : index
    %c1_33 = arith.constant 1 : index
    %58 = vector.load %arg9[%c0_32, %c1_33] : memref<8x4xf32, #tpu.memory_space<vmem>>, vector<8x1xf32>
    %59 = arith.mulf %54, %58 : vector<8x1xf32>
    %cst_34 = arith.constant dense<0.000000e+00> : vector<8xf32>
    %60 = vector.multi_reduction <add>, %57, %cst_34 [1] : vector<8x8xf32> to vector<8xf32>
    %61 = vector.shape_cast %60 : vector<8xf32> to vector<8x1xf32>
    %62 = arith.addf %59, %61 : vector<8x1xf32>
    %c0_35 = arith.constant 0 : index
    %c1_36 = arith.constant 1 : index
    %63 = vector.load %arg9[%c0_35, %c1_36] : memref<8x4xf32, #tpu.memory_space<vmem>>, vector<8x1xf32>
    tpu.vector_store %arg9[%c0_35, %c1_36], %62 {strides = array<i32>} : memref<8x4xf32, #tpu.memory_space<vmem>>, vector<8x1xf32>,
    %c0_37 = arith.constant 0 : index
    %c32 = arith.constant 32 : index
    %64 = vector.load %arg10[%c0_37, %c32] : memref<8x128xf32, #tpu.memory_space<vmem>>, vector<8x32xf32>
    %65 = vector.broadcast %54 : vector<8x1xf32> to vector<8x32xf32>
    %66 = arith.mulf %65, %64 : vector<8x32xf32>
    %67 = arith.truncf %57 : vector<8x8xf32> to vector<8x8xbf16>
    %68 = vector.extract_strided_slice %8 {offsets = [0, 32], sizes = [8, 32], strides = [1, 1]} : vector<8x128xbf16> to vector<8x32xbf16>
    %cst_38 = arith.constant dense<0.000000e+00> : vector<8x32xf32>
    %69 = tpu.matmul %67, %68, %cst_38 {dimension_numbers = #tpu.dot_dimension_numbers<[1], [0], [0], [1], [0, 0, 1, 1], [], []>} : vector<8x8xbf16>, vector<8x32xbf16>, vector<8x32xf32> -> vector<8x32xf32>
    %70 = arith.addf %66, %69 : vector<8x32xf32>
    %c0_39 = arith.constant 0 : index
    %c32_40 = arith.constant 32 : index
    %71 = vector.load %arg10[%c0_39, %c32_40] : memref<8x128xf32, #tpu.memory_space<vmem>>, vector<8x32xf32>
    tpu.vector_store %arg10[%c0_39, %c32_40], %70 {strides = array<i32>} : memref<8x128xf32, #tpu.memory_space<vmem>>, vector<8x32xf32>,
    %c0_41 = arith.constant 0 : index
    %c1_42 = arith.constant 1 : index
    %72 = vector.load %arg8[%c0_41, %c1_42] : memref<8x4xf32, #tpu.memory_space<vmem>>, vector<8x1xf32>
    tpu.vector_store %arg8[%c0_41, %c1_42], %52 {strides = array<i32>} : memref<8x4xf32, #tpu.memory_space<vmem>>, vector<8x1xf32>,
    %73 = vector.extract_strided_slice %4 {offsets = [0, 64], sizes = [8, 32], strides = [1, 1]} : vector<8x128xbf16> to vector<8x32xbf16>
    %74 = vector.extract_strided_slice %6 {offsets = [0, 64], sizes = [8, 32], strides = [1, 1]} : vector<8x128xbf16> to vector<8x32xbf16>
    %cst_43 = arith.constant dense<0.000000e+00> : vector<8x8xf32>
    %75 = tpu.matmul %73, %74, %cst_43 {dimension_numbers = #tpu.dot_dimension_numbers<[1], [1], [0], [0], [0, 0, 1, 0], [], []>} : vector<8x32xbf16>, vector<8x32xbf16>, vector<8x8xf32> -> vector<8x8xf32>
    %cst_44 = arith.constant 0.176776692 : f32
    %76 = vector.broadcast %cst_44 : f32 to vector<8x8xf32>
    %77 = arith.mulf %75, %76 : vector<8x8xf32>
    %78 = vector.broadcast %10 : vector<1x8xf32> to vector<8x8xf32>
    %79 = arith.addf %77, %78 : vector<8x8xf32>
    %c0_45 = arith.constant 0 : index
    %c2 = arith.constant 2 : index
    %80 = vector.load %arg8[%c0_45, %c2] : memref<8x4xf32, #tpu.memory_space<vmem>>, vector<8x1xf32>
    %cst_46 = arith.constant dense<0xFF800000> : vector<8xf32>
    %81 = vector.multi_reduction <maximumf>, %79, %cst_46 [1] : vector<8x8xf32> to vector<8xf32>
    %82 = vector.shape_cast %81 : vector<8xf32> to vector<8x1xf32>
    %83 = arith.maximumf %80, %82 : vector<8x1xf32>
    %84 = arith.subf %80, %83 : vector<8x1xf32>
    %85 = math.exp %84 : vector<8x1xf32>
    %86 = vector.broadcast %83 : vector<8x1xf32> to vector<8x8xf32>
    %87 = arith.subf %79, %86 : vector<8x8xf32>
    %88 = math.exp %87 : vector<8x8xf32>
    %c0_47 = arith.constant 0 : index
    %c2_48 = arith.constant 2 : index
    %89 = vector.load %arg9[%c0_47, %c2_48] : memref<8x4xf32, #tpu.memory_space<vmem>>, vector<8x1xf32>
    %90 = arith.mulf %85, %89 : vector<8x1xf32>
    %cst_49 = arith.constant dense<0.000000e+00> : vector<8xf32>
    %91 = vector.multi_reduction <add>, %88, %cst_49 [1] : vector<8x8xf32> to vector<8xf32>
    %92 = vector.shape_cast %91 : vector<8xf32> to vector<8x1xf32>
    %93 = arith.addf %90, %92 : vector<8x1xf32>
    %c0_50 = arith.constant 0 : index
    %c2_51 = arith.constant 2 : index
    %94 = vector.load %arg9[%c0_50, %c2_51] : memref<8x4xf32, #tpu.memory_space<vmem>>, vector<8x1xf32>
    tpu.vector_store %arg9[%c0_50, %c2_51], %93 {strides = array<i32>} : memref<8x4xf32, #tpu.memory_space<vmem>>, vector<8x1xf32>,
    %c0_52 = arith.constant 0 : index
    %c64 = arith.constant 64 : index
    %95 = vector.load %arg10[%c0_52, %c64] : memref<8x128xf32, #tpu.memory_space<vmem>>, vector<8x32xf32>
    %96 = vector.broadcast %85 : vector<8x1xf32> to vector<8x32xf32>
    %97 = arith.mulf %96, %95 : vector<8x32xf32>
    %98 = arith.truncf %88 : vector<8x8xf32> to vector<8x8xbf16>
    %99 = vector.extract_strided_slice %8 {offsets = [0, 64], sizes = [8, 32], strides = [1, 1]} : vector<8x128xbf16> to vector<8x32xbf16>
    %cst_53 = arith.constant dense<0.000000e+00> : vector<8x32xf32>
    %100 = tpu.matmul %98, %99, %cst_53 {dimension_numbers = #tpu.dot_dimension_numbers<[1], [0], [0], [1], [0, 0, 1, 1], [], []>} : vector<8x8xbf16>, vector<8x32xbf16>, vector<8x32xf32> -> vector<8x32xf32>
    %101 = arith.addf %97, %100 : vector<8x32xf32>
    %c0_54 = arith.constant 0 : index
    %c64_55 = arith.constant 64 : index
    %102 = vector.load %arg10[%c0_54, %c64_55] : memref<8x128xf32, #tpu.memory_space<vmem>>, vector<8x32xf32>
    tpu.vector_store %arg10[%c0_54, %c64_55], %101 {strides = array<i32>} : memref<8x128xf32, #tpu.memory_space<vmem>>, vector<8x32xf32>,
    %c0_56 = arith.constant 0 : index
    %c2_57 = arith.constant 2 : index
    %103 = vector.load %arg8[%c0_56, %c2_57] : memref<8x4xf32, #tpu.memory_space<vmem>>, vector<8x1xf32>
    tpu.vector_store %arg8[%c0_56, %c2_57], %83 {strides = array<i32>} : memref<8x4xf32, #tpu.memory_space<vmem>>, vector<8x1xf32>,
    %104 = vector.extract_strided_slice %4 {offsets = [0, 96], sizes = [8, 32], strides = [1, 1]} : vector<8x128xbf16> to vector<8x32xbf16>
    %105 = vector.extract_strided_slice %6 {offsets = [0, 96], sizes = [8, 32], strides = [1, 1]} : vector<8x128xbf16> to vector<8x32xbf16>
    %cst_58 = arith.constant dense<0.000000e+00> : vector<8x8xf32>
    %106 = tpu.matmul %104, %105, %cst_58 {dimension_numbers = #tpu.dot_dimension_numbers<[1], [1], [0], [0], [0, 0, 1, 0], [], []>} : vector<8x32xbf16>, vector<8x32xbf16>, vector<8x8xf32> -> vector<8x8xf32>
    %cst_59 = arith.constant 0.176776692 : f32
    %107 = vector.broadcast %cst_59 : f32 to vector<8x8xf32>
    %108 = arith.mulf %106, %107 : vector<8x8xf32>
    %109 = vector.broadcast %10 : vector<1x8xf32> to vector<8x8xf32>
    %110 = arith.addf %108, %109 : vector<8x8xf32>
    %c0_60 = arith.constant 0 : index
    %c3 = arith.constant 3 : index
    %111 = vector.load %arg8[%c0_60, %c3] : memref<8x4xf32, #tpu.memory_space<vmem>>, vector<8x1xf32>
    %cst_61 = arith.constant dense<0xFF800000> : vector<8xf32>
    %112 = vector.multi_reduction <maximumf>, %110, %cst_61 [1] : vector<8x8xf32> to vector<8xf32>
    %113 = vector.shape_cast %112 : vector<8xf32> to vector<8x1xf32>
    %114 = arith.maximumf %111, %113 : vector<8x1xf32>
    %115 = arith.subf %111, %114 : vector<8x1xf32>
    %116 = math.exp %115 : vector<8x1xf32>
    %117 = vector.broadcast %114 : vector<8x1xf32> to vector<8x8xf32>
    %118 = arith.subf %110, %117 : vector<8x8xf32>
    %119 = math.exp %118 : vector<8x8xf32>
    %c0_62 = arith.constant 0 : index
    %c3_63 = arith.constant 3 : index
    %120 = vector.load %arg9[%c0_62, %c3_63] : memref<8x4xf32, #tpu.memory_space<vmem>>, vector<8x1xf32>
    %121 = arith.mulf %116, %120 : vector<8x1xf32>
    %cst_64 = arith.constant dense<0.000000e+00> : vector<8xf32>
    %122 = vector.multi_reduction <add>, %119, %cst_64 [1] : vector<8x8xf32> to vector<8xf32>
    %123 = vector.shape_cast %122 : vector<8xf32> to vector<8x1xf32>
    %124 = arith.addf %121, %123 : vector<8x1xf32>
    %c0_65 = arith.constant 0 : index
    %c3_66 = arith.constant 3 : index
    %125 = vector.load %arg9[%c0_65, %c3_66] : memref<8x4xf32, #tpu.memory_space<vmem>>, vector<8x1xf32>
    tpu.vector_store %arg9[%c0_65, %c3_66], %124 {strides = array<i32>} : memref<8x4xf32, #tpu.memory_space<vmem>>, vector<8x1xf32>,
    %c0_67 = arith.constant 0 : index
    %c96 = arith.constant 96 : index
    %126 = vector.load %arg10[%c0_67, %c96] : memref<8x128xf32, #tpu.memory_space<vmem>>, vector<8x32xf32>
    %127 = vector.broadcast %116 : vector<8x1xf32> to vector<8x32xf32>
    %128 = arith.mulf %127, %126 : vector<8x32xf32>
    %129 = arith.truncf %119 : vector<8x8xf32> to vector<8x8xbf16>
    %130 = vector.extract_strided_slice %8 {offsets = [0, 96], sizes = [8, 32], strides = [1, 1]} : vector<8x128xbf16> to vector<8x32xbf16>
    %cst_68 = arith.constant dense<0.000000e+00> : vector<8x32xf32>
    %131 = tpu.matmul %129, %130, %cst_68 {dimension_numbers = #tpu.dot_dimension_numbers<[1], [0], [0], [1], [0, 0, 1, 1], [], []>} : vector<8x8xbf16>, vector<8x32xbf16>, vector<8x32xf32> -> vector<8x32xf32>
    %132 = arith.addf %128, %131 : vector<8x32xf32>
    %c0_69 = arith.constant 0 : index
    %c96_70 = arith.constant 96 : index
    %133 = vector.load %arg10[%c0_69, %c96_70] : memref<8x128xf32, #tpu.memory_space<vmem>>, vector<8x32xf32>
    tpu.vector_store %arg10[%c0_69, %c96_70], %132 {strides = array<i32>} : memref<8x128xf32, #tpu.memory_space<vmem>>, vector<8x32xf32>,
    %c0_71 = arith.constant 0 : index
    %c3_72 = arith.constant 3 : index
    %134 = vector.load %arg8[%c0_71, %c3_72] : memref<8x4xf32, #tpu.memory_space<vmem>>, vector<8x1xf32>
    tpu.vector_store %arg8[%c0_71, %c3_72], %114 {strides = array<i32>} : memref<8x4xf32, #tpu.memory_space<vmem>>, vector<8x1xf32>,
    %c0_i32_73 = arith.constant 0 : i32
    %135 = arith.cmpi eq, %arg2, %c0_i32_73 : i32
    %136 = arith.extui %135 : i1 to i32
    %c0_i32_74 = arith.constant 0 : i32
    %137 = arith.cmpi ne, %136, %c0_i32_74 : i32
    scf.if %137 {
      %c0_75 = arith.constant 0 : index
      %c0_76 = arith.constant 0 : index
      %138 = vector.load %arg9[%c0_75, %c0_76] : memref<8x4xf32, #tpu.memory_space<vmem>>, vector<8x1xf32>
      %139 = tpu.reciprocal %138 {approx = true} : vector<8x1xf32> -> vector<8x1xf32>
      %c0_77 = arith.constant 0 : index
      %c0_78 = arith.constant 0 : index
      %140 = vector.load %arg10[%c0_77, %c0_78] : memref<8x128xf32, #tpu.memory_space<vmem>>, vector<8x32xf32>
      %141 = vector.broadcast %139 : vector<8x1xf32> to vector<8x32xf32>
      %142 = arith.mulf %140, %141 : vector<8x32xf32>
      %143 = arith.truncf %142 : vector<8x32xf32> to vector<8x32xbf16>
      %c0_79 = arith.constant 0 : index
      %c0_80 = arith.constant 0 : index
      %c0_81 = arith.constant 0 : index
      %144 = vector.load %arg7[%c0_79, %c0_80, %c0_81] : memref<1x8x128xbf16, #tpu.memory_space<vmem>>, vector<1x8x32xbf16>
      %145 = vector.shape_cast %144 : vector<1x8x32xbf16> to vector<8x32xbf16>
      %146 = vector.shape_cast %143 : vector<8x32xbf16> to vector<1x8x32xbf16>
      tpu.vector_store %arg7[%c0_79, %c0_80, %c0_81], %146 {strides = array<i32>} : memref<1x8x128xbf16, #tpu.memory_space<vmem>>, vector<1x8x32xbf16>,
      %c0_82 = arith.constant 0 : index
      %c1_83 = arith.constant 1 : index
      %147 = vector.load %arg9[%c0_82, %c1_83] : memref<8x4xf32, #tpu.memory_space<vmem>>, vector<8x1xf32>
      %148 = tpu.reciprocal %147 {approx = true} : vector<8x1xf32> -> vector<8x1xf32>
      %c0_84 = arith.constant 0 : index
      %c32_85 = arith.constant 32 : index
      %149 = vector.load %arg10[%c0_84, %c32_85] : memref<8x128xf32, #tpu.memory_space<vmem>>, vector<8x32xf32>
      %150 = vector.broadcast %148 : vector<8x1xf32> to vector<8x32xf32>
      %151 = arith.mulf %149, %150 : vector<8x32xf32>
      %152 = arith.truncf %151 : vector<8x32xf32> to vector<8x32xbf16>
      %c0_86 = arith.constant 0 : index
      %c0_87 = arith.constant 0 : index
      %c32_88 = arith.constant 32 : index
      %153 = vector.load %arg7[%c0_86, %c0_87, %c32_88] : memref<1x8x128xbf16, #tpu.memory_space<vmem>>, vector<1x8x32xbf16>
      %154 = vector.shape_cast %153 : vector<1x8x32xbf16> to vector<8x32xbf16>
      %155 = vector.shape_cast %152 : vector<8x32xbf16> to vector<1x8x32xbf16>
      tpu.vector_store %arg7[%c0_86, %c0_87, %c32_88], %155 {strides = array<i32>} : memref<1x8x128xbf16, #tpu.memory_space<vmem>>, vector<1x8x32xbf16>,
      %c0_89 = arith.constant 0 : index
      %c2_90 = arith.constant 2 : index
      %156 = vector.load %arg9[%c0_89, %c2_90] : memref<8x4xf32, #tpu.memory_space<vmem>>, vector<8x1xf32>
      %157 = tpu.reciprocal %156 {approx = true} : vector<8x1xf32> -> vector<8x1xf32>
      %c0_91 = arith.constant 0 : index
      %c64_92 = arith.constant 64 : index
      %158 = vector.load %arg10[%c0_91, %c64_92] : memref<8x128xf32, #tpu.memory_space<vmem>>, vector<8x32xf32>
      %159 = vector.broadcast %157 : vector<8x1xf32> to vector<8x32xf32>
      %160 = arith.mulf %158, %159 : vector<8x32xf32>
      %161 = arith.truncf %160 : vector<8x32xf32> to vector<8x32xbf16>
      %c0_93 = arith.constant 0 : index
      %c0_94 = arith.constant 0 : index
      %c64_95 = arith.constant 64 : index
      %162 = vector.load %arg7[%c0_93, %c0_94, %c64_95] : memref<1x8x128xbf16, #tpu.memory_space<vmem>>, vector<1x8x32xbf16>
      %163 = vector.shape_cast %162 : vector<1x8x32xbf16> to vector<8x32xbf16>
      %164 = vector.shape_cast %161 : vector<8x32xbf16> to vector<1x8x32xbf16>
      tpu.vector_store %arg7[%c0_93, %c0_94, %c64_95], %164 {strides = array<i32>} : memref<1x8x128xbf16, #tpu.memory_space<vmem>>, vector<1x8x32xbf16>,
      %c0_96 = arith.constant 0 : index
      %c3_97 = arith.constant 3 : index
      %165 = vector.load %arg9[%c0_96, %c3_97] : memref<8x4xf32, #tpu.memory_space<vmem>>, vector<8x1xf32>
      %166 = tpu.reciprocal %165 {approx = true} : vector<8x1xf32> -> vector<8x1xf32>
      %c0_98 = arith.constant 0 : index
      %c96_99 = arith.constant 96 : index
      %167 = vector.load %arg10[%c0_98, %c96_99] : memref<8x128xf32, #tpu.memory_space<vmem>>, vector<8x32xf32>
      %168 = vector.broadcast %166 : vector<8x1xf32> to vector<8x32xf32>
      %169 = arith.mulf %167, %168 : vector<8x32xf32>
      %170 = arith.truncf %169 : vector<8x32xf32> to vector<8x32xbf16>
      %c0_100 = arith.constant 0 : index
      %c0_101 = arith.constant 0 : index
      %c96_102 = arith.constant 96 : index
      %171 = vector.load %arg7[%c0_100, %c0_101, %c96_102] : memref<1x8x128xbf16, #tpu.memory_space<vmem>>, vector<1x8x32xbf16>
      %172 = vector.shape_cast %171 : vector<1x8x32xbf16> to vector<8x32xbf16>
      %173 = vector.shape_cast %170 : vector<8x32xbf16> to vector<1x8x32xbf16>
      tpu.vector_store %arg7[%c0_100, %c0_101, %c96_102], %173 {strides = array<i32>} : memref<1x8x128xbf16, #tpu.memory_space<vmem>>, vector<1x8x32xbf16>,
    } else {
    }
    return
  }
  func.func @transform_0(%arg0: i32, %arg1: i32, %arg2: i32) -> (i32, i32, i32) {
    %c0_i32 = arith.constant 0 : i32
    %c0_i32_0 = arith.constant 0 : i32
    return %arg0, %arg1, %c0_i32 : i32, i32, i32
  }
  func.func @transform_1(%arg0: i32, %arg1: i32, %arg2: i32) -> (i32, i32, i32) {
    %c0_i32 = arith.constant 0 : i32
    %c0_i32_0 = arith.constant 0 : i32
    return %arg0, %arg2, %c0_i32 : i32, i32, i32
  }
  func.func @transform_2(%arg0: i32, %arg1: i32, %arg2: i32) -> (i32, i32, i32) {
    %c1_i32 = arith.constant 1 : i32
    %c0_i32 = arith.constant 0 : i32
    return %arg0, %arg2, %c1_i32 : i32, i32, i32
  }
  func.func @transform_3(%arg0: i32, %arg1: i32, %arg2: i32) -> (i32, i32, i32) {
    %c0_i32 = arith.constant 0 : i32
    %c0_i32_0 = arith.constant 0 : i32
    return %arg0, %c0_i32, %arg2 : i32, i32, i32
  }
  func.func @transform_4(%arg0: i32, %arg1: i32, %arg2: i32) -> (i32, i32, i32) {
    %c0_i32 = arith.constant 0 : i32
    %c0_i32_0 = arith.constant 0 : i32
    return %arg0, %arg1, %c0_i32 : i32, i32, i32
  }
}

</mosaic_0001>

<llo_original>
// kernel: transformer_translator_forward.35
$region0: #{transformer_translator_forward.35}
  #allocation0 [shape = 'u32[]', space=smem, size = 0x4, offset = 0x4, fixed_abs, tag = 'smem constant byte address 0x4 - core index']
  #allocation1 [shape = 'u32[72,128]{1,0:T(1,128)}', space=vmem, size = 0x9000, scoped, tag = 'internal scratch']
  #allocation2 [shape = 'f32[64,128]{1,0:T(8,128)}', space=vmem, size = 0x8000, scoped, tag = 'scratch operand']
  %s0 = inlined_call_operand.vmem [shape: bf16[64,128], index: 0, kind: input, shape index: {}]
  %s1 = inlined_call_operand.hbm [shape: bf16[128,128], index: 1, kind: input, shape index: {}]
  %s2 = inlined_call_operand.vmem [shape: f32[1,128], index: 2, kind: input, shape index: {}]
  %s3 = inlined_call_operand.vmem [shape: bf16[64,128], index: 3, kind: input, shape index: {}]
  %s4 = inlined_call_operand.vmem [shape: f32[1,128], index: 4, kind: input, shape index: {}]
  %s5 = inlined_call_operand.vmem [shape: f32[1,128], index: 5, kind: input, shape index: {}]
  %s6 = inlined_call_operand.vmem [shape: bf16[64,128], index: 6, kind: output, shape index: {}]
  %s7 = sld [smem:[#allocation0]]
  $region46: #{transformer_translator_forward.35} parent=0
    _
  %s9 = ssub.s32 1, %s7
  %s10 = scalar_select 0, %s9, %s7
  $region1: #{transformer_translator_forward.35} parent=0
    #allocation3 [shape = 'u8[32768]{0}', space=vmem, size = 0x8000, scoped, tag = 'input window, operand 1, single buffered']
    #allocation4 [shape = 's32[1]{0}', space=sflag, size = 0x4, scoped, tag = 'scoped memory for transformer_translator_forward.35']
    %11 = vsyncpa [#allocation4], 0
    // Predicated region
    $region2: #{transformer_translator_forward.35} parent=1 // pred_check
      _
    $region3: #{transformer_translator_forward.35} parent=1 // pred_check_branch
      %13 = sbr.rel (0) target = $region5
    $region4: #{transformer_translator_forward.35} parent=1 // pred_region
      _
    $region5: #{transformer_translator_forward.35} parent=1 // pred_fallthru
      _
    // Predicated region
    $region6: #{transformer_translator_forward.35} parent=1 // pred_check
      _
    $region7: #{transformer_translator_forward.35} parent=1 // pred_check_branch
      %15 = sbr.rel (0) target = $region9
    $region8: #{transformer_translator_forward.35} parent=1 // pred_region
      %17 = vsyncadd [#allocation4], 0
      %s18 = sshll.u32 %s1, 4
      %s19 = int_to_ptr.hbm [resolvable:$true] %s18
      %s20 = sshll.u32 [#allocation3], 4
      %s21 = int_to_ptr.vmem [resolvable:$true] %s20
      %26 = dma.hbm_to_vmem [thread:$0]  %s19, 1024, %s21, [#allocation4], 64, 64, 4
    $region9: #{transformer_translator_forward.35} parent=1 // pred_fallthru
      _
    // Predicated region
    $region10: #{transformer_translator_forward.35} parent=1 // pred_check
      _
    $region11: #{transformer_translator_forward.35} parent=1 // pred_check_branch
      %28 = sbr.rel (0) target = $region13
    $region12: #{transformer_translator_forward.35} parent=1 // pred_region
      _
    $region13: #{transformer_translator_forward.35} parent=1 // pred_fallthru
      _
    // Predicated region
    $region14: #{transformer_translator_forward.35} parent=1 // pred_check
      _
    $region15: #{transformer_translator_forward.35} parent=1 // pred_check_branch
      %30 = sbr.rel (0) target = $region17
    $region16: #{transformer_translator_forward.35} parent=1 // pred_region
      _
    $region17: #{transformer_translator_forward.35} parent=1 // pred_fallthru
      _
    // Predicated region
    $region18: #{transformer_translator_forward.35} parent=1 // pred_check
      _
    $region19: #{transformer_translator_forward.35} parent=1 // pred_check_branch
      %32 = sbr.rel (0) target = $region21
    $region20: #{transformer_translator_forward.35} parent=1 // pred_region
      _
    $region21: #{transformer_translator_forward.35} parent=1 // pred_fallthru
      _
    // Predicated region
    $region22: #{transformer_translator_forward.35} parent=1 // pred_check
      _
    $region23: #{transformer_translator_forward.35} parent=1 // pred_check_branch
      %34 = sbr.rel (0) target = $region25
    $region24: #{transformer_translator_forward.35} parent=1 // pred_region
      _
    $region25: #{transformer_translator_forward.35} parent=1 // pred_fallthru
      _
    // Predicated region
    $region26: #{transformer_translator_forward.35} parent=1 // pred_check
      _
    $region27: #{transformer_translator_forward.35} parent=1 // pred_check_branch
      %36 = sbr.rel (0) target = $region29
    $region28: #{transformer_translator_forward.35} parent=1 // pred_region
      %38 = dma.done [#allocation4], 1024
    $region29: #{transformer_translator_forward.35} parent=1 // pred_fallthru
      _
    %p39 = scmp.eq.s32.totalorder 0, 0
    // Predicated region
    $region30: #{transformer_translator_forward.35} parent=1 // pred_check
      %p40 = pneg %p39
    $region31: #{transformer_translator_forward.35} parent=1 // pred_check_branch
      %42 = sbr.rel (%p40) target = $region33
    $region32: #{transformer_translator_forward.35} parent=1 // pred_region
      %43 = vst [vmem:[#allocation2] sm:$0xff] 0.0
      %44 = vst [vmem:[#allocation2 + $0x8] sm:$0xff] 0.0
      %45 = vst [vmem:[#allocation2 + $0x10] sm:$0xff] 0.0
      %46 = vst [vmem:[#allocation2 + $0x18] sm:$0xff] 0.0
      %47 = vst [vmem:[#allocation2 + $0x20] sm:$0xff] 0.0
      %48 = vst [vmem:[#allocation2 + $0x28] sm:$0xff] 0.0
      %49 = vst [vmem:[#allocation2 + $0x30] sm:$0xff] 0.0
      %50 = vst [vmem:[#allocation2 + $0x38] sm:$0xff] 0.0
    $region33: #{transformer_translator_forward.35} parent=1 // pred_fallthru
      _
    %v51 = vld [vmem:[#allocation2] sm:$0xff]
    %v52 = vld [vmem:[#allocation2 + $0x8] sm:$0xff]
    %v53 = vld [vmem:[#allocation2 + $0x10] sm:$0xff]
    %v54 = vld [vmem:[#allocation2 + $0x18] sm:$0xff]
    %v55 = vld [vmem:[#allocation2 + $0x20] sm:$0xff]
    %v56 = vld [vmem:[#allocation2 + $0x28] sm:$0xff]
    %v57 = vld [vmem:[#allocation2 + $0x30] sm:$0xff]
    %v58 = vld [vmem:[#allocation2 + $0x38] sm:$0xff]
    %v59 = vld [vmem:[%s0] sm:$0xf]
    %v60 = vld [vmem:[%s0 + $0x4] sm:$0xf]
    %v61 = vld [vmem:[%s0 + $0x8] sm:$0xf]
    %v62 = vld [vmem:[%s0 + $0xc] sm:$0xf]
    %v63 = vld [vmem:[%s0 + $0x10] sm:$0xf]
    %v64 = vld [vmem:[%s0 + $0x14] sm:$0xf]
    %v65 = vld [vmem:[%s0 + $0x18] sm:$0xf]
    %v66 = vld [vmem:[%s0 + $0x1c] sm:$0xf]
    %v67 = vld [vmem:[#allocation3] sm:$0xf]
    %v68 = vld [vmem:[#allocation3 + $0x4] sm:$0xf]
    %v69 = vld [vmem:[#allocation3 + $0x8] sm:$0xf]
    %v70 = vld [vmem:[#allocation3 + $0xc] sm:$0xf]
    %v71 = vld [vmem:[#allocation3 + $0x10] sm:$0xf]
    %v72 = vld [vmem:[#allocation3 + $0x14] sm:$0xf]
    %v73 = vld [vmem:[#allocation3 + $0x18] sm:$0xf]
    %v74 = vld [vmem:[#allocation3 + $0x1c] sm:$0xf]
    %v75 = vld [vmem:[#allocation3 + $0x20] sm:$0xf]
    %v76 = vld [vmem:[#allocation3 + $0x24] sm:$0xf]
    %v77 = vld [vmem:[#allocation3 + $0x28] sm:$0xf]
    %v78 = vld [vmem:[#allocation3 + $0x2c] sm:$0xf]
    %v79 = vld [vmem:[#allocation3 + $0x30] sm:$0xf]
    %v80 = vld [vmem:[#allocation3 + $0x34] sm:$0xf]
    %v81 = vld [vmem:[#allocation3 + $0x38] sm:$0xf]
    %v82 = vld [vmem:[#allocation3 + $0x3c] sm:$0xf]
    %v91 = vunpack.c.l.b16 %v59
    %v92 = vunpack.c.l.b16 %v60
    %v93 = vunpack.c.l.b16 %v61
    %v94 = vunpack.c.l.b16 %v62
    %v95 = vunpack.c.l.b16 %v63
    %v96 = vunpack.c.l.b16 %v64
    %v97 = vunpack.c.l.b16 %v65
    %v98 = vunpack.c.l.b16 %v66
    %v99 = vpack.c.b16 %v92, %v91
    %v100 = vpack.c.b16 %v94, %v93
    %v101 = vpack.c.b16 %v96, %v95
    %v102 = vpack.c.b16 %v98, %v97
    %v123 = vunpack.c.l.b16 %v67
    %v124 = vunpack.c.l.b16 %v68
    %v125 = vunpack.c.l.b16 %v69
    %v126 = vunpack.c.l.b16 %v70
    %v127 = vunpack.c.l.b16 %v71
    %v128 = vunpack.c.l.b16 %v72
    %v129 = vunpack.c.l.b16 %v73
    %v130 = vunpack.c.l.b16 %v74
    %v131 = vunpack.c.l.b16 %v75
    %v132 = vunpack.c.l.b16 %v76
    %v133 = vunpack.c.l.b16 %v77
    %v134 = vunpack.c.l.b16 %v78
    %v135 = vunpack.c.l.b16 %v79
    %v136 = vunpack.c.l.b16 %v80
    %v137 = vunpack.c.l.b16 %v81
    %v138 = vunpack.c.l.b16 %v82
    %v139 = vpack.c.b16 %v124, %v123
    %v140 = vpack.c.b16 %v126, %v125
    %v141 = vpack.c.b16 %v128, %v127
    %v142 = vpack.c.b16 %v130, %v129
    %v143 = vpack.c.b16 %v132, %v131
    %v144 = vpack.c.b16 %v134, %v133
    %v145 = vpack.c.b16 %v136, %v135
    %v146 = vpack.c.b16 %v138, %v137
    %155 = vmatpush.bf16.msra.mxu0 %v146
    %156 = vmatpush.bf16.msra.mxu0 %v145
    %157 = vmatpush.bf16.msra.mxu0 %v144
    %158 = vmatpush.bf16.msra.mxu0 %v143
    %159 = vmatpush.bf16.msra.mxu0 %v142
    %160 = vmatpush.bf16.msra.mxu0 %v141
    %161 = vmatpush.bf16.msra.mxu0 %v140
    %162 = vmatpush.bf16.msra.mxu0 %v139
    %163 = vmatmul.bf16.gmra.mxu0 %v99
    %v164 = vpop.f32.mrf.mxu0
    %v165 = vadd.f32 0.0, %v164
    %v166 = vpop.f32.mrf.mxu0
    %v167 = vadd.f32 0.0, %v166
    %168 = vmatmul.bf16.gmra.mxu0 %v100
    %v169 = vpop.f32.mrf.mxu0
    %v170 = vadd.f32 0.0, %v169
    %v171 = vpop.f32.mrf.mxu0
    %v172 = vadd.f32 0.0, %v171
    %173 = vmatmul.bf16.gmra.mxu0 %v101
    %v174 = vpop.f32.mrf.mxu0
    %v175 = vadd.f32 0.0, %v174
    %v176 = vpop.f32.mrf.mxu0
    %v177 = vadd.f32 0.0, %v176
    %178 = vmatmul.bf16.gmra.mxu0 %v102
    %v179 = vpop.f32.mrf.mxu0
    %v180 = vadd.f32 0.0, %v179
    %v181 = vpop.f32.mrf.mxu0
    %v182 = vadd.f32 0.0, %v181
    %183 = vdwg.mxu0
    %v184 = vadd.f32 %v51, %v165
    %v185 = vadd.f32 %v52, %v167
    %v186 = vadd.f32 %v53, %v170
    %v187 = vadd.f32 %v54, %v172
    %v188 = vadd.f32 %v55, %v175
    %v189 = vadd.f32 %v56, %v177
    %v190 = vadd.f32 %v57, %v180
    %v191 = vadd.f32 %v58, %v182
    %192 = vst [vmem:[#allocation2] sm:$0xff] %v184
    %193 = vst [vmem:[#allocation2 + $0x8] sm:$0xff] %v185
    %194 = vst [vmem:[#allocation2 + $0x10] sm:$0xff] %v186
    %195 = vst [vmem:[#allocation2 + $0x18] sm:$0xff] %v187
    %196 = vst [vmem:[#allocation2 + $0x20] sm:$0xff] %v188
    %197 = vst [vmem:[#allocation2 + $0x28] sm:$0xff] %v189
    %198 = vst [vmem:[#allocation2 + $0x30] sm:$0xff] %v190
    %199 = vst [vmem:[#allocation2 + $0x38] sm:$0xff] %v191
    // Predicated region
    $region34: #{transformer_translator_forward.35} parent=1 // pred_check
      %p200 = pneg %p39
    $region35: #{transformer_translator_forward.35} parent=1 // pred_check_branch
      %202 = sbr.rel (%p200) target = $region37
    $region36: #{transformer_translator_forward.35} parent=1 // pred_region
      %v203 = vld [vmem:[#allocation2] sm:$0xff]
      %v204 = vld [vmem:[#allocation2 + $0x8] sm:$0xff]
      %v205 = vld [vmem:[#allocation2 + $0x10] sm:$0xff]
      %v206 = vld [vmem:[#allocation2 + $0x18] sm:$0xff]
      %v207 = vld [vmem:[#allocation2 + $0x20] sm:$0xff]
      %v208 = vld [vmem:[#allocation2 + $0x28] sm:$0xff]
      %v209 = vld [vmem:[#allocation2 + $0x30] sm:$0xff]
      %v210 = vld [vmem:[#allocation2 + $0x38] sm:$0xff]
      %v211 = vld [vmem:[%s2] sm:$0x1]
      %v213 = vperm.slane %v211, 0
      %v215 = vadd.f32 %v203, %v213
      %v216 = vadd.f32 %v204, %v213
      %v217 = vadd.f32 %v205, %v213
      %v218 = vadd.f32 %v206, %v213
      %v219 = vadd.f32 %v207, %v213
      %v220 = vadd.f32 %v208, %v213
      %v221 = vadd.f32 %v209, %v213
      %v222 = vadd.f32 %v210, %v213
      %v223 = vld [vmem:[%s3] sm:$0xf]
      %v224 = vld [vmem:[%s3 + $0x4] sm:$0xf]
      %v225 = vld [vmem:[%s3 + $0x8] sm:$0xf]
      %v226 = vld [vmem:[%s3 + $0xc] sm:$0xf]
      %v227 = vld [vmem:[%s3 + $0x10] sm:$0xf]
      %v228 = vld [vmem:[%s3 + $0x14] sm:$0xf]
      %v229 = vld [vmem:[%s3 + $0x18] sm:$0xf]
      %v230 = vld [vmem:[%s3 + $0x1c] sm:$0xf]
      %v231 = vunpack.c.l.bf16 %v223
      %v232 = vunpack.c.l.bf16 %v224
      %v233 = vunpack.c.l.bf16 %v225
      %v234 = vunpack.c.l.bf16 %v226
      %v235 = vunpack.c.l.bf16 %v227
      %v236 = vunpack.c.l.bf16 %v228
      %v237 = vunpack.c.l.bf16 %v229
      %v238 = vunpack.c.l.bf16 %v230
      %v239 = vadd.f32 %v215, %v231
      %v240 = vadd.f32 %v216, %v232
      %v241 = vadd.f32 %v217, %v233
      %v242 = vadd.f32 %v218, %v234
      %v243 = vadd.f32 %v219, %v235
      %v244 = vadd.f32 %v220, %v236
      %v245 = vadd.f32 %v221, %v237
      %v246 = vadd.f32 %v222, %v238
      %247 = vadd.xlane.f32.xlu0 %v239
      %v248 = vpop.xlane.xlu0 %247
      %249 = vadd.xlane.f32.xlu0 %v240
      %v250 = vpop.xlane.xlu0 %249
      %251 = vadd.xlane.f32.xlu0 %v241
      %v252 = vpop.xlane.xlu0 %251
      %253 = vadd.xlane.f32.xlu0 %v242
      %v254 = vpop.xlane.xlu0 %253
      %255 = vadd.xlane.f32.xlu0 %v243
      %v256 = vpop.xlane.xlu0 %255
      %257 = vadd.xlane.f32.xlu0 %v244
      %v258 = vpop.xlane.xlu0 %257
      %259 = vadd.xlane.f32.xlu0 %v245
      %v260 = vpop.xlane.xlu0 %259
      %261 = vadd.xlane.f32.xlu0 %v246
      %v262 = vpop.xlane.xlu0 %261
      %v263 = vrcp.pop 128.0
      %v264 = vmul.f32 128.0, %v263
      %v265 = vsub.f32 1.0, %v264
      %v266 = vmul.f32 %v263, %v265
      %v267 = vadd.f32 %v263, %v266
      %vm268 = vweird.f32 %v263
      %v269 = vsel %vm268, %v263, %v267
      %v270 = vmul.f32 %v248, %v269
      %v271 = vmul.f32 %v250, %v269
      %v272 = vmul.f32 %v252, %v269
      %v273 = vmul.f32 %v254, %v269
      %v274 = vmul.f32 %v256, %v269
      %v275 = vmul.f32 %v258, %v269
      %v276 = vmul.f32 %v260, %v269
      %v277 = vmul.f32 %v262, %v269
      %v278 = vsub.f32 %v239, %v270
      %v279 = vsub.f32 %v240, %v271
      %v280 = vsub.f32 %v241, %v272
      %v281 = vsub.f32 %v242, %v273
      %v282 = vsub.f32 %v243, %v274
      %v283 = vsub.f32 %v244, %v275
      %v284 = vsub.f32 %v245, %v276
      %v285 = vsub.f32 %v246, %v277
      %v286 = vmul.f32 %v278, %v278
      %v287 = vmul.f32 %v279, %v279
      %v288 = vmul.f32 %v280, %v280
      %v289 = vmul.f32 %v281, %v281
      %v290 = vmul.f32 %v282, %v282
      %v291 = vmul.f32 %v283, %v283
      %v292 = vmul.f32 %v284, %v284
      %v293 = vmul.f32 %v285, %v285
      %294 = vadd.xlane.f32.xlu0 %v286
      %v295 = vpop.xlane.xlu0 %294
      %296 = vadd.xlane.f32.xlu0 %v287
      %v297 = vpop.xlane.xlu0 %296
      %298 = vadd.xlane.f32.xlu0 %v288
      %v299 = vpop.xlane.xlu0 %298
      %300 = vadd.xlane.f32.xlu0 %v289
      %v301 = vpop.xlane.xlu0 %300
      %302 = vadd.xlane.f32.xlu0 %v290
      %v303 = vpop.xlane.xlu0 %302
      %304 = vadd.xlane.f32.xlu0 %v291
      %v305 = vpop.xlane.xlu0 %304
      %306 = vadd.xlane.f32.xlu0 %v292
      %v307 = vpop.xlane.xlu0 %306
      %308 = vadd.xlane.f32.xlu0 %v293
      %v309 = vpop.xlane.xlu0 %308
      %v310 = vmul.f32 %v295, %v269
      %v311 = vmul.f32 %v297, %v269
      %v312 = vmul.f32 %v299, %v269
      %v313 = vmul.f32 %v301, %v269
      %v314 = vmul.f32 %v303, %v269
      %v315 = vmul.f32 %v305, %v269
      %v316 = vmul.f32 %v307, %v269
      %v317 = vmul.f32 %v309, %v269
      %v318 = vadd.f32 %v310, 1e-05
      %v319 = vadd.f32 %v311, 1e-05
      %v320 = vadd.f32 %v312, 1e-05
      %v321 = vadd.f32 %v313, 1e-05
      %v322 = vadd.f32 %v314, 1e-05
      %v323 = vadd.f32 %v315, 1e-05
      %v324 = vadd.f32 %v316, 1e-05
      %v325 = vadd.f32 %v317, 1e-05
      %v326 = vrsqrt.pop %v318
      %v327 = vmul.f32 %v326, %v318
      %v328 = vmul.f32 %v327, %v326
      %v329 = vmul.f32 0.5, %v328
      %v330 = vsub.f32 1.5, %v329
      %v331 = vmul.f32 %v326, %v330
      %vm332 = vweird.f32 %v318
      %vm333 = vweird.f32 %v326
      %vm334 = vmor %vm332, %vm333
      %v335 = vsel %vm334, %v326, %v331
      %v336 = vrsqrt.pop %v319
      %v337 = vmul.f32 %v336, %v319
      %v338 = vmul.f32 %v337, %v336
      %v339 = vmul.f32 0.5, %v338
      %v340 = vsub.f32 1.5, %v339
      %v341 = vmul.f32 %v336, %v340
      %vm342 = vweird.f32 %v319
      %vm343 = vweird.f32 %v336
      %vm344 = vmor %vm342, %vm343
      %v345 = vsel %vm344, %v336, %v341
      %v346 = vrsqrt.pop %v320
      %v347 = vmul.f32 %v346, %v320
      %v348 = vmul.f32 %v347, %v346
      %v349 = vmul.f32 0.5, %v348
      %v350 = vsub.f32 1.5, %v349
      %v351 = vmul.f32 %v346, %v350
      %vm352 = vweird.f32 %v320
      %vm353 = vweird.f32 %v346
      %vm354 = vmor %vm352, %vm353
      %v355 = vsel %vm354, %v346, %v351
      %v356 = vrsqrt.pop %v321
      %v357 = vmul.f32 %v356, %v321
      %v358 = vmul.f32 %v357, %v356
      %v359 = vmul.f32 0.5, %v358
      %v360 = vsub.f32 1.5, %v359
      %v361 = vmul.f32 %v356, %v360
      %vm362 = vweird.f32 %v321
      %vm363 = vweird.f32 %v356
      %vm364 = vmor %vm362, %vm363
      %v365 = vsel %vm364, %v356, %v361
      %v366 = vrsqrt.pop %v322
      %v367 = vmul.f32 %v366, %v322
      %v368 = vmul.f32 %v367, %v366
      %v369 = vmul.f32 0.5, %v368
      %v370 = vsub.f32 1.5, %v369
      %v371 = vmul.f32 %v366, %v370
      %vm372 = vweird.f32 %v322
      %vm373 = vweird.f32 %v366
      %vm374 = vmor %vm372, %vm373
      %v375 = vsel %vm374, %v366, %v371
      %v376 = vrsqrt.pop %v323
      %v377 = vmul.f32 %v376, %v323
      %v378 = vmul.f32 %v377, %v376
      %v379 = vmul.f32 0.5, %v378
      %v380 = vsub.f32 1.5, %v379
      %v381 = vmul.f32 %v376, %v380
      %vm382 = vweird.f32 %v323
      %vm383 = vweird.f32 %v376
      %vm384 = vmor %vm382, %vm383
      %v385 = vsel %vm384, %v376, %v381
      %v386 = vrsqrt.pop %v324
      %v387 = vmul.f32 %v386, %v324
      %v388 = vmul.f32 %v387, %v386
      %v389 = vmul.f32 0.5, %v388
      %v390 = vsub.f32 1.5, %v389
      %v391 = vmul.f32 %v386, %v390
      %vm392 = vweird.f32 %v324
      %vm393 = vweird.f32 %v386
      %vm394 = vmor %vm392, %vm393
      %v395 = vsel %vm394, %v386, %v391
      %v396 = vrsqrt.pop %v325
      %v397 = vmul.f32 %v396, %v325
      %v398 = vmul.f32 %v397, %v396
      %v399 = vmul.f32 0.5, %v398
      %v400 = vsub.f32 1.5, %v399
      %v401 = vmul.f32 %v396, %v400
      %vm402 = vweird.f32 %v325
      %vm403 = vweird.f32 %v396
      %vm404 = vmor %vm402, %vm403
      %v405 = vsel %vm404, %v396, %v401
      %v406 = vmul.f32 %v278, %v335
      %v407 = vmul.f32 %v279, %v345
      %v408 = vmul.f32 %v280, %v355
      %v409 = vmul.f32 %v281, %v365
      %v410 = vmul.f32 %v282, %v375
      %v411 = vmul.f32 %v283, %v385
      %v412 = vmul.f32 %v284, %v395
      %v413 = vmul.f32 %v285, %v405
      %v414 = vld [vmem:[%s4] sm:$0x1]
      %v416 = vperm.slane %v414, 0
      %v418 = vmul.f32 %v406, %v416
      %v419 = vmul.f32 %v407, %v416
      %v420 = vmul.f32 %v408, %v416
      %v421 = vmul.f32 %v409, %v416
      %v422 = vmul.f32 %v410, %v416
      %v423 = vmul.f32 %v411, %v416
      %v424 = vmul.f32 %v412, %v416
      %v425 = vmul.f32 %v413, %v416
      %v426 = vld [vmem:[%s5] sm:$0x1]
      %v428 = vperm.slane %v426, 0
      %v430 = vadd.f32 %v418, %v428
      %v431 = vadd.f32 %v419, %v428
      %v432 = vadd.f32 %v420, %v428
      %v433 = vadd.f32 %v421, %v428
      %v434 = vadd.f32 %v422, %v428
      %v435 = vadd.f32 %v423, %v428
      %v436 = vadd.f32 %v424, %v428
      %v437 = vadd.f32 %v425, %v428
      %v438 = vpack.c.bf16 %v430, %v430
      %v439 = vpack.c.bf16 %v431, %v431
      %v440 = vpack.c.bf16 %v432, %v432
      %v441 = vpack.c.bf16 %v433, %v433
      %v442 = vpack.c.bf16 %v434, %v434
      %v443 = vpack.c.bf16 %v435, %v435
      %v444 = vpack.c.bf16 %v436, %v436
      %v445 = vpack.c.bf16 %v437, %v437
      %446 = vst [vmem:[%s6] sm:$0xf] %v438
      %447 = vst [vmem:[%s6 + $0x4] sm:$0xf] %v439
      %448 = vst [vmem:[%s6 + $0x8] sm:$0xf] %v440
      %449 = vst [vmem:[%s6 + $0xc] sm:$0xf] %v441
      %450 = vst [vmem:[%s6 + $0x10] sm:$0xf] %v442
      %451 = vst [vmem:[%s6 + $0x14] sm:$0xf] %v443
      %452 = vst [vmem:[%s6 + $0x18] sm:$0xf] %v444
      %453 = vst [vmem:[%s6 + $0x1c] sm:$0xf] %v445
    $region37: #{transformer_translator_forward.35} parent=1 // pred_fallthru
      _
    // Predicated region
    $region38: #{transformer_translator_forward.35} parent=1 // pred_check
      _
    $region39: #{transformer_translator_forward.35} parent=1 // pred_check_branch
      %455 = sbr.rel (0) target = $region41
    $region40: #{transformer_translator_forward.35} parent=1 // pred_region
      _
    $region41: #{transformer_translator_forward.35} parent=1 // pred_fallthru
      _
    // Predicated region
    $region42: #{transformer_translator_forward.35} parent=1 // pred_check
      _
    $region43: #{transformer_translator_forward.35} parent=1 // pred_check_branch
      %457 = sbr.rel (0) target = $region45
    $region44: #{transformer_translator_forward.35} parent=1 // pred_region
      _
    $region45: #{transformer_translator_forward.35} parent=1 // pred_fallthru
      _
    %458 = vsyncpa [#allocation4], 1

// kernel: transformer_translator_forward.36
$region0: #{transformer_translator_forward.36}
  #allocation0 [shape = 'u32[]', space=smem, size = 0x4, offset = 0x4, fixed_abs, tag = 'smem constant byte address 0x4 - core index']
  #allocation1 [shape = 'u32[72,128]{1,0:T(1,128)}', space=vmem, size = 0x9000, scoped, tag = 'internal scratch']
  #allocation2 [shape = 'f32[64,128]{1,0:T(8,128)}', space=vmem, size = 0x8000, scoped, tag = 'scratch operand']
  %s0 = inlined_call_operand.vmem [shape: bf16[64,128], index: 0, kind: input, shape index: {}]
  %s1 = inlined_call_operand.hbm [shape: bf16[128,128], index: 1, kind: input, shape index: {}]
  %s2 = inlined_call_operand.vmem [shape: f32[1,128], index: 2, kind: input, shape index: {}]
  %s3 = inlined_call_operand.vmem [shape: bf16[64,128], index: 3, kind: output, shape index: {}]
  %s4 = sld [smem:[#allocation0]]
  $region34: #{transformer_translator_forward.36} parent=0
    _
  %s6 = ssub.s32 1, %s4
  %s7 = scalar_select 0, %s6, %s4
  $region1: #{transformer_translator_forward.36} parent=0
    #allocation3 [shape = 'u8[32768]{0}', space=vmem, size = 0x8000, scoped, tag = 'input window, operand 1, single buffered']
    #allocation4 [shape = 's32[1]{0}', space=sflag, size = 0x4, scoped, tag = 'scoped memory for transformer_translator_forward.36']
    %8 = vsyncpa [#allocation4], 0
    // Predicated region
    $region2: #{transformer_translator_forward.36} parent=1 // pred_check
      _
    $region3: #{transformer_translator_forward.36} parent=1 // pred_check_branch
      %10 = sbr.rel (0) target = $region5
    $region4: #{transformer_translator_forward.36} parent=1 // pred_region
      _
    $region5: #{transformer_translator_forward.36} parent=1 // pred_fallthru
      _
    // Predicated region
    $region6: #{transformer_translator_forward.36} parent=1 // pred_check
      _
    $region7: #{transformer_translator_forward.36} parent=1 // pred_check_branch
      %12 = sbr.rel (0) target = $region9
    $region8: #{transformer_translator_forward.36} parent=1 // pred_region
      %14 = vsyncadd [#allocation4], 0
      %s15 = sshll.u32 %s1, 4
      %s16 = int_to_ptr.hbm [resolvable:$true] %s15
      %s17 = sshll.u32 [#allocation3], 4
      %s18 = int_to_ptr.vmem [resolvable:$true] %s17
      %23 = dma.hbm_to_vmem [thread:$0]  %s16, 1024, %s18, [#allocation4], 64, 64, 4
    $region9: #{transformer_translator_forward.36} parent=1 // pred_fallthru
      _
    // Predicated region
    $region10: #{transformer_translator_forward.36} parent=1 // pred_check
      _
    $region11: #{transformer_translator_forward.36} parent=1 // pred_check_branch
      %25 = sbr.rel (0) target = $region13
    $region12: #{transformer_translator_forward.36} parent=1 // pred_region
      _
    $region13: #{transformer_translator_forward.36} parent=1 // pred_fallthru
      _
    // Predicated region
    $region14: #{transformer_translator_forward.36} parent=1 // pred_check
      _
    $region15: #{transformer_translator_forward.36} parent=1 // pred_check_branch
      %27 = sbr.rel (0) target = $region17
    $region16: #{transformer_translator_forward.36} parent=1 // pred_region
      %29 = dma.done [#allocation4], 1024
    $region17: #{transformer_translator_forward.36} parent=1 // pred_fallthru
      _
    %p30 = scmp.eq.s32.totalorder 0, 0
    // Predicated region
    $region18: #{transformer_translator_forward.36} parent=1 // pred_check
      %p31 = pneg %p30
    $region19: #{transformer_translator_forward.36} parent=1 // pred_check_branch
      %33 = sbr.rel (%p31) target = $region21
    $region20: #{transformer_translator_forward.36} parent=1 // pred_region
      %34 = vst [vmem:[#allocation2] sm:$0xff] 0.0
      %35 = vst [vmem:[#allocation2 + $0x8] sm:$0xff] 0.0
      %36 = vst [vmem:[#allocation2 + $0x10] sm:$0xff] 0.0
      %37 = vst [vmem:[#allocation2 + $0x18] sm:$0xff] 0.0
      %38 = vst [vmem:[#allocation2 + $0x20] sm:$0xff] 0.0
      %39 = vst [vmem:[#allocation2 + $0x28] sm:$0xff] 0.0
      %40 = vst [vmem:[#allocation2 + $0x30] sm:$0xff] 0.0
      %41 = vst [vmem:[#allocation2 + $0x38] sm:$0xff] 0.0
    $region21: #{transformer_translator_forward.36} parent=1 // pred_fallthru
      _
    %v42 = vld [vmem:[#allocation2] sm:$0xff]
    %v43 = vld [vmem:[#allocation2 + $0x8] sm:$0xff]
    %v44 = vld [vmem:[#allocation2 + $0x10] sm:$0xff]
    %v45 = vld [vmem:[#allocation2 + $0x18] sm:$0xff]
    %v46 = vld [vmem:[#allocation2 + $0x20] sm:$0xff]
    %v47 = vld [vmem:[#allocation2 + $0x28] sm:$0xff]
    %v48 = vld [vmem:[#allocation2 + $0x30] sm:$0xff]
    %v49 = vld [vmem:[#allocation2 + $0x38] sm:$0xff]
    %v50 = vld [vmem:[%s0] sm:$0xf]
    %v51 = vld [vmem:[%s0 + $0x4] sm:$0xf]
    %v52 = vld [vmem:[%s0 + $0x8] sm:$0xf]
    %v53 = vld [vmem:[%s0 + $0xc] sm:$0xf]
    %v54 = vld [vmem:[%s0 + $0x10] sm:$0xf]
    %v55 = vld [vmem:[%s0 + $0x14] sm:$0xf]
    %v56 = vld [vmem:[%s0 + $0x18] sm:$0xf]
    %v57 = vld [vmem:[%s0 + $0x1c] sm:$0xf]
    %v58 = vld [vmem:[#allocation3] sm:$0xf]
    %v59 = vld [vmem:[#allocation3 + $0x4] sm:$0xf]
    %v60 = vld [vmem:[#allocation3 + $0x8] sm:$0xf]
    %v61 = vld [vmem:[#allocation3 + $0xc] sm:$0xf]
    %v62 = vld [vmem:[#allocation3 + $0x10] sm:$0xf]
    %v63 = vld [vmem:[#allocation3 + $0x14] sm:$0xf]
    %v64 = vld [vmem:[#allocation3 + $0x18] sm:$0xf]
    %v65 = vld [vmem:[#allocation3 + $0x1c] sm:$0xf]
    %v66 = vld [vmem:[#allocation3 + $0x20] sm:$0xf]
    %v67 = vld [vmem:[#allocation3 + $0x24] sm:$0xf]
    %v68 = vld [vmem:[#allocation3 + $0x28] sm:$0xf]
    %v69 = vld [vmem:[#allocation3 + $0x2c] sm:$0xf]
    %v70 = vld [vmem:[#allocation3 + $0x30] sm:$0xf]
    %v71 = vld [vmem:[#allocation3 + $0x34] sm:$0xf]
    %v72 = vld [vmem:[#allocation3 + $0x38] sm:$0xf]
    %v73 = vld [vmem:[#allocation3 + $0x3c] sm:$0xf]
    %v82 = vunpack.c.l.b16 %v50
    %v83 = vunpack.c.l.b16 %v51
    %v84 = vunpack.c.l.b16 %v52
    %v85 = vunpack.c.l.b16 %v53
    %v86 = vunpack.c.l.b16 %v54
    %v87 = vunpack.c.l.b16 %v55
    %v88 = vunpack.c.l.b16 %v56
    %v89 = vunpack.c.l.b16 %v57
    %v90 = vpack.c.b16 %v83, %v82
    %v91 = vpack.c.b16 %v85, %v84
    %v92 = vpack.c.b16 %v87, %v86
    %v93 = vpack.c.b16 %v89, %v88
    %v114 = vunpack.c.l.b16 %v58
    %v115 = vunpack.c.l.b16 %v59
    %v116 = vunpack.c.l.b16 %v60
    %v117 = vunpack.c.l.b16 %v61
    %v118 = vunpack.c.l.b16 %v62
    %v119 = vunpack.c.l.b16 %v63
    %v120 = vunpack.c.l.b16 %v64
    %v121 = vunpack.c.l.b16 %v65
    %v122 = vunpack.c.l.b16 %v66
    %v123 = vunpack.c.l.b16 %v67
    %v124 = vunpack.c.l.b16 %v68
    %v125 = vunpack.c.l.b16 %v69
    %v126 = vunpack.c.l.b16 %v70
    %v127 = vunpack.c.l.b16 %v71
    %v128 = vunpack.c.l.b16 %v72
    %v129 = vunpack.c.l.b16 %v73
    %v130 = vpack.c.b16 %v115, %v114
    %v131 = vpack.c.b16 %v117, %v116
    %v132 = vpack.c.b16 %v119, %v118
    %v133 = vpack.c.b16 %v121, %v120
    %v134 = vpack.c.b16 %v123, %v122
    %v135 = vpack.c.b16 %v125, %v124
    %v136 = vpack.c.b16 %v127, %v126
    %v137 = vpack.c.b16 %v129, %v128
    %146 = vmatpush.bf16.msra.mxu0 %v137
    %147 = vmatpush.bf16.msra.mxu0 %v136
    %148 = vmatpush.bf16.msra.mxu0 %v135
    %149 = vmatpush.bf16.msra.mxu0 %v134
    %150 = vmatpush.bf16.msra.mxu0 %v133
    %151 = vmatpush.bf16.msra.mxu0 %v132
    %152 = vmatpush.bf16.msra.mxu0 %v131
    %153 = vmatpush.bf16.msra.mxu0 %v130
    %154 = vmatmul.bf16.gmra.mxu0 %v90
    %v155 = vpop.f32.mrf.mxu0
    %v156 = vadd.f32 0.0, %v155
    %v157 = vpop.f32.mrf.mxu0
    %v158 = vadd.f32 0.0, %v157
    %159 = vmatmul.bf16.gmra.mxu0 %v91
    %v160 = vpop.f32.mrf.mxu0
    %v161 = vadd.f32 0.0, %v160
    %v162 = vpop.f32.mrf.mxu0
    %v163 = vadd.f32 0.0, %v162
    %164 = vmatmul.bf16.gmra.mxu0 %v92
    %v165 = vpop.f32.mrf.mxu0
    %v166 = vadd.f32 0.0, %v165
    %v167 = vpop.f32.mrf.mxu0
    %v168 = vadd.f32 0.0, %v167
    %169 = vmatmul.bf16.gmra.mxu0 %v93
    %v170 = vpop.f32.mrf.mxu0
    %v171 = vadd.f32 0.0, %v170
    %v172 = vpop.f32.mrf.mxu0
    %v173 = vadd.f32 0.0, %v172
    %174 = vdwg.mxu0
    %v175 = vadd.f32 %v42, %v156
    %v176 = vadd.f32 %v43, %v158
    %v177 = vadd.f32 %v44, %v161
    %v178 = vadd.f32 %v45, %v163
    %v179 = vadd.f32 %v46, %v166
    %v180 = vadd.f32 %v47, %v168
    %v181 = vadd.f32 %v48, %v171
    %v182 = vadd.f32 %v49, %v173
    %183 = vst [vmem:[#allocation2] sm:$0xff] %v175
    %184 = vst [vmem:[#allocation2 + $0x8] sm:$0xff] %v176
    %185 = vst [vmem:[#allocation2 + $0x10] sm:$0xff] %v177
    %186 = vst [vmem:[#allocation2 + $0x18] sm:$0xff] %v178
    %187 = vst [vmem:[#allocation2 + $0x20] sm:$0xff] %v179
    %188 = vst [vmem:[#allocation2 + $0x28] sm:$0xff] %v180
    %189 = vst [vmem:[#allocation2 + $0x30] sm:$0xff] %v181
    %190 = vst [vmem:[#allocation2 + $0x38] sm:$0xff] %v182
    // Predicated region
    $region22: #{transformer_translator_forward.36} parent=1 // pred_check
      %p191 = pneg %p30
    $region23: #{transformer_translator_forward.36} parent=1 // pred_check_branch
      %193 = sbr.rel (%p191) target = $region25
    $region24: #{transformer_translator_forward.36} parent=1 // pred_region
      %v194 = vld [vmem:[#allocation2] sm:$0xff]
      %v195 = vld [vmem:[#allocation2 + $0x8] sm:$0xff]
      %v196 = vld [vmem:[#allocation2 + $0x10] sm:$0xff]
      %v197 = vld [vmem:[#allocation2 + $0x18] sm:$0xff]
      %v198 = vld [vmem:[#allocation2 + $0x20] sm:$0xff]
      %v199 = vld [vmem:[#allocation2 + $0x28] sm:$0xff]
      %v200 = vld [vmem:[#allocation2 + $0x30] sm:$0xff]
      %v201 = vld [vmem:[#allocation2 + $0x38] sm:$0xff]
      %v202 = vld [vmem:[%s2] sm:$0x1]
      %v204 = vperm.slane %v202, 0
      %v206 = vadd.f32 %v194, %v204
      %v207 = vadd.f32 %v195, %v204
      %v208 = vadd.f32 %v196, %v204
      %v209 = vadd.f32 %v197, %v204
      %v210 = vadd.f32 %v198, %v204
      %v211 = vadd.f32 %v199, %v204
      %v212 = vadd.f32 %v200, %v204
      %v213 = vadd.f32 %v201, %v204
      %v214 = vpack.c.bf16 %v206, %v206
      %v215 = vpack.c.bf16 %v207, %v207
      %v216 = vpack.c.bf16 %v208, %v208
      %v217 = vpack.c.bf16 %v209, %v209
      %v218 = vpack.c.bf16 %v210, %v210
      %v219 = vpack.c.bf16 %v211, %v211
      %v220 = vpack.c.bf16 %v212, %v212
      %v221 = vpack.c.bf16 %v213, %v213
      %222 = vst [vmem:[%s3] sm:$0xf] %v214
      %223 = vst [vmem:[%s3 + $0x4] sm:$0xf] %v215
      %224 = vst [vmem:[%s3 + $0x8] sm:$0xf] %v216
      %225 = vst [vmem:[%s3 + $0xc] sm:$0xf] %v217
      %226 = vst [vmem:[%s3 + $0x10] sm:$0xf] %v218
      %227 = vst [vmem:[%s3 + $0x14] sm:$0xf] %v219
      %228 = vst [vmem:[%s3 + $0x18] sm:$0xf] %v220
      %229 = vst [vmem:[%s3 + $0x1c] sm:$0xf] %v221
    $region25: #{transformer_translator_forward.36} parent=1 // pred_fallthru
      _
    // Predicated region
    $region26: #{transformer_translator_forward.36} parent=1 // pred_check
      _
    $region27: #{transformer_translator_forward.36} parent=1 // pred_check_branch
      %231 = sbr.rel (0) target = $region29
    $region28: #{transformer_translator_forward.36} parent=1 // pred_region
      _
    $region29: #{transformer_translator_forward.36} parent=1 // pred_fallthru
      _
    // Predicated region
    $region30: #{transformer_translator_forward.36} parent=1 // pred_check
      _
    $region31: #{transformer_translator_forward.36} parent=1 // pred_check_branch
      %233 = sbr.rel (0) target = $region33
    $region32: #{transformer_translator_forward.36} parent=1 // pred_region
      _
    $region33: #{transformer_translator_forward.36} parent=1 // pred_fallthru
      _
    %234 = vsyncpa [#allocation4], 1

// kernel: transformer_translator_forward.34
$region0: #{transformer_translator_forward.34}
  #allocation0 [shape = 'u32[]', space=smem, size = 0x4, offset = 0x4, fixed_abs, tag = 'smem constant byte address 0x4 - core index']
  #allocation1 [shape = 'u32[72,128]{1,0:T(1,128)}', space=vmem, size = 0x9000, scoped, tag = 'internal scratch']
  #allocation2 [shape = 'f32[8,4]{1,0:T(8,128)}', space=vmem, size = 0x1000, scoped, tag = 'scratch operand']
  #allocation3 [shape = 'f32[8,4]{1,0:T(8,128)}', space=vmem, size = 0x1000, scoped, tag = 'scratch operand']
  #allocation4 [shape = 'f32[8,128]{1,0:T(8,128)}', space=vmem, size = 0x1000, scoped, tag = 'scratch operand']
  %s0 = inlined_call_operand.vmem [shape: bf16[8,8,384], index: 0, kind: input, shape index: {}, may-alias: {0,1,2}]
  %s1 = inlined_call_operand.vmem [shape: bf16[8,8,384], index: 1, kind: input, shape index: {}, may-alias: {0,1,2}]
  %s2 = inlined_call_operand.vmem [shape: bf16[8,8,384], index: 2, kind: input, shape index: {}, may-alias: {0,1,2}]
  %s3 = inlined_call_operand.vmem [shape: f32[8,1,8], index: 3, kind: input, shape index: {}]
  %s4 = inlined_call_operand.vmem [shape: bf16[8,8,128], index: 4, kind: output, shape index: {}]
  %s5 = sld [smem:[#allocation0]]
  $region57: #{transformer_translator_forward.34} parent=0
    _
  %s7 = ssub.s32 1, %s5
  %s8 = scalar_select 0, %s7, %s5
  loop: start=0, step=1, limit=10
  $region2: #{transformer_translator_forward.34} parent=0 // loop_pre_header
    _
  $region3: #{transformer_translator_forward.34} parent=0 // loop_header
    %s10 = sphi 0, %s14
    %p11 = scmp.ge.s32.totalorder %s10, 10
    %s17 = sphi 0, %s36
    %s18 = sphi 0, %s32
    %s19 = sphi 0, %s28
    %s20 = sphi 0, %s17
    %s21 = sphi 0, %s18
    %s22 = sphi 0, %s19
    %s23 = sphi 0, %s20
    %s24 = sphi 0, %s21
    %s25 = sphi 0, %s22
    %s41 = sphi 0, %s43
    %s44 = sphi 0, %s41
    %s45 = sphi 0, %s44
    %s61 = sphi 0, %s45
    %s69 = sphi 0, %s71
    %s72 = sphi 0, %s69
    %s73 = sphi 0, %s72
    %s89 = sphi 0, %s73
    %s97 = sphi 0, %s99
    %s100 = sphi 0, %s97
    %s101 = sphi 0, %s100
    %s117 = sphi 0, %s101
    %s125 = sphi 0, %s127
    %s128 = sphi 0, %s125
    %s129 = sphi 0, %s128
    %s145 = sphi 0, %s129
    %s153 = sphi 0, %s155
    %s156 = sphi 0, %s153
    %s157 = sphi 0, %s156
    %s173 = sphi 0, %s157
  $region4: #{transformer_translator_forward.34} parent=0 // loop_header_branch
    %13 = sbr.rel (%p11) target = $region8
  $region5: #{transformer_translator_forward.34} parent=0 // loop_body
    %s15 = ssub.s32 %s10, 1
    %s16 = ssub.s32 %s10, 2
    %s26 = sadd.s32 1, %s19
    %p27 = scmp.ge.s32.totalorder %s26, 1
    %s28 = scalar_select %p27, 0, %s26
    %s29 = sadd.s32 1, %s18
    %s30 = scalar_select %p27, %s29, %s18
    %p31 = scmp.ge.s32.totalorder %s30, 1
    %s32 = scalar_select %p31, 0, %s30
    %s33 = sadd.s32 1, %s17
    %s34 = scalar_select %p31, %s33, %s17
    %p35 = scmp.ge.s32.totalorder %s34, 8
    %s36 = scalar_select %p35, 0, %s34
    %s37 = ssub.s32 %s17, %s36
    %s38 = ssub.s32 %s18, %s32
    %s39 = sor.u32 %s37, %s38
    %p40 = scmp.eq.s32.totalorder %s39, 0
    %s42 = sadd.s32 %s41, 1
    %s43 = scalar_select %p40, %s41, %s42
    %p46 = pneg %p40
    %p47 = scmp.eq.s32.totalorder %s10, 7
    %p48 = por %p46, %p47
    %p49 = scmp.ne.s32.totalorder %s41, %s44
    %p50 = scmp.eq.s32.totalorder %s10, 0
    %p51 = por %p49, %p50
    %p52 = scmp.ne.s32.totalorder %s41, %s44
    %p53 = scmp.eq.s32.totalorder %s15, 7
    %p54 = por %p52, %p53
    %p55 = scmp.ne.s32.totalorder %s44, %s45
    %p56 = scmp.eq.s32.totalorder %s15, 0
    %p57 = por %p55, %p56
    %p58 = scmp.ne.s32.totalorder %s44, %s45
    %p59 = scmp.eq.s32.totalorder %s16, 7
    %p60 = por %p58, %p59
    %p62 = scmp.ne.s32.totalorder %s45, %s61
    %p63 = scmp.eq.s32.totalorder %s16, 0
    %p64 = por %p62, %p63
    %s65 = ssub.s32 %s17, %s36
    %s66 = ssub.s32 %s19, %s28
    %s67 = sor.u32 %s65, %s66
    %p68 = scmp.eq.s32.totalorder %s67, 0
    %s70 = sadd.s32 %s69, 1
    %s71 = scalar_select %p68, %s69, %s70
    %p74 = pneg %p68
    %p75 = scmp.eq.s32.totalorder %s10, 7
    %p76 = por %p74, %p75
    %p77 = scmp.ne.s32.totalorder %s69, %s72
    %p78 = scmp.eq.s32.totalorder %s10, 0
    %p79 = por %p77, %p78
    %p80 = scmp.ne.s32.totalorder %s69, %s72
    %p81 = scmp.eq.s32.totalorder %s15, 7
    %p82 = por %p80, %p81
    %p83 = scmp.ne.s32.totalorder %s72, %s73
    %p84 = scmp.eq.s32.totalorder %s15, 0
    %p85 = por %p83, %p84
    %p86 = scmp.ne.s32.totalorder %s72, %s73
    %p87 = scmp.eq.s32.totalorder %s16, 7
    %p88 = por %p86, %p87
    %p90 = scmp.ne.s32.totalorder %s73, %s89
    %p91 = scmp.eq.s32.totalorder %s16, 0
    %p92 = por %p90, %p91
    %s93 = ssub.s32 %s17, %s36
    %s94 = ssub.s32 %s19, %s28
    %s95 = sor.u32 %s93, %s94
    %p96 = scmp.eq.s32.totalorder %s95, 0
    %s98 = sadd.s32 %s97, 1
    %s99 = scalar_select %p96, %s97, %s98
    %p102 = pneg %p96
    %p103 = scmp.eq.s32.totalorder %s10, 7
    %p104 = por %p102, %p103
    %p105 = scmp.ne.s32.totalorder %s97, %s100
    %p106 = scmp.eq.s32.totalorder %s10, 0
    %p107 = por %p105, %p106
    %p108 = scmp.ne.s32.totalorder %s97, %s100
    %p109 = scmp.eq.s32.totalorder %s15, 7
    %p110 = por %p108, %p109
    %p111 = scmp.ne.s32.totalorder %s100, %s101
    %p112 = scmp.eq.s32.totalorder %s15, 0
    %p113 = por %p111, %p112
    %p114 = scmp.ne.s32.totalorder %s100, %s101
    %p115 = scmp.eq.s32.totalorder %s16, 7
    %p116 = por %p114, %p115
    %p118 = scmp.ne.s32.totalorder %s101, %s117
    %p119 = scmp.eq.s32.totalorder %s16, 0
    %p120 = por %p118, %p119
    %s121 = ssub.s32 %s17, %s36
    %s122 = ssub.s32 %s19, %s28
    %s123 = sor.u32 %s121, %s122
    %p124 = scmp.eq.s32.totalorder %s123, 0
    %s126 = sadd.s32 %s125, 1
    %s127 = scalar_select %p124, %s125, %s126
    %p130 = pneg %p124
    %p131 = scmp.eq.s32.totalorder %s10, 7
    %p132 = por %p130, %p131
    %p133 = scmp.ne.s32.totalorder %s125, %s128
    %p134 = scmp.eq.s32.totalorder %s10, 0
    %p135 = por %p133, %p134
    %p136 = scmp.ne.s32.totalorder %s125, %s128
    %p137 = scmp.eq.s32.totalorder %s15, 7
    %p138 = por %p136, %p137
    %p139 = scmp.ne.s32.totalorder %s128, %s129
    %p140 = scmp.eq.s32.totalorder %s15, 0
    %p141 = por %p139, %p140
    %p142 = scmp.ne.s32.totalorder %s128, %s129
    %p143 = scmp.eq.s32.totalorder %s16, 7
    %p144 = por %p142, %p143
    %p146 = scmp.ne.s32.totalorder %s129, %s145
    %p147 = scmp.eq.s32.totalorder %s16, 0
    %p148 = por %p146, %p147
    %s149 = ssub.s32 %s17, %s36
    %s150 = ssub.s32 %s18, %s32
    %s151 = sor.u32 %s149, %s150
    %p152 = scmp.eq.s32.totalorder %s151, 0
    %s154 = sadd.s32 %s153, 1
    %s155 = scalar_select %p152, %s153, %s154
    %p158 = pneg %p152
    %p159 = scmp.eq.s32.totalorder %s10, 7
    %p160 = por %p158, %p159
    %p161 = scmp.ne.s32.totalorder %s153, %s156
    %p162 = scmp.eq.s32.totalorder %s10, 0
    %p163 = por %p161, %p162
    %p164 = scmp.ne.s32.totalorder %s153, %s156
    %p165 = scmp.eq.s32.totalorder %s15, 7
    %p166 = por %p164, %p165
    %p167 = scmp.ne.s32.totalorder %s156, %s157
    %p168 = scmp.eq.s32.totalorder %s15, 0
    %p169 = por %p167, %p168
    %p170 = scmp.ne.s32.totalorder %s156, %s157
    %p171 = scmp.eq.s32.totalorder %s16, 7
    %p172 = por %p170, %p171
    %p174 = scmp.ne.s32.totalorder %s157, %s173
    %p175 = scmp.eq.s32.totalorder %s16, 0
    %p176 = por %p174, %p175
    %p177 = scmp.le.s32.totalorder 1, %s10
    %p178 = scmp.lt.s32.totalorder %s10, 9
    %p179 = pnand %p177, %p178
    %p180 = pneg %p179
    // Predicated region
    $region9: #{transformer_translator_forward.34} parent=5 // pred_check
      _
    $region10: #{transformer_translator_forward.34} parent=5 // pred_check_branch
      %182 = sbr.rel (%p179) target = $region12
    $region11: #{transformer_translator_forward.34} parent=5 // pred_region
      %s183 = ssub.s32 %s10, 1
    $region12: #{transformer_translator_forward.34} parent=5 // pred_fallthru
      _
    %p184 = scmp.lt.s32.totalorder %s10, 8
    // Predicated region
    $region13: #{transformer_translator_forward.34} parent=5 // pred_check
      %p185 = pneg %p184
    $region14: #{transformer_translator_forward.34} parent=5 // pred_check_branch
      %187 = sbr.rel (%p185) target = $region16
    $region15: #{transformer_translator_forward.34} parent=5 // pred_region
      // Predicated region
      $region17: #{transformer_translator_forward.34} parent=15 // pred_check
        %p188 = pneg %p51
      $region18: #{transformer_translator_forward.34} parent=15 // pred_check_branch
        %190 = sbr.rel (%p188) target = $region20
      $region19: #{transformer_translator_forward.34} parent=15 // pred_region
        %p191 = scmp.lt.s32.totalorder %s17, 7
        %s192 = scalar_select %p191, %s17, 7
        %p193 = scmp.lt.s32.totalorder %s18, 0
        %s194 = scalar_select %p193, %s18, 0
        %s195 = smul.addr %s194, 3
        %s196 = smul.addr %s192, 3
        %s197 = sadd.s32 %s195, %s196
        %s198 = smul.addr %s197, 4
        %s199 = scalar_lea.vmem %s0, %s198
      $region20: #{transformer_translator_forward.34} parent=15 // pred_fallthru
        _
      // Predicated region
      $region21: #{transformer_translator_forward.34} parent=15 // pred_check
        %p200 = pneg %p79
      $region22: #{transformer_translator_forward.34} parent=15 // pred_check_branch
        %202 = sbr.rel (%p200) target = $region24
      $region23: #{transformer_translator_forward.34} parent=15 // pred_region
        %p203 = scmp.lt.s32.totalorder %s17, 7
        %s204 = scalar_select %p203, %s17, 7
        %p205 = scmp.lt.s32.totalorder %s19, 0
        %s206 = scalar_select %p205, %s19, 0
        %s207 = smul.addr %s206, 3
        %s208 = sadd.s32 1, %s207
        %s209 = smul.addr %s204, 3
        %s210 = sadd.s32 %s208, %s209
        %s211 = smul.addr %s210, 4
        %s212 = scalar_lea.vmem %s1, %s211
      $region24: #{transformer_translator_forward.34} parent=15 // pred_fallthru
        _
      // Predicated region
      $region25: #{transformer_translator_forward.34} parent=15 // pred_check
        %p213 = pneg %p107
      $region26: #{transformer_translator_forward.34} parent=15 // pred_check_branch
        %215 = sbr.rel (%p213) target = $region28
      $region27: #{transformer_translator_forward.34} parent=15 // pred_region
        %p216 = scmp.lt.s32.totalorder %s17, 7
        %s217 = scalar_select %p216, %s17, 7
        %p218 = scmp.lt.s32.totalorder %s19, 0
        %s219 = scalar_select %p218, %s19, 0
        %s220 = smul.addr %s219, 3
        %s221 = sadd.s32 2, %s220
        %s222 = smul.addr %s217, 3
        %s223 = sadd.s32 %s221, %s222
        %s224 = smul.addr %s223, 4
        %s225 = scalar_lea.vmem %s2, %s224
      $region28: #{transformer_translator_forward.34} parent=15 // pred_fallthru
        _
      // Predicated region
      $region29: #{transformer_translator_forward.34} parent=15 // pred_check
        %p226 = pneg %p135
      $region30: #{transformer_translator_forward.34} parent=15 // pred_check_branch
        %228 = sbr.rel (%p226) target = $region32
      $region31: #{transformer_translator_forward.34} parent=15 // pred_region
        %p229 = scmp.lt.s32.totalorder %s17, 7
        %s230 = scalar_select %p229, %s17, 7
        %p231 = scmp.lt.s32.totalorder %s19, 0
        %s232 = scalar_select %p231, %s19, 0
        %s233 = sadd.s32 %s232, %s230
        %s234 = scalar_lea.vmem %s3, %s233
      $region32: #{transformer_translator_forward.34} parent=15 // pred_fallthru
        _
    $region16: #{transformer_translator_forward.34} parent=5 // pred_fallthru
      _
    %p235 = scmp.le.s32.totalorder 1, %s10
    %p236 = scmp.lt.s32.totalorder %s10, 9
    %p237 = pnand %p235, %p236
    %p238 = pneg %p237
    // Predicated region
    $region33: #{transformer_translator_forward.34} parent=5 // pred_check
      _
    $region34: #{transformer_translator_forward.34} parent=5 // pred_check_branch
      %240 = sbr.rel (%p237) target = $region36
    $region35: #{transformer_translator_forward.34} parent=5 // pred_region
      %s241 = ssub.s32 %s10, 1
      %p242 = scmp.lt.s32.totalorder %s20, 7
      %s243 = scalar_select %p242, %s20, 7
      %p244 = scmp.lt.s32.totalorder %s21, 0
      %s245 = scalar_select %p244, %s21, 0
      %s246 = smul.addr %s245, 3
      %s247 = smul.addr %s243, 3
      %s248 = sadd.s32 %s246, %s247
      %s249 = smul.addr %s248, 4
      %s250 = scalar_lea.vmem %s0, %s249
      %p251 = pneg %p57
      %p252 = pneg %p54
      %p253 = scmp.lt.s32.totalorder %s20, 7
      %s254 = scalar_select %p253, %s20, 7
      %p255 = scmp.lt.s32.totalorder %s22, 0
      %s256 = scalar_select %p255, %s22, 0
      %s257 = smul.addr %s256, 3
      %s258 = sadd.s32 1, %s257
      %s259 = smul.addr %s254, 3
      %s260 = sadd.s32 %s258, %s259
      %s261 = smul.addr %s260, 4
      %s262 = scalar_lea.vmem %s1, %s261
      %p263 = pneg %p85
      %p264 = pneg %p82
      %p265 = scmp.lt.s32.totalorder %s20, 7
      %s266 = scalar_select %p265, %s20, 7
      %p267 = scmp.lt.s32.totalorder %s22, 0
      %s268 = scalar_select %p267, %s22, 0
      %s269 = smul.addr %s268, 3
      %s270 = sadd.s32 2, %s269
      %s271 = smul.addr %s266, 3
      %s272 = sadd.s32 %s270, %s271
      %s273 = smul.addr %s272, 4
      %s274 = scalar_lea.vmem %s2, %s273
      %p275 = pneg %p113
      %p276 = pneg %p110
      %p277 = scmp.lt.s32.totalorder %s20, 7
      %s278 = scalar_select %p277, %s20, 7
      %p279 = scmp.lt.s32.totalorder %s22, 0
      %s280 = scalar_select %p279, %s22, 0
      %s281 = sadd.s32 %s280, %s278
      %s282 = scalar_lea.vmem %s3, %s281
      %p283 = pneg %p141
      %p284 = pneg %p138
      %p285 = pneg %p169
      %p286 = pneg %p166
      %p287 = scmp.lt.s32.totalorder %s20, 7
      %s288 = scalar_select %p287, %s20, 7
      %p289 = scmp.lt.s32.totalorder %s21, 0
      %s290 = scalar_select %p289, %s21, 0
      %s291 = sadd.s32 %s290, %s288
      %s292 = smul.addr %s291, 4
      %s293 = scalar_lea.vmem %s4, %s292
      %p294 = scmp.lt.s32.totalorder %s20, 7
      %s295 = scalar_select %p294, %s20, 7
      %p296 = scmp.lt.s32.totalorder %s21, 0
      %s297 = scalar_select %p296, %s21, 0
      %s298 = smul.addr %s297, 3
      %s299 = smul.addr %s295, 3
      %s300 = sadd.s32 %s298, %s299
      %s301 = smul.addr %s300, 4
      %s302 = scalar_lea.vmem %s0, %s301
      %p303 = scmp.lt.s32.totalorder %s20, 7
      %s304 = scalar_select %p303, %s20, 7
      %p305 = scmp.lt.s32.totalorder %s22, 0
      %s306 = scalar_select %p305, %s22, 0
      %s307 = smul.addr %s306, 3
      %s308 = sadd.s32 1, %s307
      %s309 = smul.addr %s304, 3
      %s310 = sadd.s32 %s308, %s309
      %s311 = smul.addr %s310, 4
      %s312 = scalar_lea.vmem %s1, %s311
      %p313 = scmp.lt.s32.totalorder %s20, 7
      %s314 = scalar_select %p313, %s20, 7
      %p315 = scmp.lt.s32.totalorder %s22, 0
      %s316 = scalar_select %p315, %s22, 0
      %s317 = smul.addr %s316, 3
      %s318 = sadd.s32 2, %s317
      %s319 = smul.addr %s314, 3
      %s320 = sadd.s32 %s318, %s319
      %s321 = smul.addr %s320, 4
      %s322 = scalar_lea.vmem %s2, %s321
      %p323 = scmp.lt.s32.totalorder %s20, 7
      %s324 = scalar_select %p323, %s20, 7
      %p325 = scmp.lt.s32.totalorder %s22, 0
      %s326 = scalar_select %p325, %s22, 0
      %s327 = sadd.s32 %s326, %s324
      %s328 = scalar_lea.vmem %s3, %s327
      %p329 = scmp.lt.s32.totalorder %s20, 7
      %s330 = scalar_select %p329, %s20, 7
      %p331 = scmp.lt.s32.totalorder %s21, 0
      %s332 = scalar_select %p331, %s21, 0
      %s333 = sadd.s32 %s332, %s330
      %s334 = smul.addr %s333, 4
      %s335 = scalar_lea.vmem %s4, %s334
      %p337 = scmp.eq.s32.totalorder %s22, 0
      // Predicated region
      $region37: #{transformer_translator_forward.34} parent=35 // pred_check
        %p338 = pneg %p337
      $region38: #{transformer_translator_forward.34} parent=35 // pred_check_branch
        %340 = sbr.rel (%p338) target = $region40
      $region39: #{transformer_translator_forward.34} parent=35 // pred_region
        %vm341 = vcmask 31744
        %342 = vst.msk [vmem:[#allocation2] sm:$0xff] %vm341, -1e+30
        %343 = vst.msk [vmem:[#allocation3] sm:$0xff] %vm341, 0.0
        %344 = vst [vmem:[#allocation4] sm:$0xff] 0.0
      $region40: #{transformer_translator_forward.34} parent=35 // pred_fallthru
        _
      %v345 = vld [vmem:[%s302] sm:$0xf]
      %v346 = vld [vmem:[%s312] sm:$0xf]
      %v347 = vld [vmem:[%s322] sm:$0xf]
      %v348 = vld [vmem:[%s328] sm:$0x1]
      %s349 = smul.u32 %s21, 8
      %v350 = vlaneseq
      %v351 = vshrl.u32 %v350, 7
      %v352 = vstv %s349
      %v353 = vadd.s32 %v352, %v351
      %s354 = smul.u32 %s22, 8
      %v355 = vlaneseq
      %v356 = vand.u32 %v355, 127
      %v357 = vstv %s354
      %v358 = vadd.s32 %v357, %v356
      %vm359 = vcmp.gt.s32.totalorder %v358, %v353
      %v360 = vsel %vm359, -1e+30, 0.0
      %v362 = vperm.slane %v348, 0
      %v364 = vadd.f32 %v362, %v360
      %vm365 = vcmask 261120
      %v367 = vsel %vm365, %v345, 0
      %v370 = vsel %vm365, %v346, 0
      %372 = vmatpush.bf16.xpose.msra.mxu0 0
      %373 = vmatpush.bf16.xpose.msra.mxu0 0
      %374 = vmatpush.bf16.xpose.msra.mxu0 0
      %375 = vmatpush.bf16.xpose.msra.mxu0 0
      %376 = vmatpush.bf16.xpose.msra.mxu0 0
      %377 = vmatpush.bf16.xpose.msra.mxu0 0
      %378 = vmatpush.bf16.xpose.msra.mxu0 0
      %379 = vmatpush.bf16.xpose.msra.mxu0 %v370
      %380 = vmatmul.bf16.gmra.mxu0 %v367
      %v381 = vpop.f32.mrf.mxu0
      %v382 = vadd.f32 0.0, %v381
      %v383 = vpop.f32.mrf.mxu0
      %384 = vdwg.mxu0
      %v385 = vmul.f32 %v382, 0.17677669
      %v386 = vadd.f32 %v385, %v364
      %v387 = vld [vmem:[#allocation2] sm:$0xff]
      %vm388 = vcmask 64512
      %v389 = vsel %vm388, %v386, -inf
      %390 = vmax.xlane.f32.xlu0 %v389
      %v391 = vpop.xlane.xlu0 %390
      %v392 = vmax.f32 %v387, %v391
      %v393 = vsub.f32 %v387, %v392
      %v394 = vmul.f32 %v393, 1.442695
      %v395 = vpow.pop %v394
      %397 = vset.pattern.permute.xlu0 0
      %398 = vperm.xlu0 %397, %v392
      %v399 = vpop.permute.xlu0 %398
      %v401 = vsub.f32 %v386, %v399
      %v402 = vmul.f32 %v401, 1.442695
      %v403 = vpow.pop %v402
      %v404 = vld [vmem:[#allocation3] sm:$0xff]
      %v405 = vmul.f32 %v395, %v404
      %v406 = vsel %vm388, %v403, 0.0
      %407 = vadd.xlane.f32.xlu0 %v406
      %v408 = vpop.xlane.xlu0 %407
      %v409 = vadd.f32 %v405, %v408
      %vm410 = vcmask 7168
      %411 = vst.msk [vmem:[#allocation3] sm:$0xff] %vm410, %v409
      %v412 = vld [vmem:[#allocation4] sm:$0xff]
      %414 = vset.pattern.permute.xlu0 0
      %415 = vperm.xlu0 %414, %v395
      %v416 = vpop.permute.xlu0 %415
      %v418 = vmul.f32 %v416, %v412
      %v419 = vpack.c.bf16 %v403, %v403
      %v421 = vsel %vm388, %v419, 0
      %vm423 = vcmask 1043456
      %v425 = vsel %vm423, %v347, 0
      %427 = vmatpush.bf16.msra.mxu0 0
      %428 = vmatpush.bf16.msra.mxu0 0
      %429 = vmatpush.bf16.msra.mxu0 0
      %430 = vmatpush.bf16.msra.mxu0 0
      %431 = vmatpush.bf16.msra.mxu0 0
      %432 = vmatpush.bf16.msra.mxu0 0
      %433 = vmatpush.bf16.msra.mxu0 0
      %434 = vmatpush.bf16.msra.mxu0 %v425
      %435 = vmatmul.bf16.gmra.mxu0 %v421
      %v436 = vpop.f32.mrf.mxu0
      %v437 = vadd.f32 0.0, %v436
      %v438 = vpop.f32.mrf.mxu0
      %439 = vdwg.mxu0
      %v440 = vadd.f32 %v418, %v437
      %441 = vst.msk [vmem:[#allocation4] sm:$0xff] %vm365, %v440
      %442 = vst.msk [vmem:[#allocation2] sm:$0xff] %vm410, %v392
      %v444 = vunpack.c.l.b16 %v345
      %v445 = vpack.c.b16 %v444, %v444
      %446 = vrot.lane.b32.xlu0 %v445, 96
      %v447 = vpop.permute.xlu0 %446
      %v449 = vunpack.c.l.b16 %v346
      %v450 = vpack.c.b16 %v449, %v449
      %451 = vrot.lane.b32.xlu0 %v450, 96
      %v452 = vpop.permute.xlu0 %451
      %v454 = vsel %vm365, %v447, 0
      %v457 = vsel %vm365, %v452, 0
      %459 = vmatpush.bf16.xpose.msra.mxu0 0
      %460 = vmatpush.bf16.xpose.msra.mxu0 0
      %461 = vmatpush.bf16.xpose.msra.mxu0 0
      %462 = vmatpush.bf16.xpose.msra.mxu0 0
      %463 = vmatpush.bf16.xpose.msra.mxu0 0
      %464 = vmatpush.bf16.xpose.msra.mxu0 0
      %465 = vmatpush.bf16.xpose.msra.mxu0 0
      %466 = vmatpush.bf16.xpose.msra.mxu0 %v457
      %467 = vmatmul.bf16.gmra.mxu0 %v454
      %v468 = vpop.f32.mrf.mxu0
      %v469 = vadd.f32 0.0, %v468
      %v470 = vpop.f32.mrf.mxu0
      %471 = vdwg.mxu0
      %v472 = vmul.f32 %v469, 0.17677669
      %v473 = vadd.f32 %v472, %v364
      %v474 = vld [vmem:[#allocation2] sm:$0xff]
      %v475 = vsel %vm388, %v473, -inf
      %476 = vmax.xlane.f32.xlu0 %v475
      %v477 = vpop.xlane.xlu0 %476
      %v478 = vmax.f32 %v474, %v477
      %v479 = vsub.f32 %v474, %v478
      %v480 = vmul.f32 %v479, 1.442695
      %v481 = vpow.pop %v480
      %483 = vset.pattern.permute.xlu0 1
      %484 = vperm.xlu0 %483, %v478
      %v485 = vpop.permute.xlu0 %484
      %v487 = vsub.f32 %v473, %v485
      %v488 = vmul.f32 %v487, 1.442695
      %v489 = vpow.pop %v488
      %v490 = vld [vmem:[#allocation3] sm:$0xff]
      %v491 = vmul.f32 %v481, %v490
      %v492 = vsel %vm388, %v489, 0.0
      %493 = vadd.xlane.f32.xlu0 %v492
      %v494 = vpop.xlane.xlu0 %493
      %v495 = vadd.f32 %v491, %v494
      %vm496 = vcmask 15368
      %497 = vst.msk [vmem:[#allocation3] sm:$0xff] %vm496, %v495
      %v498 = vld [vmem:[#allocation4] sm:$0xff]
      %500 = vset.pattern.permute.xlu0 1
      %501 = vperm.xlu0 %500, %v481
      %v502 = vpop.permute.xlu0 %501
      %v504 = vmul.f32 %v502, %v498
      %v505 = vpack.c.bf16 %v489, %v489
      %v507 = vunpack.c.l.b16 %v347
      %v508 = vpack.c.b16 %v507, %v507
      %509 = vrot.lane.b32.xlu0 %v508, 96
      %v510 = vpop.permute.xlu0 %509
      %v512 = vsel %vm388, %v505, 0
      %v515 = vsel %vm423, %v510, 0
      %517 = vmatpush.bf16.msra.mxu0 0
      %518 = vmatpush.bf16.msra.mxu0 0
      %519 = vmatpush.bf16.msra.mxu0 0
      %520 = vmatpush.bf16.msra.mxu0 0
      %521 = vmatpush.bf16.msra.mxu0 0
      %522 = vmatpush.bf16.msra.mxu0 0
      %523 = vmatpush.bf16.msra.mxu0 0
      %524 = vmatpush.bf16.msra.mxu0 %v515
      %525 = vmatmul.bf16.gmra.mxu0 %v512
      %v526 = vpop.f32.mrf.mxu0
      %v527 = vadd.f32 0.0, %v526
      %v528 = vpop.f32.mrf.mxu0
      %529 = vdwg.mxu0
      %531 = vrot.lane.b32.xlu0 %v527, 32
      %v532 = vpop.permute.xlu0 %531
      %v534 = vadd.f32 %v504, %v532
      %vm535 = vcmask 523520
      %536 = vst.msk [vmem:[#allocation4] sm:$0xff] %vm535, %v534
      %537 = vst.msk [vmem:[#allocation2] sm:$0xff] %vm496, %v478
      %538 = vrot.lane.b32.xlu0 %v445, 64
      %v539 = vpop.permute.xlu0 %538
      %540 = vrot.lane.b32.xlu0 %v450, 64
      %v541 = vpop.permute.xlu0 %540
      %v543 = vsel %vm365, %v539, 0
      %v546 = vsel %vm365, %v541, 0
      %548 = vmatpush.bf16.xpose.msra.mxu0 0
      %549 = vmatpush.bf16.xpose.msra.mxu0 0
      %550 = vmatpush.bf16.xpose.msra.mxu0 0
      %551 = vmatpush.bf16.xpose.msra.mxu0 0
      %552 = vmatpush.bf16.xpose.msra.mxu0 0
      %553 = vmatpush.bf16.xpose.msra.mxu0 0
      %554 = vmatpush.bf16.xpose.msra.mxu0 0
      %555 = vmatpush.bf16.xpose.msra.mxu0 %v546
      %556 = vmatmul.bf16.gmra.mxu0 %v543
      %v557 = vpop.f32.mrf.mxu0
      %v558 = vadd.f32 0.0, %v557
      %v559 = vpop.f32.mrf.mxu0
      %560 = vdwg.mxu0
      %v561 = vmul.f32 %v558, 0.17677669
      %v562 = vadd.f32 %v561, %v364
      %v563 = vld [vmem:[#allocation2] sm:$0xff]
      %v564 = vsel %vm388, %v562, -inf
      %565 = vmax.xlane.f32.xlu0 %v564
      %v566 = vpop.xlane.xlu0 %565
      %v567 = vmax.f32 %v563, %v566
      %v568 = vsub.f32 %v563, %v567
      %v569 = vmul.f32 %v568, 1.442695
      %v570 = vpow.pop %v569
      %572 = vset.pattern.permute.xlu0 2
      %573 = vperm.xlu0 %572, %v567
      %v574 = vpop.permute.xlu0 %573
      %v576 = vsub.f32 %v562, %v574
      %v577 = vmul.f32 %v576, 1.442695
      %v578 = vpow.pop %v577
      %v579 = vld [vmem:[#allocation3] sm:$0xff]
      %v580 = vmul.f32 %v570, %v579
      %v581 = vsel %vm388, %v578, 0.0
      %582 = vadd.xlane.f32.xlu0 %v581
      %v583 = vpop.xlane.xlu0 %582
      %v584 = vadd.f32 %v580, %v583
      %vm585 = vcmask 23568
      %586 = vst.msk [vmem:[#allocation3] sm:$0xff] %vm585, %v584
      %v587 = vld [vmem:[#allocation4] sm:$0xff]
      %589 = vset.pattern.permute.xlu0 2
      %590 = vperm.xlu0 %589, %v570
      %v591 = vpop.permute.xlu0 %590
      %v593 = vmul.f32 %v591, %v587
      %v594 = vpack.c.bf16 %v578, %v578
      %595 = vrot.lane.b32.xlu0 %v508, 64
      %v596 = vpop.permute.xlu0 %595
      %v598 = vsel %vm388, %v594, 0
      %v601 = vsel %vm423, %v596, 0
      %603 = vmatpush.bf16.msra.mxu0 0
      %604 = vmatpush.bf16.msra.mxu0 0
      %605 = vmatpush.bf16.msra.mxu0 0
      %606 = vmatpush.bf16.msra.mxu0 0
      %607 = vmatpush.bf16.msra.mxu0 0
      %608 = vmatpush.bf16.msra.mxu0 0
      %609 = vmatpush.bf16.msra.mxu0 0
      %610 = vmatpush.bf16.msra.mxu0 %v601
      %611 = vmatmul.bf16.gmra.mxu0 %v598
      %v612 = vpop.f32.mrf.mxu0
      %v613 = vadd.f32 0.0, %v612
      %v614 = vpop.f32.mrf.mxu0
      %615 = vdwg.mxu0
      %617 = vrot.lane.b32.xlu0 %v613, 64
      %v618 = vpop.permute.xlu0 %617
      %v620 = vadd.f32 %v593, %v618
      %vm621 = vcmask 785920
      %622 = vst.msk [vmem:[#allocation4] sm:$0xff] %vm621, %v620
      %623 = vst.msk [vmem:[#allocation2] sm:$0xff] %vm585, %v567
      %624 = vrot.lane.b32.xlu0 %v445, 32
      %v625 = vpop.permute.xlu0 %624
      %626 = vrot.lane.b32.xlu0 %v450, 32
      %v627 = vpop.permute.xlu0 %626
      %v629 = vsel %vm365, %v625, 0
      %v632 = vsel %vm365, %v627, 0
      %634 = vmatpush.bf16.xpose.msra.mxu0 0
      %635 = vmatpush.bf16.xpose.msra.mxu0 0
      %636 = vmatpush.bf16.xpose.msra.mxu0 0
      %637 = vmatpush.bf16.xpose.msra.mxu0 0
      %638 = vmatpush.bf16.xpose.msra.mxu0 0
      %639 = vmatpush.bf16.xpose.msra.mxu0 0
      %640 = vmatpush.bf16.xpose.msra.mxu0 0
      %641 = vmatpush.bf16.xpose.msra.mxu0 %v632
      %642 = vmatmul.bf16.gmra.mxu0 %v629
      %v643 = vpop.f32.mrf.mxu0
      %v644 = vadd.f32 0.0, %v643
      %v645 = vpop.f32.mrf.mxu0
      %646 = vdwg.mxu0
      %v647 = vmul.f32 %v644, 0.17677669
      %v648 = vadd.f32 %v647, %v364
      %v649 = vld [vmem:[#allocation2] sm:$0xff]
      %v650 = vsel %vm388, %v648, -inf
      %651 = vmax.xlane.f32.xlu0 %v650
      %v652 = vpop.xlane.xlu0 %651
      %v653 = vmax.f32 %v649, %v652
      %v654 = vsub.f32 %v649, %v653
      %v655 = vmul.f32 %v654, 1.442695
      %v656 = vpow.pop %v655
      %658 = vset.pattern.permute.xlu0 3
      %659 = vperm.xlu0 %658, %v653
      %v660 = vpop.permute.xlu0 %659
      %v662 = vsub.f32 %v648, %v660
      %v663 = vmul.f32 %v662, 1.442695
      %v664 = vpow.pop %v663
      %v665 = vld [vmem:[#allocation3] sm:$0xff]
      %v666 = vmul.f32 %v656, %v665
      %v667 = vsel %vm388, %v664, 0.0
      %668 = vadd.xlane.f32.xlu0 %v667
      %v669 = vpop.xlane.xlu0 %668
      %v670 = vadd.f32 %v666, %v669
      %vm671 = vcmask 31768
      %672 = vst.msk [vmem:[#allocation3] sm:$0xff] %vm671, %v670
      %v673 = vld [vmem:[#allocation4] sm:$0xff]
      %675 = vset.pattern.permute.xlu0 3
      %676 = vperm.xlu0 %675, %v656
      %v677 = vpop.permute.xlu0 %676
      %v679 = vmul.f32 %v677, %v673
      %v680 = vpack.c.bf16 %v664, %v664
      %681 = vrot.lane.b32.xlu0 %v508, 32
      %v682 = vpop.permute.xlu0 %681
      %v684 = vsel %vm388, %v680, 0
      %v687 = vsel %vm423, %v682, 0
      %689 = vmatpush.bf16.msra.mxu0 0
      %690 = vmatpush.bf16.msra.mxu0 0
      %691 = vmatpush.bf16.msra.mxu0 0
      %692 = vmatpush.bf16.msra.mxu0 0
      %693 = vmatpush.bf16.msra.mxu0 0
      %694 = vmatpush.bf16.msra.mxu0 0
      %695 = vmatpush.bf16.msra.mxu0 0
      %696 = vmatpush.bf16.msra.mxu0 %v687
      %697 = vmatmul.bf16.gmra.mxu0 %v684
      %v698 = vpop.f32.mrf.mxu0
      %v699 = vadd.f32 0.0, %v698
      %v700 = vpop.f32.mrf.mxu0
      %701 = vdwg.mxu0
      %703 = vrot.lane.b32.xlu0 %v699, 96
      %v704 = vpop.permute.xlu0 %703
      %v706 = vadd.f32 %v679, %v704
      %vm707 = vcmask 1048320
      %708 = vst.msk [vmem:[#allocation4] sm:$0xff] %vm707, %v706
      %709 = vst.msk [vmem:[#allocation2] sm:$0xff] %vm671, %v653
      // Predicated region
      $region41: #{transformer_translator_forward.34} parent=35 // pred_check
        %p710 = pneg %p337
      $region42: #{transformer_translator_forward.34} parent=35 // pred_check_branch
        %712 = sbr.rel (%p710) target = $region44
      $region43: #{transformer_translator_forward.34} parent=35 // pred_region
        %v713 = vld [vmem:[#allocation3] sm:$0xff]
        %v714 = vrcp.pop %v713
        %v715 = vld [vmem:[#allocation4] sm:$0xff]
        %717 = vset.pattern.permute.xlu0 0
        %718 = vperm.xlu0 %717, %v714
        %v719 = vpop.permute.xlu0 %718
        %v721 = vmul.f32 %v715, %v719
        %v722 = vpack.c.bf16 %v721, %v721
        %vm723 = vcmask 257024
        %724 = vst.msk [vmem:[%s335] sm:$0xf] %vm723, %v722
        %v725 = vld [vmem:[#allocation3] sm:$0xff]
        %v726 = vrcp.pop %v725
        %v727 = vld [vmem:[#allocation4] sm:$0xff]
        %729 = vset.pattern.permute.xlu0 1
        %730 = vperm.xlu0 %729, %v726
        %v731 = vpop.permute.xlu0 %730
        %v733 = vmul.f32 %v727, %v731
        %v734 = vpack.c.bf16 %v733, %v733
        %vm735 = vcmask 519424
        %736 = vst.msk [vmem:[%s335] sm:$0xf] %vm735, %v734
        %v737 = vld [vmem:[#allocation3] sm:$0xff]
        %v738 = vrcp.pop %v737
        %v739 = vld [vmem:[#allocation4] sm:$0xff]
        %741 = vset.pattern.permute.xlu0 2
        %742 = vperm.xlu0 %741, %v738
        %v743 = vpop.permute.xlu0 %742
        %v745 = vmul.f32 %v739, %v743
        %v746 = vpack.c.bf16 %v745, %v745
        %vm747 = vcmask 781824
        %748 = vst.msk [vmem:[%s335] sm:$0xf] %vm747, %v746
        %v749 = vld [vmem:[#allocation3] sm:$0xff]
        %v750 = vrcp.pop %v749
        %v751 = vld [vmem:[#allocation4] sm:$0xff]
        %753 = vset.pattern.permute.xlu0 3
        %754 = vperm.xlu0 %753, %v750
        %v755 = vpop.permute.xlu0 %754
        %v757 = vmul.f32 %v751, %v755
        %v758 = vpack.c.bf16 %v757, %v757
        %vm759 = vcmask 1044224
        %760 = vst.msk [vmem:[%s335] sm:$0xf] %vm759, %v758
      $region44: #{transformer_translator_forward.34} parent=35 // pred_fallthru
        _
      %p761 = scmp.lt.s32.totalorder %s20, 7
      %s762 = scalar_select %p761, %s20, 7
      %p763 = scmp.lt.s32.totalorder %s21, 0
      %s764 = scalar_select %p763, %s21, 0
      %s765 = sadd.s32 %s764, %s762
      %s766 = smul.addr %s765, 4
      %s767 = scalar_lea.vmem %s4, %s766
      // Predicated region
      $region45: #{transformer_translator_forward.34} parent=35 // pred_check
        %p768 = pneg %p166
      $region46: #{transformer_translator_forward.34} parent=35 // pred_check_branch
        %770 = sbr.rel (%p768) target = $region48
      $region47: #{transformer_translator_forward.34} parent=35 // pred_region
        _
      $region48: #{transformer_translator_forward.34} parent=35 // pred_fallthru
        _
    $region36: #{transformer_translator_forward.34} parent=5 // pred_fallthru
      _
    %p771 = scmp.le.s32.totalorder 2, %s10
    // Predicated region
    $region49: #{transformer_translator_forward.34} parent=5 // pred_check
      %p772 = pneg %p771
    $region50: #{transformer_translator_forward.34} parent=5 // pred_check_branch
      %774 = sbr.rel (%p772) target = $region52
    $region51: #{transformer_translator_forward.34} parent=5 // pred_region
      %s775 = ssub.s32 %s10, 2
      // Predicated region
      $region53: #{transformer_translator_forward.34} parent=51 // pred_check
        %p776 = pneg %p172
      $region54: #{transformer_translator_forward.34} parent=51 // pred_check_branch
        %778 = sbr.rel (%p776) target = $region56
      $region55: #{transformer_translator_forward.34} parent=51 // pred_region
        %p779 = scmp.lt.s32.totalorder %s23, 7
        %s780 = scalar_select %p779, %s23, 7
        %p781 = scmp.lt.s32.totalorder %s24, 0
        %s782 = scalar_select %p781, %s24, 0
        %s783 = sadd.s32 %s782, %s780
        %s784 = smul.addr %s783, 4
        %s785 = scalar_lea.vmem %s4, %s784
      $region56: #{transformer_translator_forward.34} parent=51 // pred_fallthru
        _
    $region52: #{transformer_translator_forward.34} parent=5 // pred_fallthru
      _
  $region6: #{transformer_translator_forward.34} parent=0 // loop_footer
    %s14 = sadd.s32 1, %s10
  $region7: #{transformer_translator_forward.34} parent=0 // loop_footer_branch
    %9 = sbr.rel target = $region3
  $region8: #{transformer_translator_forward.34} parent=0 // loop_exit
    _

// kernel: transformer_translator_forward.33
$region0: #{transformer_translator_forward.33}
  #allocation0 [shape = 'u32[]', space=smem, size = 0x4, offset = 0x4, fixed_abs, tag = 'smem constant byte address 0x4 - core index']
  #allocation1 [shape = 'u32[72,128]{1,0:T(1,128)}', space=vmem, size = 0x9000, scoped, tag = 'internal scratch']
  #allocation2 [shape = 'f32[64,384]{1,0:T(8,128)}', space=vmem, size = 0x18000, scoped, tag = 'scratch operand']
  %s0 = inlined_call_operand.vmem [shape: bf16[64,128], index: 0, kind: input, shape index: {}]
  %s1 = inlined_call_operand.vmem [shape: bf16[128,384], index: 1, kind: input, shape index: {}]
  %s2 = inlined_call_operand.vmem [shape: f32[1,384], index: 2, kind: input, shape index: {}]
  %s3 = inlined_call_operand.vmem [shape: bf16[64,384], index: 3, kind: output, shape index: {}]
  %s4 = sld [smem:[#allocation0]]
  $region30: #{transformer_translator_forward.33} parent=0
    _
  %s6 = ssub.s32 1, %s4
  %s7 = scalar_select 0, %s6, %s4
  // Predicated region
  $region2: #{transformer_translator_forward.33} parent=0 // pred_check
    _
  $region3: #{transformer_translator_forward.33} parent=0 // pred_check_branch
    %9 = sbr.rel (0) target = $region5
  $region4: #{transformer_translator_forward.33} parent=0 // pred_region
    _
  $region5: #{transformer_translator_forward.33} parent=0 // pred_fallthru
    _
  // Predicated region
  $region6: #{transformer_translator_forward.33} parent=0 // pred_check
    _
  $region7: #{transformer_translator_forward.33} parent=0 // pred_check_branch
    %11 = sbr.rel (0) target = $region9
  $region8: #{transformer_translator_forward.33} parent=0 // pred_region
    _
  $region9: #{transformer_translator_forward.33} parent=0 // pred_fallthru
    _
  // Predicated region
  $region10: #{transformer_translator_forward.33} parent=0 // pred_check
    _
  $region11: #{transformer_translator_forward.33} parent=0 // pred_check_branch
    %13 = sbr.rel (0) target = $region13
  $region12: #{transformer_translator_forward.33} parent=0 // pred_region
    _
  $region13: #{transformer_translator_forward.33} parent=0 // pred_fallthru
    _
  %p14 = scmp.eq.s32.totalorder 0, 0
  // Predicated region
  $region14: #{transformer_translator_forward.33} parent=0 // pred_check
    %p15 = pneg %p14
  $region15: #{transformer_translator_forward.33} parent=0 // pred_check_branch
    %17 = sbr.rel (%p15) target = $region17
  $region16: #{transformer_translator_forward.33} parent=0 // pred_region
    %18 = vst [vmem:[#allocation2] sm:$0xff] 0.0
    %19 = vst [vmem:[#allocation2 + $0x8] sm:$0xff] 0.0
    %20 = vst [vmem:[#allocation2 + $0x10] sm:$0xff] 0.0
    %21 = vst [vmem:[#allocation2 + $0x18] sm:$0xff] 0.0
    %22 = vst [vmem:[#allocation2 + $0x20] sm:$0xff] 0.0
    %23 = vst [vmem:[#allocation2 + $0x28] sm:$0xff] 0.0
    %24 = vst [vmem:[#allocation2 + $0x30] sm:$0xff] 0.0
    %25 = vst [vmem:[#allocation2 + $0x38] sm:$0xff] 0.0
    %26 = vst [vmem:[#allocation2 + $0x40] sm:$0xff] 0.0
    %27 = vst [vmem:[#allocation2 + $0x48] sm:$0xff] 0.0
    %28 = vst [vmem:[#allocation2 + $0x50] sm:$0xff] 0.0
    %29 = vst [vmem:[#allocation2 + $0x58] sm:$0xff] 0.0
    %30 = vst [vmem:[#allocation2 + $0x60] sm:$0xff] 0.0
    %31 = vst [vmem:[#allocation2 + $0x68] sm:$0xff] 0.0
    %32 = vst [vmem:[#allocation2 + $0x70] sm:$0xff] 0.0
    %33 = vst [vmem:[#allocation2 + $0x78] sm:$0xff] 0.0
    %34 = vst [vmem:[#allocation2 + $0x80] sm:$0xff] 0.0
    %35 = vst [vmem:[#allocation2 + $0x88] sm:$0xff] 0.0
    %36 = vst [vmem:[#allocation2 + $0x90] sm:$0xff] 0.0
    %37 = vst [vmem:[#allocation2 + $0x98] sm:$0xff] 0.0
    %38 = vst [vmem:[#allocation2 + $0xa0] sm:$0xff] 0.0
    %39 = vst [vmem:[#allocation2 + $0xa8] sm:$0xff] 0.0
    %40 = vst [vmem:[#allocation2 + $0xb0] sm:$0xff] 0.0
    %41 = vst [vmem:[#allocation2 + $0xb8] sm:$0xff] 0.0
  $region17: #{transformer_translator_forward.33} parent=0 // pred_fallthru
    _
  %v42 = vld [vmem:[#allocation2] sm:$0xff]
  %v43 = vld [vmem:[#allocation2 + $0x8] sm:$0xff]
  %v44 = vld [vmem:[#allocation2 + $0x10] sm:$0xff]
  %v45 = vld [vmem:[#allocation2 + $0x18] sm:$0xff]
  %v46 = vld [vmem:[#allocation2 + $0x20] sm:$0xff]
  %v47 = vld [vmem:[#allocation2 + $0x28] sm:$0xff]
  %v48 = vld [vmem:[#allocation2 + $0x30] sm:$0xff]
  %v49 = vld [vmem:[#allocation2 + $0x38] sm:$0xff]
  %v50 = vld [vmem:[#allocation2 + $0x40] sm:$0xff]
  %v51 = vld [vmem:[#allocation2 + $0x48] sm:$0xff]
  %v52 = vld [vmem:[#allocation2 + $0x50] sm:$0xff]
  %v53 = vld [vmem:[#allocation2 + $0x58] sm:$0xff]
  %v54 = vld [vmem:[#allocation2 + $0x60] sm:$0xff]
  %v55 = vld [vmem:[#allocation2 + $0x68] sm:$0xff]
  %v56 = vld [vmem:[#allocation2 + $0x70] sm:$0xff]
  %v57 = vld [vmem:[#allocation2 + $0x78] sm:$0xff]
  %v58 = vld [vmem:[#allocation2 + $0x80] sm:$0xff]
  %v59 = vld [vmem:[#allocation2 + $0x88] sm:$0xff]
  %v60 = vld [vmem:[#allocation2 + $0x90] sm:$0xff]
  %v61 = vld [vmem:[#allocation2 + $0x98] sm:$0xff]
  %v62 = vld [vmem:[#allocation2 + $0xa0] sm:$0xff]
  %v63 = vld [vmem:[#allocation2 + $0xa8] sm:$0xff]
  %v64 = vld [vmem:[#allocation2 + $0xb0] sm:$0xff]
  %v65 = vld [vmem:[#allocation2 + $0xb8] sm:$0xff]
  %v66 = vld [vmem:[%s0] sm:$0xf]
  %v67 = vld [vmem:[%s0 + $0x4] sm:$0xf]
  %v68 = vld [vmem:[%s0 + $0x8] sm:$0xf]
  %v69 = vld [vmem:[%s0 + $0xc] sm:$0xf]
  %v70 = vld [vmem:[%s0 + $0x10] sm:$0xf]
  %v71 = vld [vmem:[%s0 + $0x14] sm:$0xf]
  %v72 = vld [vmem:[%s0 + $0x18] sm:$0xf]
  %v73 = vld [vmem:[%s0 + $0x1c] sm:$0xf]
  %v74 = vld [vmem:[%s1] sm:$0xff]
  %v75 = vld [vmem:[%s1 + $0x8] sm:$0xf]
  %v76 = vld [vmem:[%s1 + $0xc] sm:$0xff]
  %v77 = vld [vmem:[%s1 + $0x14] sm:$0xf]
  %v78 = vld [vmem:[%s1 + $0x18] sm:$0xff]
  %v79 = vld [vmem:[%s1 + $0x20] sm:$0xf]
  %v80 = vld [vmem:[%s1 + $0x24] sm:$0xff]
  %v81 = vld [vmem:[%s1 + $0x2c] sm:$0xf]
  %v82 = vld [vmem:[%s1 + $0x30] sm:$0xff]
  %v83 = vld [vmem:[%s1 + $0x38] sm:$0xf]
  %v84 = vld [vmem:[%s1 + $0x3c] sm:$0xff]
  %v85 = vld [vmem:[%s1 + $0x44] sm:$0xf]
  %v86 = vld [vmem:[%s1 + $0x48] sm:$0xff]
  %v87 = vld [vmem:[%s1 + $0x50] sm:$0xf]
  %v88 = vld [vmem:[%s1 + $0x54] sm:$0xff]
  %v89 = vld [vmem:[%s1 + $0x5c] sm:$0xf]
  %v90 = vld [vmem:[%s1 + $0x60] sm:$0xff]
  %v91 = vld [vmem:[%s1 + $0x68] sm:$0xf]
  %v92 = vld [vmem:[%s1 + $0x6c] sm:$0xff]
  %v93 = vld [vmem:[%s1 + $0x74] sm:$0xf]
  %v94 = vld [vmem:[%s1 + $0x78] sm:$0xff]
  %v95 = vld [vmem:[%s1 + $0x80] sm:$0xf]
  %v96 = vld [vmem:[%s1 + $0x84] sm:$0xff]
  %v97 = vld [vmem:[%s1 + $0x8c] sm:$0xf]
  %v98 = vld [vmem:[%s1 + $0x90] sm:$0xff]
  %v99 = vld [vmem:[%s1 + $0x98] sm:$0xf]
  %v100 = vld [vmem:[%s1 + $0x9c] sm:$0xff]
  %v101 = vld [vmem:[%s1 + $0xa4] sm:$0xf]
  %v102 = vld [vmem:[%s1 + $0xa8] sm:$0xff]
  %v103 = vld [vmem:[%s1 + $0xb0] sm:$0xf]
  %v104 = vld [vmem:[%s1 + $0xb4] sm:$0xff]
  %v105 = vld [vmem:[%s1 + $0xbc] sm:$0xf]
  %v114 = vunpack.c.l.b16 %v66
  %v115 = vunpack.c.l.b16 %v67
  %v116 = vunpack.c.l.b16 %v68
  %v117 = vunpack.c.l.b16 %v69
  %v118 = vunpack.c.l.b16 %v70
  %v119 = vunpack.c.l.b16 %v71
  %v120 = vunpack.c.l.b16 %v72
  %v121 = vunpack.c.l.b16 %v73
  %v122 = vpack.c.b16 %v115, %v114
  %v123 = vpack.c.b16 %v117, %v116
  %v124 = vpack.c.b16 %v119, %v118
  %v125 = vpack.c.b16 %v121, %v120
  %v162 = vunpack.c.l.b16 %v74
  %v163 = vunpack.c.h.b16 %v74
  %v164 = vunpack.c.l.b16 %v75
  %v165 = vunpack.c.l.b16 %v76
  %v166 = vunpack.c.h.b16 %v76
  %v167 = vunpack.c.l.b16 %v77
  %v168 = vunpack.c.l.b16 %v78
  %v169 = vunpack.c.h.b16 %v78
  %v170 = vunpack.c.l.b16 %v79
  %v171 = vunpack.c.l.b16 %v80
  %v172 = vunpack.c.h.b16 %v80
  %v173 = vunpack.c.l.b16 %v81
  %v174 = vunpack.c.l.b16 %v82
  %v175 = vunpack.c.h.b16 %v82
  %v176 = vunpack.c.l.b16 %v83
  %v177 = vunpack.c.l.b16 %v84
  %v178 = vunpack.c.h.b16 %v84
  %v179 = vunpack.c.l.b16 %v85
  %v180 = vunpack.c.l.b16 %v86
  %v181 = vunpack.c.h.b16 %v86
  %v182 = vunpack.c.l.b16 %v87
  %v183 = vunpack.c.l.b16 %v88
  %v184 = vunpack.c.h.b16 %v88
  %v185 = vunpack.c.l.b16 %v89
  %v186 = vunpack.c.l.b16 %v90
  %v187 = vunpack.c.h.b16 %v90
  %v188 = vunpack.c.l.b16 %v91
  %v189 = vunpack.c.l.b16 %v92
  %v190 = vunpack.c.h.b16 %v92
  %v191 = vunpack.c.l.b16 %v93
  %v192 = vunpack.c.l.b16 %v94
  %v193 = vunpack.c.h.b16 %v94
  %v194 = vunpack.c.l.b16 %v95
  %v195 = vunpack.c.l.b16 %v96
  %v196 = vunpack.c.h.b16 %v96
  %v197 = vunpack.c.l.b16 %v97
  %v198 = vunpack.c.l.b16 %v98
  %v199 = vunpack.c.h.b16 %v98
  %v200 = vunpack.c.l.b16 %v99
  %v201 = vunpack.c.l.b16 %v100
  %v202 = vunpack.c.h.b16 %v100
  %v203 = vunpack.c.l.b16 %v101
  %v204 = vunpack.c.l.b16 %v102
  %v205 = vunpack.c.h.b16 %v102
  %v206 = vunpack.c.l.b16 %v103
  %v207 = vunpack.c.l.b16 %v104
  %v208 = vunpack.c.h.b16 %v104
  %v209 = vunpack.c.l.b16 %v105
  %v210 = vpack.c.b16 %v165, %v162
  %v211 = vpack.c.b16 %v166, %v163
  %v212 = vpack.c.b16 %v167, %v164
  %v213 = vpack.c.b16 %v171, %v168
  %v214 = vpack.c.b16 %v172, %v169
  %v215 = vpack.c.b16 %v173, %v170
  %v216 = vpack.c.b16 %v177, %v174
  %v217 = vpack.c.b16 %v178, %v175
  %v218 = vpack.c.b16 %v179, %v176
  %v219 = vpack.c.b16 %v183, %v180
  %v220 = vpack.c.b16 %v184, %v181
  %v221 = vpack.c.b16 %v185, %v182
  %v222 = vpack.c.b16 %v189, %v186
  %v223 = vpack.c.b16 %v190, %v187
  %v224 = vpack.c.b16 %v191, %v188
  %v225 = vpack.c.b16 %v195, %v192
  %v226 = vpack.c.b16 %v196, %v193
  %v227 = vpack.c.b16 %v197, %v194
  %v228 = vpack.c.b16 %v201, %v198
  %v229 = vpack.c.b16 %v202, %v199
  %v230 = vpack.c.b16 %v203, %v200
  %v231 = vpack.c.b16 %v207, %v204
  %v232 = vpack.c.b16 %v208, %v205
  %v233 = vpack.c.b16 %v209, %v206
  %258 = vmatpush.bf16.msra.mxu0 %v231
  %259 = vmatpush.bf16.msra.mxu0 %v228
  %260 = vmatpush.bf16.msra.mxu0 %v225
  %261 = vmatpush.bf16.msra.mxu0 %v222
  %262 = vmatpush.bf16.msra.mxu0 %v219
  %263 = vmatpush.bf16.msra.mxu0 %v216
  %264 = vmatpush.bf16.msra.mxu0 %v213
  %265 = vmatpush.bf16.msra.mxu0 %v210
  %266 = vmatmul.bf16.gmra.mxu0 %v122
  %v267 = vpop.f32.mrf.mxu0
  %v268 = vadd.f32 0.0, %v267
  %v269 = vpop.f32.mrf.mxu0
  %v270 = vadd.f32 0.0, %v269
  %271 = vmatmul.bf16.gmra.mxu0 %v123
  %v272 = vpop.f32.mrf.mxu0
  %v273 = vadd.f32 0.0, %v272
  %v274 = vpop.f32.mrf.mxu0
  %v275 = vadd.f32 0.0, %v274
  %276 = vmatmul.bf16.gmra.mxu0 %v124
  %v277 = vpop.f32.mrf.mxu0
  %v278 = vadd.f32 0.0, %v277
  %v279 = vpop.f32.mrf.mxu0
  %v280 = vadd.f32 0.0, %v279
  %281 = vmatmul.bf16.gmra.mxu0 %v125
  %v282 = vpop.f32.mrf.mxu0
  %v283 = vadd.f32 0.0, %v282
  %v284 = vpop.f32.mrf.mxu0
  %v285 = vadd.f32 0.0, %v284
  %286 = vdwg.mxu0
  %287 = vmatpush.bf16.msra.mxu0 %v232
  %288 = vmatpush.bf16.msra.mxu0 %v229
  %289 = vmatpush.bf16.msra.mxu0 %v226
  %290 = vmatpush.bf16.msra.mxu0 %v223
  %291 = vmatpush.bf16.msra.mxu0 %v220
  %292 = vmatpush.bf16.msra.mxu0 %v217
  %293 = vmatpush.bf16.msra.mxu0 %v214
  %294 = vmatpush.bf16.msra.mxu0 %v211
  %295 = vmatmul.bf16.gmra.mxu0 %v122
  %v296 = vpop.f32.mrf.mxu0
  %v297 = vadd.f32 0.0, %v296
  %v298 = vpop.f32.mrf.mxu0
  %v299 = vadd.f32 0.0, %v298
  %300 = vmatmul.bf16.gmra.mxu0 %v123
  %v301 = vpop.f32.mrf.mxu0
  %v302 = vadd.f32 0.0, %v301
  %v303 = vpop.f32.mrf.mxu0
  %v304 = vadd.f32 0.0, %v303
  %305 = vmatmul.bf16.gmra.mxu0 %v124
  %v306 = vpop.f32.mrf.mxu0
  %v307 = vadd.f32 0.0, %v306
  %v308 = vpop.f32.mrf.mxu0
  %v309 = vadd.f32 0.0, %v308
  %310 = vmatmul.bf16.gmra.mxu0 %v125
  %v311 = vpop.f32.mrf.mxu0
  %v312 = vadd.f32 0.0, %v311
  %v313 = vpop.f32.mrf.mxu0
  %v314 = vadd.f32 0.0, %v313
  %315 = vdwg.mxu0
  %316 = vmatpush.bf16.msra.mxu0 %v233
  %317 = vmatpush.bf16.msra.mxu0 %v230
  %318 = vmatpush.bf16.msra.mxu0 %v227
  %319 = vmatpush.bf16.msra.mxu0 %v224
  %320 = vmatpush.bf16.msra.mxu0 %v221
  %321 = vmatpush.bf16.msra.mxu0 %v218
  %322 = vmatpush.bf16.msra.mxu0 %v215
  %323 = vmatpush.bf16.msra.mxu0 %v212
  %324 = vmatmul.bf16.gmra.mxu0 %v122
  %v325 = vpop.f32.mrf.mxu0
  %v326 = vadd.f32 0.0, %v325
  %v327 = vpop.f32.mrf.mxu0
  %v328 = vadd.f32 0.0, %v327
  %329 = vmatmul.bf16.gmra.mxu0 %v123
  %v330 = vpop.f32.mrf.mxu0
  %v331 = vadd.f32 0.0, %v330
  %v332 = vpop.f32.mrf.mxu0
  %v333 = vadd.f32 0.0, %v332
  %334 = vmatmul.bf16.gmra.mxu0 %v124
  %v335 = vpop.f32.mrf.mxu0
  %v336 = vadd.f32 0.0, %v335
  %v337 = vpop.f32.mrf.mxu0
  %v338 = vadd.f32 0.0, %v337
  %339 = vmatmul.bf16.gmra.mxu0 %v125
  %v340 = vpop.f32.mrf.mxu0
  %v341 = vadd.f32 0.0, %v340
  %v342 = vpop.f32.mrf.mxu0
  %v343 = vadd.f32 0.0, %v342
  %344 = vdwg.mxu0
  %v345 = vadd.f32 %v42, %v268
  %v346 = vadd.f32 %v43, %v297
  %v347 = vadd.f32 %v44, %v326
  %v348 = vadd.f32 %v45, %v270
  %v349 = vadd.f32 %v46, %v299
  %v350 = vadd.f32 %v47, %v328
  %v351 = vadd.f32 %v48, %v273
  %v352 = vadd.f32 %v49, %v302
  %v353 = vadd.f32 %v50, %v331
  %v354 = vadd.f32 %v51, %v275
  %v355 = vadd.f32 %v52, %v304
  %v356 = vadd.f32 %v53, %v333
  %v357 = vadd.f32 %v54, %v278
  %v358 = vadd.f32 %v55, %v307
  %v359 = vadd.f32 %v56, %v336
  %v360 = vadd.f32 %v57, %v280
  %v361 = vadd.f32 %v58, %v309
  %v362 = vadd.f32 %v59, %v338
  %v363 = vadd.f32 %v60, %v283
  %v364 = vadd.f32 %v61, %v312
  %v365 = vadd.f32 %v62, %v341
  %v366 = vadd.f32 %v63, %v285
  %v367 = vadd.f32 %v64, %v314
  %v368 = vadd.f32 %v65, %v343
  %369 = vst [vmem:[#allocation2] sm:$0xff] %v345
  %370 = vst [vmem:[#allocation2 + $0x8] sm:$0xff] %v346
  %371 = vst [vmem:[#allocation2 + $0x10] sm:$0xff] %v347
  %372 = vst [vmem:[#allocation2 + $0x18] sm:$0xff] %v348
  %373 = vst [vmem:[#allocation2 + $0x20] sm:$0xff] %v349
  %374 = vst [vmem:[#allocation2 + $0x28] sm:$0xff] %v350
  %375 = vst [vmem:[#allocation2 + $0x30] sm:$0xff] %v351
  %376 = vst [vmem:[#allocation2 + $0x38] sm:$0xff] %v352
  %377 = vst [vmem:[#allocation2 + $0x40] sm:$0xff] %v353
  %378 = vst [vmem:[#allocation2 + $0x48] sm:$0xff] %v354
  %379 = vst [vmem:[#allocation2 + $0x50] sm:$0xff] %v355
  %380 = vst [vmem:[#allocation2 + $0x58] sm:$0xff] %v356
  %381 = vst [vmem:[#allocation2 + $0x60] sm:$0xff] %v357
  %382 = vst [vmem:[#allocation2 + $0x68] sm:$0xff] %v358
  %383 = vst [vmem:[#allocation2 + $0x70] sm:$0xff] %v359
  %384 = vst [vmem:[#allocation2 + $0x78] sm:$0xff] %v360
  %385 = vst [vmem:[#allocation2 + $0x80] sm:$0xff] %v361
  %386 = vst [vmem:[#allocation2 + $0x88] sm:$0xff] %v362
  %387 = vst [vmem:[#allocation2 + $0x90] sm:$0xff] %v363
  %388 = vst [vmem:[#allocation2 + $0x98] sm:$0xff] %v364
  %389 = vst [vmem:[#allocation2 + $0xa0] sm:$0xff] %v365
  %390 = vst [vmem:[#allocation2 + $0xa8] sm:$0xff] %v366
  %391 = vst [vmem:[#allocation2 + $0xb0] sm:$0xff] %v367
  %392 = vst [vmem:[#allocation2 + $0xb8] sm:$0xff] %v368
  // Predicated region
  $region18: #{transformer_translator_forward.33} parent=0 // pred_check
    %p393 = pneg %p14
  $region19: #{transformer_translator_forward.33} parent=0 // pred_check_branch
    %395 = sbr.rel (%p393) target = $region21
  $region20: #{transformer_translator_forward.33} parent=0 // pred_region
    %v396 = vld [vmem:[#allocation2] sm:$0xff]
    %v397 = vld [vmem:[#allocation2 + $0x8] sm:$0xff]
    %v398 = vld [vmem:[#allocation2 + $0x10] sm:$0xff]
    %v399 = vld [vmem:[#allocation2 + $0x18] sm:$0xff]
    %v400 = vld [vmem:[#allocation2 + $0x20] sm:$0xff]
    %v401 = vld [vmem:[#allocation2 + $0x28] sm:$0xff]
    %v402 = vld [vmem:[#allocation2 + $0x30] sm:$0xff]
    %v403 = vld [vmem:[#allocation2 + $0x38] sm:$0xff]
    %v404 = vld [vmem:[#allocation2 + $0x40] sm:$0xff]
    %v405 = vld [vmem:[#allocation2 + $0x48] sm:$0xff]
    %v406 = vld [vmem:[#allocation2 + $0x50] sm:$0xff]
    %v407 = vld [vmem:[#allocation2 + $0x58] sm:$0xff]
    %v408 = vld [vmem:[#allocation2 + $0x60] sm:$0xff]
    %v409 = vld [vmem:[#allocation2 + $0x68] sm:$0xff]
    %v410 = vld [vmem:[#allocation2 + $0x70] sm:$0xff]
    %v411 = vld [vmem:[#allocation2 + $0x78] sm:$0xff]
    %v412 = vld [vmem:[#allocation2 + $0x80] sm:$0xff]
    %v413 = vld [vmem:[#allocation2 + $0x88] sm:$0xff]
    %v414 = vld [vmem:[#allocation2 + $0x90] sm:$0xff]
    %v415 = vld [vmem:[#allocation2 + $0x98] sm:$0xff]
    %v416 = vld [vmem:[#allocation2 + $0xa0] sm:$0xff]
    %v417 = vld [vmem:[#allocation2 + $0xa8] sm:$0xff]
    %v418 = vld [vmem:[#allocation2 + $0xb0] sm:$0xff]
    %v419 = vld [vmem:[#allocation2 + $0xb8] sm:$0xff]
    %v420 = vld [vmem:[%s2] sm:$0x7]
    %v422 = vperm.slane %v420, 0
    %v423 = vperm.slane %v420, 1
    %v424 = vperm.slane %v420, 2
    %v428 = vadd.f32 %v396, %v422
    %v429 = vadd.f32 %v397, %v423
    %v430 = vadd.f32 %v398, %v424
    %v431 = vadd.f32 %v399, %v422
    %v432 = vadd.f32 %v400, %v423
    %v433 = vadd.f32 %v401, %v424
    %v434 = vadd.f32 %v402, %v422
    %v435 = vadd.f32 %v403, %v423
    %v436 = vadd.f32 %v404, %v424
    %v437 = vadd.f32 %v405, %v422
    %v438 = vadd.f32 %v406, %v423
    %v439 = vadd.f32 %v407, %v424
    %v440 = vadd.f32 %v408, %v422
    %v441 = vadd.f32 %v409, %v423
    %v442 = vadd.f32 %v410, %v424
    %v443 = vadd.f32 %v411, %v422
    %v444 = vadd.f32 %v412, %v423
    %v445 = vadd.f32 %v413, %v424
    %v446 = vadd.f32 %v414, %v422
    %v447 = vadd.f32 %v415, %v423
    %v448 = vadd.f32 %v416, %v424
    %v449 = vadd.f32 %v417, %v422
    %v450 = vadd.f32 %v418, %v423
    %v451 = vadd.f32 %v419, %v424
    %v452 = vpack.c.bf16 %v429, %v428
    %v453 = vpack.c.bf16 %v430, %v430
    %v454 = vpack.c.bf16 %v432, %v431
    %v455 = vpack.c.bf16 %v433, %v433
    %v456 = vpack.c.bf16 %v435, %v434
    %v457 = vpack.c.bf16 %v436, %v436
    %v458 = vpack.c.bf16 %v438, %v437
    %v459 = vpack.c.bf16 %v439, %v439
    %v460 = vpack.c.bf16 %v441, %v440
    %v461 = vpack.c.bf16 %v442, %v442
    %v462 = vpack.c.bf16 %v444, %v443
    %v463 = vpack.c.bf16 %v445, %v445
    %v464 = vpack.c.bf16 %v447, %v446
    %v465 = vpack.c.bf16 %v448, %v448
    %v466 = vpack.c.bf16 %v450, %v449
    %v467 = vpack.c.bf16 %v451, %v451
    %468 = vst [vmem:[%s3] sm:$0xff] %v452
    %469 = vst [vmem:[%s3 + $0x8] sm:$0xf] %v453
    %470 = vst [vmem:[%s3 + $0xc] sm:$0xff] %v454
    %471 = vst [vmem:[%s3 + $0x14] sm:$0xf] %v455
    %472 = vst [vmem:[%s3 + $0x18] sm:$0xff] %v456
    %473 = vst [vmem:[%s3 + $0x20] sm:$0xf] %v457
    %474 = vst [vmem:[%s3 + $0x24] sm:$0xff] %v458
    %475 = vst [vmem:[%s3 + $0x2c] sm:$0xf] %v459
    %476 = vst [vmem:[%s3 + $0x30] sm:$0xff] %v460
    %477 = vst [vmem:[%s3 + $0x38] sm:$0xf] %v461
    %478 = vst [vmem:[%s3 + $0x3c] sm:$0xff] %v462
    %479 = vst [vmem:[%s3 + $0x44] sm:$0xf] %v463
    %480 = vst [vmem:[%s3 + $0x48] sm:$0xff] %v464
    %481 = vst [vmem:[%s3 + $0x50] sm:$0xf] %v465
    %482 = vst [vmem:[%s3 + $0x54] sm:$0xff] %v466
    %483 = vst [vmem:[%s3 + $0x5c] sm:$0xf] %v467
  $region21: #{transformer_translator_forward.33} parent=0 // pred_fallthru
    _
  // Predicated region
  $region22: #{transformer_translator_forward.33} parent=0 // pred_check
    _
  $region23: #{transformer_translator_forward.33} parent=0 // pred_check_branch
    %485 = sbr.rel (0) target = $region25
  $region24: #{transformer_translator_forward.33} parent=0 // pred_region
    _
  $region25: #{transformer_translator_forward.33} parent=0 // pred_fallthru
    _
  // Predicated region
  $region26: #{transformer_translator_forward.33} parent=0 // pred_check
    _
  $region27: #{transformer_translator_forward.33} parent=0 // pred_check_branch
    %487 = sbr.rel (0) target = $region29
  $region28: #{transformer_translator_forward.33} parent=0 // pred_region
    _
  $region29: #{transformer_translator_forward.33} parent=0 // pred_fallthru
    _

// kernel: transformer_translator_forward.26
$region0: #{transformer_translator_forward.26}
  #allocation0 [shape = 'u32[]', space=smem, size = 0x4, offset = 0x4, fixed_abs, tag = 'smem constant byte address 0x4 - core index']
  #allocation1 [shape = 'u32[72,128]{1,0:T(1,128)}', space=vmem, size = 0x9000, scoped, tag = 'internal scratch']
  #allocation2 [shape = 'f32[8,4]{1,0:T(8,128)}', space=vmem, size = 0x1000, scoped, tag = 'scratch operand']
  #allocation3 [shape = 'f32[8,4]{1,0:T(8,128)}', space=vmem, size = 0x1000, scoped, tag = 'scratch operand']
  #allocation4 [shape = 'f32[8,128]{1,0:T(8,128)}', space=vmem, size = 0x1000, scoped, tag = 'scratch operand']
  %s0 = inlined_call_operand.vmem [shape: bf16[8,8,384], index: 0, kind: input, shape index: {}, may-alias: {0,1,2}]
  %s1 = inlined_call_operand.vmem [shape: bf16[8,8,384], index: 1, kind: input, shape index: {}, may-alias: {0,1,2}]
  %s2 = inlined_call_operand.vmem [shape: bf16[8,8,384], index: 2, kind: input, shape index: {}, may-alias: {0,1,2}]
  %s3 = inlined_call_operand.vmem [shape: f32[8,1,8], index: 3, kind: input, shape index: {}]
  %s4 = inlined_call_operand.vmem [shape: bf16[8,8,128], index: 4, kind: output, shape index: {}]
  %s5 = sld [smem:[#allocation0]]
  $region57: #{transformer_translator_forward.26} parent=0
    _
  %s7 = ssub.s32 1, %s5
  %s8 = scalar_select 0, %s7, %s5
  loop: start=0, step=1, limit=10
  $region2: #{transformer_translator_forward.26} parent=0 // loop_pre_header
    _
  $region3: #{transformer_translator_forward.26} parent=0 // loop_header
    %s10 = sphi 0, %s14
    %p11 = scmp.ge.s32.totalorder %s10, 10
    %s17 = sphi 0, %s36
    %s18 = sphi 0, %s32
    %s19 = sphi 0, %s28
    %s20 = sphi 0, %s17
    %s21 = sphi 0, %s18
    %s22 = sphi 0, %s19
    %s23 = sphi 0, %s20
    %s24 = sphi 0, %s21
    %s25 = sphi 0, %s22
    %s41 = sphi 0, %s43
    %s44 = sphi 0, %s41
    %s45 = sphi 0, %s44
    %s61 = sphi 0, %s45
    %s69 = sphi 0, %s71
    %s72 = sphi 0, %s69
    %s73 = sphi 0, %s72
    %s89 = sphi 0, %s73
    %s97 = sphi 0, %s99
    %s100 = sphi 0, %s97
    %s101 = sphi 0, %s100
    %s117 = sphi 0, %s101
    %s125 = sphi 0, %s127
    %s128 = sphi 0, %s125
    %s129 = sphi 0, %s128
    %s145 = sphi 0, %s129
    %s153 = sphi 0, %s155
    %s156 = sphi 0, %s153
    %s157 = sphi 0, %s156
    %s173 = sphi 0, %s157
  $region4: #{transformer_translator_forward.26} parent=0 // loop_header_branch
    %13 = sbr.rel (%p11) target = $region8
  $region5: #{transformer_translator_forward.26} parent=0 // loop_body
    %s15 = ssub.s32 %s10, 1
    %s16 = ssub.s32 %s10, 2
    %s26 = sadd.s32 1, %s19
    %p27 = scmp.ge.s32.totalorder %s26, 1
    %s28 = scalar_select %p27, 0, %s26
    %s29 = sadd.s32 1, %s18
    %s30 = scalar_select %p27, %s29, %s18
    %p31 = scmp.ge.s32.totalorder %s30, 1
    %s32 = scalar_select %p31, 0, %s30
    %s33 = sadd.s32 1, %s17
    %s34 = scalar_select %p31, %s33, %s17
    %p35 = scmp.ge.s32.totalorder %s34, 8
    %s36 = scalar_select %p35, 0, %s34
    %s37 = ssub.s32 %s17, %s36
    %s38 = ssub.s32 %s18, %s32
    %s39 = sor.u32 %s37, %s38
    %p40 = scmp.eq.s32.totalorder %s39, 0
    %s42 = sadd.s32 %s41, 1
    %s43 = scalar_select %p40, %s41, %s42
    %p46 = pneg %p40
    %p47 = scmp.eq.s32.totalorder %s10, 7
    %p48 = por %p46, %p47
    %p49 = scmp.ne.s32.totalorder %s41, %s44
    %p50 = scmp.eq.s32.totalorder %s10, 0
    %p51 = por %p49, %p50
    %p52 = scmp.ne.s32.totalorder %s41, %s44
    %p53 = scmp.eq.s32.totalorder %s15, 7
    %p54 = por %p52, %p53
    %p55 = scmp.ne.s32.totalorder %s44, %s45
    %p56 = scmp.eq.s32.totalorder %s15, 0
    %p57 = por %p55, %p56
    %p58 = scmp.ne.s32.totalorder %s44, %s45
    %p59 = scmp.eq.s32.totalorder %s16, 7
    %p60 = por %p58, %p59
    %p62 = scmp.ne.s32.totalorder %s45, %s61
    %p63 = scmp.eq.s32.totalorder %s16, 0
    %p64 = por %p62, %p63
    %s65 = ssub.s32 %s17, %s36
    %s66 = ssub.s32 %s19, %s28
    %s67 = sor.u32 %s65, %s66
    %p68 = scmp.eq.s32.totalorder %s67, 0
    %s70 = sadd.s32 %s69, 1
    %s71 = scalar_select %p68, %s69, %s70
    %p74 = pneg %p68
    %p75 = scmp.eq.s32.totalorder %s10, 7
    %p76 = por %p74, %p75
    %p77 = scmp.ne.s32.totalorder %s69, %s72
    %p78 = scmp.eq.s32.totalorder %s10, 0
    %p79 = por %p77, %p78
    %p80 = scmp.ne.s32.totalorder %s69, %s72
    %p81 = scmp.eq.s32.totalorder %s15, 7
    %p82 = por %p80, %p81
    %p83 = scmp.ne.s32.totalorder %s72, %s73
    %p84 = scmp.eq.s32.totalorder %s15, 0
    %p85 = por %p83, %p84
    %p86 = scmp.ne.s32.totalorder %s72, %s73
    %p87 = scmp.eq.s32.totalorder %s16, 7
    %p88 = por %p86, %p87
    %p90 = scmp.ne.s32.totalorder %s73, %s89
    %p91 = scmp.eq.s32.totalorder %s16, 0
    %p92 = por %p90, %p91
    %s93 = ssub.s32 %s17, %s36
    %s94 = ssub.s32 %s19, %s28
    %s95 = sor.u32 %s93, %s94
    %p96 = scmp.eq.s32.totalorder %s95, 0
    %s98 = sadd.s32 %s97, 1
    %s99 = scalar_select %p96, %s97, %s98
    %p102 = pneg %p96
    %p103 = scmp.eq.s32.totalorder %s10, 7
    %p104 = por %p102, %p103
    %p105 = scmp.ne.s32.totalorder %s97, %s100
    %p106 = scmp.eq.s32.totalorder %s10, 0
    %p107 = por %p105, %p106
    %p108 = scmp.ne.s32.totalorder %s97, %s100
    %p109 = scmp.eq.s32.totalorder %s15, 7
    %p110 = por %p108, %p109
    %p111 = scmp.ne.s32.totalorder %s100, %s101
    %p112 = scmp.eq.s32.totalorder %s15, 0
    %p113 = por %p111, %p112
    %p114 = scmp.ne.s32.totalorder %s100, %s101
    %p115 = scmp.eq.s32.totalorder %s16, 7
    %p116 = por %p114, %p115
    %p118 = scmp.ne.s32.totalorder %s101, %s117
    %p119 = scmp.eq.s32.totalorder %s16, 0
    %p120 = por %p118, %p119
    %s121 = ssub.s32 %s17, %s36
    %s122 = ssub.s32 %s19, %s28
    %s123 = sor.u32 %s121, %s122
    %p124 = scmp.eq.s32.totalorder %s123, 0
    %s126 = sadd.s32 %s125, 1
    %s127 = scalar_select %p124, %s125, %s126
    %p130 = pneg %p124
    %p131 = scmp.eq.s32.totalorder %s10, 7
    %p132 = por %p130, %p131
    %p133 = scmp.ne.s32.totalorder %s125, %s128
    %p134 = scmp.eq.s32.totalorder %s10, 0
    %p135 = por %p133, %p134
    %p136 = scmp.ne.s32.totalorder %s125, %s128
    %p137 = scmp.eq.s32.totalorder %s15, 7
    %p138 = por %p136, %p137
    %p139 = scmp.ne.s32.totalorder %s128, %s129
    %p140 = scmp.eq.s32.totalorder %s15, 0
    %p141 = por %p139, %p140
    %p142 = scmp.ne.s32.totalorder %s128, %s129
    %p143 = scmp.eq.s32.totalorder %s16, 7
    %p144 = por %p142, %p143
    %p146 = scmp.ne.s32.totalorder %s129, %s145
    %p147 = scmp.eq.s32.totalorder %s16, 0
    %p148 = por %p146, %p147
    %s149 = ssub.s32 %s17, %s36
    %s150 = ssub.s32 %s18, %s32
    %s151 = sor.u32 %s149, %s150
    %p152 = scmp.eq.s32.totalorder %s151, 0
    %s154 = sadd.s32 %s153, 1
    %s155 = scalar_select %p152, %s153, %s154
    %p158 = pneg %p152
    %p159 = scmp.eq.s32.totalorder %s10, 7
    %p160 = por %p158, %p159
    %p161 = scmp.ne.s32.totalorder %s153, %s156
    %p162 = scmp.eq.s32.totalorder %s10, 0
    %p163 = por %p161, %p162
    %p164 = scmp.ne.s32.totalorder %s153, %s156
    %p165 = scmp.eq.s32.totalorder %s15, 7
    %p166 = por %p164, %p165
    %p167 = scmp.ne.s32.totalorder %s156, %s157
    %p168 = scmp.eq.s32.totalorder %s15, 0
    %p169 = por %p167, %p168
    %p170 = scmp.ne.s32.totalorder %s156, %s157
    %p171 = scmp.eq.s32.totalorder %s16, 7
    %p172 = por %p170, %p171
    %p174 = scmp.ne.s32.totalorder %s157, %s173
    %p175 = scmp.eq.s32.totalorder %s16, 0
    %p176 = por %p174, %p175
    %p177 = scmp.le.s32.totalorder 1, %s10
    %p178 = scmp.lt.s32.totalorder %s10, 9
    %p179 = pnand %p177, %p178
    %p180 = pneg %p179
    // Predicated region
    $region9: #{transformer_translator_forward.26} parent=5 // pred_check
      _
    $region10: #{transformer_translator_forward.26} parent=5 // pred_check_branch
      %182 = sbr.rel (%p179) target = $region12
    $region11: #{transformer_translator_forward.26} parent=5 // pred_region
      %s183 = ssub.s32 %s10, 1
    $region12: #{transformer_translator_forward.26} parent=5 // pred_fallthru
      _
    %p184 = scmp.lt.s32.totalorder %s10, 8
    // Predicated region
    $region13: #{transformer_translator_forward.26} parent=5 // pred_check
      %p185 = pneg %p184
    $region14: #{transformer_translator_forward.26} parent=5 // pred_check_branch
      %187 = sbr.rel (%p185) target = $region16
    $region15: #{transformer_translator_forward.26} parent=5 // pred_region
      // Predicated region
      $region17: #{transformer_translator_forward.26} parent=15 // pred_check
        %p188 = pneg %p51
      $region18: #{transformer_translator_forward.26} parent=15 // pred_check_branch
        %190 = sbr.rel (%p188) target = $region20
      $region19: #{transformer_translator_forward.26} parent=15 // pred_region
        %p191 = scmp.lt.s32.totalorder %s17, 7
        %s192 = scalar_select %p191, %s17, 7
        %p193 = scmp.lt.s32.totalorder %s18, 0
        %s194 = scalar_select %p193, %s18, 0
        %s195 = smul.addr %s194, 3
        %s196 = smul.addr %s192, 3
        %s197 = sadd.s32 %s195, %s196
        %s198 = smul.addr %s197, 4
        %s199 = scalar_lea.vmem %s0, %s198
      $region20: #{transformer_translator_forward.26} parent=15 // pred_fallthru
        _
      // Predicated region
      $region21: #{transformer_translator_forward.26} parent=15 // pred_check
        %p200 = pneg %p79
      $region22: #{transformer_translator_forward.26} parent=15 // pred_check_branch
        %202 = sbr.rel (%p200) target = $region24
      $region23: #{transformer_translator_forward.26} parent=15 // pred_region
        %p203 = scmp.lt.s32.totalorder %s17, 7
        %s204 = scalar_select %p203, %s17, 7
        %p205 = scmp.lt.s32.totalorder %s19, 0
        %s206 = scalar_select %p205, %s19, 0
        %s207 = smul.addr %s206, 3
        %s208 = sadd.s32 1, %s207
        %s209 = smul.addr %s204, 3
        %s210 = sadd.s32 %s208, %s209
        %s211 = smul.addr %s210, 4
        %s212 = scalar_lea.vmem %s1, %s211
      $region24: #{transformer_translator_forward.26} parent=15 // pred_fallthru
        _
      // Predicated region
      $region25: #{transformer_translator_forward.26} parent=15 // pred_check
        %p213 = pneg %p107
      $region26: #{transformer_translator_forward.26} parent=15 // pred_check_branch
        %215 = sbr.rel (%p213) target = $region28
      $region27: #{transformer_translator_forward.26} parent=15 // pred_region
        %p216 = scmp.lt.s32.totalorder %s17, 7
        %s217 = scalar_select %p216, %s17, 7
        %p218 = scmp.lt.s32.totalorder %s19, 0
        %s219 = scalar_select %p218, %s19, 0
        %s220 = smul.addr %s219, 3
        %s221 = sadd.s32 2, %s220
        %s222 = smul.addr %s217, 3
        %s223 = sadd.s32 %s221, %s222
        %s224 = smul.addr %s223, 4
        %s225 = scalar_lea.vmem %s2, %s224
      $region28: #{transformer_translator_forward.26} parent=15 // pred_fallthru
        _
      // Predicated region
      $region29: #{transformer_translator_forward.26} parent=15 // pred_check
        %p226 = pneg %p135
      $region30: #{transformer_translator_forward.26} parent=15 // pred_check_branch
        %228 = sbr.rel (%p226) target = $region32
      $region31: #{transformer_translator_forward.26} parent=15 // pred_region
        %p229 = scmp.lt.s32.totalorder %s17, 7
        %s230 = scalar_select %p229, %s17, 7
        %p231 = scmp.lt.s32.totalorder %s19, 0
        %s232 = scalar_select %p231, %s19, 0
        %s233 = sadd.s32 %s232, %s230
        %s234 = scalar_lea.vmem %s3, %s233
      $region32: #{transformer_translator_forward.26} parent=15 // pred_fallthru
        _
    $region16: #{transformer_translator_forward.26} parent=5 // pred_fallthru
      _
    %p235 = scmp.le.s32.totalorder 1, %s10
    %p236 = scmp.lt.s32.totalorder %s10, 9
    %p237 = pnand %p235, %p236
    %p238 = pneg %p237
    // Predicated region
    $region33: #{transformer_translator_forward.26} parent=5 // pred_check
      _
    $region34: #{transformer_translator_forward.26} parent=5 // pred_check_branch
      %240 = sbr.rel (%p237) target = $region36
    $region35: #{transformer_translator_forward.26} parent=5 // pred_region
      %s241 = ssub.s32 %s10, 1
      %p242 = scmp.lt.s32.totalorder %s20, 7
      %s243 = scalar_select %p242, %s20, 7
      %p244 = scmp.lt.s32.totalorder %s21, 0
      %s245 = scalar_select %p244, %s21, 0
      %s246 = smul.addr %s245, 3
      %s247 = smul.addr %s243, 3
      %s248 = sadd.s32 %s246, %s247
      %s249 = smul.addr %s248, 4
      %s250 = scalar_lea.vmem %s0, %s249
      %p251 = pneg %p57
      %p252 = pneg %p54
      %p253 = scmp.lt.s32.totalorder %s20, 7
      %s254 = scalar_select %p253, %s20, 7
      %p255 = scmp.lt.s32.totalorder %s22, 0
      %s256 = scalar_select %p255, %s22, 0
      %s257 = smul.addr %s256, 3
      %s258 = sadd.s32 1, %s257
      %s259 = smul.addr %s254, 3
      %s260 = sadd.s32 %s258, %s259
      %s261 = smul.addr %s260, 4
      %s262 = scalar_lea.vmem %s1, %s261
      %p263 = pneg %p85
      %p264 = pneg %p82
      %p265 = scmp.lt.s32.totalorder %s20, 7
      %s266 = scalar_select %p265, %s20, 7
      %p267 = scmp.lt.s32.totalorder %s22, 0
      %s268 = scalar_select %p267, %s22, 0
      %s269 = smul.addr %s268, 3
      %s270 = sadd.s32 2, %s269
      %s271 = smul.addr %s266, 3
      %s272 = sadd.s32 %s270, %s271
      %s273 = smul.addr %s272, 4
      %s274 = scalar_lea.vmem %s2, %s273
      %p275 = pneg %p113
      %p276 = pneg %p110
      %p277 = scmp.lt.s32.totalorder %s20, 7
      %s278 = scalar_select %p277, %s20, 7
      %p279 = scmp.lt.s32.totalorder %s22, 0
      %s280 = scalar_select %p279, %s22, 0
      %s281 = sadd.s32 %s280, %s278
      %s282 = scalar_lea.vmem %s3, %s281
      %p283 = pneg %p141
      %p284 = pneg %p138
      %p285 = pneg %p169
      %p286 = pneg %p166
      %p287 = scmp.lt.s32.totalorder %s20, 7
      %s288 = scalar_select %p287, %s20, 7
      %p289 = scmp.lt.s32.totalorder %s21, 0
      %s290 = scalar_select %p289, %s21, 0
      %s291 = sadd.s32 %s290, %s288
      %s292 = smul.addr %s291, 4
      %s293 = scalar_lea.vmem %s4, %s292
      %p294 = scmp.lt.s32.totalorder %s20, 7
      %s295 = scalar_select %p294, %s20, 7
      %p296 = scmp.lt.s32.totalorder %s21, 0
      %s297 = scalar_select %p296, %s21, 0
      %s298 = smul.addr %s297, 3
      %s299 = smul.addr %s295, 3
      %s300 = sadd.s32 %s298, %s299
      %s301 = smul.addr %s300, 4
      %s302 = scalar_lea.vmem %s0, %s301
      %p303 = scmp.lt.s32.totalorder %s20, 7
      %s304 = scalar_select %p303, %s20, 7
      %p305 = scmp.lt.s32.totalorder %s22, 0
      %s306 = scalar_select %p305, %s22, 0
      %s307 = smul.addr %s306, 3
      %s308 = sadd.s32 1, %s307
      %s309 = smul.addr %s304, 3
      %s310 = sadd.s32 %s308, %s309
      %s311 = smul.addr %s310, 4
      %s312 = scalar_lea.vmem %s1, %s311
      %p313 = scmp.lt.s32.totalorder %s20, 7
      %s314 = scalar_select %p313, %s20, 7
      %p315 = scmp.lt.s32.totalorder %s22, 0
      %s316 = scalar_select %p315, %s22, 0
      %s317 = smul.addr %s316, 3
      %s318 = sadd.s32 2, %s317
      %s319 = smul.addr %s314, 3
      %s320 = sadd.s32 %s318, %s319
      %s321 = smul.addr %s320, 4
      %s322 = scalar_lea.vmem %s2, %s321
      %p323 = scmp.lt.s32.totalorder %s20, 7
      %s324 = scalar_select %p323, %s20, 7
      %p325 = scmp.lt.s32.totalorder %s22, 0
      %s326 = scalar_select %p325, %s22, 0
      %s327 = sadd.s32 %s326, %s324
      %s328 = scalar_lea.vmem %s3, %s327
      %p329 = scmp.lt.s32.totalorder %s20, 7
      %s330 = scalar_select %p329, %s20, 7
      %p331 = scmp.lt.s32.totalorder %s21, 0
      %s332 = scalar_select %p331, %s21, 0
      %s333 = sadd.s32 %s332, %s330
      %s334 = smul.addr %s333, 4
      %s335 = scalar_lea.vmem %s4, %s334
      %p337 = scmp.eq.s32.totalorder %s22, 0
      // Predicated region
      $region37: #{transformer_translator_forward.26} parent=35 // pred_check
        %p338 = pneg %p337
      $region38: #{transformer_translator_forward.26} parent=35 // pred_check_branch
        %340 = sbr.rel (%p338) target = $region40
      $region39: #{transformer_translator_forward.26} parent=35 // pred_region
        %vm341 = vcmask 31744
        %342 = vst.msk [vmem:[#allocation2] sm:$0xff] %vm341, -1e+30
        %343 = vst.msk [vmem:[#allocation3] sm:$0xff] %vm341, 0.0
        %344 = vst [vmem:[#allocation4] sm:$0xff] 0.0
      $region40: #{transformer_translator_forward.26} parent=35 // pred_fallthru
        _
      %v345 = vld [vmem:[%s302] sm:$0xf]
      %v346 = vld [vmem:[%s312] sm:$0xf]
      %v347 = vld [vmem:[%s322] sm:$0xf]
      %v348 = vld [vmem:[%s328] sm:$0x1]
      %vm349 = vcmask 261120
      %v351 = vsel %vm349, %v345, 0
      %v354 = vsel %vm349, %v346, 0
      %356 = vmatpush.bf16.xpose.msra.mxu0 0
      %357 = vmatpush.bf16.xpose.msra.mxu0 0
      %358 = vmatpush.bf16.xpose.msra.mxu0 0
      %359 = vmatpush.bf16.xpose.msra.mxu0 0
      %360 = vmatpush.bf16.xpose.msra.mxu0 0
      %361 = vmatpush.bf16.xpose.msra.mxu0 0
      %362 = vmatpush.bf16.xpose.msra.mxu0 0
      %363 = vmatpush.bf16.xpose.msra.mxu0 %v354
      %364 = vmatmul.bf16.gmra.mxu0 %v351
      %v365 = vpop.f32.mrf.mxu0
      %v366 = vadd.f32 0.0, %v365
      %v367 = vpop.f32.mrf.mxu0
      %368 = vdwg.mxu0
      %v369 = vmul.f32 %v366, 0.17677669
      %v371 = vperm.slane %v348, 0
      %v373 = vadd.f32 %v369, %v371
      %v374 = vld [vmem:[#allocation2] sm:$0xff]
      %vm375 = vcmask 64512
      %v376 = vsel %vm375, %v373, -inf
      %377 = vmax.xlane.f32.xlu0 %v376
      %v378 = vpop.xlane.xlu0 %377
      %v379 = vmax.f32 %v374, %v378
      %v380 = vsub.f32 %v374, %v379
      %v381 = vmul.f32 %v380, 1.442695
      %v382 = vpow.pop %v381
      %384 = vset.pattern.permute.xlu0 0
      %385 = vperm.xlu0 %384, %v379
      %v386 = vpop.permute.xlu0 %385
      %v388 = vsub.f32 %v373, %v386
      %v389 = vmul.f32 %v388, 1.442695
      %v390 = vpow.pop %v389
      %v391 = vld [vmem:[#allocation3] sm:$0xff]
      %v392 = vmul.f32 %v382, %v391
      %v393 = vsel %vm375, %v390, 0.0
      %394 = vadd.xlane.f32.xlu0 %v393
      %v395 = vpop.xlane.xlu0 %394
      %v396 = vadd.f32 %v392, %v395
      %vm397 = vcmask 7168
      %398 = vst.msk [vmem:[#allocation3] sm:$0xff] %vm397, %v396
      %v399 = vld [vmem:[#allocation4] sm:$0xff]
      %401 = vset.pattern.permute.xlu0 0
      %402 = vperm.xlu0 %401, %v382
      %v403 = vpop.permute.xlu0 %402
      %v405 = vmul.f32 %v403, %v399
      %v406 = vpack.c.bf16 %v390, %v390
      %v408 = vsel %vm375, %v406, 0
      %vm410 = vcmask 1043456
      %v412 = vsel %vm410, %v347, 0
      %414 = vmatpush.bf16.msra.mxu0 0
      %415 = vmatpush.bf16.msra.mxu0 0
      %416 = vmatpush.bf16.msra.mxu0 0
      %417 = vmatpush.bf16.msra.mxu0 0
      %418 = vmatpush.bf16.msra.mxu0 0
      %419 = vmatpush.bf16.msra.mxu0 0
      %420 = vmatpush.bf16.msra.mxu0 0
      %421 = vmatpush.bf16.msra.mxu0 %v412
      %422 = vmatmul.bf16.gmra.mxu0 %v408
      %v423 = vpop.f32.mrf.mxu0
      %v424 = vadd.f32 0.0, %v423
      %v425 = vpop.f32.mrf.mxu0
      %426 = vdwg.mxu0
      %v427 = vadd.f32 %v405, %v424
      %428 = vst.msk [vmem:[#allocation4] sm:$0xff] %vm349, %v427
      %429 = vst.msk [vmem:[#allocation2] sm:$0xff] %vm397, %v379
      %v431 = vunpack.c.l.b16 %v345
      %v432 = vpack.c.b16 %v431, %v431
      %433 = vrot.lane.b32.xlu0 %v432, 96
      %v434 = vpop.permute.xlu0 %433
      %v436 = vunpack.c.l.b16 %v346
      %v437 = vpack.c.b16 %v436, %v436
      %438 = vrot.lane.b32.xlu0 %v437, 96
      %v439 = vpop.permute.xlu0 %438
      %v441 = vsel %vm349, %v434, 0
      %v444 = vsel %vm349, %v439, 0
      %446 = vmatpush.bf16.xpose.msra.mxu0 0
      %447 = vmatpush.bf16.xpose.msra.mxu0 0
      %448 = vmatpush.bf16.xpose.msra.mxu0 0
      %449 = vmatpush.bf16.xpose.msra.mxu0 0
      %450 = vmatpush.bf16.xpose.msra.mxu0 0
      %451 = vmatpush.bf16.xpose.msra.mxu0 0
      %452 = vmatpush.bf16.xpose.msra.mxu0 0
      %453 = vmatpush.bf16.xpose.msra.mxu0 %v444
      %454 = vmatmul.bf16.gmra.mxu0 %v441
      %v455 = vpop.f32.mrf.mxu0
      %v456 = vadd.f32 0.0, %v455
      %v457 = vpop.f32.mrf.mxu0
      %458 = vdwg.mxu0
      %v459 = vmul.f32 %v456, 0.17677669
      %v460 = vadd.f32 %v459, %v371
      %v461 = vld [vmem:[#allocation2] sm:$0xff]
      %v462 = vsel %vm375, %v460, -inf
      %463 = vmax.xlane.f32.xlu0 %v462
      %v464 = vpop.xlane.xlu0 %463
      %v465 = vmax.f32 %v461, %v464
      %v466 = vsub.f32 %v461, %v465
      %v467 = vmul.f32 %v466, 1.442695
      %v468 = vpow.pop %v467
      %470 = vset.pattern.permute.xlu0 1
      %471 = vperm.xlu0 %470, %v465
      %v472 = vpop.permute.xlu0 %471
      %v474 = vsub.f32 %v460, %v472
      %v475 = vmul.f32 %v474, 1.442695
      %v476 = vpow.pop %v475
      %v477 = vld [vmem:[#allocation3] sm:$0xff]
      %v478 = vmul.f32 %v468, %v477
      %v479 = vsel %vm375, %v476, 0.0
      %480 = vadd.xlane.f32.xlu0 %v479
      %v481 = vpop.xlane.xlu0 %480
      %v482 = vadd.f32 %v478, %v481
      %vm483 = vcmask 15368
      %484 = vst.msk [vmem:[#allocation3] sm:$0xff] %vm483, %v482
      %v485 = vld [vmem:[#allocation4] sm:$0xff]
      %487 = vset.pattern.permute.xlu0 1
      %488 = vperm.xlu0 %487, %v468
      %v489 = vpop.permute.xlu0 %488
      %v491 = vmul.f32 %v489, %v485
      %v492 = vpack.c.bf16 %v476, %v476
      %v494 = vunpack.c.l.b16 %v347
      %v495 = vpack.c.b16 %v494, %v494
      %496 = vrot.lane.b32.xlu0 %v495, 96
      %v497 = vpop.permute.xlu0 %496
      %v499 = vsel %vm375, %v492, 0
      %v502 = vsel %vm410, %v497, 0
      %504 = vmatpush.bf16.msra.mxu0 0
      %505 = vmatpush.bf16.msra.mxu0 0
      %506 = vmatpush.bf16.msra.mxu0 0
      %507 = vmatpush.bf16.msra.mxu0 0
      %508 = vmatpush.bf16.msra.mxu0 0
      %509 = vmatpush.bf16.msra.mxu0 0
      %510 = vmatpush.bf16.msra.mxu0 0
      %511 = vmatpush.bf16.msra.mxu0 %v502
      %512 = vmatmul.bf16.gmra.mxu0 %v499
      %v513 = vpop.f32.mrf.mxu0
      %v514 = vadd.f32 0.0, %v513
      %v515 = vpop.f32.mrf.mxu0
      %516 = vdwg.mxu0
      %518 = vrot.lane.b32.xlu0 %v514, 32
      %v519 = vpop.permute.xlu0 %518
      %v521 = vadd.f32 %v491, %v519
      %vm522 = vcmask 523520
      %523 = vst.msk [vmem:[#allocation4] sm:$0xff] %vm522, %v521
      %524 = vst.msk [vmem:[#allocation2] sm:$0xff] %vm483, %v465
      %525 = vrot.lane.b32.xlu0 %v432, 64
      %v526 = vpop.permute.xlu0 %525
      %527 = vrot.lane.b32.xlu0 %v437, 64
      %v528 = vpop.permute.xlu0 %527
      %v530 = vsel %vm349, %v526, 0
      %v533 = vsel %vm349, %v528, 0
      %535 = vmatpush.bf16.xpose.msra.mxu0 0
      %536 = vmatpush.bf16.xpose.msra.mxu0 0
      %537 = vmatpush.bf16.xpose.msra.mxu0 0
      %538 = vmatpush.bf16.xpose.msra.mxu0 0
      %539 = vmatpush.bf16.xpose.msra.mxu0 0
      %540 = vmatpush.bf16.xpose.msra.mxu0 0
      %541 = vmatpush.bf16.xpose.msra.mxu0 0
      %542 = vmatpush.bf16.xpose.msra.mxu0 %v533
      %543 = vmatmul.bf16.gmra.mxu0 %v530
      %v544 = vpop.f32.mrf.mxu0
      %v545 = vadd.f32 0.0, %v544
      %v546 = vpop.f32.mrf.mxu0
      %547 = vdwg.mxu0
      %v548 = vmul.f32 %v545, 0.17677669
      %v549 = vadd.f32 %v548, %v371
      %v550 = vld [vmem:[#allocation2] sm:$0xff]
      %v551 = vsel %vm375, %v549, -inf
      %552 = vmax.xlane.f32.xlu0 %v551
      %v553 = vpop.xlane.xlu0 %552
      %v554 = vmax.f32 %v550, %v553
      %v555 = vsub.f32 %v550, %v554
      %v556 = vmul.f32 %v555, 1.442695
      %v557 = vpow.pop %v556
      %559 = vset.pattern.permute.xlu0 2
      %560 = vperm.xlu0 %559, %v554
      %v561 = vpop.permute.xlu0 %560
      %v563 = vsub.f32 %v549, %v561
      %v564 = vmul.f32 %v563, 1.442695
      %v565 = vpow.pop %v564
      %v566 = vld [vmem:[#allocation3] sm:$0xff]
      %v567 = vmul.f32 %v557, %v566
      %v568 = vsel %vm375, %v565, 0.0
      %569 = vadd.xlane.f32.xlu0 %v568
      %v570 = vpop.xlane.xlu0 %569
      %v571 = vadd.f32 %v567, %v570
      %vm572 = vcmask 23568
      %573 = vst.msk [vmem:[#allocation3] sm:$0xff] %vm572, %v571
      %v574 = vld [vmem:[#allocation4] sm:$0xff]
      %576 = vset.pattern.permute.xlu0 2
      %577 = vperm.xlu0 %576, %v557
      %v578 = vpop.permute.xlu0 %577
      %v580 = vmul.f32 %v578, %v574
      %v581 = vpack.c.bf16 %v565, %v565
      %582 = vrot.lane.b32.xlu0 %v495, 64
      %v583 = vpop.permute.xlu0 %582
      %v585 = vsel %vm375, %v581, 0
      %v588 = vsel %vm410, %v583, 0
      %590 = vmatpush.bf16.msra.mxu0 0
      %591 = vmatpush.bf16.msra.mxu0 0
      %592 = vmatpush.bf16.msra.mxu0 0
      %593 = vmatpush.bf16.msra.mxu0 0
      %594 = vmatpush.bf16.msra.mxu0 0
      %595 = vmatpush.bf16.msra.mxu0 0
      %596 = vmatpush.bf16.msra.mxu0 0
      %597 = vmatpush.bf16.msra.mxu0 %v588
      %598 = vmatmul.bf16.gmra.mxu0 %v585
      %v599 = vpop.f32.mrf.mxu0
      %v600 = vadd.f32 0.0, %v599
      %v601 = vpop.f32.mrf.mxu0
      %602 = vdwg.mxu0
      %604 = vrot.lane.b32.xlu0 %v600, 64
      %v605 = vpop.permute.xlu0 %604
      %v607 = vadd.f32 %v580, %v605
      %vm608 = vcmask 785920
      %609 = vst.msk [vmem:[#allocation4] sm:$0xff] %vm608, %v607
      %610 = vst.msk [vmem:[#allocation2] sm:$0xff] %vm572, %v554
      %611 = vrot.lane.b32.xlu0 %v432, 32
      %v612 = vpop.permute.xlu0 %611
      %613 = vrot.lane.b32.xlu0 %v437, 32
      %v614 = vpop.permute.xlu0 %613
      %v616 = vsel %vm349, %v612, 0
      %v619 = vsel %vm349, %v614, 0
      %621 = vmatpush.bf16.xpose.msra.mxu0 0
      %622 = vmatpush.bf16.xpose.msra.mxu0 0
      %623 = vmatpush.bf16.xpose.msra.mxu0 0
      %624 = vmatpush.bf16.xpose.msra.mxu0 0
      %625 = vmatpush.bf16.xpose.msra.mxu0 0
      %626 = vmatpush.bf16.xpose.msra.mxu0 0
      %627 = vmatpush.bf16.xpose.msra.mxu0 0
      %628 = vmatpush.bf16.xpose.msra.mxu0 %v619
      %629 = vmatmul.bf16.gmra.mxu0 %v616
      %v630 = vpop.f32.mrf.mxu0
      %v631 = vadd.f32 0.0, %v630
      %v632 = vpop.f32.mrf.mxu0
      %633 = vdwg.mxu0
      %v634 = vmul.f32 %v631, 0.17677669
      %v635 = vadd.f32 %v634, %v371
      %v636 = vld [vmem:[#allocation2] sm:$0xff]
      %v637 = vsel %vm375, %v635, -inf
      %638 = vmax.xlane.f32.xlu0 %v637
      %v639 = vpop.xlane.xlu0 %638
      %v640 = vmax.f32 %v636, %v639
      %v641 = vsub.f32 %v636, %v640
      %v642 = vmul.f32 %v641, 1.442695
      %v643 = vpow.pop %v642
      %645 = vset.pattern.permute.xlu0 3
      %646 = vperm.xlu0 %645, %v640
      %v647 = vpop.permute.xlu0 %646
      %v649 = vsub.f32 %v635, %v647
      %v650 = vmul.f32 %v649, 1.442695
      %v651 = vpow.pop %v650
      %v652 = vld [vmem:[#allocation3] sm:$0xff]
      %v653 = vmul.f32 %v643, %v652
      %v654 = vsel %vm375, %v651, 0.0
      %655 = vadd.xlane.f32.xlu0 %v654
      %v656 = vpop.xlane.xlu0 %655
      %v657 = vadd.f32 %v653, %v656
      %vm658 = vcmask 31768
      %659 = vst.msk [vmem:[#allocation3] sm:$0xff] %vm658, %v657
      %v660 = vld [vmem:[#allocation4] sm:$0xff]
      %662 = vset.pattern.permute.xlu0 3
      %663 = vperm.xlu0 %662, %v643
      %v664 = vpop.permute.xlu0 %663
      %v666 = vmul.f32 %v664, %v660
      %v667 = vpack.c.bf16 %v651, %v651
      %668 = vrot.lane.b32.xlu0 %v495, 32
      %v669 = vpop.permute.xlu0 %668
      %v671 = vsel %vm375, %v667, 0
      %v674 = vsel %vm410, %v669, 0
      %676 = vmatpush.bf16.msra.mxu0 0
      %677 = vmatpush.bf16.msra.mxu0 0
      %678 = vmatpush.bf16.msra.mxu0 0
      %679 = vmatpush.bf16.msra.mxu0 0
      %680 = vmatpush.bf16.msra.mxu0 0
      %681 = vmatpush.bf16.msra.mxu0 0
      %682 = vmatpush.bf16.msra.mxu0 0
      %683 = vmatpush.bf16.msra.mxu0 %v674
      %684 = vmatmul.bf16.gmra.mxu0 %v671
      %v685 = vpop.f32.mrf.mxu0
      %v686 = vadd.f32 0.0, %v685
      %v687 = vpop.f32.mrf.mxu0
      %688 = vdwg.mxu0
      %690 = vrot.lane.b32.xlu0 %v686, 96
      %v691 = vpop.permute.xlu0 %690
      %v693 = vadd.f32 %v666, %v691
      %vm694 = vcmask 1048320
      %695 = vst.msk [vmem:[#allocation4] sm:$0xff] %vm694, %v693
      %696 = vst.msk [vmem:[#allocation2] sm:$0xff] %vm658, %v640
      // Predicated region
      $region41: #{transformer_translator_forward.26} parent=35 // pred_check
        %p697 = pneg %p337
      $region42: #{transformer_translator_forward.26} parent=35 // pred_check_branch
        %699 = sbr.rel (%p697) target = $region44
      $region43: #{transformer_translator_forward.26} parent=35 // pred_region
        %v700 = vld [vmem:[#allocation3] sm:$0xff]
        %v701 = vrcp.pop %v700
        %v702 = vld [vmem:[#allocation4] sm:$0xff]
        %704 = vset.pattern.permute.xlu0 0
        %705 = vperm.xlu0 %704, %v701
        %v706 = vpop.permute.xlu0 %705
        %v708 = vmul.f32 %v702, %v706
        %v709 = vpack.c.bf16 %v708, %v708
        %vm710 = vcmask 257024
        %711 = vst.msk [vmem:[%s335] sm:$0xf] %vm710, %v709
        %v712 = vld [vmem:[#allocation3] sm:$0xff]
        %v713 = vrcp.pop %v712
        %v714 = vld [vmem:[#allocation4] sm:$0xff]
        %716 = vset.pattern.permute.xlu0 1
        %717 = vperm.xlu0 %716, %v713
        %v718 = vpop.permute.xlu0 %717
        %v720 = vmul.f32 %v714, %v718
        %v721 = vpack.c.bf16 %v720, %v720
        %vm722 = vcmask 519424
        %723 = vst.msk [vmem:[%s335] sm:$0xf] %vm722, %v721
        %v724 = vld [vmem:[#allocation3] sm:$0xff]
        %v725 = vrcp.pop %v724
        %v726 = vld [vmem:[#allocation4] sm:$0xff]
        %728 = vset.pattern.permute.xlu0 2
        %729 = vperm.xlu0 %728, %v725
        %v730 = vpop.permute.xlu0 %729
        %v732 = vmul.f32 %v726, %v730
        %v733 = vpack.c.bf16 %v732, %v732
        %vm734 = vcmask 781824
        %735 = vst.msk [vmem:[%s335] sm:$0xf] %vm734, %v733
        %v736 = vld [vmem:[#allocation3] sm:$0xff]
        %v737 = vrcp.pop %v736
        %v738 = vld [vmem:[#allocation4] sm:$0xff]
        %740 = vset.pattern.permute.xlu0 3
        %741 = vperm.xlu0 %740, %v737
        %v742 = vpop.permute.xlu0 %741
        %v744 = vmul.f32 %v738, %v742
        %v745 = vpack.c.bf16 %v744, %v744
        %vm746 = vcmask 1044224
        %747 = vst.msk [vmem:[%s335] sm:$0xf] %vm746, %v745
      $region44: #{transformer_translator_forward.26} parent=35 // pred_fallthru
        _
      %p748 = scmp.lt.s32.totalorder %s20, 7
      %s749 = scalar_select %p748, %s20, 7
      %p750 = scmp.lt.s32.totalorder %s21, 0
      %s751 = scalar_select %p750, %s21, 0
      %s752 = sadd.s32 %s751, %s749
      %s753 = smul.addr %s752, 4
      %s754 = scalar_lea.vmem %s4, %s753
      // Predicated region
      $region45: #{transformer_translator_forward.26} parent=35 // pred_check
        %p755 = pneg %p166
      $region46: #{transformer_translator_forward.26} parent=35 // pred_check_branch
        %757 = sbr.rel (%p755) target = $region48
      $region47: #{transformer_translator_forward.26} parent=35 // pred_region
        _
      $region48: #{transformer_translator_forward.26} parent=35 // pred_fallthru
        _
    $region36: #{transformer_translator_forward.26} parent=5 // pred_fallthru
      _
    %p758 = scmp.le.s32.totalorder 2, %s10
    // Predicated region
    $region49: #{transformer_translator_forward.26} parent=5 // pred_check
      %p759 = pneg %p758
    $region50: #{transformer_translator_forward.26} parent=5 // pred_check_branch
      %761 = sbr.rel (%p759) target = $region52
    $region51: #{transformer_translator_forward.26} parent=5 // pred_region
      %s762 = ssub.s32 %s10, 2
      // Predicated region
      $region53: #{transformer_translator_forward.26} parent=51 // pred_check
        %p763 = pneg %p172
      $region54: #{transformer_translator_forward.26} parent=51 // pred_check_branch
        %765 = sbr.rel (%p763) target = $region56
      $region55: #{transformer_translator_forward.26} parent=51 // pred_region
        %p766 = scmp.lt.s32.totalorder %s23, 7
        %s767 = scalar_select %p766, %s23, 7
        %p768 = scmp.lt.s32.totalorder %s24, 0
        %s769 = scalar_select %p768, %s24, 0
        %s770 = sadd.s32 %s769, %s767
        %s771 = smul.addr %s770, 4
        %s772 = scalar_lea.vmem %s4, %s771
      $region56: #{transformer_translator_forward.26} parent=51 // pred_fallthru
        _
    $region52: #{transformer_translator_forward.26} parent=5 // pred_fallthru
      _
  $region6: #{transformer_translator_forward.26} parent=0 // loop_footer
    %s14 = sadd.s32 1, %s10
  $region7: #{transformer_translator_forward.26} parent=0 // loop_footer_branch
    %9 = sbr.rel target = $region3
  $region8: #{transformer_translator_forward.26} parent=0 // loop_exit
    _

// kernel: transformer_translator_forward.28
$region0: #{transformer_translator_forward.28}
  #allocation0 [shape = 'u32[]', space=smem, size = 0x4, offset = 0x4, fixed_abs, tag = 'smem constant byte address 0x4 - core index']
  #allocation1 [shape = 'u32[72,128]{1,0:T(1,128)}', space=vmem, size = 0x9000, scoped, tag = 'internal scratch']
  #allocation2 [shape = 'f32[64,128]{1,0:T(8,128)}', space=vmem, size = 0x8000, scoped, tag = 'scratch operand']
  %s0 = inlined_call_operand.vmem [shape: bf16[64,128], index: 0, kind: input, shape index: {}, may-alias: {0,5}]
  %s1 = inlined_call_operand.hbm [shape: bf16[128,2048], index: 1, kind: input, shape index: {}]
  %s2 = inlined_call_operand.vmem [shape: f32[1,2048], index: 2, kind: input, shape index: {}]
  %s3 = inlined_call_operand.hbm [shape: bf16[2048,128], index: 3, kind: input, shape index: {}]
  %s4 = inlined_call_operand.vmem [shape: f32[1,128], index: 4, kind: input, shape index: {}]
  %s5 = inlined_call_operand.vmem [shape: bf16[64,128], index: 5, kind: input, shape index: {}, may-alias: {0,5}]
  %s6 = inlined_call_operand.vmem [shape: f32[1,128], index: 6, kind: input, shape index: {}]
  %s7 = inlined_call_operand.vmem [shape: f32[1,128], index: 7, kind: input, shape index: {}]
  %s8 = inlined_call_operand.vmem [shape: bf16[64,128], index: 8, kind: output, shape index: {}]
  %s9 = sld [smem:[#allocation0]]
  $region81: #{transformer_translator_forward.28} parent=0
    _
  %s11 = ssub.s32 1, %s9
  %s12 = scalar_select 0, %s11, %s9
  $region1: #{transformer_translator_forward.28} parent=0
    #allocation3 [shape = 'u8[262144]{0}', space=vmem, size = 0x40000, scoped, tag = 'input window, operand 1']
    #allocation4 [shape = 's32[2]{0}', space=sflag, size = 0x8, scoped, tag = 'scoped memory for transformer_translator_forward.28']
    #allocation5 [shape = 'u8[262144]{0}', space=vmem, size = 0x40000, scoped, tag = 'input window, operand 3']
    #allocation6 [shape = 's32[2]{0}', space=sflag, size = 0x8, scoped, tag = 'scoped memory for transformer_translator_forward.28']
    %13 = vsyncpa [#allocation4], 0
    %s14 = scalar_lea.sflag [#allocation4], 1
    %15 = vsyncpa %s14, 0
    %16 = vsyncpa [#allocation6], 0
    %s17 = scalar_lea.sflag [#allocation6], 1
    %18 = vsyncpa %s17, 0
    loop: start=0, step=1, limit=6
    $region2: #{transformer_translator_forward.28} parent=1 // loop_pre_header
      _
    $region3: #{transformer_translator_forward.28} parent=1 // loop_header
      %s20 = sphi 0, %s24
      %p21 = scmp.ge.s32.totalorder %s20, 6
      %s27 = sphi 0, %s39
      %s28 = sphi 0, %s35
      %s29 = sphi 0, %s27
      %s30 = sphi 0, %s28
      %s31 = sphi 0, %s29
      %s32 = sphi 0, %s30
      %s42 = sphi 0, %s44
      %s45 = sphi 0, %s42
      %s46 = sphi 0, %s45
      %s62 = sphi 0, %s46
      %s68 = sphi 0, %s70
      %s71 = sphi 0, %s68
      %s72 = sphi 0, %s71
      %s88 = sphi 0, %s72
      %s94 = sphi 0, %s96
      %s97 = sphi 0, %s94
      %s98 = sphi 0, %s97
      %s114 = sphi 0, %s98
      %s120 = sphi 0, %s122
      %s123 = sphi 0, %s120
      %s124 = sphi 0, %s123
      %s140 = sphi 0, %s124
      %s144 = sphi 0, %s144
      %s146 = sphi 0, %s144
      %s147 = sphi 0, %s146
      %s161 = sphi 0, %s147
      %s167 = sphi 0, %s169
      %s170 = sphi 0, %s167
      %s171 = sphi 0, %s170
      %s187 = sphi 0, %s171
      %s191 = sphi 0, %s191
      %s193 = sphi 0, %s191
      %s194 = sphi 0, %s193
      %s208 = sphi 0, %s194
      %s212 = sphi 0, %s212
      %s214 = sphi 0, %s212
      %s215 = sphi 0, %s214
      %s229 = sphi 0, %s215
      %s235 = sphi 0, %s237
      %s238 = sphi 0, %s235
      %s239 = sphi 0, %s238
      %s255 = sphi 0, %s239
    $region4: #{transformer_translator_forward.28} parent=1 // loop_header_branch
      %23 = sbr.rel (%p21) target = $region8
    $region5: #{transformer_translator_forward.28} parent=1 // loop_body
      %s25 = ssub.s32 %s20, 1
      %s26 = ssub.s32 %s20, 2
      %s33 = sadd.s32 1, %s28
      %p34 = scmp.ge.s32.totalorder %s33, 4
      %s35 = scalar_select %p34, 0, %s33
      %s36 = sadd.s32 1, %s27
      %s37 = scalar_select %p34, %s36, %s27
      %p38 = scmp.ge.s32.totalorder %s37, 1
      %s39 = scalar_select %p38, 0, %s37
      %s40 = ssub.s32 %s27, %s39
      %p41 = scmp.eq.s32.totalorder %s40, 0
      %s43 = sadd.s32 %s42, 1
      %s44 = scalar_select %p41, %s42, %s43
      %p47 = pneg %p41
      %p48 = scmp.eq.s32.totalorder %s20, 3
      %p49 = por %p47, %p48
      %p50 = scmp.ne.s32.totalorder %s42, %s45
      %p51 = scmp.eq.s32.totalorder %s20, 0
      %p52 = por %p50, %p51
      %p53 = scmp.ne.s32.totalorder %s42, %s45
      %p54 = scmp.eq.s32.totalorder %s25, 3
      %p55 = por %p53, %p54
      %p56 = scmp.ne.s32.totalorder %s45, %s46
      %p57 = scmp.eq.s32.totalorder %s25, 0
      %p58 = por %p56, %p57
      %p59 = scmp.ne.s32.totalorder %s45, %s46
      %p60 = scmp.eq.s32.totalorder %s26, 3
      %p61 = por %p59, %p60
      %p63 = scmp.ne.s32.totalorder %s46, %s62
      %p64 = scmp.eq.s32.totalorder %s26, 0
      %p65 = por %p63, %p64
      %s66 = ssub.s32 %s28, %s35
      %p67 = scmp.eq.s32.totalorder %s66, 0
      %s69 = sadd.s32 %s68, 1
      %s70 = scalar_select %p67, %s68, %s69
      %p73 = pneg %p67
      %p74 = scmp.eq.s32.totalorder %s20, 3
      %p75 = por %p73, %p74
      %p76 = scmp.ne.s32.totalorder %s68, %s71
      %p77 = scmp.eq.s32.totalorder %s20, 0
      %p78 = por %p76, %p77
      %p79 = scmp.ne.s32.totalorder %s68, %s71
      %p80 = scmp.eq.s32.totalorder %s25, 3
      %p81 = por %p79, %p80
      %p82 = scmp.ne.s32.totalorder %s71, %s72
      %p83 = scmp.eq.s32.totalorder %s25, 0
      %p84 = por %p82, %p83
      %p85 = scmp.ne.s32.totalorder %s71, %s72
      %p86 = scmp.eq.s32.totalorder %s26, 3
      %p87 = por %p85, %p86
      %p89 = scmp.ne.s32.totalorder %s72, %s88
      %p90 = scmp.eq.s32.totalorder %s26, 0
      %p91 = por %p89, %p90
      %s92 = ssub.s32 %s28, %s35
      %p93 = scmp.eq.s32.totalorder %s92, 0
      %s95 = sadd.s32 %s94, 1
      %s96 = scalar_select %p93, %s94, %s95
      %p99 = pneg %p93
      %p100 = scmp.eq.s32.totalorder %s20, 3
      %p101 = por %p99, %p100
      %p102 = scmp.ne.s32.totalorder %s94, %s97
      %p103 = scmp.eq.s32.totalorder %s20, 0
      %p104 = por %p102, %p103
      %p105 = scmp.ne.s32.totalorder %s94, %s97
      %p106 = scmp.eq.s32.totalorder %s25, 3
      %p107 = por %p105, %p106
      %p108 = scmp.ne.s32.totalorder %s97, %s98
      %p109 = scmp.eq.s32.totalorder %s25, 0
      %p110 = por %p108, %p109
      %p111 = scmp.ne.s32.totalorder %s97, %s98
      %p112 = scmp.eq.s32.totalorder %s26, 3
      %p113 = por %p111, %p112
      %p115 = scmp.ne.s32.totalorder %s98, %s114
      %p116 = scmp.eq.s32.totalorder %s26, 0
      %p117 = por %p115, %p116
      %s118 = ssub.s32 %s28, %s35
      %p119 = scmp.eq.s32.totalorder %s118, 0
      %s121 = sadd.s32 %s120, 1
      %s122 = scalar_select %p119, %s120, %s121
      %p125 = pneg %p119
      %p126 = scmp.eq.s32.totalorder %s20, 3
      %p127 = por %p125, %p126
      %p128 = scmp.ne.s32.totalorder %s120, %s123
      %p129 = scmp.eq.s32.totalorder %s20, 0
      %p130 = por %p128, %p129
      %p131 = scmp.ne.s32.totalorder %s120, %s123
      %p132 = scmp.eq.s32.totalorder %s25, 3
      %p133 = por %p131, %p132
      %p134 = scmp.ne.s32.totalorder %s123, %s124
      %p135 = scmp.eq.s32.totalorder %s25, 0
      %p136 = por %p134, %p135
      %p137 = scmp.ne.s32.totalorder %s123, %s124
      %p138 = scmp.eq.s32.totalorder %s26, 3
      %p139 = por %p137, %p138
      %p141 = scmp.ne.s32.totalorder %s124, %s140
      %p142 = scmp.eq.s32.totalorder %s26, 0
      %p143 = por %p141, %p142
      %s145 = sadd.s32 %s144, 1
      %p148 = scmp.eq.s32.totalorder %s20, 3
      %p149 = scmp.ne.s32.totalorder %s144, %s146
      %p150 = scmp.eq.s32.totalorder %s20, 0
      %p151 = por %p149, %p150
      %p152 = scmp.ne.s32.totalorder %s144, %s146
      %p153 = scmp.eq.s32.totalorder %s25, 3
      %p154 = por %p152, %p153
      %p155 = scmp.ne.s32.totalorder %s146, %s147
      %p156 = scmp.eq.s32.totalorder %s25, 0
      %p157 = por %p155, %p156
      %p158 = scmp.ne.s32.totalorder %s146, %s147
      %p159 = scmp.eq.s32.totalorder %s26, 3
      %p160 = por %p158, %p159
      %p162 = scmp.ne.s32.totalorder %s147, %s161
      %p163 = scmp.eq.s32.totalorder %s26, 0
      %p164 = por %p162, %p163
      %s165 = ssub.s32 %s27, %s39
      %p166 = scmp.eq.s32.totalorder %s165, 0
      %s168 = sadd.s32 %s167, 1
      %s169 = scalar_select %p166, %s167, %s168
      %p172 = pneg %p166
      %p173 = scmp.eq.s32.totalorder %s20, 3
      %p174 = por %p172, %p173
      %p175 = scmp.ne.s32.totalorder %s167, %s170
      %p176 = scmp.eq.s32.totalorder %s20, 0
      %p177 = por %p175, %p176
      %p178 = scmp.ne.s32.totalorder %s167, %s170
      %p179 = scmp.eq.s32.totalorder %s25, 3
      %p180 = por %p178, %p179
      %p181 = scmp.ne.s32.totalorder %s170, %s171
      %p182 = scmp.eq.s32.totalorder %s25, 0
      %p183 = por %p181, %p182
      %p184 = scmp.ne.s32.totalorder %s170, %s171
      %p185 = scmp.eq.s32.totalorder %s26, 3
      %p186 = por %p184, %p185
      %p188 = scmp.ne.s32.totalorder %s171, %s187
      %p189 = scmp.eq.s32.totalorder %s26, 0
      %p190 = por %p188, %p189
      %s192 = sadd.s32 %s191, 1
      %p195 = scmp.eq.s32.totalorder %s20, 3
      %p196 = scmp.ne.s32.totalorder %s191, %s193
      %p197 = scmp.eq.s32.totalorder %s20, 0
      %p198 = por %p196, %p197
      %p199 = scmp.ne.s32.totalorder %s191, %s193
      %p200 = scmp.eq.s32.totalorder %s25, 3
      %p201 = por %p199, %p200
      %p202 = scmp.ne.s32.totalorder %s193, %s194
      %p203 = scmp.eq.s32.totalorder %s25, 0
      %p204 = por %p202, %p203
      %p205 = scmp.ne.s32.totalorder %s193, %s194
      %p206 = scmp.eq.s32.totalorder %s26, 3
      %p207 = por %p205, %p206
      %p209 = scmp.ne.s32.totalorder %s194, %s208
      %p210 = scmp.eq.s32.totalorder %s26, 0
      %p211 = por %p209, %p210
      %s213 = sadd.s32 %s212, 1
      %p216 = scmp.eq.s32.totalorder %s20, 3
      %p217 = scmp.ne.s32.totalorder %s212, %s214
      %p218 = scmp.eq.s32.totalorder %s20, 0
      %p219 = por %p217, %p218
      %p220 = scmp.ne.s32.totalorder %s212, %s214
      %p221 = scmp.eq.s32.totalorder %s25, 3
      %p222 = por %p220, %p221
      %p223 = scmp.ne.s32.totalorder %s214, %s215
      %p224 = scmp.eq.s32.totalorder %s25, 0
      %p225 = por %p223, %p224
      %p226 = scmp.ne.s32.totalorder %s214, %s215
      %p227 = scmp.eq.s32.totalorder %s26, 3
      %p228 = por %p226, %p227
      %p230 = scmp.ne.s32.totalorder %s215, %s229
      %p231 = scmp.eq.s32.totalorder %s26, 0
      %p232 = por %p230, %p231
      %s233 = ssub.s32 %s27, %s39
      %p234 = scmp.eq.s32.totalorder %s233, 0
      %s236 = sadd.s32 %s235, 1
      %s237 = scalar_select %p234, %s235, %s236
      %p240 = pneg %p234
      %p241 = scmp.eq.s32.totalorder %s20, 3
      %p242 = por %p240, %p241
      %p243 = scmp.ne.s32.totalorder %s235, %s238
      %p244 = scmp.eq.s32.totalorder %s20, 0
      %p245 = por %p243, %p244
      %p246 = scmp.ne.s32.totalorder %s235, %s238
      %p247 = scmp.eq.s32.totalorder %s25, 3
      %p248 = por %p246, %p247
      %p249 = scmp.ne.s32.totalorder %s238, %s239
      %p250 = scmp.eq.s32.totalorder %s25, 0
      %p251 = por %p249, %p250
      %p252 = scmp.ne.s32.totalorder %s238, %s239
      %p253 = scmp.eq.s32.totalorder %s26, 3
      %p254 = por %p252, %p253
      %p256 = scmp.ne.s32.totalorder %s239, %s255
      %p257 = scmp.eq.s32.totalorder %s26, 0
      %p258 = por %p256, %p257
      %p259 = scmp.le.s32.totalorder 1, %s20
      %p260 = scmp.lt.s32.totalorder %s20, 5
      %p261 = pnand %p259, %p260
      %p262 = pneg %p261
      // Predicated region
      $region9: #{transformer_translator_forward.28} parent=5 // pred_check
        _
      $region10: #{transformer_translator_forward.28} parent=5 // pred_check_branch
        %264 = sbr.rel (%p261) target = $region12
      $region11: #{transformer_translator_forward.28} parent=5 // pred_region
        %s265 = ssub.s32 %s20, 1
        // Predicated region
        $region13: #{transformer_translator_forward.28} parent=11 // pred_check
          %p266 = pneg %p58
        $region14: #{transformer_translator_forward.28} parent=11 // pred_check_branch
          %268 = sbr.rel (%p266) target = $region16
        $region15: #{transformer_translator_forward.28} parent=11 // pred_region
          %s269 = smul.u32 8, %s29
          %p270 = scmp.lt.s32.totalorder %s269, 7
          %s271 = scalar_select %p270, %s269, 7
          %s272 = smul.addr %s271, 4
          %s273 = scalar_lea.vmem %s0, %s272
          %s274 = smul.u32 8, %s29
        $region16: #{transformer_translator_forward.28} parent=11 // pred_fallthru
          _
        // Predicated region
        $region17: #{transformer_translator_forward.28} parent=11 // pred_check
          %p275 = pneg %p157
        $region18: #{transformer_translator_forward.28} parent=11 // pred_check_branch
          %277 = sbr.rel (%p275) target = $region20
        $region19: #{transformer_translator_forward.28} parent=11 // pred_region
          _
        $region20: #{transformer_translator_forward.28} parent=11 // pred_fallthru
          _
        // Predicated region
        $region21: #{transformer_translator_forward.28} parent=11 // pred_check
          %p278 = pneg %p183
        $region22: #{transformer_translator_forward.28} parent=11 // pred_check_branch
          %280 = sbr.rel (%p278) target = $region24
        $region23: #{transformer_translator_forward.28} parent=11 // pred_region
          %s281 = smul.u32 8, %s29
          %p282 = scmp.lt.s32.totalorder %s281, 7
          %s283 = scalar_select %p282, %s281, 7
          %s284 = smul.addr %s283, 4
          %s285 = scalar_lea.vmem %s5, %s284
          %s286 = smul.u32 8, %s29
        $region24: #{transformer_translator_forward.28} parent=11 // pred_fallthru
          _
        // Predicated region
        $region25: #{transformer_translator_forward.28} parent=11 // pred_check
          %p287 = pneg %p204
        $region26: #{transformer_translator_forward.28} parent=11 // pred_check_branch
          %289 = sbr.rel (%p287) target = $region28
        $region27: #{transformer_translator_forward.28} parent=11 // pred_region
          _
        $region28: #{transformer_translator_forward.28} parent=11 // pred_fallthru
          _
        // Predicated region
        $region29: #{transformer_translator_forward.28} parent=11 // pred_check
          %p290 = pneg %p225
        $region30: #{transformer_translator_forward.28} parent=11 // pred_check_branch
          %292 = sbr.rel (%p290) target = $region32
        $region31: #{transformer_translator_forward.28} parent=11 // pred_region
          _
        $region32: #{transformer_translator_forward.28} parent=11 // pred_fallthru
          _
      $region12: #{transformer_translator_forward.28} parent=5 // pred_fallthru
        _
      %p293 = scmp.lt.s32.totalorder %s20, 4
      // Predicated region
      $region33: #{transformer_translator_forward.28} parent=5 // pred_check
        %p294 = pneg %p293
      $region34: #{transformer_translator_forward.28} parent=5 // pred_check_branch
        %296 = sbr.rel (%p294) target = $region36
      $region35: #{transformer_translator_forward.28} parent=5 // pred_region
        // Predicated region
        $region37: #{transformer_translator_forward.28} parent=35 // pred_check
          %p297 = pneg %p78
        $region38: #{transformer_translator_forward.28} parent=35 // pred_check_branch
          %299 = sbr.rel (%p297) target = $region40
        $region39: #{transformer_translator_forward.28} parent=35 // pred_region
          %s300 = sand.u32 %s68, 1
          %s301 = scalar_lea.sflag [#allocation4], %s300
          %s302 = sand.u32 %s68, 1
          %s303 = smul.addr %s302, 256
          %s304 = scalar_lea.vmem [#allocation3], %s303
          %s305 = smul.u32 4, %s28
          %307 = vsyncadd %s301, 0
          %s308 = smul.addr %s305, 4
          %s309 = scalar_lea.hbm %s1, %s308
          %s310 = sshll.u32 %s309, 4
          %s311 = int_to_ptr.hbm [resolvable:$true] %s310
          %s312 = sshll.u32 %s304, 4
          %s313 = int_to_ptr.vmem [resolvable:$true] %s312
          %318 = dma.hbm_to_vmem [thread:$0]  %s311, 4096, %s313, %s301, 1024, 256, 16
        $region40: #{transformer_translator_forward.28} parent=35 // pred_fallthru
          _
        // Predicated region
        $region41: #{transformer_translator_forward.28} parent=35 // pred_check
          %p319 = pneg %p104
        $region42: #{transformer_translator_forward.28} parent=35 // pred_check_branch
          %321 = sbr.rel (%p319) target = $region44
        $region43: #{transformer_translator_forward.28} parent=35 // pred_region
          %s322 = smul.u32 4, %s28
          %p323 = scmp.lt.s32.totalorder %s322, 15
          %s324 = scalar_select %p323, %s322, 15
          %s325 = scalar_lea.vmem %s2, %s324
          %s326 = smul.u32 4, %s28
        $region44: #{transformer_translator_forward.28} parent=35 // pred_fallthru
          _
        // Predicated region
        $region45: #{transformer_translator_forward.28} parent=35 // pred_check
          %p327 = pneg %p130
        $region46: #{transformer_translator_forward.28} parent=35 // pred_check_branch
          %329 = sbr.rel (%p327) target = $region48
        $region47: #{transformer_translator_forward.28} parent=35 // pred_region
          %s330 = sand.u32 %s120, 1
          %s331 = scalar_lea.sflag [#allocation6], %s330
          %s332 = sand.u32 %s120, 1
          %s333 = smul.addr %s332, 256
          %s334 = scalar_lea.vmem [#allocation5], %s333
          %s335 = smul.u32 64, %s28
          %337 = vsyncadd %s331, 0
          %s338 = smul.addr %s335, 4
          %s339 = scalar_lea.hbm %s3, %s338
          %s340 = sshll.u32 %s339, 4
          %s341 = int_to_ptr.hbm [resolvable:$true] %s340
          %s342 = sshll.u32 %s334, 4
          %s343 = int_to_ptr.vmem [resolvable:$true] %s342
          %348 = dma.hbm_to_vmem [thread:$0]  %s341, 4096, %s343, %s331, 64, 64, 4
        $region48: #{transformer_translator_forward.28} parent=35 // pred_fallthru
          _
      $region36: #{transformer_translator_forward.28} parent=5 // pred_fallthru
        _
      %p349 = scmp.le.s32.totalorder 1, %s20
      %p350 = scmp.lt.s32.totalorder %s20, 5
      %p351 = pnand %p349, %p350
      %p352 = pneg %p351
      // Predicated region
      $region49: #{transformer_translator_forward.28} parent=5 // pred_check
        _
      $region50: #{transformer_translator_forward.28} parent=5 // pred_check_branch
        %354 = sbr.rel (%p351) target = $region52
      $region51: #{transformer_translator_forward.28} parent=5 // pred_region
        %s355 = ssub.s32 %s20, 1
        %s356 = sand.u32 %s71, 1
        %s357 = scalar_lea.sflag [#allocation4], %s356
        %s358 = sand.u32 %s71, 1
        %s359 = smul.addr %s358, 256
        %s360 = scalar_lea.vmem [#allocation3], %s359
        // Predicated region
        $region53: #{transformer_translator_forward.28} parent=51 // pred_check
          %p361 = pneg %p84
        $region54: #{transformer_translator_forward.28} parent=51 // pred_check_branch
          %363 = sbr.rel (%p361) target = $region56
        $region55: #{transformer_translator_forward.28} parent=51 // pred_region
          %365 = dma.done %s357, 4096
        $region56: #{transformer_translator_forward.28} parent=51 // pred_fallthru
          _
        %s366 = sand.u32 %s123, 1
        %s367 = scalar_lea.sflag [#allocation6], %s366
        %s368 = sand.u32 %s123, 1
        %s369 = smul.addr %s368, 256
        %s370 = scalar_lea.vmem [#allocation5], %s369
        // Predicated region
        $region57: #{transformer_translator_forward.28} parent=51 // pred_check
          %p371 = pneg %p136
        $region58: #{transformer_translator_forward.28} parent=51 // pred_check_branch
          %373 = sbr.rel (%p371) target = $region60
        $region59: #{transformer_translator_forward.28} parent=51 // pred_region
          %375 = dma.done %s367, 4096
        $region60: #{transformer_translator_forward.28} parent=51 // pred_fallthru
          _
        %s376 = smul.u32 8, %s29
        %p377 = scmp.lt.s32.totalorder %s376, 7
        %s378 = scalar_select %p377, %s376, 7
        %s379 = smul.addr %s378, 4
        %s380 = scalar_lea.vmem %s0, %s379
        %p381 = pneg %p58
        %p382 = pneg %p55
        %s383 = sand.u32 %s71, 1
        %s384 = scalar_lea.sflag [#allocation4], %s383
        %s385 = sand.u32 %s71, 1
        %s386 = smul.addr %s385, 256
        %s387 = scalar_lea.vmem [#allocation3], %s386
        %p388 = pneg %p84
        %p389 = pneg %p81
        %s390 = smul.u32 4, %s30
        %p391 = scmp.lt.s32.totalorder %s390, 15
        %s392 = scalar_select %p391, %s390, 15
        %s393 = scalar_lea.vmem %s2, %s392
        %p394 = pneg %p110
        %p395 = pneg %p107
        %s396 = sand.u32 %s123, 1
        %s397 = scalar_lea.sflag [#allocation6], %s396
        %s398 = sand.u32 %s123, 1
        %s399 = smul.addr %s398, 256
        %s400 = scalar_lea.vmem [#allocation5], %s399
        %p401 = pneg %p136
        %p402 = pneg %p133
        %p403 = pneg %p157
        %p404 = pneg %p154
        %s405 = smul.u32 8, %s29
        %p406 = scmp.lt.s32.totalorder %s405, 7
        %s407 = scalar_select %p406, %s405, 7
        %s408 = smul.addr %s407, 4
        %s409 = scalar_lea.vmem %s5, %s408
        %p410 = pneg %p183
        %p411 = pneg %p180
        %p412 = pneg %p204
        %p413 = pneg %p201
        %p414 = pneg %p225
        %p415 = pneg %p222
        %p416 = pneg %p251
        %p417 = pneg %p248
        %s418 = smul.u32 8, %s29
        %p419 = scmp.lt.s32.totalorder %s418, 7
        %s420 = scalar_select %p419, %s418, 7
        %s421 = smul.addr %s420, 4
        %s422 = scalar_lea.vmem %s8, %s421
        %s423 = smul.u32 8, %s29
        %p424 = scmp.lt.s32.totalorder %s423, 7
        %s425 = scalar_select %p424, %s423, 7
        %s426 = smul.addr %s425, 4
        %s427 = scalar_lea.vmem %s0, %s426
        %s428 = smul.u32 8, %s29
        %s429 = smul.u32 4, %s30
        %s430 = smul.u32 4, %s30
        %p431 = scmp.lt.s32.totalorder %s430, 15
        %s432 = scalar_select %p431, %s430, 15
        %s433 = scalar_lea.vmem %s2, %s432
        %s434 = smul.u32 4, %s30
        %s435 = smul.u32 64, %s30
        %s436 = smul.u32 8, %s29
        %p437 = scmp.lt.s32.totalorder %s436, 7
        %s438 = scalar_select %p437, %s436, 7
        %s439 = smul.addr %s438, 4
        %s440 = scalar_lea.vmem %s5, %s439
        %s441 = smul.u32 8, %s29
        %s442 = smul.u32 8, %s29
        %p443 = scmp.lt.s32.totalorder %s442, 7
        %s444 = scalar_select %p443, %s442, 7
        %s445 = smul.addr %s444, 4
        %s446 = scalar_lea.vmem %s8, %s445
        %s447 = smul.u32 8, %s29
        %p448 = scmp.eq.s32.totalorder %s30, 0
        // Predicated region
        $region61: #{transformer_translator_forward.28} parent=51 // pred_check
          %p449 = pneg %p448
        $region62: #{transformer_translator_forward.28} parent=51 // pred_check_branch
          %451 = sbr.rel (%p449) target = $region64
        $region63: #{transformer_translator_forward.28} parent=51 // pred_region
          %452 = vst [vmem:[#allocation2] sm:$0xff] 0.0
          %453 = vst [vmem:[#allocation2 + $0x8] sm:$0xff] 0.0
          %454 = vst [vmem:[#allocation2 + $0x10] sm:$0xff] 0.0
          %455 = vst [vmem:[#allocation2 + $0x18] sm:$0xff] 0.0
          %456 = vst [vmem:[#allocation2 + $0x20] sm:$0xff] 0.0
          %457 = vst [vmem:[#allocation2 + $0x28] sm:$0xff] 0.0
          %458 = vst [vmem:[#allocation2 + $0x30] sm:$0xff] 0.0
          %459 = vst [vmem:[#allocation2 + $0x38] sm:$0xff] 0.0
        $region64: #{transformer_translator_forward.28} parent=51 // pred_fallthru
          _
        %v460 = vld [vmem:[%s427] sm:$0xf]
        %v461 = vld [vmem:[%s427 + $0x4] sm:$0xf]
        %v462 = vld [vmem:[%s427 + $0x8] sm:$0xf]
        %v463 = vld [vmem:[%s427 + $0xc] sm:$0xf]
        %v464 = vld [vmem:[%s427 + $0x10] sm:$0xf]
        %v465 = vld [vmem:[%s427 + $0x14] sm:$0xf]
        %v466 = vld [vmem:[%s427 + $0x18] sm:$0xf]
        %v467 = vld [vmem:[%s427 + $0x1c] sm:$0xf]
        %v468 = vld [vmem:[%s360] sm:$0xff]
        %v469 = vld [vmem:[%s360 + $0x8] sm:$0xff]
        %v470 = vld [vmem:[%s360 + $0x10] sm:$0xff]
        %v471 = vld [vmem:[%s360 + $0x18] sm:$0xff]
        %v472 = vld [vmem:[%s360 + $0x20] sm:$0xff]
        %v473 = vld [vmem:[%s360 + $0x28] sm:$0xff]
        %v474 = vld [vmem:[%s360 + $0x30] sm:$0xff]
        %v475 = vld [vmem:[%s360 + $0x38] sm:$0xff]
        %v476 = vld [vmem:[%s360 + $0x40] sm:$0xff]
        %v477 = vld [vmem:[%s360 + $0x48] sm:$0xff]
        %v478 = vld [vmem:[%s360 + $0x50] sm:$0xff]
        %v479 = vld [vmem:[%s360 + $0x58] sm:$0xff]
        %v480 = vld [vmem:[%s360 + $0x60] sm:$0xff]
        %v481 = vld [vmem:[%s360 + $0x68] sm:$0xff]
        %v482 = vld [vmem:[%s360 + $0x70] sm:$0xff]
        %v483 = vld [vmem:[%s360 + $0x78] sm:$0xff]
        %v484 = vld [vmem:[%s360 + $0x80] sm:$0xff]
        %v485 = vld [vmem:[%s360 + $0x88] sm:$0xff]
        %v486 = vld [vmem:[%s360 + $0x90] sm:$0xff]
        %v487 = vld [vmem:[%s360 + $0x98] sm:$0xff]
        %v488 = vld [vmem:[%s360 + $0xa0] sm:$0xff]
        %v489 = vld [vmem:[%s360 + $0xa8] sm:$0xff]
        %v490 = vld [vmem:[%s360 + $0xb0] sm:$0xff]
        %v491 = vld [vmem:[%s360 + $0xb8] sm:$0xff]
        %v492 = vld [vmem:[%s360 + $0xc0] sm:$0xff]
        %v493 = vld [vmem:[%s360 + $0xc8] sm:$0xff]
        %v494 = vld [vmem:[%s360 + $0xd0] sm:$0xff]
        %v495 = vld [vmem:[%s360 + $0xd8] sm:$0xff]
        %v496 = vld [vmem:[%s360 + $0xe0] sm:$0xff]
        %v497 = vld [vmem:[%s360 + $0xe8] sm:$0xff]
        %v498 = vld [vmem:[%s360 + $0xf0] sm:$0xff]
        %v499 = vld [vmem:[%s360 + $0xf8] sm:$0xff]
        %v500 = vld [vmem:[%s433] sm:$0xf]
        %v502 = vperm.slane %v500, 0
        %v503 = vperm.slane %v500, 1
        %v504 = vperm.slane %v500, 2
        %v505 = vperm.slane %v500, 3
        %v518 = vunpack.c.l.b16 %v460
        %v519 = vunpack.c.l.b16 %v461
        %v520 = vunpack.c.l.b16 %v462
        %v521 = vunpack.c.l.b16 %v463
        %v522 = vunpack.c.l.b16 %v464
        %v523 = vunpack.c.l.b16 %v465
        %v524 = vunpack.c.l.b16 %v466
        %v525 = vunpack.c.l.b16 %v467
        %v526 = vpack.c.b16 %v519, %v518
        %v527 = vpack.c.b16 %v521, %v520
        %v528 = vpack.c.b16 %v523, %v522
        %v529 = vpack.c.b16 %v525, %v524
        %v566 = vunpack.c.l.b16 %v468
        %v567 = vunpack.c.h.b16 %v468
        %v568 = vunpack.c.l.b16 %v469
        %v569 = vunpack.c.h.b16 %v469
        %v570 = vunpack.c.l.b16 %v470
        %v571 = vunpack.c.h.b16 %v470
        %v572 = vunpack.c.l.b16 %v471
        %v573 = vunpack.c.h.b16 %v471
        %v574 = vunpack.c.l.b16 %v472
        %v575 = vunpack.c.h.b16 %v472
        %v576 = vunpack.c.l.b16 %v473
        %v577 = vunpack.c.h.b16 %v473
        %v578 = vunpack.c.l.b16 %v474
        %v579 = vunpack.c.h.b16 %v474
        %v580 = vunpack.c.l.b16 %v475
        %v581 = vunpack.c.h.b16 %v475
        %v582 = vunpack.c.l.b16 %v476
        %v583 = vunpack.c.h.b16 %v476
        %v584 = vunpack.c.l.b16 %v477
        %v585 = vunpack.c.h.b16 %v477
        %v586 = vunpack.c.l.b16 %v478
        %v587 = vunpack.c.h.b16 %v478
        %v588 = vunpack.c.l.b16 %v479
        %v589 = vunpack.c.h.b16 %v479
        %v590 = vunpack.c.l.b16 %v480
        %v591 = vunpack.c.h.b16 %v480
        %v592 = vunpack.c.l.b16 %v481
        %v593 = vunpack.c.h.b16 %v481
        %v594 = vunpack.c.l.b16 %v482
        %v595 = vunpack.c.h.b16 %v482
        %v596 = vunpack.c.l.b16 %v483
        %v597 = vunpack.c.h.b16 %v483
        %v598 = vunpack.c.l.b16 %v484
        %v599 = vunpack.c.h.b16 %v484
        %v600 = vunpack.c.l.b16 %v485
        %v601 = vunpack.c.h.b16 %v485
        %v602 = vunpack.c.l.b16 %v486
        %v603 = vunpack.c.h.b16 %v486
        %v604 = vunpack.c.l.b16 %v487
        %v605 = vunpack.c.h.b16 %v487
        %v606 = vunpack.c.l.b16 %v488
        %v607 = vunpack.c.h.b16 %v488
        %v608 = vunpack.c.l.b16 %v489
        %v609 = vunpack.c.h.b16 %v489
        %v610 = vunpack.c.l.b16 %v490
        %v611 = vunpack.c.h.b16 %v490
        %v612 = vunpack.c.l.b16 %v491
        %v613 = vunpack.c.h.b16 %v491
        %v614 = vunpack.c.l.b16 %v492
        %v615 = vunpack.c.h.b16 %v492
        %v616 = vunpack.c.l.b16 %v493
        %v617 = vunpack.c.h.b16 %v493
        %v618 = vunpack.c.l.b16 %v494
        %v619 = vunpack.c.h.b16 %v494
        %v620 = vunpack.c.l.b16 %v495
        %v621 = vunpack.c.h.b16 %v495
        %v622 = vunpack.c.l.b16 %v496
        %v623 = vunpack.c.h.b16 %v496
        %v624 = vunpack.c.l.b16 %v497
        %v625 = vunpack.c.h.b16 %v497
        %v626 = vunpack.c.l.b16 %v498
        %v627 = vunpack.c.h.b16 %v498
        %v628 = vunpack.c.l.b16 %v499
        %v629 = vunpack.c.h.b16 %v499
        %v630 = vpack.c.b16 %v570, %v566
        %v631 = vpack.c.b16 %v571, %v567
        %v632 = vpack.c.b16 %v572, %v568
        %v633 = vpack.c.b16 %v573, %v569
        %v634 = vpack.c.b16 %v578, %v574
        %v635 = vpack.c.b16 %v579, %v575
        %v636 = vpack.c.b16 %v580, %v576
        %v637 = vpack.c.b16 %v581, %v577
        %v638 = vpack.c.b16 %v586, %v582
        %v639 = vpack.c.b16 %v587, %v583
        %v640 = vpack.c.b16 %v588, %v584
        %v641 = vpack.c.b16 %v589, %v585
        %v642 = vpack.c.b16 %v594, %v590
        %v643 = vpack.c.b16 %v595, %v591
        %v644 = vpack.c.b16 %v596, %v592
        %v645 = vpack.c.b16 %v597, %v593
        %v646 = vpack.c.b16 %v602, %v598
        %v647 = vpack.c.b16 %v603, %v599
        %v648 = vpack.c.b16 %v604, %v600
        %v649 = vpack.c.b16 %v605, %v601
        %v650 = vpack.c.b16 %v610, %v606
        %v651 = vpack.c.b16 %v611, %v607
        %v652 = vpack.c.b16 %v612, %v608
        %v653 = vpack.c.b16 %v613, %v609
        %v654 = vpack.c.b16 %v618, %v614
        %v655 = vpack.c.b16 %v619, %v615
        %v656 = vpack.c.b16 %v620, %v616
        %v657 = vpack.c.b16 %v621, %v617
        %v658 = vpack.c.b16 %v626, %v622
        %v659 = vpack.c.b16 %v627, %v623
        %v660 = vpack.c.b16 %v628, %v624
        %v661 = vpack.c.b16 %v629, %v625
        %694 = vmatpush.bf16.msra.mxu0 %v658
        %695 = vmatpush.bf16.msra.mxu0 %v654
        %696 = vmatpush.bf16.msra.mxu0 %v650
        %697 = vmatpush.bf16.msra.mxu0 %v646
        %698 = vmatpush.bf16.msra.mxu0 %v642
        %699 = vmatpush.bf16.msra.mxu0 %v638
        %700 = vmatpush.bf16.msra.mxu0 %v634
        %701 = vmatpush.bf16.msra.mxu0 %v630
        %702 = vmatmul.bf16.gmra.mxu0 %v526
        %v703 = vpop.f32.mrf.mxu0
        %v704 = vadd.f32 %v502, %v703
        %v705 = vpop.f32.mrf.mxu0
        %v706 = vadd.f32 %v502, %v705
        %707 = vmatmul.bf16.gmra.mxu0 %v527
        %v708 = vpop.f32.mrf.mxu0
        %v709 = vadd.f32 %v502, %v708
        %v710 = vpop.f32.mrf.mxu0
        %v711 = vadd.f32 %v502, %v710
        %712 = vmatmul.bf16.gmra.mxu0 %v528
        %v713 = vpop.f32.mrf.mxu0
        %v714 = vadd.f32 %v502, %v713
        %v715 = vpop.f32.mrf.mxu0
        %v716 = vadd.f32 %v502, %v715
        %717 = vmatmul.bf16.gmra.mxu0 %v529
        %v718 = vpop.f32.mrf.mxu0
        %v719 = vadd.f32 %v502, %v718
        %v720 = vpop.f32.mrf.mxu0
        %v721 = vadd.f32 %v502, %v720
        %722 = vdwg.mxu0
        %723 = vmatpush.bf16.msra.mxu0 %v659
        %724 = vmatpush.bf16.msra.mxu0 %v655
        %725 = vmatpush.bf16.msra.mxu0 %v651
        %726 = vmatpush.bf16.msra.mxu0 %v647
        %727 = vmatpush.bf16.msra.mxu0 %v643
        %728 = vmatpush.bf16.msra.mxu0 %v639
        %729 = vmatpush.bf16.msra.mxu0 %v635
        %730 = vmatpush.bf16.msra.mxu0 %v631
        %731 = vmatmul.bf16.gmra.mxu0 %v526
        %v732 = vpop.f32.mrf.mxu0
        %v733 = vadd.f32 %v503, %v732
        %v734 = vpop.f32.mrf.mxu0
        %v735 = vadd.f32 %v503, %v734
        %736 = vmatmul.bf16.gmra.mxu0 %v527
        %v737 = vpop.f32.mrf.mxu0
        %v738 = vadd.f32 %v503, %v737
        %v739 = vpop.f32.mrf.mxu0
        %v740 = vadd.f32 %v503, %v739
        %741 = vmatmul.bf16.gmra.mxu0 %v528
        %v742 = vpop.f32.mrf.mxu0
        %v743 = vadd.f32 %v503, %v742
        %v744 = vpop.f32.mrf.mxu0
        %v745 = vadd.f32 %v503, %v744
        %746 = vmatmul.bf16.gmra.mxu0 %v529
        %v747 = vpop.f32.mrf.mxu0
        %v748 = vadd.f32 %v503, %v747
        %v749 = vpop.f32.mrf.mxu0
        %v750 = vadd.f32 %v503, %v749
        %751 = vdwg.mxu0
        %752 = vmatpush.bf16.msra.mxu0 %v660
        %753 = vmatpush.bf16.msra.mxu0 %v656
        %754 = vmatpush.bf16.msra.mxu0 %v652
        %755 = vmatpush.bf16.msra.mxu0 %v648
        %756 = vmatpush.bf16.msra.mxu0 %v644
        %757 = vmatpush.bf16.msra.mxu0 %v640
        %758 = vmatpush.bf16.msra.mxu0 %v636
        %759 = vmatpush.bf16.msra.mxu0 %v632
        %760 = vmatmul.bf16.gmra.mxu0 %v526
        %v761 = vpop.f32.mrf.mxu0
        %v762 = vadd.f32 %v504, %v761
        %v763 = vpop.f32.mrf.mxu0
        %v764 = vadd.f32 %v504, %v763
        %765 = vmatmul.bf16.gmra.mxu0 %v527
        %v766 = vpop.f32.mrf.mxu0
        %v767 = vadd.f32 %v504, %v766
        %v768 = vpop.f32.mrf.mxu0
        %v769 = vadd.f32 %v504, %v768
        %770 = vmatmul.bf16.gmra.mxu0 %v528
        %v771 = vpop.f32.mrf.mxu0
        %v772 = vadd.f32 %v504, %v771
        %v773 = vpop.f32.mrf.mxu0
        %v774 = vadd.f32 %v504, %v773
        %775 = vmatmul.bf16.gmra.mxu0 %v529
        %v776 = vpop.f32.mrf.mxu0
        %v777 = vadd.f32 %v504, %v776
        %v778 = vpop.f32.mrf.mxu0
        %v779 = vadd.f32 %v504, %v778
        %780 = vdwg.mxu0
        %781 = vmatpush.bf16.msra.mxu0 %v661
        %782 = vmatpush.bf16.msra.mxu0 %v657
        %783 = vmatpush.bf16.msra.mxu0 %v653
        %784 = vmatpush.bf16.msra.mxu0 %v649
        %785 = vmatpush.bf16.msra.mxu0 %v645
        %786 = vmatpush.bf16.msra.mxu0 %v641
        %787 = vmatpush.bf16.msra.mxu0 %v637
        %788 = vmatpush.bf16.msra.mxu0 %v633
        %789 = vmatmul.bf16.gmra.mxu0 %v526
        %v790 = vpop.f32.mrf.mxu0
        %v791 = vadd.f32 %v505, %v790
        %v792 = vpop.f32.mrf.mxu0
        %v793 = vadd.f32 %v505, %v792
        %794 = vmatmul.bf16.gmra.mxu0 %v527
        %v795 = vpop.f32.mrf.mxu0
        %v796 = vadd.f32 %v505, %v795
        %v797 = vpop.f32.mrf.mxu0
        %v798 = vadd.f32 %v505, %v797
        %799 = vmatmul.bf16.gmra.mxu0 %v528
        %v800 = vpop.f32.mrf.mxu0
        %v801 = vadd.f32 %v505, %v800
        %v802 = vpop.f32.mrf.mxu0
        %v803 = vadd.f32 %v505, %v802
        %804 = vmatmul.bf16.gmra.mxu0 %v529
        %v805 = vpop.f32.mrf.mxu0
        %v806 = vadd.f32 %v505, %v805
        %v807 = vpop.f32.mrf.mxu0
        %v808 = vadd.f32 %v505, %v807
        %809 = vdwg.mxu0
        %v810 = vmax.f32 %v704, 0.0
        %v811 = vmax.f32 %v733, 0.0
        %v812 = vmax.f32 %v762, 0.0
        %v813 = vmax.f32 %v791, 0.0
        %v814 = vmax.f32 %v706, 0.0
        %v815 = vmax.f32 %v735, 0.0
        %v816 = vmax.f32 %v764, 0.0
        %v817 = vmax.f32 %v793, 0.0
        %v818 = vmax.f32 %v709, 0.0
        %v819 = vmax.f32 %v738, 0.0
        %v820 = vmax.f32 %v767, 0.0
        %v821 = vmax.f32 %v796, 0.0
        %v822 = vmax.f32 %v711, 0.0
        %v823 = vmax.f32 %v740, 0.0
        %v824 = vmax.f32 %v769, 0.0
        %v825 = vmax.f32 %v798, 0.0
        %v826 = vmax.f32 %v714, 0.0
        %v827 = vmax.f32 %v743, 0.0
        %v828 = vmax.f32 %v772, 0.0
        %v829 = vmax.f32 %v801, 0.0
        %v830 = vmax.f32 %v716, 0.0
        %v831 = vmax.f32 %v745, 0.0
        %v832 = vmax.f32 %v774, 0.0
        %v833 = vmax.f32 %v803, 0.0
        %v834 = vmax.f32 %v719, 0.0
        %v835 = vmax.f32 %v748, 0.0
        %v836 = vmax.f32 %v777, 0.0
        %v837 = vmax.f32 %v806, 0.0
        %v838 = vmax.f32 %v721, 0.0
        %v839 = vmax.f32 %v750, 0.0
        %v840 = vmax.f32 %v779, 0.0
        %v841 = vmax.f32 %v808, 0.0
        %v842 = vpack.c.bf16 %v814, %v810
        %v843 = vpack.c.bf16 %v815, %v811
        %v844 = vpack.c.bf16 %v816, %v812
        %v845 = vpack.c.bf16 %v817, %v813
        %v846 = vpack.c.bf16 %v822, %v818
        %v847 = vpack.c.bf16 %v823, %v819
        %v848 = vpack.c.bf16 %v824, %v820
        %v849 = vpack.c.bf16 %v825, %v821
        %v850 = vpack.c.bf16 %v830, %v826
        %v851 = vpack.c.bf16 %v831, %v827
        %v852 = vpack.c.bf16 %v832, %v828
        %v853 = vpack.c.bf16 %v833, %v829
        %v854 = vpack.c.bf16 %v838, %v834
        %v855 = vpack.c.bf16 %v839, %v835
        %v856 = vpack.c.bf16 %v840, %v836
        %v857 = vpack.c.bf16 %v841, %v837
        %v858 = vld [vmem:[#allocation2] sm:$0xff]
        %v859 = vld [vmem:[#allocation2 + $0x8] sm:$0xff]
        %v860 = vld [vmem:[#allocation2 + $0x10] sm:$0xff]
        %v861 = vld [vmem:[#allocation2 + $0x18] sm:$0xff]
        %v862 = vld [vmem:[#allocation2 + $0x20] sm:$0xff]
        %v863 = vld [vmem:[#allocation2 + $0x28] sm:$0xff]
        %v864 = vld [vmem:[#allocation2 + $0x30] sm:$0xff]
        %v865 = vld [vmem:[#allocation2 + $0x38] sm:$0xff]
        %v866 = vld [vmem:[%s370] sm:$0xf]
        %v867 = vld [vmem:[%s370 + $0x4] sm:$0xf]
        %v868 = vld [vmem:[%s370 + $0x8] sm:$0xf]
        %v869 = vld [vmem:[%s370 + $0xc] sm:$0xf]
        %v870 = vld [vmem:[%s370 + $0x10] sm:$0xf]
        %v871 = vld [vmem:[%s370 + $0x14] sm:$0xf]
        %v872 = vld [vmem:[%s370 + $0x18] sm:$0xf]
        %v873 = vld [vmem:[%s370 + $0x1c] sm:$0xf]
        %v874 = vld [vmem:[%s370 + $0x20] sm:$0xf]
        %v875 = vld [vmem:[%s370 + $0x24] sm:$0xf]
        %v876 = vld [vmem:[%s370 + $0x28] sm:$0xf]
        %v877 = vld [vmem:[%s370 + $0x2c] sm:$0xf]
        %v878 = vld [vmem:[%s370 + $0x30] sm:$0xf]
        %v879 = vld [vmem:[%s370 + $0x34] sm:$0xf]
        %v880 = vld [vmem:[%s370 + $0x38] sm:$0xf]
        %v881 = vld [vmem:[%s370 + $0x3c] sm:$0xf]
        %v882 = vld [vmem:[%s370 + $0x40] sm:$0xf]
        %v883 = vld [vmem:[%s370 + $0x44] sm:$0xf]
        %v884 = vld [vmem:[%s370 + $0x48] sm:$0xf]
        %v885 = vld [vmem:[%s370 + $0x4c] sm:$0xf]
        %v886 = vld [vmem:[%s370 + $0x50] sm:$0xf]
        %v887 = vld [vmem:[%s370 + $0x54] sm:$0xf]
        %v888 = vld [vmem:[%s370 + $0x58] sm:$0xf]
        %v889 = vld [vmem:[%s370 + $0x5c] sm:$0xf]
        %v890 = vld [vmem:[%s370 + $0x60] sm:$0xf]
        %v891 = vld [vmem:[%s370 + $0x64] sm:$0xf]
        %v892 = vld [vmem:[%s370 + $0x68] sm:$0xf]
        %v893 = vld [vmem:[%s370 + $0x6c] sm:$0xf]
        %v894 = vld [vmem:[%s370 + $0x70] sm:$0xf]
        %v895 = vld [vmem:[%s370 + $0x74] sm:$0xf]
        %v896 = vld [vmem:[%s370 + $0x78] sm:$0xf]
        %v897 = vld [vmem:[%s370 + $0x7c] sm:$0xf]
        %v898 = vld [vmem:[%s370 + $0x80] sm:$0xf]
        %v899 = vld [vmem:[%s370 + $0x84] sm:$0xf]
        %v900 = vld [vmem:[%s370 + $0x88] sm:$0xf]
        %v901 = vld [vmem:[%s370 + $0x8c] sm:$0xf]
        %v902 = vld [vmem:[%s370 + $0x90] sm:$0xf]
        %v903 = vld [vmem:[%s370 + $0x94] sm:$0xf]
        %v904 = vld [vmem:[%s370 + $0x98] sm:$0xf]
        %v905 = vld [vmem:[%s370 + $0x9c] sm:$0xf]
        %v906 = vld [vmem:[%s370 + $0xa0] sm:$0xf]
        %v907 = vld [vmem:[%s370 + $0xa4] sm:$0xf]
        %v908 = vld [vmem:[%s370 + $0xa8] sm:$0xf]
        %v909 = vld [vmem:[%s370 + $0xac] sm:$0xf]
        %v910 = vld [vmem:[%s370 + $0xb0] sm:$0xf]
        %v911 = vld [vmem:[%s370 + $0xb4] sm:$0xf]
        %v912 = vld [vmem:[%s370 + $0xb8] sm:$0xf]
        %v913 = vld [vmem:[%s370 + $0xbc] sm:$0xf]
        %v914 = vld [vmem:[%s370 + $0xc0] sm:$0xf]
        %v915 = vld [vmem:[%s370 + $0xc4] sm:$0xf]
        %v916 = vld [vmem:[%s370 + $0xc8] sm:$0xf]
        %v917 = vld [vmem:[%s370 + $0xcc] sm:$0xf]
        %v918 = vld [vmem:[%s370 + $0xd0] sm:$0xf]
        %v919 = vld [vmem:[%s370 + $0xd4] sm:$0xf]
        %v920 = vld [vmem:[%s370 + $0xd8] sm:$0xf]
        %v921 = vld [vmem:[%s370 + $0xdc] sm:$0xf]
        %v922 = vld [vmem:[%s370 + $0xe0] sm:$0xf]
        %v923 = vld [vmem:[%s370 + $0xe4] sm:$0xf]
        %v924 = vld [vmem:[%s370 + $0xe8] sm:$0xf]
        %v925 = vld [vmem:[%s370 + $0xec] sm:$0xf]
        %v926 = vld [vmem:[%s370 + $0xf0] sm:$0xf]
        %v927 = vld [vmem:[%s370 + $0xf4] sm:$0xf]
        %v928 = vld [vmem:[%s370 + $0xf8] sm:$0xf]
        %v929 = vld [vmem:[%s370 + $0xfc] sm:$0xf]
        %v994 = vunpack.c.l.b16 %v866
        %v995 = vunpack.c.l.b16 %v867
        %v996 = vunpack.c.l.b16 %v868
        %v997 = vunpack.c.l.b16 %v869
        %v998 = vunpack.c.l.b16 %v870
        %v999 = vunpack.c.l.b16 %v871
        %v1000 = vunpack.c.l.b16 %v872
        %v1001 = vunpack.c.l.b16 %v873
        %v1002 = vunpack.c.l.b16 %v874
        %v1003 = vunpack.c.l.b16 %v875
        %v1004 = vunpack.c.l.b16 %v876
        %v1005 = vunpack.c.l.b16 %v877
        %v1006 = vunpack.c.l.b16 %v878
        %v1007 = vunpack.c.l.b16 %v879
        %v1008 = vunpack.c.l.b16 %v880
        %v1009 = vunpack.c.l.b16 %v881
        %v1010 = vunpack.c.l.b16 %v882
        %v1011 = vunpack.c.l.b16 %v883
        %v1012 = vunpack.c.l.b16 %v884
        %v1013 = vunpack.c.l.b16 %v885
        %v1014 = vunpack.c.l.b16 %v886
        %v1015 = vunpack.c.l.b16 %v887
        %v1016 = vunpack.c.l.b16 %v888
        %v1017 = vunpack.c.l.b16 %v889
        %v1018 = vunpack.c.l.b16 %v890
        %v1019 = vunpack.c.l.b16 %v891
        %v1020 = vunpack.c.l.b16 %v892
        %v1021 = vunpack.c.l.b16 %v893
        %v1022 = vunpack.c.l.b16 %v894
        %v1023 = vunpack.c.l.b16 %v895
        %v1024 = vunpack.c.l.b16 %v896
        %v1025 = vunpack.c.l.b16 %v897
        %v1026 = vunpack.c.l.b16 %v898
        %v1027 = vunpack.c.l.b16 %v899
        %v1028 = vunpack.c.l.b16 %v900
        %v1029 = vunpack.c.l.b16 %v901
        %v1030 = vunpack.c.l.b16 %v902
        %v1031 = vunpack.c.l.b16 %v903
        %v1032 = vunpack.c.l.b16 %v904
        %v1033 = vunpack.c.l.b16 %v905
        %v1034 = vunpack.c.l.b16 %v906
        %v1035 = vunpack.c.l.b16 %v907
        %v1036 = vunpack.c.l.b16 %v908
        %v1037 = vunpack.c.l.b16 %v909
        %v1038 = vunpack.c.l.b16 %v910
        %v1039 = vunpack.c.l.b16 %v911
        %v1040 = vunpack.c.l.b16 %v912
        %v1041 = vunpack.c.l.b16 %v913
        %v1042 = vunpack.c.l.b16 %v914
        %v1043 = vunpack.c.l.b16 %v915
        %v1044 = vunpack.c.l.b16 %v916
        %v1045 = vunpack.c.l.b16 %v917
        %v1046 = vunpack.c.l.b16 %v918
        %v1047 = vunpack.c.l.b16 %v919
        %v1048 = vunpack.c.l.b16 %v920
        %v1049 = vunpack.c.l.b16 %v921
        %v1050 = vunpack.c.l.b16 %v922
        %v1051 = vunpack.c.l.b16 %v923
        %v1052 = vunpack.c.l.b16 %v924
        %v1053 = vunpack.c.l.b16 %v925
        %v1054 = vunpack.c.l.b16 %v926
        %v1055 = vunpack.c.l.b16 %v927
        %v1056 = vunpack.c.l.b16 %v928
        %v1057 = vunpack.c.l.b16 %v929
        %v1058 = vpack.c.b16 %v995, %v994
        %v1059 = vpack.c.b16 %v997, %v996
        %v1060 = vpack.c.b16 %v999, %v998
        %v1061 = vpack.c.b16 %v1001, %v1000
        %v1062 = vpack.c.b16 %v1003, %v1002
        %v1063 = vpack.c.b16 %v1005, %v1004
        %v1064 = vpack.c.b16 %v1007, %v1006
        %v1065 = vpack.c.b16 %v1009, %v1008
        %v1066 = vpack.c.b16 %v1011, %v1010
        %v1067 = vpack.c.b16 %v1013, %v1012
        %v1068 = vpack.c.b16 %v1015, %v1014
        %v1069 = vpack.c.b16 %v1017, %v1016
        %v1070 = vpack.c.b16 %v1019, %v1018
        %v1071 = vpack.c.b16 %v1021, %v1020
        %v1072 = vpack.c.b16 %v1023, %v1022
        %v1073 = vpack.c.b16 %v1025, %v1024
        %v1074 = vpack.c.b16 %v1027, %v1026
        %v1075 = vpack.c.b16 %v1029, %v1028
        %v1076 = vpack.c.b16 %v1031, %v1030
        %v1077 = vpack.c.b16 %v1033, %v1032
        %v1078 = vpack.c.b16 %v1035, %v1034
        %v1079 = vpack.c.b16 %v1037, %v1036
        %v1080 = vpack.c.b16 %v1039, %v1038
        %v1081 = vpack.c.b16 %v1041, %v1040
        %v1082 = vpack.c.b16 %v1043, %v1042
        %v1083 = vpack.c.b16 %v1045, %v1044
        %v1084 = vpack.c.b16 %v1047, %v1046
        %v1085 = vpack.c.b16 %v1049, %v1048
        %v1086 = vpack.c.b16 %v1051, %v1050
        %v1087 = vpack.c.b16 %v1053, %v1052
        %v1088 = vpack.c.b16 %v1055, %v1054
        %v1089 = vpack.c.b16 %v1057, %v1056
        %1122 = vmatpush.bf16.msra.mxu0 %v1065
        %1123 = vmatpush.bf16.msra.mxu0 %v1064
        %1124 = vmatpush.bf16.msra.mxu0 %v1063
        %1125 = vmatpush.bf16.msra.mxu0 %v1062
        %1126 = vmatpush.bf16.msra.mxu0 %v1061
        %1127 = vmatpush.bf16.msra.mxu0 %v1060
        %1128 = vmatpush.bf16.msra.mxu0 %v1059
        %1129 = vmatpush.bf16.msra.mxu0 %v1058
        %1130 = vmatmul.bf16.gmra.mxu0 %v842
        %v1131 = vpop.f32.mrf.mxu0
        %v1132 = vadd.f32 0.0, %v1131
        %v1133 = vpop.f32.mrf.mxu0
        %v1134 = vadd.f32 0.0, %v1133
        %1135 = vmatmul.bf16.gmra.mxu0 %v846
        %v1136 = vpop.f32.mrf.mxu0
        %v1137 = vadd.f32 0.0, %v1136
        %v1138 = vpop.f32.mrf.mxu0
        %v1139 = vadd.f32 0.0, %v1138
        %1140 = vmatmul.bf16.gmra.mxu0 %v850
        %v1141 = vpop.f32.mrf.mxu0
        %v1142 = vadd.f32 0.0, %v1141
        %v1143 = vpop.f32.mrf.mxu0
        %v1144 = vadd.f32 0.0, %v1143
        %1145 = vmatmul.bf16.gmra.mxu0 %v854
        %v1146 = vpop.f32.mrf.mxu0
        %v1147 = vadd.f32 0.0, %v1146
        %v1148 = vpop.f32.mrf.mxu0
        %v1149 = vadd.f32 0.0, %v1148
        %1150 = vdwg.mxu0
        %1151 = vmatpush.bf16.msra.mxu0 %v1073
        %1152 = vmatpush.bf16.msra.mxu0 %v1072
        %1153 = vmatpush.bf16.msra.mxu0 %v1071
        %1154 = vmatpush.bf16.msra.mxu0 %v1070
        %1155 = vmatpush.bf16.msra.mxu0 %v1069
        %1156 = vmatpush.bf16.msra.mxu0 %v1068
        %1157 = vmatpush.bf16.msra.mxu0 %v1067
        %1158 = vmatpush.bf16.msra.mxu0 %v1066
        %1159 = vmatmul.bf16.gmra.mxu0 %v843
        %v1160 = vpop.f32.mrf.mxu0
        %v1161 = vadd.f32 %v1132, %v1160
        %v1162 = vpop.f32.mrf.mxu0
        %v1163 = vadd.f32 %v1134, %v1162
        %1164 = vmatmul.bf16.gmra.mxu0 %v847
        %v1165 = vpop.f32.mrf.mxu0
        %v1166 = vadd.f32 %v1137, %v1165
        %v1167 = vpop.f32.mrf.mxu0
        %v1168 = vadd.f32 %v1139, %v1167
        %1169 = vmatmul.bf16.gmra.mxu0 %v851
        %v1170 = vpop.f32.mrf.mxu0
        %v1171 = vadd.f32 %v1142, %v1170
        %v1172 = vpop.f32.mrf.mxu0
        %v1173 = vadd.f32 %v1144, %v1172
        %1174 = vmatmul.bf16.gmra.mxu0 %v855
        %v1175 = vpop.f32.mrf.mxu0
        %v1176 = vadd.f32 %v1147, %v1175
        %v1177 = vpop.f32.mrf.mxu0
        %v1178 = vadd.f32 %v1149, %v1177
        %1179 = vdwg.mxu0
        %1180 = vmatpush.bf16.msra.mxu0 %v1081
        %1181 = vmatpush.bf16.msra.mxu0 %v1080
        %1182 = vmatpush.bf16.msra.mxu0 %v1079
        %1183 = vmatpush.bf16.msra.mxu0 %v1078
        %1184 = vmatpush.bf16.msra.mxu0 %v1077
        %1185 = vmatpush.bf16.msra.mxu0 %v1076
        %1186 = vmatpush.bf16.msra.mxu0 %v1075
        %1187 = vmatpush.bf16.msra.mxu0 %v1074
        %1188 = vmatmul.bf16.gmra.mxu0 %v844
        %v1189 = vpop.f32.mrf.mxu0
        %v1190 = vadd.f32 %v1161, %v1189
        %v1191 = vpop.f32.mrf.mxu0
        %v1192 = vadd.f32 %v1163, %v1191
        %1193 = vmatmul.bf16.gmra.mxu0 %v848
        %v1194 = vpop.f32.mrf.mxu0
        %v1195 = vadd.f32 %v1166, %v1194
        %v1196 = vpop.f32.mrf.mxu0
        %v1197 = vadd.f32 %v1168, %v1196
        %1198 = vmatmul.bf16.gmra.mxu0 %v852
        %v1199 = vpop.f32.mrf.mxu0
        %v1200 = vadd.f32 %v1171, %v1199
        %v1201 = vpop.f32.mrf.mxu0
        %v1202 = vadd.f32 %v1173, %v1201
        %1203 = vmatmul.bf16.gmra.mxu0 %v856
        %v1204 = vpop.f32.mrf.mxu0
        %v1205 = vadd.f32 %v1176, %v1204
        %v1206 = vpop.f32.mrf.mxu0
        %v1207 = vadd.f32 %v1178, %v1206
        %1208 = vdwg.mxu0
        %1209 = vmatpush.bf16.msra.mxu0 %v1089
        %1210 = vmatpush.bf16.msra.mxu0 %v1088
        %1211 = vmatpush.bf16.msra.mxu0 %v1087
        %1212 = vmatpush.bf16.msra.mxu0 %v1086
        %1213 = vmatpush.bf16.msra.mxu0 %v1085
        %1214 = vmatpush.bf16.msra.mxu0 %v1084
        %1215 = vmatpush.bf16.msra.mxu0 %v1083
        %1216 = vmatpush.bf16.msra.mxu0 %v1082
        %1217 = vmatmul.bf16.gmra.mxu0 %v845
        %v1218 = vpop.f32.mrf.mxu0
        %v1219 = vadd.f32 %v1190, %v1218
        %v1220 = vpop.f32.mrf.mxu0
        %v1221 = vadd.f32 %v1192, %v1220
        %1222 = vmatmul.bf16.gmra.mxu0 %v849
        %v1223 = vpop.f32.mrf.mxu0
        %v1224 = vadd.f32 %v1195, %v1223
        %v1225 = vpop.f32.mrf.mxu0
        %v1226 = vadd.f32 %v1197, %v1225
        %1227 = vmatmul.bf16.gmra.mxu0 %v853
        %v1228 = vpop.f32.mrf.mxu0
        %v1229 = vadd.f32 %v1200, %v1228
        %v1230 = vpop.f32.mrf.mxu0
        %v1231 = vadd.f32 %v1202, %v1230
        %1232 = vmatmul.bf16.gmra.mxu0 %v857
        %v1233 = vpop.f32.mrf.mxu0
        %v1234 = vadd.f32 %v1205, %v1233
        %v1235 = vpop.f32.mrf.mxu0
        %v1236 = vadd.f32 %v1207, %v1235
        %1237 = vdwg.mxu0
        %v1238 = vadd.f32 %v858, %v1219
        %v1239 = vadd.f32 %v859, %v1221
        %v1240 = vadd.f32 %v860, %v1224
        %v1241 = vadd.f32 %v861, %v1226
        %v1242 = vadd.f32 %v862, %v1229
        %v1243 = vadd.f32 %v863, %v1231
        %v1244 = vadd.f32 %v864, %v1234
        %v1245 = vadd.f32 %v865, %v1236
        %1246 = vst [vmem:[#allocation2] sm:$0xff] %v1238
        %1247 = vst [vmem:[#allocation2 + $0x8] sm:$0xff] %v1239
        %1248 = vst [vmem:[#allocation2 + $0x10] sm:$0xff] %v1240
        %1249 = vst [vmem:[#allocation2 + $0x18] sm:$0xff] %v1241
        %1250 = vst [vmem:[#allocation2 + $0x20] sm:$0xff] %v1242
        %1251 = vst [vmem:[#allocation2 + $0x28] sm:$0xff] %v1243
        %1252 = vst [vmem:[#allocation2 + $0x30] sm:$0xff] %v1244
        %1253 = vst [vmem:[#allocation2 + $0x38] sm:$0xff] %v1245
        %p1254 = scmp.eq.s32.totalorder %s30, 3
        // Predicated region
        $region65: #{transformer_translator_forward.28} parent=51 // pred_check
          %p1255 = pneg %p1254
        $region66: #{transformer_translator_forward.28} parent=51 // pred_check_branch
          %1257 = sbr.rel (%p1255) target = $region68
        $region67: #{transformer_translator_forward.28} parent=51 // pred_region
          %v1258 = vld [vmem:[#allocation2] sm:$0xff]
          %v1259 = vld [vmem:[#allocation2 + $0x8] sm:$0xff]
          %v1260 = vld [vmem:[#allocation2 + $0x10] sm:$0xff]
          %v1261 = vld [vmem:[#allocation2 + $0x18] sm:$0xff]
          %v1262 = vld [vmem:[#allocation2 + $0x20] sm:$0xff]
          %v1263 = vld [vmem:[#allocation2 + $0x28] sm:$0xff]
          %v1264 = vld [vmem:[#allocation2 + $0x30] sm:$0xff]
          %v1265 = vld [vmem:[#allocation2 + $0x38] sm:$0xff]
          %v1266 = vld [vmem:[%s4] sm:$0x1]
          %v1268 = vperm.slane %v1266, 0
          %v1270 = vadd.f32 %v1258, %v1268
          %v1271 = vadd.f32 %v1259, %v1268
          %v1272 = vadd.f32 %v1260, %v1268
          %v1273 = vadd.f32 %v1261, %v1268
          %v1274 = vadd.f32 %v1262, %v1268
          %v1275 = vadd.f32 %v1263, %v1268
          %v1276 = vadd.f32 %v1264, %v1268
          %v1277 = vadd.f32 %v1265, %v1268
          %v1278 = vld [vmem:[%s440] sm:$0xf]
          %v1279 = vld [vmem:[%s440 + $0x4] sm:$0xf]
          %v1280 = vld [vmem:[%s440 + $0x8] sm:$0xf]
          %v1281 = vld [vmem:[%s440 + $0xc] sm:$0xf]
          %v1282 = vld [vmem:[%s440 + $0x10] sm:$0xf]
          %v1283 = vld [vmem:[%s440 + $0x14] sm:$0xf]
          %v1284 = vld [vmem:[%s440 + $0x18] sm:$0xf]
          %v1285 = vld [vmem:[%s440 + $0x1c] sm:$0xf]
          %v1286 = vunpack.c.l.bf16 %v1278
          %v1287 = vunpack.c.l.bf16 %v1279
          %v1288 = vunpack.c.l.bf16 %v1280
          %v1289 = vunpack.c.l.bf16 %v1281
          %v1290 = vunpack.c.l.bf16 %v1282
          %v1291 = vunpack.c.l.bf16 %v1283
          %v1292 = vunpack.c.l.bf16 %v1284
          %v1293 = vunpack.c.l.bf16 %v1285
          %v1294 = vadd.f32 %v1270, %v1286
          %v1295 = vadd.f32 %v1271, %v1287
          %v1296 = vadd.f32 %v1272, %v1288
          %v1297 = vadd.f32 %v1273, %v1289
          %v1298 = vadd.f32 %v1274, %v1290
          %v1299 = vadd.f32 %v1275, %v1291
          %v1300 = vadd.f32 %v1276, %v1292
          %v1301 = vadd.f32 %v1277, %v1293
          %1302 = vadd.xlane.f32.xlu0 %v1294
          %v1303 = vpop.xlane.xlu0 %1302
          %1304 = vadd.xlane.f32.xlu0 %v1295
          %v1305 = vpop.xlane.xlu0 %1304
          %1306 = vadd.xlane.f32.xlu0 %v1296
          %v1307 = vpop.xlane.xlu0 %1306
          %1308 = vadd.xlane.f32.xlu0 %v1297
          %v1309 = vpop.xlane.xlu0 %1308
          %1310 = vadd.xlane.f32.xlu0 %v1298
          %v1311 = vpop.xlane.xlu0 %1310
          %1312 = vadd.xlane.f32.xlu0 %v1299
          %v1313 = vpop.xlane.xlu0 %1312
          %1314 = vadd.xlane.f32.xlu0 %v1300
          %v1315 = vpop.xlane.xlu0 %1314
          %1316 = vadd.xlane.f32.xlu0 %v1301
          %v1317 = vpop.xlane.xlu0 %1316
          %v1318 = vrcp.pop 128.0
          %v1319 = vmul.f32 128.0, %v1318
          %v1320 = vsub.f32 1.0, %v1319
          %v1321 = vmul.f32 %v1318, %v1320
          %v1322 = vadd.f32 %v1318, %v1321
          %vm1323 = vweird.f32 %v1318
          %v1324 = vsel %vm1323, %v1318, %v1322
          %v1325 = vmul.f32 %v1303, %v1324
          %v1326 = vmul.f32 %v1305, %v1324
          %v1327 = vmul.f32 %v1307, %v1324
          %v1328 = vmul.f32 %v1309, %v1324
          %v1329 = vmul.f32 %v1311, %v1324
          %v1330 = vmul.f32 %v1313, %v1324
          %v1331 = vmul.f32 %v1315, %v1324
          %v1332 = vmul.f32 %v1317, %v1324
          %v1333 = vsub.f32 %v1294, %v1325
          %v1334 = vsub.f32 %v1295, %v1326
          %v1335 = vsub.f32 %v1296, %v1327
          %v1336 = vsub.f32 %v1297, %v1328
          %v1337 = vsub.f32 %v1298, %v1329
          %v1338 = vsub.f32 %v1299, %v1330
          %v1339 = vsub.f32 %v1300, %v1331
          %v1340 = vsub.f32 %v1301, %v1332
          %v1341 = vmul.f32 %v1333, %v1333
          %v1342 = vmul.f32 %v1334, %v1334
          %v1343 = vmul.f32 %v1335, %v1335
          %v1344 = vmul.f32 %v1336, %v1336
          %v1345 = vmul.f32 %v1337, %v1337
          %v1346 = vmul.f32 %v1338, %v1338
          %v1347 = vmul.f32 %v1339, %v1339
          %v1348 = vmul.f32 %v1340, %v1340
          %1349 = vadd.xlane.f32.xlu0 %v1341
          %v1350 = vpop.xlane.xlu0 %1349
          %1351 = vadd.xlane.f32.xlu0 %v1342
          %v1352 = vpop.xlane.xlu0 %1351
          %1353 = vadd.xlane.f32.xlu0 %v1343
          %v1354 = vpop.xlane.xlu0 %1353
          %1355 = vadd.xlane.f32.xlu0 %v1344
          %v1356 = vpop.xlane.xlu0 %1355
          %1357 = vadd.xlane.f32.xlu0 %v1345
          %v1358 = vpop.xlane.xlu0 %1357
          %1359 = vadd.xlane.f32.xlu0 %v1346
          %v1360 = vpop.xlane.xlu0 %1359
          %1361 = vadd.xlane.f32.xlu0 %v1347
          %v1362 = vpop.xlane.xlu0 %1361
          %1363 = vadd.xlane.f32.xlu0 %v1348
          %v1364 = vpop.xlane.xlu0 %1363
          %v1365 = vmul.f32 %v1350, %v1324
          %v1366 = vmul.f32 %v1352, %v1324
          %v1367 = vmul.f32 %v1354, %v1324
          %v1368 = vmul.f32 %v1356, %v1324
          %v1369 = vmul.f32 %v1358, %v1324
          %v1370 = vmul.f32 %v1360, %v1324
          %v1371 = vmul.f32 %v1362, %v1324
          %v1372 = vmul.f32 %v1364, %v1324
          %v1373 = vadd.f32 %v1365, 1e-05
          %v1374 = vadd.f32 %v1366, 1e-05
          %v1375 = vadd.f32 %v1367, 1e-05
          %v1376 = vadd.f32 %v1368, 1e-05
          %v1377 = vadd.f32 %v1369, 1e-05
          %v1378 = vadd.f32 %v1370, 1e-05
          %v1379 = vadd.f32 %v1371, 1e-05
          %v1380 = vadd.f32 %v1372, 1e-05
          %v1381 = vrsqrt.pop %v1373
          %v1382 = vmul.f32 %v1381, %v1373
          %v1383 = vmul.f32 %v1382, %v1381
          %v1384 = vmul.f32 0.5, %v1383
          %v1385 = vsub.f32 1.5, %v1384
          %v1386 = vmul.f32 %v1381, %v1385
          %vm1387 = vweird.f32 %v1373
          %vm1388 = vweird.f32 %v1381
          %vm1389 = vmor %vm1387, %vm1388
          %v1390 = vsel %vm1389, %v1381, %v1386
          %v1391 = vrsqrt.pop %v1374
          %v1392 = vmul.f32 %v1391, %v1374
          %v1393 = vmul.f32 %v1392, %v1391
          %v1394 = vmul.f32 0.5, %v1393
          %v1395 = vsub.f32 1.5, %v1394
          %v1396 = vmul.f32 %v1391, %v1395
          %vm1397 = vweird.f32 %v1374
          %vm1398 = vweird.f32 %v1391
          %vm1399 = vmor %vm1397, %vm1398
          %v1400 = vsel %vm1399, %v1391, %v1396
          %v1401 = vrsqrt.pop %v1375
          %v1402 = vmul.f32 %v1401, %v1375
          %v1403 = vmul.f32 %v1402, %v1401
          %v1404 = vmul.f32 0.5, %v1403
          %v1405 = vsub.f32 1.5, %v1404
          %v1406 = vmul.f32 %v1401, %v1405
          %vm1407 = vweird.f32 %v1375
          %vm1408 = vweird.f32 %v1401
          %vm1409 = vmor %vm1407, %vm1408
          %v1410 = vsel %vm1409, %v1401, %v1406
          %v1411 = vrsqrt.pop %v1376
          %v1412 = vmul.f32 %v1411, %v1376
          %v1413 = vmul.f32 %v1412, %v1411
          %v1414 = vmul.f32 0.5, %v1413
          %v1415 = vsub.f32 1.5, %v1414
          %v1416 = vmul.f32 %v1411, %v1415
          %vm1417 = vweird.f32 %v1376
          %vm1418 = vweird.f32 %v1411
          %vm1419 = vmor %vm1417, %vm1418
          %v1420 = vsel %vm1419, %v1411, %v1416
          %v1421 = vrsqrt.pop %v1377
          %v1422 = vmul.f32 %v1421, %v1377
          %v1423 = vmul.f32 %v1422, %v1421
          %v1424 = vmul.f32 0.5, %v1423
          %v1425 = vsub.f32 1.5, %v1424
          %v1426 = vmul.f32 %v1421, %v1425
          %vm1427 = vweird.f32 %v1377
          %vm1428 = vweird.f32 %v1421
          %vm1429 = vmor %vm1427, %vm1428
          %v1430 = vsel %vm1429, %v1421, %v1426
          %v1431 = vrsqrt.pop %v1378
          %v1432 = vmul.f32 %v1431, %v1378
          %v1433 = vmul.f32 %v1432, %v1431
          %v1434 = vmul.f32 0.5, %v1433
          %v1435 = vsub.f32 1.5, %v1434
          %v1436 = vmul.f32 %v1431, %v1435
          %vm1437 = vweird.f32 %v1378
          %vm1438 = vweird.f32 %v1431
          %vm1439 = vmor %vm1437, %vm1438
          %v1440 = vsel %vm1439, %v1431, %v1436
          %v1441 = vrsqrt.pop %v1379
          %v1442 = vmul.f32 %v1441, %v1379
          %v1443 = vmul.f32 %v1442, %v1441
          %v1444 = vmul.f32 0.5, %v1443
          %v1445 = vsub.f32 1.5, %v1444
          %v1446 = vmul.f32 %v1441, %v1445
          %vm1447 = vweird.f32 %v1379
          %vm1448 = vweird.f32 %v1441
          %vm1449 = vmor %vm1447, %vm1448
          %v1450 = vsel %vm1449, %v1441, %v1446
          %v1451 = vrsqrt.pop %v1380
          %v1452 = vmul.f32 %v1451, %v1380
          %v1453 = vmul.f32 %v1452, %v1451
          %v1454 = vmul.f32 0.5, %v1453
          %v1455 = vsub.f32 1.5, %v1454
          %v1456 = vmul.f32 %v1451, %v1455
          %vm1457 = vweird.f32 %v1380
          %vm1458 = vweird.f32 %v1451
          %vm1459 = vmor %vm1457, %vm1458
          %v1460 = vsel %vm1459, %v1451, %v1456
          %v1461 = vmul.f32 %v1333, %v1390
          %v1462 = vmul.f32 %v1334, %v1400
          %v1463 = vmul.f32 %v1335, %v1410
          %v1464 = vmul.f32 %v1336, %v1420
          %v1465 = vmul.f32 %v1337, %v1430
          %v1466 = vmul.f32 %v1338, %v1440
          %v1467 = vmul.f32 %v1339, %v1450
          %v1468 = vmul.f32 %v1340, %v1460
          %v1469 = vld [vmem:[%s6] sm:$0x1]
          %v1471 = vperm.slane %v1469, 0
          %v1473 = vmul.f32 %v1461, %v1471
          %v1474 = vmul.f32 %v1462, %v1471
          %v1475 = vmul.f32 %v1463, %v1471
          %v1476 = vmul.f32 %v1464, %v1471
          %v1477 = vmul.f32 %v1465, %v1471
          %v1478 = vmul.f32 %v1466, %v1471
          %v1479 = vmul.f32 %v1467, %v1471
          %v1480 = vmul.f32 %v1468, %v1471
          %v1481 = vld [vmem:[%s7] sm:$0x1]
          %v1483 = vperm.slane %v1481, 0
          %v1485 = vadd.f32 %v1473, %v1483
          %v1486 = vadd.f32 %v1474, %v1483
          %v1487 = vadd.f32 %v1475, %v1483
          %v1488 = vadd.f32 %v1476, %v1483
          %v1489 = vadd.f32 %v1477, %v1483
          %v1490 = vadd.f32 %v1478, %v1483
          %v1491 = vadd.f32 %v1479, %v1483
          %v1492 = vadd.f32 %v1480, %v1483
          %v1493 = vpack.c.bf16 %v1485, %v1485
          %v1494 = vpack.c.bf16 %v1486, %v1486
          %v1495 = vpack.c.bf16 %v1487, %v1487
          %v1496 = vpack.c.bf16 %v1488, %v1488
          %v1497 = vpack.c.bf16 %v1489, %v1489
          %v1498 = vpack.c.bf16 %v1490, %v1490
          %v1499 = vpack.c.bf16 %v1491, %v1491
          %v1500 = vpack.c.bf16 %v1492, %v1492
          %1501 = vst [vmem:[%s446] sm:$0xf] %v1493
          %1502 = vst [vmem:[%s446 + $0x4] sm:$0xf] %v1494
          %1503 = vst [vmem:[%s446 + $0x8] sm:$0xf] %v1495
          %1504 = vst [vmem:[%s446 + $0xc] sm:$0xf] %v1496
          %1505 = vst [vmem:[%s446 + $0x10] sm:$0xf] %v1497
          %1506 = vst [vmem:[%s446 + $0x14] sm:$0xf] %v1498
          %1507 = vst [vmem:[%s446 + $0x18] sm:$0xf] %v1499
          %1508 = vst [vmem:[%s446 + $0x1c] sm:$0xf] %v1500
        $region68: #{transformer_translator_forward.28} parent=51 // pred_fallthru
          _
        %s1509 = smul.u32 8, %s29
        %p1510 = scmp.lt.s32.totalorder %s1509, 7
        %s1511 = scalar_select %p1510, %s1509, 7
        %s1512 = smul.addr %s1511, 4
        %s1513 = scalar_lea.vmem %s8, %s1512
        // Predicated region
        $region69: #{transformer_translator_forward.28} parent=51 // pred_check
          %p1514 = pneg %p248
        $region70: #{transformer_translator_forward.28} parent=51 // pred_check_branch
          %1516 = sbr.rel (%p1514) target = $region72
        $region71: #{transformer_translator_forward.28} parent=51 // pred_region
          %s1517 = smul.u32 8, %s29
        $region72: #{transformer_translator_forward.28} parent=51 // pred_fallthru
          _
        // Predicated region
        $region73: #{transformer_translator_forward.28} parent=51 // pred_check
          %p1518 = pneg %p248
        $region74: #{transformer_translator_forward.28} parent=51 // pred_check_branch
          %1520 = sbr.rel (%p1518) target = $region76
        $region75: #{transformer_translator_forward.28} parent=51 // pred_region
          %s1521 = smul.u32 8, %s29
          %p1522 = scmp.lt.s32.totalorder %s1521, 7
          %s1523 = scalar_select %p1522, %s1521, 7
          %s1524 = smul.addr %s1523, 4
          %s1525 = scalar_lea.vmem %s8, %s1524
        $region76: #{transformer_translator_forward.28} parent=51 // pred_fallthru
          _
      $region52: #{transformer_translator_forward.28} parent=5 // pred_fallthru
        _
      %p1526 = scmp.le.s32.totalorder 2, %s20
      // Predicated region
      $region77: #{transformer_translator_forward.28} parent=5 // pred_check
        %p1527 = pneg %p1526
      $region78: #{transformer_translator_forward.28} parent=5 // pred_check_branch
        %1529 = sbr.rel (%p1527) target = $region80
      $region79: #{transformer_translator_forward.28} parent=5 // pred_region
        %s1530 = ssub.s32 %s20, 2
      $region80: #{transformer_translator_forward.28} parent=5 // pred_fallthru
        _
    $region6: #{transformer_translator_forward.28} parent=1 // loop_footer
      %s24 = sadd.s32 1, %s20
    $region7: #{transformer_translator_forward.28} parent=1 // loop_footer_branch
      %19 = sbr.rel target = $region3
    $region8: #{transformer_translator_forward.28} parent=1 // loop_exit
      _
    %1531 = vsyncpa [#allocation4], 1
    %s1532 = scalar_lea.sflag [#allocation4], 1
    %1533 = vsyncpa %s1532, 1
    %1534 = vsyncpa [#allocation6], 1
    %s1535 = scalar_lea.sflag [#allocation6], 1
    %1536 = vsyncpa %s1535, 1

// kernel: transformer_translator_forward.29
$region0: #{transformer_translator_forward.29}
  #allocation0 [shape = 'u32[]', space=smem, size = 0x4, offset = 0x4, fixed_abs, tag = 'smem constant byte address 0x4 - core index']
  #allocation1 [shape = 'u32[72,128]{1,0:T(1,128)}', space=vmem, size = 0x9000, scoped, tag = 'internal scratch']
  #allocation2 [shape = 'f32[64,384]{1,0:T(8,128)}', space=vmem, size = 0x18000, scoped, tag = 'scratch operand']
  %s0 = inlined_call_operand.vmem [shape: bf16[64,128], index: 0, kind: input, shape index: {}]
  %s1 = inlined_call_operand.hbm [shape: bf16[128,384], index: 1, kind: input, shape index: {}]
  %s2 = inlined_call_operand.vmem [shape: f32[1,384], index: 2, kind: input, shape index: {}]
  %s3 = inlined_call_operand.vmem [shape: bf16[64,384], index: 3, kind: output, shape index: {}]
  %s4 = sld [smem:[#allocation0]]
  $region34: #{transformer_translator_forward.29} parent=0
    _
  %s6 = ssub.s32 1, %s4
  %s7 = scalar_select 0, %s6, %s4
  $region1: #{transformer_translator_forward.29} parent=0
    #allocation3 [shape = 'u8[98304]{0}', space=vmem, size = 0x18000, scoped, tag = 'input window, operand 1, single buffered']
    #allocation4 [shape = 's32[1]{0}', space=sflag, size = 0x4, scoped, tag = 'scoped memory for transformer_translator_forward.29']
    %8 = vsyncpa [#allocation4], 0
    // Predicated region
    $region2: #{transformer_translator_forward.29} parent=1 // pred_check
      _
    $region3: #{transformer_translator_forward.29} parent=1 // pred_check_branch
      %10 = sbr.rel (0) target = $region5
    $region4: #{transformer_translator_forward.29} parent=1 // pred_region
      _
    $region5: #{transformer_translator_forward.29} parent=1 // pred_fallthru
      _
    // Predicated region
    $region6: #{transformer_translator_forward.29} parent=1 // pred_check
      _
    $region7: #{transformer_translator_forward.29} parent=1 // pred_check_branch
      %12 = sbr.rel (0) target = $region9
    $region8: #{transformer_translator_forward.29} parent=1 // pred_region
      %14 = vsyncadd [#allocation4], 0
      %s15 = sshll.u32 %s1, 4
      %s16 = int_to_ptr.hbm [resolvable:$true] %s15
      %s17 = sshll.u32 [#allocation3], 4
      %s18 = int_to_ptr.vmem [resolvable:$true] %s17
      %23 = dma.hbm_to_vmem [thread:$0]  %s16, 3072, %s18, [#allocation4], 192, 192, 12
    $region9: #{transformer_translator_forward.29} parent=1 // pred_fallthru
      _
    // Predicated region
    $region10: #{transformer_translator_forward.29} parent=1 // pred_check
      _
    $region11: #{transformer_translator_forward.29} parent=1 // pred_check_branch
      %25 = sbr.rel (0) target = $region13
    $region12: #{transformer_translator_forward.29} parent=1 // pred_region
      _
    $region13: #{transformer_translator_forward.29} parent=1 // pred_fallthru
      _
    // Predicated region
    $region14: #{transformer_translator_forward.29} parent=1 // pred_check
      _
    $region15: #{transformer_translator_forward.29} parent=1 // pred_check_branch
      %27 = sbr.rel (0) target = $region17
    $region16: #{transformer_translator_forward.29} parent=1 // pred_region
      %29 = dma.done [#allocation4], 3072
    $region17: #{transformer_translator_forward.29} parent=1 // pred_fallthru
      _
    %p30 = scmp.eq.s32.totalorder 0, 0
    // Predicated region
    $region18: #{transformer_translator_forward.29} parent=1 // pred_check
      %p31 = pneg %p30
    $region19: #{transformer_translator_forward.29} parent=1 // pred_check_branch
      %33 = sbr.rel (%p31) target = $region21
    $region20: #{transformer_translator_forward.29} parent=1 // pred_region
      %34 = vst [vmem:[#allocation2] sm:$0xff] 0.0
      %35 = vst [vmem:[#allocation2 + $0x8] sm:$0xff] 0.0
      %36 = vst [vmem:[#allocation2 + $0x10] sm:$0xff] 0.0
      %37 = vst [vmem:[#allocation2 + $0x18] sm:$0xff] 0.0
      %38 = vst [vmem:[#allocation2 + $0x20] sm:$0xff] 0.0
      %39 = vst [vmem:[#allocation2 + $0x28] sm:$0xff] 0.0
      %40 = vst [vmem:[#allocation2 + $0x30] sm:$0xff] 0.0
      %41 = vst [vmem:[#allocation2 + $0x38] sm:$0xff] 0.0
      %42 = vst [vmem:[#allocation2 + $0x40] sm:$0xff] 0.0
      %43 = vst [vmem:[#allocation2 + $0x48] sm:$0xff] 0.0
      %44 = vst [vmem:[#allocation2 + $0x50] sm:$0xff] 0.0
      %45 = vst [vmem:[#allocation2 + $0x58] sm:$0xff] 0.0
      %46 = vst [vmem:[#allocation2 + $0x60] sm:$0xff] 0.0
      %47 = vst [vmem:[#allocation2 + $0x68] sm:$0xff] 0.0
      %48 = vst [vmem:[#allocation2 + $0x70] sm:$0xff] 0.0
      %49 = vst [vmem:[#allocation2 + $0x78] sm:$0xff] 0.0
      %50 = vst [vmem:[#allocation2 + $0x80] sm:$0xff] 0.0
      %51 = vst [vmem:[#allocation2 + $0x88] sm:$0xff] 0.0
      %52 = vst [vmem:[#allocation2 + $0x90] sm:$0xff] 0.0
      %53 = vst [vmem:[#allocation2 + $0x98] sm:$0xff] 0.0
      %54 = vst [vmem:[#allocation2 + $0xa0] sm:$0xff] 0.0
      %55 = vst [vmem:[#allocation2 + $0xa8] sm:$0xff] 0.0
      %56 = vst [vmem:[#allocation2 + $0xb0] sm:$0xff] 0.0
      %57 = vst [vmem:[#allocation2 + $0xb8] sm:$0xff] 0.0
    $region21: #{transformer_translator_forward.29} parent=1 // pred_fallthru
      _
    %v58 = vld [vmem:[#allocation2] sm:$0xff]
    %v59 = vld [vmem:[#allocation2 + $0x8] sm:$0xff]
    %v60 = vld [vmem:[#allocation2 + $0x10] sm:$0xff]
    %v61 = vld [vmem:[#allocation2 + $0x18] sm:$0xff]
    %v62 = vld [vmem:[#allocation2 + $0x20] sm:$0xff]
    %v63 = vld [vmem:[#allocation2 + $0x28] sm:$0xff]
    %v64 = vld [vmem:[#allocation2 + $0x30] sm:$0xff]
    %v65 = vld [vmem:[#allocation2 + $0x38] sm:$0xff]
    %v66 = vld [vmem:[#allocation2 + $0x40] sm:$0xff]
    %v67 = vld [vmem:[#allocation2 + $0x48] sm:$0xff]
    %v68 = vld [vmem:[#allocation2 + $0x50] sm:$0xff]
    %v69 = vld [vmem:[#allocation2 + $0x58] sm:$0xff]
    %v70 = vld [vmem:[#allocation2 + $0x60] sm:$0xff]
    %v71 = vld [vmem:[#allocation2 + $0x68] sm:$0xff]
    %v72 = vld [vmem:[#allocation2 + $0x70] sm:$0xff]
    %v73 = vld [vmem:[#allocation2 + $0x78] sm:$0xff]
    %v74 = vld [vmem:[#allocation2 + $0x80] sm:$0xff]
    %v75 = vld [vmem:[#allocation2 + $0x88] sm:$0xff]
    %v76 = vld [vmem:[#allocation2 + $0x90] sm:$0xff]
    %v77 = vld [vmem:[#allocation2 + $0x98] sm:$0xff]
    %v78 = vld [vmem:[#allocation2 + $0xa0] sm:$0xff]
    %v79 = vld [vmem:[#allocation2 + $0xa8] sm:$0xff]
    %v80 = vld [vmem:[#allocation2 + $0xb0] sm:$0xff]
    %v81 = vld [vmem:[#allocation2 + $0xb8] sm:$0xff]
    %v82 = vld [vmem:[%s0] sm:$0xf]
    %v83 = vld [vmem:[%s0 + $0x4] sm:$0xf]
    %v84 = vld [vmem:[%s0 + $0x8] sm:$0xf]
    %v85 = vld [vmem:[%s0 + $0xc] sm:$0xf]
    %v86 = vld [vmem:[%s0 + $0x10] sm:$0xf]
    %v87 = vld [vmem:[%s0 + $0x14] sm:$0xf]
    %v88 = vld [vmem:[%s0 + $0x18] sm:$0xf]
    %v89 = vld [vmem:[%s0 + $0x1c] sm:$0xf]
    %v90 = vld [vmem:[#allocation3] sm:$0xff]
    %v91 = vld [vmem:[#allocation3 + $0x8] sm:$0xf]
    %v92 = vld [vmem:[#allocation3 + $0xc] sm:$0xff]
    %v93 = vld [vmem:[#allocation3 + $0x14] sm:$0xf]
    %v94 = vld [vmem:[#allocation3 + $0x18] sm:$0xff]
    %v95 = vld [vmem:[#allocation3 + $0x20] sm:$0xf]
    %v96 = vld [vmem:[#allocation3 + $0x24] sm:$0xff]
    %v97 = vld [vmem:[#allocation3 + $0x2c] sm:$0xf]
    %v98 = vld [vmem:[#allocation3 + $0x30] sm:$0xff]
    %v99 = vld [vmem:[#allocation3 + $0x38] sm:$0xf]
    %v100 = vld [vmem:[#allocation3 + $0x3c] sm:$0xff]
    %v101 = vld [vmem:[#allocation3 + $0x44] sm:$0xf]
    %v102 = vld [vmem:[#allocation3 + $0x48] sm:$0xff]
    %v103 = vld [vmem:[#allocation3 + $0x50] sm:$0xf]
    %v104 = vld [vmem:[#allocation3 + $0x54] sm:$0xff]
    %v105 = vld [vmem:[#allocation3 + $0x5c] sm:$0xf]
    %v106 = vld [vmem:[#allocation3 + $0x60] sm:$0xff]
    %v107 = vld [vmem:[#allocation3 + $0x68] sm:$0xf]
    %v108 = vld [vmem:[#allocation3 + $0x6c] sm:$0xff]
    %v109 = vld [vmem:[#allocation3 + $0x74] sm:$0xf]
    %v110 = vld [vmem:[#allocation3 + $0x78] sm:$0xff]
    %v111 = vld [vmem:[#allocation3 + $0x80] sm:$0xf]
    %v112 = vld [vmem:[#allocation3 + $0x84] sm:$0xff]
    %v113 = vld [vmem:[#allocation3 + $0x8c] sm:$0xf]
    %v114 = vld [vmem:[#allocation3 + $0x90] sm:$0xff]
    %v115 = vld [vmem:[#allocation3 + $0x98] sm:$0xf]
    %v116 = vld [vmem:[#allocation3 + $0x9c] sm:$0xff]
    %v117 = vld [vmem:[#allocation3 + $0xa4] sm:$0xf]
    %v118 = vld [vmem:[#allocation3 + $0xa8] sm:$0xff]
    %v119 = vld [vmem:[#allocation3 + $0xb0] sm:$0xf]
    %v120 = vld [vmem:[#allocation3 + $0xb4] sm:$0xff]
    %v121 = vld [vmem:[#allocation3 + $0xbc] sm:$0xf]
    %v130 = vunpack.c.l.b16 %v82
    %v131 = vunpack.c.l.b16 %v83
    %v132 = vunpack.c.l.b16 %v84
    %v133 = vunpack.c.l.b16 %v85
    %v134 = vunpack.c.l.b16 %v86
    %v135 = vunpack.c.l.b16 %v87
    %v136 = vunpack.c.l.b16 %v88
    %v137 = vunpack.c.l.b16 %v89
    %v138 = vpack.c.b16 %v131, %v130
    %v139 = vpack.c.b16 %v133, %v132
    %v140 = vpack.c.b16 %v135, %v134
    %v141 = vpack.c.b16 %v137, %v136
    %v178 = vunpack.c.l.b16 %v90
    %v179 = vunpack.c.h.b16 %v90
    %v180 = vunpack.c.l.b16 %v91
    %v181 = vunpack.c.l.b16 %v92
    %v182 = vunpack.c.h.b16 %v92
    %v183 = vunpack.c.l.b16 %v93
    %v184 = vunpack.c.l.b16 %v94
    %v185 = vunpack.c.h.b16 %v94
    %v186 = vunpack.c.l.b16 %v95
    %v187 = vunpack.c.l.b16 %v96
    %v188 = vunpack.c.h.b16 %v96
    %v189 = vunpack.c.l.b16 %v97
    %v190 = vunpack.c.l.b16 %v98
    %v191 = vunpack.c.h.b16 %v98
    %v192 = vunpack.c.l.b16 %v99
    %v193 = vunpack.c.l.b16 %v100
    %v194 = vunpack.c.h.b16 %v100
    %v195 = vunpack.c.l.b16 %v101
    %v196 = vunpack.c.l.b16 %v102
    %v197 = vunpack.c.h.b16 %v102
    %v198 = vunpack.c.l.b16 %v103
    %v199 = vunpack.c.l.b16 %v104
    %v200 = vunpack.c.h.b16 %v104
    %v201 = vunpack.c.l.b16 %v105
    %v202 = vunpack.c.l.b16 %v106
    %v203 = vunpack.c.h.b16 %v106
    %v204 = vunpack.c.l.b16 %v107
    %v205 = vunpack.c.l.b16 %v108
    %v206 = vunpack.c.h.b16 %v108
    %v207 = vunpack.c.l.b16 %v109
    %v208 = vunpack.c.l.b16 %v110
    %v209 = vunpack.c.h.b16 %v110
    %v210 = vunpack.c.l.b16 %v111
    %v211 = vunpack.c.l.b16 %v112
    %v212 = vunpack.c.h.b16 %v112
    %v213 = vunpack.c.l.b16 %v113
    %v214 = vunpack.c.l.b16 %v114
    %v215 = vunpack.c.h.b16 %v114
    %v216 = vunpack.c.l.b16 %v115
    %v217 = vunpack.c.l.b16 %v116
    %v218 = vunpack.c.h.b16 %v116
    %v219 = vunpack.c.l.b16 %v117
    %v220 = vunpack.c.l.b16 %v118
    %v221 = vunpack.c.h.b16 %v118
    %v222 = vunpack.c.l.b16 %v119
    %v223 = vunpack.c.l.b16 %v120
    %v224 = vunpack.c.h.b16 %v120
    %v225 = vunpack.c.l.b16 %v121
    %v226 = vpack.c.b16 %v181, %v178
    %v227 = vpack.c.b16 %v182, %v179
    %v228 = vpack.c.b16 %v183, %v180
    %v229 = vpack.c.b16 %v187, %v184
    %v230 = vpack.c.b16 %v188, %v185
    %v231 = vpack.c.b16 %v189, %v186
    %v232 = vpack.c.b16 %v193, %v190
    %v233 = vpack.c.b16 %v194, %v191
    %v234 = vpack.c.b16 %v195, %v192
    %v235 = vpack.c.b16 %v199, %v196
    %v236 = vpack.c.b16 %v200, %v197
    %v237 = vpack.c.b16 %v201, %v198
    %v238 = vpack.c.b16 %v205, %v202
    %v239 = vpack.c.b16 %v206, %v203
    %v240 = vpack.c.b16 %v207, %v204
    %v241 = vpack.c.b16 %v211, %v208
    %v242 = vpack.c.b16 %v212, %v209
    %v243 = vpack.c.b16 %v213, %v210
    %v244 = vpack.c.b16 %v217, %v214
    %v245 = vpack.c.b16 %v218, %v215
    %v246 = vpack.c.b16 %v219, %v216
    %v247 = vpack.c.b16 %v223, %v220
    %v248 = vpack.c.b16 %v224, %v221
    %v249 = vpack.c.b16 %v225, %v222
    %274 = vmatpush.bf16.msra.mxu0 %v247
    %275 = vmatpush.bf16.msra.mxu0 %v244
    %276 = vmatpush.bf16.msra.mxu0 %v241
    %277 = vmatpush.bf16.msra.mxu0 %v238
    %278 = vmatpush.bf16.msra.mxu0 %v235
    %279 = vmatpush.bf16.msra.mxu0 %v232
    %280 = vmatpush.bf16.msra.mxu0 %v229
    %281 = vmatpush.bf16.msra.mxu0 %v226
    %282 = vmatmul.bf16.gmra.mxu0 %v138
    %v283 = vpop.f32.mrf.mxu0
    %v284 = vadd.f32 0.0, %v283
    %v285 = vpop.f32.mrf.mxu0
    %v286 = vadd.f32 0.0, %v285
    %287 = vmatmul.bf16.gmra.mxu0 %v139
    %v288 = vpop.f32.mrf.mxu0
    %v289 = vadd.f32 0.0, %v288
    %v290 = vpop.f32.mrf.mxu0
    %v291 = vadd.f32 0.0, %v290
    %292 = vmatmul.bf16.gmra.mxu0 %v140
    %v293 = vpop.f32.mrf.mxu0
    %v294 = vadd.f32 0.0, %v293
    %v295 = vpop.f32.mrf.mxu0
    %v296 = vadd.f32 0.0, %v295
    %297 = vmatmul.bf16.gmra.mxu0 %v141
    %v298 = vpop.f32.mrf.mxu0
    %v299 = vadd.f32 0.0, %v298
    %v300 = vpop.f32.mrf.mxu0
    %v301 = vadd.f32 0.0, %v300
    %302 = vdwg.mxu0
    %303 = vmatpush.bf16.msra.mxu0 %v248
    %304 = vmatpush.bf16.msra.mxu0 %v245
    %305 = vmatpush.bf16.msra.mxu0 %v242
    %306 = vmatpush.bf16.msra.mxu0 %v239
    %307 = vmatpush.bf16.msra.mxu0 %v236
    %308 = vmatpush.bf16.msra.mxu0 %v233
    %309 = vmatpush.bf16.msra.mxu0 %v230
    %310 = vmatpush.bf16.msra.mxu0 %v227
    %311 = vmatmul.bf16.gmra.mxu0 %v138
    %v312 = vpop.f32.mrf.mxu0
    %v313 = vadd.f32 0.0, %v312
    %v314 = vpop.f32.mrf.mxu0
    %v315 = vadd.f32 0.0, %v314
    %316 = vmatmul.bf16.gmra.mxu0 %v139
    %v317 = vpop.f32.mrf.mxu0
    %v318 = vadd.f32 0.0, %v317
    %v319 = vpop.f32.mrf.mxu0
    %v320 = vadd.f32 0.0, %v319
    %321 = vmatmul.bf16.gmra.mxu0 %v140
    %v322 = vpop.f32.mrf.mxu0
    %v323 = vadd.f32 0.0, %v322
    %v324 = vpop.f32.mrf.mxu0
    %v325 = vadd.f32 0.0, %v324
    %326 = vmatmul.bf16.gmra.mxu0 %v141
    %v327 = vpop.f32.mrf.mxu0
    %v328 = vadd.f32 0.0, %v327
    %v329 = vpop.f32.mrf.mxu0
    %v330 = vadd.f32 0.0, %v329
    %331 = vdwg.mxu0
    %332 = vmatpush.bf16.msra.mxu0 %v249
    %333 = vmatpush.bf16.msra.mxu0 %v246
    %334 = vmatpush.bf16.msra.mxu0 %v243
    %335 = vmatpush.bf16.msra.mxu0 %v240
    %336 = vmatpush.bf16.msra.mxu0 %v237
    %337 = vmatpush.bf16.msra.mxu0 %v234
    %338 = vmatpush.bf16.msra.mxu0 %v231
    %339 = vmatpush.bf16.msra.mxu0 %v228
    %340 = vmatmul.bf16.gmra.mxu0 %v138
    %v341 = vpop.f32.mrf.mxu0
    %v342 = vadd.f32 0.0, %v341
    %v343 = vpop.f32.mrf.mxu0
    %v344 = vadd.f32 0.0, %v343
    %345 = vmatmul.bf16.gmra.mxu0 %v139
    %v346 = vpop.f32.mrf.mxu0
    %v347 = vadd.f32 0.0, %v346
    %v348 = vpop.f32.mrf.mxu0
    %v349 = vadd.f32 0.0, %v348
    %350 = vmatmul.bf16.gmra.mxu0 %v140
    %v351 = vpop.f32.mrf.mxu0
    %v352 = vadd.f32 0.0, %v351
    %v353 = vpop.f32.mrf.mxu0
    %v354 = vadd.f32 0.0, %v353
    %355 = vmatmul.bf16.gmra.mxu0 %v141
    %v356 = vpop.f32.mrf.mxu0
    %v357 = vadd.f32 0.0, %v356
    %v358 = vpop.f32.mrf.mxu0
    %v359 = vadd.f32 0.0, %v358
    %360 = vdwg.mxu0
    %v361 = vadd.f32 %v58, %v284
    %v362 = vadd.f32 %v59, %v313
    %v363 = vadd.f32 %v60, %v342
    %v364 = vadd.f32 %v61, %v286
    %v365 = vadd.f32 %v62, %v315
    %v366 = vadd.f32 %v63, %v344
    %v367 = vadd.f32 %v64, %v289
    %v368 = vadd.f32 %v65, %v318
    %v369 = vadd.f32 %v66, %v347
    %v370 = vadd.f32 %v67, %v291
    %v371 = vadd.f32 %v68, %v320
    %v372 = vadd.f32 %v69, %v349
    %v373 = vadd.f32 %v70, %v294
    %v374 = vadd.f32 %v71, %v323
    %v375 = vadd.f32 %v72, %v352
    %v376 = vadd.f32 %v73, %v296
    %v377 = vadd.f32 %v74, %v325
    %v378 = vadd.f32 %v75, %v354
    %v379 = vadd.f32 %v76, %v299
    %v380 = vadd.f32 %v77, %v328
    %v381 = vadd.f32 %v78, %v357
    %v382 = vadd.f32 %v79, %v301
    %v383 = vadd.f32 %v80, %v330
    %v384 = vadd.f32 %v81, %v359
    %385 = vst [vmem:[#allocation2] sm:$0xff] %v361
    %386 = vst [vmem:[#allocation2 + $0x8] sm:$0xff] %v362
    %387 = vst [vmem:[#allocation2 + $0x10] sm:$0xff] %v363
    %388 = vst [vmem:[#allocation2 + $0x18] sm:$0xff] %v364
    %389 = vst [vmem:[#allocation2 + $0x20] sm:$0xff] %v365
    %390 = vst [vmem:[#allocation2 + $0x28] sm:$0xff] %v366
    %391 = vst [vmem:[#allocation2 + $0x30] sm:$0xff] %v367
    %392 = vst [vmem:[#allocation2 + $0x38] sm:$0xff] %v368
    %393 = vst [vmem:[#allocation2 + $0x40] sm:$0xff] %v369
    %394 = vst [vmem:[#allocation2 + $0x48] sm:$0xff] %v370
    %395 = vst [vmem:[#allocation2 + $0x50] sm:$0xff] %v371
    %396 = vst [vmem:[#allocation2 + $0x58] sm:$0xff] %v372
    %397 = vst [vmem:[#allocation2 + $0x60] sm:$0xff] %v373
    %398 = vst [vmem:[#allocation2 + $0x68] sm:$0xff] %v374
    %399 = vst [vmem:[#allocation2 + $0x70] sm:$0xff] %v375
    %400 = vst [vmem:[#allocation2 + $0x78] sm:$0xff] %v376
    %401 = vst [vmem:[#allocation2 + $0x80] sm:$0xff] %v377
    %402 = vst [vmem:[#allocation2 + $0x88] sm:$0xff] %v378
    %403 = vst [vmem:[#allocation2 + $0x90] sm:$0xff] %v379
    %404 = vst [vmem:[#allocation2 + $0x98] sm:$0xff] %v380
    %405 = vst [vmem:[#allocation2 + $0xa0] sm:$0xff] %v381
    %406 = vst [vmem:[#allocation2 + $0xa8] sm:$0xff] %v382
    %407 = vst [vmem:[#allocation2 + $0xb0] sm:$0xff] %v383
    %408 = vst [vmem:[#allocation2 + $0xb8] sm:$0xff] %v384
    // Predicated region
    $region22: #{transformer_translator_forward.29} parent=1 // pred_check
      %p409 = pneg %p30
    $region23: #{transformer_translator_forward.29} parent=1 // pred_check_branch
      %411 = sbr.rel (%p409) target = $region25
    $region24: #{transformer_translator_forward.29} parent=1 // pred_region
      %v412 = vld [vmem:[#allocation2] sm:$0xff]
      %v413 = vld [vmem:[#allocation2 + $0x8] sm:$0xff]
      %v414 = vld [vmem:[#allocation2 + $0x10] sm:$0xff]
      %v415 = vld [vmem:[#allocation2 + $0x18] sm:$0xff]
      %v416 = vld [vmem:[#allocation2 + $0x20] sm:$0xff]
      %v417 = vld [vmem:[#allocation2 + $0x28] sm:$0xff]
      %v418 = vld [vmem:[#allocation2 + $0x30] sm:$0xff]
      %v419 = vld [vmem:[#allocation2 + $0x38] sm:$0xff]
      %v420 = vld [vmem:[#allocation2 + $0x40] sm:$0xff]
      %v421 = vld [vmem:[#allocation2 + $0x48] sm:$0xff]
      %v422 = vld [vmem:[#allocation2 + $0x50] sm:$0xff]
      %v423 = vld [vmem:[#allocation2 + $0x58] sm:$0xff]
      %v424 = vld [vmem:[#allocation2 + $0x60] sm:$0xff]
      %v425 = vld [vmem:[#allocation2 + $0x68] sm:$0xff]
      %v426 = vld [vmem:[#allocation2 + $0x70] sm:$0xff]
      %v427 = vld [vmem:[#allocation2 + $0x78] sm:$0xff]
      %v428 = vld [vmem:[#allocation2 + $0x80] sm:$0xff]
      %v429 = vld [vmem:[#allocation2 + $0x88] sm:$0xff]
      %v430 = vld [vmem:[#allocation2 + $0x90] sm:$0xff]
      %v431 = vld [vmem:[#allocation2 + $0x98] sm:$0xff]
      %v432 = vld [vmem:[#allocation2 + $0xa0] sm:$0xff]
      %v433 = vld [vmem:[#allocation2 + $0xa8] sm:$0xff]
      %v434 = vld [vmem:[#allocation2 + $0xb0] sm:$0xff]
      %v435 = vld [vmem:[#allocation2 + $0xb8] sm:$0xff]
      %v436 = vld [vmem:[%s2] sm:$0x7]
      %v438 = vperm.slane %v436, 0
      %v439 = vperm.slane %v436, 1
      %v440 = vperm.slane %v436, 2
      %v444 = vadd.f32 %v412, %v438
      %v445 = vadd.f32 %v413, %v439
      %v446 = vadd.f32 %v414, %v440
      %v447 = vadd.f32 %v415, %v438
      %v448 = vadd.f32 %v416, %v439
      %v449 = vadd.f32 %v417, %v440
      %v450 = vadd.f32 %v418, %v438
      %v451 = vadd.f32 %v419, %v439
      %v452 = vadd.f32 %v420, %v440
      %v453 = vadd.f32 %v421, %v438
      %v454 = vadd.f32 %v422, %v439
      %v455 = vadd.f32 %v423, %v440
      %v456 = vadd.f32 %v424, %v438
      %v457 = vadd.f32 %v425, %v439
      %v458 = vadd.f32 %v426, %v440
      %v459 = vadd.f32 %v427, %v438
      %v460 = vadd.f32 %v428, %v439
      %v461 = vadd.f32 %v429, %v440
      %v462 = vadd.f32 %v430, %v438
      %v463 = vadd.f32 %v431, %v439
      %v464 = vadd.f32 %v432, %v440
      %v465 = vadd.f32 %v433, %v438
      %v466 = vadd.f32 %v434, %v439
      %v467 = vadd.f32 %v435, %v440
      %v468 = vpack.c.bf16 %v445, %v444
      %v469 = vpack.c.bf16 %v446, %v446
      %v470 = vpack.c.bf16 %v448, %v447
      %v471 = vpack.c.bf16 %v449, %v449
      %v472 = vpack.c.bf16 %v451, %v450
      %v473 = vpack.c.bf16 %v452, %v452
      %v474 = vpack.c.bf16 %v454, %v453
      %v475 = vpack.c.bf16 %v455, %v455
      %v476 = vpack.c.bf16 %v457, %v456
      %v477 = vpack.c.bf16 %v458, %v458
      %v478 = vpack.c.bf16 %v460, %v459
      %v479 = vpack.c.bf16 %v461, %v461
      %v480 = vpack.c.bf16 %v463, %v462
      %v481 = vpack.c.bf16 %v464, %v464
      %v482 = vpack.c.bf16 %v466, %v465
      %v483 = vpack.c.bf16 %v467, %v467
      %484 = vst [vmem:[%s3] sm:$0xff] %v468
      %485 = vst [vmem:[%s3 + $0x8] sm:$0xf] %v469
      %486 = vst [vmem:[%s3 + $0xc] sm:$0xff] %v470
      %487 = vst [vmem:[%s3 + $0x14] sm:$0xf] %v471
      %488 = vst [vmem:[%s3 + $0x18] sm:$0xff] %v472
      %489 = vst [vmem:[%s3 + $0x20] sm:$0xf] %v473
      %490 = vst [vmem:[%s3 + $0x24] sm:$0xff] %v474
      %491 = vst [vmem:[%s3 + $0x2c] sm:$0xf] %v475
      %492 = vst [vmem:[%s3 + $0x30] sm:$0xff] %v476
      %493 = vst [vmem:[%s3 + $0x38] sm:$0xf] %v477
      %494 = vst [vmem:[%s3 + $0x3c] sm:$0xff] %v478
      %495 = vst [vmem:[%s3 + $0x44] sm:$0xf] %v479
      %496 = vst [vmem:[%s3 + $0x48] sm:$0xff] %v480
      %497 = vst [vmem:[%s3 + $0x50] sm:$0xf] %v481
      %498 = vst [vmem:[%s3 + $0x54] sm:$0xff] %v482
      %499 = vst [vmem:[%s3 + $0x5c] sm:$0xf] %v483
    $region25: #{transformer_translator_forward.29} parent=1 // pred_fallthru
      _
    // Predicated region
    $region26: #{transformer_translator_forward.29} parent=1 // pred_check
      _
    $region27: #{transformer_translator_forward.29} parent=1 // pred_check_branch
      %501 = sbr.rel (0) target = $region29
    $region28: #{transformer_translator_forward.29} parent=1 // pred_region
      _
    $region29: #{transformer_translator_forward.29} parent=1 // pred_fallthru
      _
    // Predicated region
    $region30: #{transformer_translator_forward.29} parent=1 // pred_check
      _
    $region31: #{transformer_translator_forward.29} parent=1 // pred_check_branch
      %503 = sbr.rel (0) target = $region33
    $region32: #{transformer_translator_forward.29} parent=1 // pred_region
      _
    $region33: #{transformer_translator_forward.29} parent=1 // pred_fallthru
      _
    %504 = vsyncpa [#allocation4], 1

// kernel: transformer_translator_forward.37
$region0: #{transformer_translator_forward.37}
  #allocation0 [shape = 'u32[]', space=smem, size = 0x4, offset = 0x4, fixed_abs, tag = 'smem constant byte address 0x4 - core index']
  #allocation1 [shape = 'u32[72,128]{1,0:T(1,128)}', space=vmem, size = 0x9000, scoped, tag = 'internal scratch']
  #allocation2 [shape = 'f32[64,256]{1,0:T(8,128)}', space=vmem, size = 0x10000, scoped, tag = 'scratch operand']
  %s0 = inlined_call_operand.vmem [shape: bf16[64,128], index: 0, kind: input, shape index: {}]
  %s1 = inlined_call_operand.vmem [shape: bf16[128,256], index: 1, kind: input, shape index: {}]
  %s2 = inlined_call_operand.vmem [shape: f32[1,256], index: 2, kind: input, shape index: {}]
  %s3 = inlined_call_operand.vmem [shape: bf16[64,256], index: 3, kind: output, shape index: {}]
  %s4 = sld [smem:[#allocation0]]
  $region30: #{transformer_translator_forward.37} parent=0
    _
  %s6 = ssub.s32 1, %s4
  %s7 = scalar_select 0, %s6, %s4
  // Predicated region
  $region2: #{transformer_translator_forward.37} parent=0 // pred_check
    _
  $region3: #{transformer_translator_forward.37} parent=0 // pred_check_branch
    %9 = sbr.rel (0) target = $region5
  $region4: #{transformer_translator_forward.37} parent=0 // pred_region
    _
  $region5: #{transformer_translator_forward.37} parent=0 // pred_fallthru
    _
  // Predicated region
  $region6: #{transformer_translator_forward.37} parent=0 // pred_check
    _
  $region7: #{transformer_translator_forward.37} parent=0 // pred_check_branch
    %11 = sbr.rel (0) target = $region9
  $region8: #{transformer_translator_forward.37} parent=0 // pred_region
    _
  $region9: #{transformer_translator_forward.37} parent=0 // pred_fallthru
    _
  // Predicated region
  $region10: #{transformer_translator_forward.37} parent=0 // pred_check
    _
  $region11: #{transformer_translator_forward.37} parent=0 // pred_check_branch
    %13 = sbr.rel (0) target = $region13
  $region12: #{transformer_translator_forward.37} parent=0 // pred_region
    _
  $region13: #{transformer_translator_forward.37} parent=0 // pred_fallthru
    _
  %p14 = scmp.eq.s32.totalorder 0, 0
  // Predicated region
  $region14: #{transformer_translator_forward.37} parent=0 // pred_check
    %p15 = pneg %p14
  $region15: #{transformer_translator_forward.37} parent=0 // pred_check_branch
    %17 = sbr.rel (%p15) target = $region17
  $region16: #{transformer_translator_forward.37} parent=0 // pred_region
    %18 = vst [vmem:[#allocation2] sm:$0xff] 0.0
    %19 = vst [vmem:[#allocation2 + $0x8] sm:$0xff] 0.0
    %20 = vst [vmem:[#allocation2 + $0x10] sm:$0xff] 0.0
    %21 = vst [vmem:[#allocation2 + $0x18] sm:$0xff] 0.0
    %22 = vst [vmem:[#allocation2 + $0x20] sm:$0xff] 0.0
    %23 = vst [vmem:[#allocation2 + $0x28] sm:$0xff] 0.0
    %24 = vst [vmem:[#allocation2 + $0x30] sm:$0xff] 0.0
    %25 = vst [vmem:[#allocation2 + $0x38] sm:$0xff] 0.0
    %26 = vst [vmem:[#allocation2 + $0x40] sm:$0xff] 0.0
    %27 = vst [vmem:[#allocation2 + $0x48] sm:$0xff] 0.0
    %28 = vst [vmem:[#allocation2 + $0x50] sm:$0xff] 0.0
    %29 = vst [vmem:[#allocation2 + $0x58] sm:$0xff] 0.0
    %30 = vst [vmem:[#allocation2 + $0x60] sm:$0xff] 0.0
    %31 = vst [vmem:[#allocation2 + $0x68] sm:$0xff] 0.0
    %32 = vst [vmem:[#allocation2 + $0x70] sm:$0xff] 0.0
    %33 = vst [vmem:[#allocation2 + $0x78] sm:$0xff] 0.0
  $region17: #{transformer_translator_forward.37} parent=0 // pred_fallthru
    _
  %v34 = vld [vmem:[#allocation2] sm:$0xff]
  %v35 = vld [vmem:[#allocation2 + $0x8] sm:$0xff]
  %v36 = vld [vmem:[#allocation2 + $0x10] sm:$0xff]
  %v37 = vld [vmem:[#allocation2 + $0x18] sm:$0xff]
  %v38 = vld [vmem:[#allocation2 + $0x20] sm:$0xff]
  %v39 = vld [vmem:[#allocation2 + $0x28] sm:$0xff]
  %v40 = vld [vmem:[#allocation2 + $0x30] sm:$0xff]
  %v41 = vld [vmem:[#allocation2 + $0x38] sm:$0xff]
  %v42 = vld [vmem:[#allocation2 + $0x40] sm:$0xff]
  %v43 = vld [vmem:[#allocation2 + $0x48] sm:$0xff]
  %v44 = vld [vmem:[#allocation2 + $0x50] sm:$0xff]
  %v45 = vld [vmem:[#allocation2 + $0x58] sm:$0xff]
  %v46 = vld [vmem:[#allocation2 + $0x60] sm:$0xff]
  %v47 = vld [vmem:[#allocation2 + $0x68] sm:$0xff]
  %v48 = vld [vmem:[#allocation2 + $0x70] sm:$0xff]
  %v49 = vld [vmem:[#allocation2 + $0x78] sm:$0xff]
  %v50 = vld [vmem:[%s0] sm:$0xf]
  %v51 = vld [vmem:[%s0 + $0x4] sm:$0xf]
  %v52 = vld [vmem:[%s0 + $0x8] sm:$0xf]
  %v53 = vld [vmem:[%s0 + $0xc] sm:$0xf]
  %v54 = vld [vmem:[%s0 + $0x10] sm:$0xf]
  %v55 = vld [vmem:[%s0 + $0x14] sm:$0xf]
  %v56 = vld [vmem:[%s0 + $0x18] sm:$0xf]
  %v57 = vld [vmem:[%s0 + $0x1c] sm:$0xf]
  %v58 = vld [vmem:[%s1] sm:$0xff]
  %v59 = vld [vmem:[%s1 + $0x8] sm:$0xff]
  %v60 = vld [vmem:[%s1 + $0x10] sm:$0xff]
  %v61 = vld [vmem:[%s1 + $0x18] sm:$0xff]
  %v62 = vld [vmem:[%s1 + $0x20] sm:$0xff]
  %v63 = vld [vmem:[%s1 + $0x28] sm:$0xff]
  %v64 = vld [vmem:[%s1 + $0x30] sm:$0xff]
  %v65 = vld [vmem:[%s1 + $0x38] sm:$0xff]
  %v66 = vld [vmem:[%s1 + $0x40] sm:$0xff]
  %v67 = vld [vmem:[%s1 + $0x48] sm:$0xff]
  %v68 = vld [vmem:[%s1 + $0x50] sm:$0xff]
  %v69 = vld [vmem:[%s1 + $0x58] sm:$0xff]
  %v70 = vld [vmem:[%s1 + $0x60] sm:$0xff]
  %v71 = vld [vmem:[%s1 + $0x68] sm:$0xff]
  %v72 = vld [vmem:[%s1 + $0x70] sm:$0xff]
  %v73 = vld [vmem:[%s1 + $0x78] sm:$0xff]
  %v82 = vunpack.c.l.b16 %v50
  %v83 = vunpack.c.l.b16 %v51
  %v84 = vunpack.c.l.b16 %v52
  %v85 = vunpack.c.l.b16 %v53
  %v86 = vunpack.c.l.b16 %v54
  %v87 = vunpack.c.l.b16 %v55
  %v88 = vunpack.c.l.b16 %v56
  %v89 = vunpack.c.l.b16 %v57
  %v90 = vpack.c.b16 %v83, %v82
  %v91 = vpack.c.b16 %v85, %v84
  %v92 = vpack.c.b16 %v87, %v86
  %v93 = vpack.c.b16 %v89, %v88
  %v114 = vunpack.c.l.b16 %v58
  %v115 = vunpack.c.h.b16 %v58
  %v116 = vunpack.c.l.b16 %v59
  %v117 = vunpack.c.h.b16 %v59
  %v118 = vunpack.c.l.b16 %v60
  %v119 = vunpack.c.h.b16 %v60
  %v120 = vunpack.c.l.b16 %v61
  %v121 = vunpack.c.h.b16 %v61
  %v122 = vunpack.c.l.b16 %v62
  %v123 = vunpack.c.h.b16 %v62
  %v124 = vunpack.c.l.b16 %v63
  %v125 = vunpack.c.h.b16 %v63
  %v126 = vunpack.c.l.b16 %v64
  %v127 = vunpack.c.h.b16 %v64
  %v128 = vunpack.c.l.b16 %v65
  %v129 = vunpack.c.h.b16 %v65
  %v130 = vunpack.c.l.b16 %v66
  %v131 = vunpack.c.h.b16 %v66
  %v132 = vunpack.c.l.b16 %v67
  %v133 = vunpack.c.h.b16 %v67
  %v134 = vunpack.c.l.b16 %v68
  %v135 = vunpack.c.h.b16 %v68
  %v136 = vunpack.c.l.b16 %v69
  %v137 = vunpack.c.h.b16 %v69
  %v138 = vunpack.c.l.b16 %v70
  %v139 = vunpack.c.h.b16 %v70
  %v140 = vunpack.c.l.b16 %v71
  %v141 = vunpack.c.h.b16 %v71
  %v142 = vunpack.c.l.b16 %v72
  %v143 = vunpack.c.h.b16 %v72
  %v144 = vunpack.c.l.b16 %v73
  %v145 = vunpack.c.h.b16 %v73
  %v146 = vpack.c.b16 %v116, %v114
  %v147 = vpack.c.b16 %v117, %v115
  %v148 = vpack.c.b16 %v120, %v118
  %v149 = vpack.c.b16 %v121, %v119
  %v150 = vpack.c.b16 %v124, %v122
  %v151 = vpack.c.b16 %v125, %v123
  %v152 = vpack.c.b16 %v128, %v126
  %v153 = vpack.c.b16 %v129, %v127
  %v154 = vpack.c.b16 %v132, %v130
  %v155 = vpack.c.b16 %v133, %v131
  %v156 = vpack.c.b16 %v136, %v134
  %v157 = vpack.c.b16 %v137, %v135
  %v158 = vpack.c.b16 %v140, %v138
  %v159 = vpack.c.b16 %v141, %v139
  %v160 = vpack.c.b16 %v144, %v142
  %v161 = vpack.c.b16 %v145, %v143
  %178 = vmatpush.bf16.msra.mxu0 %v160
  %179 = vmatpush.bf16.msra.mxu0 %v158
  %180 = vmatpush.bf16.msra.mxu0 %v156
  %181 = vmatpush.bf16.msra.mxu0 %v154
  %182 = vmatpush.bf16.msra.mxu0 %v152
  %183 = vmatpush.bf16.msra.mxu0 %v150
  %184 = vmatpush.bf16.msra.mxu0 %v148
  %185 = vmatpush.bf16.msra.mxu0 %v146
  %186 = vmatmul.bf16.gmra.mxu0 %v90
  %v187 = vpop.f32.mrf.mxu0
  %v188 = vadd.f32 0.0, %v187
  %v189 = vpop.f32.mrf.mxu0
  %v190 = vadd.f32 0.0, %v189
  %191 = vmatmul.bf16.gmra.mxu0 %v91
  %v192 = vpop.f32.mrf.mxu0
  %v193 = vadd.f32 0.0, %v192
  %v194 = vpop.f32.mrf.mxu0
  %v195 = vadd.f32 0.0, %v194
  %196 = vmatmul.bf16.gmra.mxu0 %v92
  %v197 = vpop.f32.mrf.mxu0
  %v198 = vadd.f32 0.0, %v197
  %v199 = vpop.f32.mrf.mxu0
  %v200 = vadd.f32 0.0, %v199
  %201 = vmatmul.bf16.gmra.mxu0 %v93
  %v202 = vpop.f32.mrf.mxu0
  %v203 = vadd.f32 0.0, %v202
  %v204 = vpop.f32.mrf.mxu0
  %v205 = vadd.f32 0.0, %v204
  %206 = vdwg.mxu0
  %207 = vmatpush.bf16.msra.mxu0 %v161
  %208 = vmatpush.bf16.msra.mxu0 %v159
  %209 = vmatpush.bf16.msra.mxu0 %v157
  %210 = vmatpush.bf16.msra.mxu0 %v155
  %211 = vmatpush.bf16.msra.mxu0 %v153
  %212 = vmatpush.bf16.msra.mxu0 %v151
  %213 = vmatpush.bf16.msra.mxu0 %v149
  %214 = vmatpush.bf16.msra.mxu0 %v147
  %215 = vmatmul.bf16.gmra.mxu0 %v90
  %v216 = vpop.f32.mrf.mxu0
  %v217 = vadd.f32 0.0, %v216
  %v218 = vpop.f32.mrf.mxu0
  %v219 = vadd.f32 0.0, %v218
  %220 = vmatmul.bf16.gmra.mxu0 %v91
  %v221 = vpop.f32.mrf.mxu0
  %v222 = vadd.f32 0.0, %v221
  %v223 = vpop.f32.mrf.mxu0
  %v224 = vadd.f32 0.0, %v223
  %225 = vmatmul.bf16.gmra.mxu0 %v92
  %v226 = vpop.f32.mrf.mxu0
  %v227 = vadd.f32 0.0, %v226
  %v228 = vpop.f32.mrf.mxu0
  %v229 = vadd.f32 0.0, %v228
  %230 = vmatmul.bf16.gmra.mxu0 %v93
  %v231 = vpop.f32.mrf.mxu0
  %v232 = vadd.f32 0.0, %v231
  %v233 = vpop.f32.mrf.mxu0
  %v234 = vadd.f32 0.0, %v233
  %235 = vdwg.mxu0
  %v236 = vadd.f32 %v34, %v188
  %v237 = vadd.f32 %v35, %v217
  %v238 = vadd.f32 %v36, %v190
  %v239 = vadd.f32 %v37, %v219
  %v240 = vadd.f32 %v38, %v193
  %v241 = vadd.f32 %v39, %v222
  %v242 = vadd.f32 %v40, %v195
  %v243 = vadd.f32 %v41, %v224
  %v244 = vadd.f32 %v42, %v198
  %v245 = vadd.f32 %v43, %v227
  %v246 = vadd.f32 %v44, %v200
  %v247 = vadd.f32 %v45, %v229
  %v248 = vadd.f32 %v46, %v203
  %v249 = vadd.f32 %v47, %v232
  %v250 = vadd.f32 %v48, %v205
  %v251 = vadd.f32 %v49, %v234
  %252 = vst [vmem:[#allocation2] sm:$0xff] %v236
  %253 = vst [vmem:[#allocation2 + $0x8] sm:$0xff] %v237
  %254 = vst [vmem:[#allocation2 + $0x10] sm:$0xff] %v238
  %255 = vst [vmem:[#allocation2 + $0x18] sm:$0xff] %v239
  %256 = vst [vmem:[#allocation2 + $0x20] sm:$0xff] %v240
  %257 = vst [vmem:[#allocation2 + $0x28] sm:$0xff] %v241
  %258 = vst [vmem:[#allocation2 + $0x30] sm:$0xff] %v242
  %259 = vst [vmem:[#allocation2 + $0x38] sm:$0xff] %v243
  %260 = vst [vmem:[#allocation2 + $0x40] sm:$0xff] %v244
  %261 = vst [vmem:[#allocation2 + $0x48] sm:$0xff] %v245
  %262 = vst [vmem:[#allocation2 + $0x50] sm:$0xff] %v246
  %263 = vst [vmem:[#allocation2 + $0x58] sm:$0xff] %v247
  %264 = vst [vmem:[#allocation2 + $0x60] sm:$0xff] %v248
  %265 = vst [vmem:[#allocation2 + $0x68] sm:$0xff] %v249
  %266 = vst [vmem:[#allocation2 + $0x70] sm:$0xff] %v250
  %267 = vst [vmem:[#allocation2 + $0x78] sm:$0xff] %v251
  // Predicated region
  $region18: #{transformer_translator_forward.37} parent=0 // pred_check
    %p268 = pneg %p14
  $region19: #{transformer_translator_forward.37} parent=0 // pred_check_branch
    %270 = sbr.rel (%p268) target = $region21
  $region20: #{transformer_translator_forward.37} parent=0 // pred_region
    %v271 = vld [vmem:[#allocation2] sm:$0xff]
    %v272 = vld [vmem:[#allocation2 + $0x8] sm:$0xff]
    %v273 = vld [vmem:[#allocation2 + $0x10] sm:$0xff]
    %v274 = vld [vmem:[#allocation2 + $0x18] sm:$0xff]
    %v275 = vld [vmem:[#allocation2 + $0x20] sm:$0xff]
    %v276 = vld [vmem:[#allocation2 + $0x28] sm:$0xff]
    %v277 = vld [vmem:[#allocation2 + $0x30] sm:$0xff]
    %v278 = vld [vmem:[#allocation2 + $0x38] sm:$0xff]
    %v279 = vld [vmem:[#allocation2 + $0x40] sm:$0xff]
    %v280 = vld [vmem:[#allocation2 + $0x48] sm:$0xff]
    %v281 = vld [vmem:[#allocation2 + $0x50] sm:$0xff]
    %v282 = vld [vmem:[#allocation2 + $0x58] sm:$0xff]
    %v283 = vld [vmem:[#allocation2 + $0x60] sm:$0xff]
    %v284 = vld [vmem:[#allocation2 + $0x68] sm:$0xff]
    %v285 = vld [vmem:[#allocation2 + $0x70] sm:$0xff]
    %v286 = vld [vmem:[#allocation2 + $0x78] sm:$0xff]
    %v287 = vld [vmem:[%s2] sm:$0x3]
    %v289 = vperm.slane %v287, 0
    %v290 = vperm.slane %v287, 1
    %v293 = vadd.f32 %v271, %v289
    %v294 = vadd.f32 %v272, %v290
    %v295 = vadd.f32 %v273, %v289
    %v296 = vadd.f32 %v274, %v290
    %v297 = vadd.f32 %v275, %v289
    %v298 = vadd.f32 %v276, %v290
    %v299 = vadd.f32 %v277, %v289
    %v300 = vadd.f32 %v278, %v290
    %v301 = vadd.f32 %v279, %v289
    %v302 = vadd.f32 %v280, %v290
    %v303 = vadd.f32 %v281, %v289
    %v304 = vadd.f32 %v282, %v290
    %v305 = vadd.f32 %v283, %v289
    %v306 = vadd.f32 %v284, %v290
    %v307 = vadd.f32 %v285, %v289
    %v308 = vadd.f32 %v286, %v290
    %v309 = vpack.c.bf16 %v294, %v293
    %v310 = vpack.c.bf16 %v296, %v295
    %v311 = vpack.c.bf16 %v298, %v297
    %v312 = vpack.c.bf16 %v300, %v299
    %v313 = vpack.c.bf16 %v302, %v301
    %v314 = vpack.c.bf16 %v304, %v303
    %v315 = vpack.c.bf16 %v306, %v305
    %v316 = vpack.c.bf16 %v308, %v307
    %317 = vst [vmem:[%s3] sm:$0xff] %v309
    %318 = vst [vmem:[%s3 + $0x8] sm:$0xff] %v310
    %319 = vst [vmem:[%s3 + $0x10] sm:$0xff] %v311
    %320 = vst [vmem:[%s3 + $0x18] sm:$0xff] %v312
    %321 = vst [vmem:[%s3 + $0x20] sm:$0xff] %v313
    %322 = vst [vmem:[%s3 + $0x28] sm:$0xff] %v314
    %323 = vst [vmem:[%s3 + $0x30] sm:$0xff] %v315
    %324 = vst [vmem:[%s3 + $0x38] sm:$0xff] %v316
  $region21: #{transformer_translator_forward.37} parent=0 // pred_fallthru
    _
  // Predicated region
  $region22: #{transformer_translator_forward.37} parent=0 // pred_check
    _
  $region23: #{transformer_translator_forward.37} parent=0 // pred_check_branch
    %326 = sbr.rel (0) target = $region25
  $region24: #{transformer_translator_forward.37} parent=0 // pred_region
    _
  $region25: #{transformer_translator_forward.37} parent=0 // pred_fallthru
    _
  // Predicated region
  $region26: #{transformer_translator_forward.37} parent=0 // pred_check
    _
  $region27: #{transformer_translator_forward.37} parent=0 // pred_check_branch
    %328 = sbr.rel (0) target = $region29
  $region28: #{transformer_translator_forward.37} parent=0 // pred_region
    _
  $region29: #{transformer_translator_forward.37} parent=0 // pred_fallthru
    _

// kernel: transformer_translator_forward.49
$region0: #{transformer_translator_forward.49}
  #allocation0 [shape = 'u32[]', space=smem, size = 0x4, offset = 0x4, fixed_abs, tag = 'smem constant byte address 0x4 - core index']
  #allocation1 [shape = 'u32[72,128]{1,0:T(1,128)}', space=vmem, size = 0x9000, scoped, tag = 'internal scratch']
  #allocation2 [shape = 'f32[64,128]{1,0:T(8,128)}', space=vmem, size = 0x8000, scoped, tag = 'scratch operand']
  %s0 = inlined_call_operand.vmem [shape: bf16[64,128], index: 0, kind: input, shape index: {}]
  %s1 = inlined_call_operand.hbm [shape: bf16[128,128], index: 1, kind: input, shape index: {}]
  %s2 = inlined_call_operand.vmem [shape: f32[1,128], index: 2, kind: input, shape index: {}]
  %s3 = inlined_call_operand.hbm [shape: f32[64,128], index: 3, kind: output, shape index: {}]
  %s4 = sld [smem:[#allocation0]]
  $region34: #{transformer_translator_forward.49} parent=0
    _
  %s6 = ssub.s32 1, %s4
  %s7 = scalar_select 0, %s6, %s4
  $region1: #{transformer_translator_forward.49} parent=0
    #allocation3 [shape = 'u8[32768]{0}', space=vmem, size = 0x8000, scoped, tag = 'input window, operand 1, single buffered']
    #allocation4 [shape = 's32[1]{0}', space=sflag, size = 0x4, scoped, tag = 'scoped memory for transformer_translator_forward.49']
    #allocation5 [shape = 's32[1]{0}', space=sflag, size = 0x4, scoped, tag = 'scoped memory for transformer_translator_forward.49']
    #allocation6 [shape = 'u8[32768]{0}', space=vmem, size = 0x8000, scoped, tag = 'output window, operand 0, single buffered']
    %8 = vsyncpa [#allocation4], 0
    %9 = vsyncpa [#allocation5], 0
    // Predicated region
    $region2: #{transformer_translator_forward.49} parent=1 // pred_check
      _
    $region3: #{transformer_translator_forward.49} parent=1 // pred_check_branch
      %11 = sbr.rel (0) target = $region5
    $region4: #{transformer_translator_forward.49} parent=1 // pred_region
      _
    $region5: #{transformer_translator_forward.49} parent=1 // pred_fallthru
      _
    // Predicated region
    $region6: #{transformer_translator_forward.49} parent=1 // pred_check
      _
    $region7: #{transformer_translator_forward.49} parent=1 // pred_check_branch
      %13 = sbr.rel (0) target = $region9
    $region8: #{transformer_translator_forward.49} parent=1 // pred_region
      %15 = vsyncadd [#allocation4], 0
      %s16 = sshll.u32 %s1, 4
      %s17 = int_to_ptr.hbm [resolvable:$true] %s16
      %s18 = sshll.u32 [#allocation3], 4
      %s19 = int_to_ptr.vmem [resolvable:$true] %s18
      %24 = dma.hbm_to_vmem [thread:$0]  %s17, 1024, %s19, [#allocation4], 64, 64, 4
    $region9: #{transformer_translator_forward.49} parent=1 // pred_fallthru
      _
    // Predicated region
    $region10: #{transformer_translator_forward.49} parent=1 // pred_check
      _
    $region11: #{transformer_translator_forward.49} parent=1 // pred_check_branch
      %26 = sbr.rel (0) target = $region13
    $region12: #{transformer_translator_forward.49} parent=1 // pred_region
      _
    $region13: #{transformer_translator_forward.49} parent=1 // pred_fallthru
      _
    // Predicated region
    $region14: #{transformer_translator_forward.49} parent=1 // pred_check
      _
    $region15: #{transformer_translator_forward.49} parent=1 // pred_check_branch
      %28 = sbr.rel (0) target = $region17
    $region16: #{transformer_translator_forward.49} parent=1 // pred_region
      %30 = dma.done [#allocation4], 1024
    $region17: #{transformer_translator_forward.49} parent=1 // pred_fallthru
      _
    %p31 = scmp.eq.s32.totalorder 0, 0
    // Predicated region
    $region18: #{transformer_translator_forward.49} parent=1 // pred_check
      %p32 = pneg %p31
    $region19: #{transformer_translator_forward.49} parent=1 // pred_check_branch
      %34 = sbr.rel (%p32) target = $region21
    $region20: #{transformer_translator_forward.49} parent=1 // pred_region
      %35 = vst [vmem:[#allocation2] sm:$0xff] 0.0
      %36 = vst [vmem:[#allocation2 + $0x8] sm:$0xff] 0.0
      %37 = vst [vmem:[#allocation2 + $0x10] sm:$0xff] 0.0
      %38 = vst [vmem:[#allocation2 + $0x18] sm:$0xff] 0.0
      %39 = vst [vmem:[#allocation2 + $0x20] sm:$0xff] 0.0
      %40 = vst [vmem:[#allocation2 + $0x28] sm:$0xff] 0.0
      %41 = vst [vmem:[#allocation2 + $0x30] sm:$0xff] 0.0
      %42 = vst [vmem:[#allocation2 + $0x38] sm:$0xff] 0.0
    $region21: #{transformer_translator_forward.49} parent=1 // pred_fallthru
      _
    %v43 = vld [vmem:[#allocation2] sm:$0xff]
    %v44 = vld [vmem:[#allocation2 + $0x8] sm:$0xff]
    %v45 = vld [vmem:[#allocation2 + $0x10] sm:$0xff]
    %v46 = vld [vmem:[#allocation2 + $0x18] sm:$0xff]
    %v47 = vld [vmem:[#allocation2 + $0x20] sm:$0xff]
    %v48 = vld [vmem:[#allocation2 + $0x28] sm:$0xff]
    %v49 = vld [vmem:[#allocation2 + $0x30] sm:$0xff]
    %v50 = vld [vmem:[#allocation2 + $0x38] sm:$0xff]
    %v51 = vld [vmem:[%s0] sm:$0xf]
    %v52 = vld [vmem:[%s0 + $0x4] sm:$0xf]
    %v53 = vld [vmem:[%s0 + $0x8] sm:$0xf]
    %v54 = vld [vmem:[%s0 + $0xc] sm:$0xf]
    %v55 = vld [vmem:[%s0 + $0x10] sm:$0xf]
    %v56 = vld [vmem:[%s0 + $0x14] sm:$0xf]
    %v57 = vld [vmem:[%s0 + $0x18] sm:$0xf]
    %v58 = vld [vmem:[%s0 + $0x1c] sm:$0xf]
    %v59 = vld [vmem:[#allocation3] sm:$0xf]
    %v60 = vld [vmem:[#allocation3 + $0x4] sm:$0xf]
    %v61 = vld [vmem:[#allocation3 + $0x8] sm:$0xf]
    %v62 = vld [vmem:[#allocation3 + $0xc] sm:$0xf]
    %v63 = vld [vmem:[#allocation3 + $0x10] sm:$0xf]
    %v64 = vld [vmem:[#allocation3 + $0x14] sm:$0xf]
    %v65 = vld [vmem:[#allocation3 + $0x18] sm:$0xf]
    %v66 = vld [vmem:[#allocation3 + $0x1c] sm:$0xf]
    %v67 = vld [vmem:[#allocation3 + $0x20] sm:$0xf]
    %v68 = vld [vmem:[#allocation3 + $0x24] sm:$0xf]
    %v69 = vld [vmem:[#allocation3 + $0x28] sm:$0xf]
    %v70 = vld [vmem:[#allocation3 + $0x2c] sm:$0xf]
    %v71 = vld [vmem:[#allocation3 + $0x30] sm:$0xf]
    %v72 = vld [vmem:[#allocation3 + $0x34] sm:$0xf]
    %v73 = vld [vmem:[#allocation3 + $0x38] sm:$0xf]
    %v74 = vld [vmem:[#allocation3 + $0x3c] sm:$0xf]
    %v83 = vunpack.c.l.b16 %v51
    %v84 = vunpack.c.l.b16 %v52
    %v85 = vunpack.c.l.b16 %v53
    %v86 = vunpack.c.l.b16 %v54
    %v87 = vunpack.c.l.b16 %v55
    %v88 = vunpack.c.l.b16 %v56
    %v89 = vunpack.c.l.b16 %v57
    %v90 = vunpack.c.l.b16 %v58
    %v91 = vpack.c.b16 %v84, %v83
    %v92 = vpack.c.b16 %v86, %v85
    %v93 = vpack.c.b16 %v88, %v87
    %v94 = vpack.c.b16 %v90, %v89
    %v115 = vunpack.c.l.b16 %v59
    %v116 = vunpack.c.l.b16 %v60
    %v117 = vunpack.c.l.b16 %v61
    %v118 = vunpack.c.l.b16 %v62
    %v119 = vunpack.c.l.b16 %v63
    %v120 = vunpack.c.l.b16 %v64
    %v121 = vunpack.c.l.b16 %v65
    %v122 = vunpack.c.l.b16 %v66
    %v123 = vunpack.c.l.b16 %v67
    %v124 = vunpack.c.l.b16 %v68
    %v125 = vunpack.c.l.b16 %v69
    %v126 = vunpack.c.l.b16 %v70
    %v127 = vunpack.c.l.b16 %v71
    %v128 = vunpack.c.l.b16 %v72
    %v129 = vunpack.c.l.b16 %v73
    %v130 = vunpack.c.l.b16 %v74
    %v131 = vpack.c.b16 %v116, %v115
    %v132 = vpack.c.b16 %v118, %v117
    %v133 = vpack.c.b16 %v120, %v119
    %v134 = vpack.c.b16 %v122, %v121
    %v135 = vpack.c.b16 %v124, %v123
    %v136 = vpack.c.b16 %v126, %v125
    %v137 = vpack.c.b16 %v128, %v127
    %v138 = vpack.c.b16 %v130, %v129
    %147 = vmatpush.bf16.msra.mxu0 %v138
    %148 = vmatpush.bf16.msra.mxu0 %v137
    %149 = vmatpush.bf16.msra.mxu0 %v136
    %150 = vmatpush.bf16.msra.mxu0 %v135
    %151 = vmatpush.bf16.msra.mxu0 %v134
    %152 = vmatpush.bf16.msra.mxu0 %v133
    %153 = vmatpush.bf16.msra.mxu0 %v132
    %154 = vmatpush.bf16.msra.mxu0 %v131
    %155 = vmatmul.bf16.gmra.mxu0 %v91
    %v156 = vpop.f32.mrf.mxu0
    %v157 = vadd.f32 0.0, %v156
    %v158 = vpop.f32.mrf.mxu0
    %v159 = vadd.f32 0.0, %v158
    %160 = vmatmul.bf16.gmra.mxu0 %v92
    %v161 = vpop.f32.mrf.mxu0
    %v162 = vadd.f32 0.0, %v161
    %v163 = vpop.f32.mrf.mxu0
    %v164 = vadd.f32 0.0, %v163
    %165 = vmatmul.bf16.gmra.mxu0 %v93
    %v166 = vpop.f32.mrf.mxu0
    %v167 = vadd.f32 0.0, %v166
    %v168 = vpop.f32.mrf.mxu0
    %v169 = vadd.f32 0.0, %v168
    %170 = vmatmul.bf16.gmra.mxu0 %v94
    %v171 = vpop.f32.mrf.mxu0
    %v172 = vadd.f32 0.0, %v171
    %v173 = vpop.f32.mrf.mxu0
    %v174 = vadd.f32 0.0, %v173
    %175 = vdwg.mxu0
    %v176 = vadd.f32 %v43, %v157
    %v177 = vadd.f32 %v44, %v159
    %v178 = vadd.f32 %v45, %v162
    %v179 = vadd.f32 %v46, %v164
    %v180 = vadd.f32 %v47, %v167
    %v181 = vadd.f32 %v48, %v169
    %v182 = vadd.f32 %v49, %v172
    %v183 = vadd.f32 %v50, %v174
    %184 = vst [vmem:[#allocation2] sm:$0xff] %v176
    %185 = vst [vmem:[#allocation2 + $0x8] sm:$0xff] %v177
    %186 = vst [vmem:[#allocation2 + $0x10] sm:$0xff] %v178
    %187 = vst [vmem:[#allocation2 + $0x18] sm:$0xff] %v179
    %188 = vst [vmem:[#allocation2 + $0x20] sm:$0xff] %v180
    %189 = vst [vmem:[#allocation2 + $0x28] sm:$0xff] %v181
    %190 = vst [vmem:[#allocation2 + $0x30] sm:$0xff] %v182
    %191 = vst [vmem:[#allocation2 + $0x38] sm:$0xff] %v183
    // Predicated region
    $region22: #{transformer_translator_forward.49} parent=1 // pred_check
      %p192 = pneg %p31
    $region23: #{transformer_translator_forward.49} parent=1 // pred_check_branch
      %194 = sbr.rel (%p192) target = $region25
    $region24: #{transformer_translator_forward.49} parent=1 // pred_region
      %v195 = vld [vmem:[#allocation2] sm:$0xff]
      %v196 = vld [vmem:[#allocation2 + $0x8] sm:$0xff]
      %v197 = vld [vmem:[#allocation2 + $0x10] sm:$0xff]
      %v198 = vld [vmem:[#allocation2 + $0x18] sm:$0xff]
      %v199 = vld [vmem:[#allocation2 + $0x20] sm:$0xff]
      %v200 = vld [vmem:[#allocation2 + $0x28] sm:$0xff]
      %v201 = vld [vmem:[#allocation2 + $0x30] sm:$0xff]
      %v202 = vld [vmem:[#allocation2 + $0x38] sm:$0xff]
      %v203 = vld [vmem:[%s2] sm:$0x1]
      %v205 = vperm.slane %v203, 0
      %v207 = vadd.f32 %v195, %v205
      %v208 = vadd.f32 %v196, %v205
      %v209 = vadd.f32 %v197, %v205
      %v210 = vadd.f32 %v198, %v205
      %v211 = vadd.f32 %v199, %v205
      %v212 = vadd.f32 %v200, %v205
      %v213 = vadd.f32 %v201, %v205
      %v214 = vadd.f32 %v202, %v205
      %215 = vst [vmem:[#allocation6] sm:$0xff] %v207
      %216 = vst [vmem:[#allocation6 + $0x8] sm:$0xff] %v208
      %217 = vst [vmem:[#allocation6 + $0x10] sm:$0xff] %v209
      %218 = vst [vmem:[#allocation6 + $0x18] sm:$0xff] %v210
      %219 = vst [vmem:[#allocation6 + $0x20] sm:$0xff] %v211
      %220 = vst [vmem:[#allocation6 + $0x28] sm:$0xff] %v212
      %221 = vst [vmem:[#allocation6 + $0x30] sm:$0xff] %v213
      %222 = vst [vmem:[#allocation6 + $0x38] sm:$0xff] %v214
    $region25: #{transformer_translator_forward.49} parent=1 // pred_fallthru
      _
    // Predicated region
    $region26: #{transformer_translator_forward.49} parent=1 // pred_check
      _
    $region27: #{transformer_translator_forward.49} parent=1 // pred_check_branch
      %224 = sbr.rel (0) target = $region29
    $region28: #{transformer_translator_forward.49} parent=1 // pred_region
      %226 = vsyncadd [#allocation5], 0
      %s227 = sshll.u32 [#allocation6], 4
      %s228 = int_to_ptr.vmem [resolvable:$true] %s227
      %s229 = sshll.u32 %s3, 4
      %s230 = int_to_ptr.hbm [resolvable:$true] %s229
      %235 = dma.vmem_to_hbm [thread:$0]  %s228, 1024, %s230, [#allocation5], 128, 128, 8
    $region29: #{transformer_translator_forward.49} parent=1 // pred_fallthru
      _
    // Predicated region
    $region30: #{transformer_translator_forward.49} parent=1 // pred_check
      _
    $region31: #{transformer_translator_forward.49} parent=1 // pred_check_branch
      %237 = sbr.rel (0) target = $region33
    $region32: #{transformer_translator_forward.49} parent=1 // pred_region
      %239 = dma.done [#allocation5], 1024
    $region33: #{transformer_translator_forward.49} parent=1 // pred_fallthru
      _
    %240 = vsyncpa [#allocation4], 1
    %241 = vsyncpa [#allocation5], 1

// kernel: transformer_translator_forward.38
$region0: #{transformer_translator_forward.38}
  #allocation0 [shape = 'u32[]', space=smem, size = 0x4, offset = 0x4, fixed_abs, tag = 'smem constant byte address 0x4 - core index']
  #allocation1 [shape = 'u32[72,128]{1,0:T(1,128)}', space=vmem, size = 0x9000, scoped, tag = 'internal scratch']
  #allocation2 [shape = 'f32[8,4]{1,0:T(8,128)}', space=vmem, size = 0x1000, scoped, tag = 'scratch operand']
  #allocation3 [shape = 'f32[8,4]{1,0:T(8,128)}', space=vmem, size = 0x1000, scoped, tag = 'scratch operand']
  #allocation4 [shape = 'f32[8,128]{1,0:T(8,128)}', space=vmem, size = 0x1000, scoped, tag = 'scratch operand']
  %s0 = inlined_call_operand.vmem [shape: bf16[8,8,128], index: 0, kind: input, shape index: {}]
  %s1 = inlined_call_operand.vmem [shape: bf16[8,8,256], index: 1, kind: input, shape index: {}, may-alias: {1,2}]
  %s2 = inlined_call_operand.vmem [shape: bf16[8,8,256], index: 2, kind: input, shape index: {}, may-alias: {1,2}]
  %s3 = inlined_call_operand.vmem [shape: f32[8,1,8], index: 3, kind: input, shape index: {}]
  %s4 = inlined_call_operand.vmem [shape: bf16[8,8,128], index: 4, kind: output, shape index: {}]
  %s5 = sld [smem:[#allocation0]]
  $region57: #{transformer_translator_forward.38} parent=0
    _
  %s7 = ssub.s32 1, %s5
  %s8 = scalar_select 0, %s7, %s5
  loop: start=0, step=1, limit=10
  $region2: #{transformer_translator_forward.38} parent=0 // loop_pre_header
    _
  $region3: #{transformer_translator_forward.38} parent=0 // loop_header
    %s10 = sphi 0, %s14
    %p11 = scmp.ge.s32.totalorder %s10, 10
    %s17 = sphi 0, %s36
    %s18 = sphi 0, %s32
    %s19 = sphi 0, %s28
    %s20 = sphi 0, %s17
    %s21 = sphi 0, %s18
    %s22 = sphi 0, %s19
    %s23 = sphi 0, %s20
    %s24 = sphi 0, %s21
    %s25 = sphi 0, %s22
    %s41 = sphi 0, %s43
    %s44 = sphi 0, %s41
    %s45 = sphi 0, %s44
    %s61 = sphi 0, %s45
    %s69 = sphi 0, %s71
    %s72 = sphi 0, %s69
    %s73 = sphi 0, %s72
    %s89 = sphi 0, %s73
    %s97 = sphi 0, %s99
    %s100 = sphi 0, %s97
    %s101 = sphi 0, %s100
    %s117 = sphi 0, %s101
    %s125 = sphi 0, %s127
    %s128 = sphi 0, %s125
    %s129 = sphi 0, %s128
    %s145 = sphi 0, %s129
    %s153 = sphi 0, %s155
    %s156 = sphi 0, %s153
    %s157 = sphi 0, %s156
    %s173 = sphi 0, %s157
  $region4: #{transformer_translator_forward.38} parent=0 // loop_header_branch
    %13 = sbr.rel (%p11) target = $region8
  $region5: #{transformer_translator_forward.38} parent=0 // loop_body
    %s15 = ssub.s32 %s10, 1
    %s16 = ssub.s32 %s10, 2
    %s26 = sadd.s32 1, %s19
    %p27 = scmp.ge.s32.totalorder %s26, 1
    %s28 = scalar_select %p27, 0, %s26
    %s29 = sadd.s32 1, %s18
    %s30 = scalar_select %p27, %s29, %s18
    %p31 = scmp.ge.s32.totalorder %s30, 1
    %s32 = scalar_select %p31, 0, %s30
    %s33 = sadd.s32 1, %s17
    %s34 = scalar_select %p31, %s33, %s17
    %p35 = scmp.ge.s32.totalorder %s34, 8
    %s36 = scalar_select %p35, 0, %s34
    %s37 = ssub.s32 %s17, %s36
    %s38 = ssub.s32 %s18, %s32
    %s39 = sor.u32 %s37, %s38
    %p40 = scmp.eq.s32.totalorder %s39, 0
    %s42 = sadd.s32 %s41, 1
    %s43 = scalar_select %p40, %s41, %s42
    %p46 = pneg %p40
    %p47 = scmp.eq.s32.totalorder %s10, 7
    %p48 = por %p46, %p47
    %p49 = scmp.ne.s32.totalorder %s41, %s44
    %p50 = scmp.eq.s32.totalorder %s10, 0
    %p51 = por %p49, %p50
    %p52 = scmp.ne.s32.totalorder %s41, %s44
    %p53 = scmp.eq.s32.totalorder %s15, 7
    %p54 = por %p52, %p53
    %p55 = scmp.ne.s32.totalorder %s44, %s45
    %p56 = scmp.eq.s32.totalorder %s15, 0
    %p57 = por %p55, %p56
    %p58 = scmp.ne.s32.totalorder %s44, %s45
    %p59 = scmp.eq.s32.totalorder %s16, 7
    %p60 = por %p58, %p59
    %p62 = scmp.ne.s32.totalorder %s45, %s61
    %p63 = scmp.eq.s32.totalorder %s16, 0
    %p64 = por %p62, %p63
    %s65 = ssub.s32 %s17, %s36
    %s66 = ssub.s32 %s19, %s28
    %s67 = sor.u32 %s65, %s66
    %p68 = scmp.eq.s32.totalorder %s67, 0
    %s70 = sadd.s32 %s69, 1
    %s71 = scalar_select %p68, %s69, %s70
    %p74 = pneg %p68
    %p75 = scmp.eq.s32.totalorder %s10, 7
    %p76 = por %p74, %p75
    %p77 = scmp.ne.s32.totalorder %s69, %s72
    %p78 = scmp.eq.s32.totalorder %s10, 0
    %p79 = por %p77, %p78
    %p80 = scmp.ne.s32.totalorder %s69, %s72
    %p81 = scmp.eq.s32.totalorder %s15, 7
    %p82 = por %p80, %p81
    %p83 = scmp.ne.s32.totalorder %s72, %s73
    %p84 = scmp.eq.s32.totalorder %s15, 0
    %p85 = por %p83, %p84
    %p86 = scmp.ne.s32.totalorder %s72, %s73
    %p87 = scmp.eq.s32.totalorder %s16, 7
    %p88 = por %p86, %p87
    %p90 = scmp.ne.s32.totalorder %s73, %s89
    %p91 = scmp.eq.s32.totalorder %s16, 0
    %p92 = por %p90, %p91
    %s93 = ssub.s32 %s17, %s36
    %s94 = ssub.s32 %s19, %s28
    %s95 = sor.u32 %s93, %s94
    %p96 = scmp.eq.s32.totalorder %s95, 0
    %s98 = sadd.s32 %s97, 1
    %s99 = scalar_select %p96, %s97, %s98
    %p102 = pneg %p96
    %p103 = scmp.eq.s32.totalorder %s10, 7
    %p104 = por %p102, %p103
    %p105 = scmp.ne.s32.totalorder %s97, %s100
    %p106 = scmp.eq.s32.totalorder %s10, 0
    %p107 = por %p105, %p106
    %p108 = scmp.ne.s32.totalorder %s97, %s100
    %p109 = scmp.eq.s32.totalorder %s15, 7
    %p110 = por %p108, %p109
    %p111 = scmp.ne.s32.totalorder %s100, %s101
    %p112 = scmp.eq.s32.totalorder %s15, 0
    %p113 = por %p111, %p112
    %p114 = scmp.ne.s32.totalorder %s100, %s101
    %p115 = scmp.eq.s32.totalorder %s16, 7
    %p116 = por %p114, %p115
    %p118 = scmp.ne.s32.totalorder %s101, %s117
    %p119 = scmp.eq.s32.totalorder %s16, 0
    %p120 = por %p118, %p119
    %s121 = ssub.s32 %s17, %s36
    %s122 = ssub.s32 %s19, %s28
    %s123 = sor.u32 %s121, %s122
    %p124 = scmp.eq.s32.totalorder %s123, 0
    %s126 = sadd.s32 %s125, 1
    %s127 = scalar_select %p124, %s125, %s126
    %p130 = pneg %p124
    %p131 = scmp.eq.s32.totalorder %s10, 7
    %p132 = por %p130, %p131
    %p133 = scmp.ne.s32.totalorder %s125, %s128
    %p134 = scmp.eq.s32.totalorder %s10, 0
    %p135 = por %p133, %p134
    %p136 = scmp.ne.s32.totalorder %s125, %s128
    %p137 = scmp.eq.s32.totalorder %s15, 7
    %p138 = por %p136, %p137
    %p139 = scmp.ne.s32.totalorder %s128, %s129
    %p140 = scmp.eq.s32.totalorder %s15, 0
    %p141 = por %p139, %p140
    %p142 = scmp.ne.s32.totalorder %s128, %s129
    %p143 = scmp.eq.s32.totalorder %s16, 7
    %p144 = por %p142, %p143
    %p146 = scmp.ne.s32.totalorder %s129, %s145
    %p147 = scmp.eq.s32.totalorder %s16, 0
    %p148 = por %p146, %p147
    %s149 = ssub.s32 %s17, %s36
    %s150 = ssub.s32 %s18, %s32
    %s151 = sor.u32 %s149, %s150
    %p152 = scmp.eq.s32.totalorder %s151, 0
    %s154 = sadd.s32 %s153, 1
    %s155 = scalar_select %p152, %s153, %s154
    %p158 = pneg %p152
    %p159 = scmp.eq.s32.totalorder %s10, 7
    %p160 = por %p158, %p159
    %p161 = scmp.ne.s32.totalorder %s153, %s156
    %p162 = scmp.eq.s32.totalorder %s10, 0
    %p163 = por %p161, %p162
    %p164 = scmp.ne.s32.totalorder %s153, %s156
    %p165 = scmp.eq.s32.totalorder %s15, 7
    %p166 = por %p164, %p165
    %p167 = scmp.ne.s32.totalorder %s156, %s157
    %p168 = scmp.eq.s32.totalorder %s15, 0
    %p169 = por %p167, %p168
    %p170 = scmp.ne.s32.totalorder %s156, %s157
    %p171 = scmp.eq.s32.totalorder %s16, 7
    %p172 = por %p170, %p171
    %p174 = scmp.ne.s32.totalorder %s157, %s173
    %p175 = scmp.eq.s32.totalorder %s16, 0
    %p176 = por %p174, %p175
    %p177 = scmp.le.s32.totalorder 1, %s10
    %p178 = scmp.lt.s32.totalorder %s10, 9
    %p179 = pnand %p177, %p178
    %p180 = pneg %p179
    // Predicated region
    $region9: #{transformer_translator_forward.38} parent=5 // pred_check
      _
    $region10: #{transformer_translator_forward.38} parent=5 // pred_check_branch
      %182 = sbr.rel (%p179) target = $region12
    $region11: #{transformer_translator_forward.38} parent=5 // pred_region
      %s183 = ssub.s32 %s10, 1
    $region12: #{transformer_translator_forward.38} parent=5 // pred_fallthru
      _
    %p184 = scmp.lt.s32.totalorder %s10, 8
    // Predicated region
    $region13: #{transformer_translator_forward.38} parent=5 // pred_check
      %p185 = pneg %p184
    $region14: #{transformer_translator_forward.38} parent=5 // pred_check_branch
      %187 = sbr.rel (%p185) target = $region16
    $region15: #{transformer_translator_forward.38} parent=5 // pred_region
      // Predicated region
      $region17: #{transformer_translator_forward.38} parent=15 // pred_check
        %p188 = pneg %p51
      $region18: #{transformer_translator_forward.38} parent=15 // pred_check_branch
        %190 = sbr.rel (%p188) target = $region20
      $region19: #{transformer_translator_forward.38} parent=15 // pred_region
        %p191 = scmp.lt.s32.totalorder %s17, 7
        %s192 = scalar_select %p191, %s17, 7
        %p193 = scmp.lt.s32.totalorder %s18, 0
        %s194 = scalar_select %p193, %s18, 0
        %s195 = sadd.s32 %s194, %s192
        %s196 = smul.addr %s195, 4
        %s197 = scalar_lea.vmem %s0, %s196
      $region20: #{transformer_translator_forward.38} parent=15 // pred_fallthru
        _
      // Predicated region
      $region21: #{transformer_translator_forward.38} parent=15 // pred_check
        %p198 = pneg %p79
      $region22: #{transformer_translator_forward.38} parent=15 // pred_check_branch
        %200 = sbr.rel (%p198) target = $region24
      $region23: #{transformer_translator_forward.38} parent=15 // pred_region
        %p201 = scmp.lt.s32.totalorder %s17, 7
        %s202 = scalar_select %p201, %s17, 7
        %p203 = scmp.lt.s32.totalorder %s19, 0
        %s204 = scalar_select %p203, %s19, 0
        %s205 = smul.addr %s204, 2
        %s206 = smul.addr %s202, 2
        %s207 = sadd.s32 %s205, %s206
        %s208 = smul.addr %s207, 4
        %s209 = scalar_lea.vmem %s1, %s208
      $region24: #{transformer_translator_forward.38} parent=15 // pred_fallthru
        _
      // Predicated region
      $region25: #{transformer_translator_forward.38} parent=15 // pred_check
        %p210 = pneg %p107
      $region26: #{transformer_translator_forward.38} parent=15 // pred_check_branch
        %212 = sbr.rel (%p210) target = $region28
      $region27: #{transformer_translator_forward.38} parent=15 // pred_region
        %p213 = scmp.lt.s32.totalorder %s17, 7
        %s214 = scalar_select %p213, %s17, 7
        %p215 = scmp.lt.s32.totalorder %s19, 0
        %s216 = scalar_select %p215, %s19, 0
        %s217 = smul.addr %s216, 2
        %s218 = sadd.s32 1, %s217
        %s219 = smul.addr %s214, 2
        %s220 = sadd.s32 %s218, %s219
        %s221 = smul.addr %s220, 4
        %s222 = scalar_lea.vmem %s2, %s221
      $region28: #{transformer_translator_forward.38} parent=15 // pred_fallthru
        _
      // Predicated region
      $region29: #{transformer_translator_forward.38} parent=15 // pred_check
        %p223 = pneg %p135
      $region30: #{transformer_translator_forward.38} parent=15 // pred_check_branch
        %225 = sbr.rel (%p223) target = $region32
      $region31: #{transformer_translator_forward.38} parent=15 // pred_region
        %p226 = scmp.lt.s32.totalorder %s17, 7
        %s227 = scalar_select %p226, %s17, 7
        %p228 = scmp.lt.s32.totalorder %s19, 0
        %s229 = scalar_select %p228, %s19, 0
        %s230 = sadd.s32 %s229, %s227
        %s231 = scalar_lea.vmem %s3, %s230
      $region32: #{transformer_translator_forward.38} parent=15 // pred_fallthru
        _
    $region16: #{transformer_translator_forward.38} parent=5 // pred_fallthru
      _
    %p232 = scmp.le.s32.totalorder 1, %s10
    %p233 = scmp.lt.s32.totalorder %s10, 9
    %p234 = pnand %p232, %p233
    %p235 = pneg %p234
    // Predicated region
    $region33: #{transformer_translator_forward.38} parent=5 // pred_check
      _
    $region34: #{transformer_translator_forward.38} parent=5 // pred_check_branch
      %237 = sbr.rel (%p234) target = $region36
    $region35: #{transformer_translator_forward.38} parent=5 // pred_region
      %s238 = ssub.s32 %s10, 1
      %p239 = scmp.lt.s32.totalorder %s20, 7
      %s240 = scalar_select %p239, %s20, 7
      %p241 = scmp.lt.s32.totalorder %s21, 0
      %s242 = scalar_select %p241, %s21, 0
      %s243 = sadd.s32 %s242, %s240
      %s244 = smul.addr %s243, 4
      %s245 = scalar_lea.vmem %s0, %s244
      %p246 = pneg %p57
      %p247 = pneg %p54
      %p248 = scmp.lt.s32.totalorder %s20, 7
      %s249 = scalar_select %p248, %s20, 7
      %p250 = scmp.lt.s32.totalorder %s22, 0
      %s251 = scalar_select %p250, %s22, 0
      %s252 = smul.addr %s251, 2
      %s253 = smul.addr %s249, 2
      %s254 = sadd.s32 %s252, %s253
      %s255 = smul.addr %s254, 4
      %s256 = scalar_lea.vmem %s1, %s255
      %p257 = pneg %p85
      %p258 = pneg %p82
      %p259 = scmp.lt.s32.totalorder %s20, 7
      %s260 = scalar_select %p259, %s20, 7
      %p261 = scmp.lt.s32.totalorder %s22, 0
      %s262 = scalar_select %p261, %s22, 0
      %s263 = smul.addr %s262, 2
      %s264 = sadd.s32 1, %s263
      %s265 = smul.addr %s260, 2
      %s266 = sadd.s32 %s264, %s265
      %s267 = smul.addr %s266, 4
      %s268 = scalar_lea.vmem %s2, %s267
      %p269 = pneg %p113
      %p270 = pneg %p110
      %p271 = scmp.lt.s32.totalorder %s20, 7
      %s272 = scalar_select %p271, %s20, 7
      %p273 = scmp.lt.s32.totalorder %s22, 0
      %s274 = scalar_select %p273, %s22, 0
      %s275 = sadd.s32 %s274, %s272
      %s276 = scalar_lea.vmem %s3, %s275
      %p277 = pneg %p141
      %p278 = pneg %p138
      %p279 = pneg %p169
      %p280 = pneg %p166
      %p281 = scmp.lt.s32.totalorder %s20, 7
      %s282 = scalar_select %p281, %s20, 7
      %p283 = scmp.lt.s32.totalorder %s21, 0
      %s284 = scalar_select %p283, %s21, 0
      %s285 = sadd.s32 %s284, %s282
      %s286 = smul.addr %s285, 4
      %s287 = scalar_lea.vmem %s4, %s286
      %p288 = scmp.lt.s32.totalorder %s20, 7
      %s289 = scalar_select %p288, %s20, 7
      %p290 = scmp.lt.s32.totalorder %s21, 0
      %s291 = scalar_select %p290, %s21, 0
      %s292 = sadd.s32 %s291, %s289
      %s293 = smul.addr %s292, 4
      %s294 = scalar_lea.vmem %s0, %s293
      %p295 = scmp.lt.s32.totalorder %s20, 7
      %s296 = scalar_select %p295, %s20, 7
      %p297 = scmp.lt.s32.totalorder %s22, 0
      %s298 = scalar_select %p297, %s22, 0
      %s299 = smul.addr %s298, 2
      %s300 = smul.addr %s296, 2
      %s301 = sadd.s32 %s299, %s300
      %s302 = smul.addr %s301, 4
      %s303 = scalar_lea.vmem %s1, %s302
      %p304 = scmp.lt.s32.totalorder %s20, 7
      %s305 = scalar_select %p304, %s20, 7
      %p306 = scmp.lt.s32.totalorder %s22, 0
      %s307 = scalar_select %p306, %s22, 0
      %s308 = smul.addr %s307, 2
      %s309 = sadd.s32 1, %s308
      %s310 = smul.addr %s305, 2
      %s311 = sadd.s32 %s309, %s310
      %s312 = smul.addr %s311, 4
      %s313 = scalar_lea.vmem %s2, %s312
      %p314 = scmp.lt.s32.totalorder %s20, 7
      %s315 = scalar_select %p314, %s20, 7
      %p316 = scmp.lt.s32.totalorder %s22, 0
      %s317 = scalar_select %p316, %s22, 0
      %s318 = sadd.s32 %s317, %s315
      %s319 = scalar_lea.vmem %s3, %s318
      %p320 = scmp.lt.s32.totalorder %s20, 7
      %s321 = scalar_select %p320, %s20, 7
      %p322 = scmp.lt.s32.totalorder %s21, 0
      %s323 = scalar_select %p322, %s21, 0
      %s324 = sadd.s32 %s323, %s321
      %s325 = smul.addr %s324, 4
      %s326 = scalar_lea.vmem %s4, %s325
      %p328 = scmp.eq.s32.totalorder %s22, 0
      // Predicated region
      $region37: #{transformer_translator_forward.38} parent=35 // pred_check
        %p329 = pneg %p328
      $region38: #{transformer_translator_forward.38} parent=35 // pred_check_branch
        %331 = sbr.rel (%p329) target = $region40
      $region39: #{transformer_translator_forward.38} parent=35 // pred_region
        %vm332 = vcmask 31744
        %333 = vst.msk [vmem:[#allocation2] sm:$0xff] %vm332, -1e+30
        %334 = vst.msk [vmem:[#allocation3] sm:$0xff] %vm332, 0.0
        %335 = vst [vmem:[#allocation4] sm:$0xff] 0.0
      $region40: #{transformer_translator_forward.38} parent=35 // pred_fallthru
        _
      %v336 = vld [vmem:[%s294] sm:$0xf]
      %v337 = vld [vmem:[%s303] sm:$0xf]
      %v338 = vld [vmem:[%s313] sm:$0xf]
      %v339 = vld [vmem:[%s319] sm:$0x1]
      %vm340 = vcmask 261120
      %v342 = vsel %vm340, %v336, 0
      %v345 = vsel %vm340, %v337, 0
      %347 = vmatpush.bf16.xpose.msra.mxu0 0
      %348 = vmatpush.bf16.xpose.msra.mxu0 0
      %349 = vmatpush.bf16.xpose.msra.mxu0 0
      %350 = vmatpush.bf16.xpose.msra.mxu0 0
      %351 = vmatpush.bf16.xpose.msra.mxu0 0
      %352 = vmatpush.bf16.xpose.msra.mxu0 0
      %353 = vmatpush.bf16.xpose.msra.mxu0 0
      %354 = vmatpush.bf16.xpose.msra.mxu0 %v345
      %355 = vmatmul.bf16.gmra.mxu0 %v342
      %v356 = vpop.f32.mrf.mxu0
      %v357 = vadd.f32 0.0, %v356
      %v358 = vpop.f32.mrf.mxu0
      %359 = vdwg.mxu0
      %v360 = vmul.f32 %v357, 0.17677669
      %v362 = vperm.slane %v339, 0
      %v364 = vadd.f32 %v360, %v362
      %v365 = vld [vmem:[#allocation2] sm:$0xff]
      %vm366 = vcmask 64512
      %v367 = vsel %vm366, %v364, -inf
      %368 = vmax.xlane.f32.xlu0 %v367
      %v369 = vpop.xlane.xlu0 %368
      %v370 = vmax.f32 %v365, %v369
      %v371 = vsub.f32 %v365, %v370
      %v372 = vmul.f32 %v371, 1.442695
      %v373 = vpow.pop %v372
      %375 = vset.pattern.permute.xlu0 0
      %376 = vperm.xlu0 %375, %v370
      %v377 = vpop.permute.xlu0 %376
      %v379 = vsub.f32 %v364, %v377
      %v380 = vmul.f32 %v379, 1.442695
      %v381 = vpow.pop %v380
      %v382 = vld [vmem:[#allocation3] sm:$0xff]
      %v383 = vmul.f32 %v373, %v382
      %v384 = vsel %vm366, %v381, 0.0
      %385 = vadd.xlane.f32.xlu0 %v384
      %v386 = vpop.xlane.xlu0 %385
      %v387 = vadd.f32 %v383, %v386
      %vm388 = vcmask 7168
      %389 = vst.msk [vmem:[#allocation3] sm:$0xff] %vm388, %v387
      %v390 = vld [vmem:[#allocation4] sm:$0xff]
      %392 = vset.pattern.permute.xlu0 0
      %393 = vperm.xlu0 %392, %v373
      %v394 = vpop.permute.xlu0 %393
      %v396 = vmul.f32 %v394, %v390
      %v397 = vpack.c.bf16 %v381, %v381
      %v399 = vsel %vm366, %v397, 0
      %vm401 = vcmask 1043456
      %v403 = vsel %vm401, %v338, 0
      %405 = vmatpush.bf16.msra.mxu0 0
      %406 = vmatpush.bf16.msra.mxu0 0
      %407 = vmatpush.bf16.msra.mxu0 0
      %408 = vmatpush.bf16.msra.mxu0 0
      %409 = vmatpush.bf16.msra.mxu0 0
      %410 = vmatpush.bf16.msra.mxu0 0
      %411 = vmatpush.bf16.msra.mxu0 0
      %412 = vmatpush.bf16.msra.mxu0 %v403
      %413 = vmatmul.bf16.gmra.mxu0 %v399
      %v414 = vpop.f32.mrf.mxu0
      %v415 = vadd.f32 0.0, %v414
      %v416 = vpop.f32.mrf.mxu0
      %417 = vdwg.mxu0
      %v418 = vadd.f32 %v396, %v415
      %419 = vst.msk [vmem:[#allocation4] sm:$0xff] %vm340, %v418
      %420 = vst.msk [vmem:[#allocation2] sm:$0xff] %vm388, %v370
      %v422 = vunpack.c.l.b16 %v336
      %v423 = vpack.c.b16 %v422, %v422
      %424 = vrot.lane.b32.xlu0 %v423, 96
      %v425 = vpop.permute.xlu0 %424
      %v427 = vunpack.c.l.b16 %v337
      %v428 = vpack.c.b16 %v427, %v427
      %429 = vrot.lane.b32.xlu0 %v428, 96
      %v430 = vpop.permute.xlu0 %429
      %v432 = vsel %vm340, %v425, 0
      %v435 = vsel %vm340, %v430, 0
      %437 = vmatpush.bf16.xpose.msra.mxu0 0
      %438 = vmatpush.bf16.xpose.msra.mxu0 0
      %439 = vmatpush.bf16.xpose.msra.mxu0 0
      %440 = vmatpush.bf16.xpose.msra.mxu0 0
      %441 = vmatpush.bf16.xpose.msra.mxu0 0
      %442 = vmatpush.bf16.xpose.msra.mxu0 0
      %443 = vmatpush.bf16.xpose.msra.mxu0 0
      %444 = vmatpush.bf16.xpose.msra.mxu0 %v435
      %445 = vmatmul.bf16.gmra.mxu0 %v432
      %v446 = vpop.f32.mrf.mxu0
      %v447 = vadd.f32 0.0, %v446
      %v448 = vpop.f32.mrf.mxu0
      %449 = vdwg.mxu0
      %v450 = vmul.f32 %v447, 0.17677669
      %v451 = vadd.f32 %v450, %v362
      %v452 = vld [vmem:[#allocation2] sm:$0xff]
      %v453 = vsel %vm366, %v451, -inf
      %454 = vmax.xlane.f32.xlu0 %v453
      %v455 = vpop.xlane.xlu0 %454
      %v456 = vmax.f32 %v452, %v455
      %v457 = vsub.f32 %v452, %v456
      %v458 = vmul.f32 %v457, 1.442695
      %v459 = vpow.pop %v458
      %461 = vset.pattern.permute.xlu0 1
      %462 = vperm.xlu0 %461, %v456
      %v463 = vpop.permute.xlu0 %462
      %v465 = vsub.f32 %v451, %v463
      %v466 = vmul.f32 %v465, 1.442695
      %v467 = vpow.pop %v466
      %v468 = vld [vmem:[#allocation3] sm:$0xff]
      %v469 = vmul.f32 %v459, %v468
      %v470 = vsel %vm366, %v467, 0.0
      %471 = vadd.xlane.f32.xlu0 %v470
      %v472 = vpop.xlane.xlu0 %471
      %v473 = vadd.f32 %v469, %v472
      %vm474 = vcmask 15368
      %475 = vst.msk [vmem:[#allocation3] sm:$0xff] %vm474, %v473
      %v476 = vld [vmem:[#allocation4] sm:$0xff]
      %478 = vset.pattern.permute.xlu0 1
      %479 = vperm.xlu0 %478, %v459
      %v480 = vpop.permute.xlu0 %479
      %v482 = vmul.f32 %v480, %v476
      %v483 = vpack.c.bf16 %v467, %v467
      %v485 = vunpack.c.l.b16 %v338
      %v486 = vpack.c.b16 %v485, %v485
      %487 = vrot.lane.b32.xlu0 %v486, 96
      %v488 = vpop.permute.xlu0 %487
      %v490 = vsel %vm366, %v483, 0
      %v493 = vsel %vm401, %v488, 0
      %495 = vmatpush.bf16.msra.mxu0 0
      %496 = vmatpush.bf16.msra.mxu0 0
      %497 = vmatpush.bf16.msra.mxu0 0
      %498 = vmatpush.bf16.msra.mxu0 0
      %499 = vmatpush.bf16.msra.mxu0 0
      %500 = vmatpush.bf16.msra.mxu0 0
      %501 = vmatpush.bf16.msra.mxu0 0
      %502 = vmatpush.bf16.msra.mxu0 %v493
      %503 = vmatmul.bf16.gmra.mxu0 %v490
      %v504 = vpop.f32.mrf.mxu0
      %v505 = vadd.f32 0.0, %v504
      %v506 = vpop.f32.mrf.mxu0
      %507 = vdwg.mxu0
      %509 = vrot.lane.b32.xlu0 %v505, 32
      %v510 = vpop.permute.xlu0 %509
      %v512 = vadd.f32 %v482, %v510
      %vm513 = vcmask 523520
      %514 = vst.msk [vmem:[#allocation4] sm:$0xff] %vm513, %v512
      %515 = vst.msk [vmem:[#allocation2] sm:$0xff] %vm474, %v456
      %516 = vrot.lane.b32.xlu0 %v423, 64
      %v517 = vpop.permute.xlu0 %516
      %518 = vrot.lane.b32.xlu0 %v428, 64
      %v519 = vpop.permute.xlu0 %518
      %v521 = vsel %vm340, %v517, 0
      %v524 = vsel %vm340, %v519, 0
      %526 = vmatpush.bf16.xpose.msra.mxu0 0
      %527 = vmatpush.bf16.xpose.msra.mxu0 0
      %528 = vmatpush.bf16.xpose.msra.mxu0 0
      %529 = vmatpush.bf16.xpose.msra.mxu0 0
      %530 = vmatpush.bf16.xpose.msra.mxu0 0
      %531 = vmatpush.bf16.xpose.msra.mxu0 0
      %532 = vmatpush.bf16.xpose.msra.mxu0 0
      %533 = vmatpush.bf16.xpose.msra.mxu0 %v524
      %534 = vmatmul.bf16.gmra.mxu0 %v521
      %v535 = vpop.f32.mrf.mxu0
      %v536 = vadd.f32 0.0, %v535
      %v537 = vpop.f32.mrf.mxu0
      %538 = vdwg.mxu0
      %v539 = vmul.f32 %v536, 0.17677669
      %v540 = vadd.f32 %v539, %v362
      %v541 = vld [vmem:[#allocation2] sm:$0xff]
      %v542 = vsel %vm366, %v540, -inf
      %543 = vmax.xlane.f32.xlu0 %v542
      %v544 = vpop.xlane.xlu0 %543
      %v545 = vmax.f32 %v541, %v544
      %v546 = vsub.f32 %v541, %v545
      %v547 = vmul.f32 %v546, 1.442695
      %v548 = vpow.pop %v547
      %550 = vset.pattern.permute.xlu0 2
      %551 = vperm.xlu0 %550, %v545
      %v552 = vpop.permute.xlu0 %551
      %v554 = vsub.f32 %v540, %v552
      %v555 = vmul.f32 %v554, 1.442695
      %v556 = vpow.pop %v555
      %v557 = vld [vmem:[#allocation3] sm:$0xff]
      %v558 = vmul.f32 %v548, %v557
      %v559 = vsel %vm366, %v556, 0.0
      %560 = vadd.xlane.f32.xlu0 %v559
      %v561 = vpop.xlane.xlu0 %560
      %v562 = vadd.f32 %v558, %v561
      %vm563 = vcmask 23568
      %564 = vst.msk [vmem:[#allocation3] sm:$0xff] %vm563, %v562
      %v565 = vld [vmem:[#allocation4] sm:$0xff]
      %567 = vset.pattern.permute.xlu0 2
      %568 = vperm.xlu0 %567, %v548
      %v569 = vpop.permute.xlu0 %568
      %v571 = vmul.f32 %v569, %v565
      %v572 = vpack.c.bf16 %v556, %v556
      %573 = vrot.lane.b32.xlu0 %v486, 64
      %v574 = vpop.permute.xlu0 %573
      %v576 = vsel %vm366, %v572, 0
      %v579 = vsel %vm401, %v574, 0
      %581 = vmatpush.bf16.msra.mxu0 0
      %582 = vmatpush.bf16.msra.mxu0 0
      %583 = vmatpush.bf16.msra.mxu0 0
      %584 = vmatpush.bf16.msra.mxu0 0
      %585 = vmatpush.bf16.msra.mxu0 0
      %586 = vmatpush.bf16.msra.mxu0 0
      %587 = vmatpush.bf16.msra.mxu0 0
      %588 = vmatpush.bf16.msra.mxu0 %v579
      %589 = vmatmul.bf16.gmra.mxu0 %v576
      %v590 = vpop.f32.mrf.mxu0
      %v591 = vadd.f32 0.0, %v590
      %v592 = vpop.f32.mrf.mxu0
      %593 = vdwg.mxu0
      %595 = vrot.lane.b32.xlu0 %v591, 64
      %v596 = vpop.permute.xlu0 %595
      %v598 = vadd.f32 %v571, %v596
      %vm599 = vcmask 785920
      %600 = vst.msk [vmem:[#allocation4] sm:$0xff] %vm599, %v598
      %601 = vst.msk [vmem:[#allocation2] sm:$0xff] %vm563, %v545
      %602 = vrot.lane.b32.xlu0 %v423, 32
      %v603 = vpop.permute.xlu0 %602
      %604 = vrot.lane.b32.xlu0 %v428, 32
      %v605 = vpop.permute.xlu0 %604
      %v607 = vsel %vm340, %v603, 0
      %v610 = vsel %vm340, %v605, 0
      %612 = vmatpush.bf16.xpose.msra.mxu0 0
      %613 = vmatpush.bf16.xpose.msra.mxu0 0
      %614 = vmatpush.bf16.xpose.msra.mxu0 0
      %615 = vmatpush.bf16.xpose.msra.mxu0 0
      %616 = vmatpush.bf16.xpose.msra.mxu0 0
      %617 = vmatpush.bf16.xpose.msra.mxu0 0
      %618 = vmatpush.bf16.xpose.msra.mxu0 0
      %619 = vmatpush.bf16.xpose.msra.mxu0 %v610
      %620 = vmatmul.bf16.gmra.mxu0 %v607
      %v621 = vpop.f32.mrf.mxu0
      %v622 = vadd.f32 0.0, %v621
      %v623 = vpop.f32.mrf.mxu0
      %624 = vdwg.mxu0
      %v625 = vmul.f32 %v622, 0.17677669
      %v626 = vadd.f32 %v625, %v362
      %v627 = vld [vmem:[#allocation2] sm:$0xff]
      %v628 = vsel %vm366, %v626, -inf
      %629 = vmax.xlane.f32.xlu0 %v628
      %v630 = vpop.xlane.xlu0 %629
      %v631 = vmax.f32 %v627, %v630
      %v632 = vsub.f32 %v627, %v631
      %v633 = vmul.f32 %v632, 1.442695
      %v634 = vpow.pop %v633
      %636 = vset.pattern.permute.xlu0 3
      %637 = vperm.xlu0 %636, %v631
      %v638 = vpop.permute.xlu0 %637
      %v640 = vsub.f32 %v626, %v638
      %v641 = vmul.f32 %v640, 1.442695
      %v642 = vpow.pop %v641
      %v643 = vld [vmem:[#allocation3] sm:$0xff]
      %v644 = vmul.f32 %v634, %v643
      %v645 = vsel %vm366, %v642, 0.0
      %646 = vadd.xlane.f32.xlu0 %v645
      %v647 = vpop.xlane.xlu0 %646
      %v648 = vadd.f32 %v644, %v647
      %vm649 = vcmask 31768
      %650 = vst.msk [vmem:[#allocation3] sm:$0xff] %vm649, %v648
      %v651 = vld [vmem:[#allocation4] sm:$0xff]
      %653 = vset.pattern.permute.xlu0 3
      %654 = vperm.xlu0 %653, %v634
      %v655 = vpop.permute.xlu0 %654
      %v657 = vmul.f32 %v655, %v651
      %v658 = vpack.c.bf16 %v642, %v642
      %659 = vrot.lane.b32.xlu0 %v486, 32
      %v660 = vpop.permute.xlu0 %659
      %v662 = vsel %vm366, %v658, 0
      %v665 = vsel %vm401, %v660, 0
      %667 = vmatpush.bf16.msra.mxu0 0
      %668 = vmatpush.bf16.msra.mxu0 0
      %669 = vmatpush.bf16.msra.mxu0 0
      %670 = vmatpush.bf16.msra.mxu0 0
      %671 = vmatpush.bf16.msra.mxu0 0
      %672 = vmatpush.bf16.msra.mxu0 0
      %673 = vmatpush.bf16.msra.mxu0 0
      %674 = vmatpush.bf16.msra.mxu0 %v665
      %675 = vmatmul.bf16.gmra.mxu0 %v662
      %v676 = vpop.f32.mrf.mxu0
      %v677 = vadd.f32 0.0, %v676
      %v678 = vpop.f32.mrf.mxu0
      %679 = vdwg.mxu0
      %681 = vrot.lane.b32.xlu0 %v677, 96
      %v682 = vpop.permute.xlu0 %681
      %v684 = vadd.f32 %v657, %v682
      %vm685 = vcmask 1048320
      %686 = vst.msk [vmem:[#allocation4] sm:$0xff] %vm685, %v684
      %687 = vst.msk [vmem:[#allocation2] sm:$0xff] %vm649, %v631
      // Predicated region
      $region41: #{transformer_translator_forward.38} parent=35 // pred_check
        %p688 = pneg %p328
      $region42: #{transformer_translator_forward.38} parent=35 // pred_check_branch
        %690 = sbr.rel (%p688) target = $region44
      $region43: #{transformer_translator_forward.38} parent=35 // pred_region
        %v691 = vld [vmem:[#allocation3] sm:$0xff]
        %v692 = vrcp.pop %v691
        %v693 = vld [vmem:[#allocation4] sm:$0xff]
        %695 = vset.pattern.permute.xlu0 0
        %696 = vperm.xlu0 %695, %v692
        %v697 = vpop.permute.xlu0 %696
        %v699 = vmul.f32 %v693, %v697
        %v700 = vpack.c.bf16 %v699, %v699
        %vm701 = vcmask 257024
        %702 = vst.msk [vmem:[%s326] sm:$0xf] %vm701, %v700
        %v703 = vld [vmem:[#allocation3] sm:$0xff]
        %v704 = vrcp.pop %v703
        %v705 = vld [vmem:[#allocation4] sm:$0xff]
        %707 = vset.pattern.permute.xlu0 1
        %708 = vperm.xlu0 %707, %v704
        %v709 = vpop.permute.xlu0 %708
        %v711 = vmul.f32 %v705, %v709
        %v712 = vpack.c.bf16 %v711, %v711
        %vm713 = vcmask 519424
        %714 = vst.msk [vmem:[%s326] sm:$0xf] %vm713, %v712
        %v715 = vld [vmem:[#allocation3] sm:$0xff]
        %v716 = vrcp.pop %v715
        %v717 = vld [vmem:[#allocation4] sm:$0xff]
        %719 = vset.pattern.permute.xlu0 2
        %720 = vperm.xlu0 %719, %v716
        %v721 = vpop.permute.xlu0 %720
        %v723 = vmul.f32 %v717, %v721
        %v724 = vpack.c.bf16 %v723, %v723
        %vm725 = vcmask 781824
        %726 = vst.msk [vmem:[%s326] sm:$0xf] %vm725, %v724
        %v727 = vld [vmem:[#allocation3] sm:$0xff]
        %v728 = vrcp.pop %v727
        %v729 = vld [vmem:[#allocation4] sm:$0xff]
        %731 = vset.pattern.permute.xlu0 3
        %732 = vperm.xlu0 %731, %v728
        %v733 = vpop.permute.xlu0 %732
        %v735 = vmul.f32 %v729, %v733
        %v736 = vpack.c.bf16 %v735, %v735
        %vm737 = vcmask 1044224
        %738 = vst.msk [vmem:[%s326] sm:$0xf] %vm737, %v736
      $region44: #{transformer_translator_forward.38} parent=35 // pred_fallthru
        _
      %p739 = scmp.lt.s32.totalorder %s20, 7
      %s740 = scalar_select %p739, %s20, 7
      %p741 = scmp.lt.s32.totalorder %s21, 0
      %s742 = scalar_select %p741, %s21, 0
      %s743 = sadd.s32 %s742, %s740
      %s744 = smul.addr %s743, 4
      %s745 = scalar_lea.vmem %s4, %s744
      // Predicated region
      $region45: #{transformer_translator_forward.38} parent=35 // pred_check
        %p746 = pneg %p166
      $region46: #{transformer_translator_forward.38} parent=35 // pred_check_branch
        %748 = sbr.rel (%p746) target = $region48
      $region47: #{transformer_translator_forward.38} parent=35 // pred_region
        _
      $region48: #{transformer_translator_forward.38} parent=35 // pred_fallthru
        _
    $region36: #{transformer_translator_forward.38} parent=5 // pred_fallthru
      _
    %p749 = scmp.le.s32.totalorder 2, %s10
    // Predicated region
    $region49: #{transformer_translator_forward.38} parent=5 // pred_check
      %p750 = pneg %p749
    $region50: #{transformer_translator_forward.38} parent=5 // pred_check_branch
      %752 = sbr.rel (%p750) target = $region52
    $region51: #{transformer_translator_forward.38} parent=5 // pred_region
      %s753 = ssub.s32 %s10, 2
      // Predicated region
      $region53: #{transformer_translator_forward.38} parent=51 // pred_check
        %p754 = pneg %p172
      $region54: #{transformer_translator_forward.38} parent=51 // pred_check_branch
        %756 = sbr.rel (%p754) target = $region56
      $region55: #{transformer_translator_forward.38} parent=51 // pred_region
        %p757 = scmp.lt.s32.totalorder %s23, 7
        %s758 = scalar_select %p757, %s23, 7
        %p759 = scmp.lt.s32.totalorder %s24, 0
        %s760 = scalar_select %p759, %s24, 0
        %s761 = sadd.s32 %s760, %s758
        %s762 = smul.addr %s761, 4
        %s763 = scalar_lea.vmem %s4, %s762
      $region56: #{transformer_translator_forward.38} parent=51 // pred_fallthru
        _
    $region52: #{transformer_translator_forward.38} parent=5 // pred_fallthru
      _
  $region6: #{transformer_translator_forward.38} parent=0 // loop_footer
    %s14 = sadd.s32 1, %s10
  $region7: #{transformer_translator_forward.38} parent=0 // loop_footer_branch
    %9 = sbr.rel target = $region3
  $region8: #{transformer_translator_forward.38} parent=0 // loop_exit
    _

</llo_original>
